<compile_context>
chip_gen: v5e
topology: v5e:2x2
jax: 0.10.0
libtpu: 0.0.40
codegen_flags: <defaults>
</compile_context>

<pallas_src>
import functools

import jax
import jax.numpy as jnp
from jax import lax
from jax.experimental import pallas as pl
from jax.experimental.pallas import tpu as pltpu


def _ceil_to(a, m):
    return (a + m - 1) // m * m


def _vmem_limit_bytes(need):
    """Generation-aware scoped-VMEM limit (v5e/v6e: 128 MiB phys, v7x: 64 MiB)."""
    try:
        cap = pltpu.get_tpu_info().vmem_capacity_bytes
    except Exception:
        cap = 64 * 1024 * 1024
    return int(min(max(2 * need, 32 * 1024 * 1024), int(0.70 * cap)))


# --------------------------- fused NCDHW kernel ------------------------------
def _fused_kernel(w_ref, b_ref, e_ref, x_ref, o_ref, *, cin, cout, hh, ww):
    # w_ref: (8, Cin, Cout)  tap-major (tap = kd*4 + kh*2 + kw)
    # b_ref: (Cout, 1)
    # e_ref: (2, W, 2W)      one-hot lane-interleave matrices (kw -> lane 2w+kw)
    # x_ref: (Cin, H, W)     one input depth slice
    # o_ref: (Cout, 2, H, 4W) = output rows 2d, 2d+1 in a free view of NCDHW
    w2 = 2 * ww
    x = x_ref[...].reshape(cin, hh * ww)                      # lane-dense RHS for MXU
    ews = [jnp.broadcast_to(e_ref[0], (hh, ww, w2)),
           jnp.broadcast_to(e_ref[1], (hh, ww, w2))]
    bias = b_ref[...]                                         # (Cout, 1)

    for kd in range(2):
        for kh in range(2):
            acc = None
            for kw in range(2):
                t = kd * 4 + kh * 2 + kw
                # channel contraction: (H*W, Cin) x (Cin, Cout) via transposed-LHS dot
                bt = lax.dot_general(x, w_ref[t], (((0,), (0,)), ((), ())),
                                     preferred_element_type=jnp.float32)   # (H*W, Cout)
                bt = bt.reshape(hh, ww, cout)
                # stride-2 lane interleave as a tiny batched one-hot matmul (XLU/MXU slack)
                c = lax.dot_general(bt, ews[kw], (((1,), (1,)), ((0,), (0,))),
                                    preferred_element_type=jnp.float32)    # (H, Cout, 2W)
                acc = c if acc is None else acc + c
            acc = acc + bias                                               # (H, Cout, 2W)
            # place at output rows (2d+kd, 2h+kh): kd via static index, kh via lane offset
            o_ref[:, kd, :, kh * w2:(kh + 1) * w2] = jnp.transpose(acc, (1, 0, 2))


def _deconv_fused(x, w, b):
    N, Cin, D, H, W = x.shape
    Cout = w.shape[1]
    S = D * H * W

    wt8 = jnp.transpose(w, (2, 3, 4, 0, 1)).reshape(8, Cin, Cout)   # tap-major, tiny
    b2 = b.reshape(Cout, 1)
    j = jnp.arange(2 * W)
    wc = jnp.arange(W)
    ew = jnp.stack([(j[None, :] == (2 * wc[:, None] + kw)).astype(jnp.float32)
                    for kw in (0, 1)], axis=0)                       # (2, W, 2W)

    # VMEM accounting: 2x (input + output tiles + weights) + intermediates.
    f = 4
    x_tile = Cin * _ceil_to(H, 8) * _ceil_to(W, 128) * f
    o_tile = Cout * 2 * _ceil_to(H, 8) * _ceil_to(4 * W, 128) * f
    w_tile = 8 * _ceil_to(Cin, 8) * _ceil_to(Cout, 128) * f
    scratch = 4 * (H * W * _ceil_to(Cout, 128) * f + _ceil_to(H, 8) * _ceil_to(2 * W, 128) * f)
    need = 2 * (x_tile + o_tile + w_tile) + scratch

    cost = pl.CostEstimate(
        flops=2 * N * D * 8 * (H * W * Cin * Cout + H * W * Cout * 2 * W),
        transcendentals=0,
        bytes_accessed=4 * (N * Cin * S + 8 * N * Cout * S + wt8.size + b.size + ew.size))

    kern = functools.partial(_fused_kernel, cin=Cin, cout=Cout, hh=H, ww=W)
    y6 = pl.pallas_call(
        kern,
        out_shape=jax.ShapeDtypeStruct((N, Cout, D, 2, H, 4 * W), jnp.float32),
        grid=(N, D),
        in_specs=[
            pl.BlockSpec((8, Cin, Cout), lambda n, d: (0, 0, 0)),      # weights (resident)
            pl.BlockSpec((Cout, 1), lambda n, d: (0, 0)),              # bias (resident)
            pl.BlockSpec((2, W, 2 * W), lambda n, d: (0, 0, 0)),       # interleave one-hots
            pl.BlockSpec((None, Cin, None, H, W), lambda n, d: (n, 0, d, 0, 0)),
        ],
        out_specs=pl.BlockSpec((None, Cout, None, 2, H, 4 * W),
                               lambda n, d: (n, 0, d, 0, 0, 0)),
        compiler_params=pltpu.CompilerParams(
            dimension_semantics=("parallel", "parallel"),
            vmem_limit_bytes=_vmem_limit_bytes(need)),
        cost_estimate=cost,
    )(wt8, b2, ew, x)

    # Free (row-major-preserving) view back to NCDHW: (D,2,H,4W) == (2D,2H,2W).
    return y6.reshape(N, Cout, 2 * D, 2 * H, 2 * W)


# ------------------- fallback: matmul kernel + XLA interleave ----------------
def _fallback_kernel(w_ref, b_ref, x_ref, o_ref):
    o_ref[...] = (jnp.dot(w_ref[...], x_ref[...], preferred_element_type=jnp.float32)
                  + b_ref[...])


def _deconv_fallback(x, w, b):
    N, Cin, D, H, W = x.shape
    Cout = w.shape[1]
    Nout = Cout * 8
    S = D * H * W
    wt = w.reshape(Cin, Nout).T
    b2 = jnp.repeat(b, 8).reshape(Nout, 1)

    Sp = _ceil_to(S, 128)
    budget = 12 * 1024 * 1024
    fixed = 2 * (Nout * Cin + Nout) * 4                       # weights + bias, double-buffered
    per_col = 4 * (Cin + Nout) * 2
    cap_cols = max(128, ((budget - fixed) // per_col) // 128 * 128)
    m = Sp // 128
    ts = 128
    for k in range(min(m, cap_cols // 128), 0, -1):
        if m % k == 0:
            ts = 128 * k
            break

    x3 = x.reshape(N, Cin, S)
    if Sp != S:
        x3 = jnp.pad(x3, ((0, 0), (0, 0), (0, Sp - S)))
    y = pl.pallas_call(
        _fallback_kernel,
        out_shape=jax.ShapeDtypeStruct((N, Nout, Sp), jnp.float32),
        grid=(N, Sp // ts),
        in_specs=[pl.BlockSpec((Nout, Cin), lambda n, s: (0, 0)),
                  pl.BlockSpec((Nout, 1), lambda n, s: (0, 0)),
                  pl.BlockSpec((None, Cin, ts), lambda n, s: (n, 0, s))],
        out_specs=pl.BlockSpec((None, Nout, ts), lambda n, s: (n, 0, s)),
        compiler_params=pltpu.CompilerParams(
            dimension_semantics=("parallel", "parallel")),
    )(wt, b2, x3)
    if Sp != S:
        y = y[:, :, :S]
    y = y.reshape(N, Cout, 2, 2, 2, D, H, W)
    return y.transpose(0, 1, 5, 2, 6, 3, 7, 4).reshape(N, Cout, 2 * D, 2 * H, 2 * W)


# --------------------------------- API ---------------------------------------
def deconv3d_k2s2(x, w, b, *, fused=True):
    """ConvTranspose3d(kernel=2, stride=2) forward.  x:(N,Cin,D,H,W), w:(Cin,Cout,2,2,2)."""
    return _deconv_fused(x, w, b) if fused else _deconv_fallback(x, w, b)


def reference_deconv(x, w, b):
    N, Cin, D, H, W = x.shape
    Cout = w.shape[1]
    y = jnp.einsum('bcdhw,coijk->bodihjwk', x, w)
    y = y.reshape(N, Cout, 2 * D, 2 * H, 2 * W)
    return y + b[None, :, None, None, None]


# --------------------------------- main ---------------------------------------
if __name__ == "__main__":
    key = jax.random.PRNGKey(0)
    kx, kwt, kb = jax.random.split(key, 3)

    B, Cin, Cout = 2, 4, 8
    D, H, W = 16, 16, 8

    x = jax.random.normal(kx, (B, Cin, D, H, W), dtype=jnp.float32)
    w = 0.1 * jax.random.normal(kwt, (Cin, Cout, 2, 2, 2), dtype=jnp.float32)
    b = 0.1 * jax.random.normal(kb, (Cout,), dtype=jnp.float32)

    try:
        fwd = jax.jit(functools.partial(deconv3d_k2s2, fused=True))
        out = jax.block_until_ready(fwd(x, w, b))
    except Exception:
        # Lowering safety net: proven matmul kernel + XLA-side interleave.
        fwd = jax.jit(functools.partial(deconv3d_k2s2, fused=False))
        out = jax.block_until_ready(fwd(x, w, b))

    expected = (B, Cout, 2 * D, 2 * H, 2 * W)
    assert out.shape == expected, (out.shape, expected)
    assert bool(jnp.all(jnp.isfinite(out)))

    ref = reference_deconv(x, w, b)
    err = float(jnp.max(jnp.abs(out - ref)))
    assert err < 1e-3, err

    print("KERNEL_OK")
</pallas_src>

<mosaic_0001>
module attributes {stable_mosaic.version = 11 : i64} {
  func.func @_fused_kernel(%arg0: i32, %arg1: i32, %arg2: memref<8x4x8xf32, #tpu.memory_space<vmem>>, %arg3: memref<8x1xf32, #tpu.memory_space<vmem>>, %arg4: memref<2x8x16xf32, #tpu.memory_space<vmem>>, %arg5: memref<1x4x1x16x8xf32, #tpu.memory_space<vmem>>, %arg6: memref<1x8x1x2x16x32xf32, #tpu.memory_space<vmem>>) attributes {dimension_semantics = [#tpu.dimension_semantics<parallel>, #tpu.dimension_semantics<parallel>], iteration_bounds = array<i64: 2, 16>, scalar_prefetch = 0 : i64, scratch_operands = 0 : i64, tpu.core_type = #tpu.core_type<tc>, window_params = [{pipeline_mode = #tpu.pipeline_mode<synchronous>, transform_indices = @transform_0, window_bounds = array<i64: 8, 4, 8>}, {pipeline_mode = #tpu.pipeline_mode<synchronous>, transform_indices = @transform_1, window_bounds = array<i64: 8, 1>}, {pipeline_mode = #tpu.pipeline_mode<synchronous>, transform_indices = @transform_2, window_bounds = array<i64: 2, 8, 16>}, {transform_indices = @transform_3, window_bounds = array<i64: 1, 4, 1, 16, 8>}, {transform_indices = @transform_4, window_bounds = array<i64: 1, 8, 1, 2, 16, 32>}]} {
    %c0 = arith.constant 0 : index
    %c0_0 = arith.constant 0 : index
    %c0_1 = arith.constant 0 : index
    %c0_2 = arith.constant 0 : index
    %c0_3 = arith.constant 0 : index
    %0 = vector.load %arg5[%c0, %c0_0, %c0_1, %c0_2, %c0_3] : memref<1x4x1x16x8xf32, #tpu.memory_space<vmem>>, vector<1x4x1x16x8xf32>
    %1 = vector.shape_cast %0 : vector<1x4x1x16x8xf32> to vector<4x16x8xf32>
    %2 = vector.shape_cast %1 : vector<4x16x8xf32> to vector<4x128xf32>
    %c0_4 = arith.constant 0 : index
    %c0_5 = arith.constant 0 : index
    %c0_6 = arith.constant 0 : index
    %3 = vector.load %arg4[%c0_4, %c0_5, %c0_6] : memref<2x8x16xf32, #tpu.memory_space<vmem>>, vector<1x8x16xf32>
    %4 = vector.shape_cast %3 : vector<1x8x16xf32> to vector<8x16xf32>
    %5 = vector.shape_cast %4 : vector<8x16xf32> to vector<1x8x16xf32>
    %6 = vector.broadcast %5 : vector<1x8x16xf32> to vector<16x8x16xf32>
    %c1 = arith.constant 1 : index
    %c0_7 = arith.constant 0 : index
    %c0_8 = arith.constant 0 : index
    %7 = vector.load %arg4[%c1, %c0_7, %c0_8] : memref<2x8x16xf32, #tpu.memory_space<vmem>>, vector<1x8x16xf32>
    %8 = vector.shape_cast %7 : vector<1x8x16xf32> to vector<8x16xf32>
    %9 = vector.shape_cast %8 : vector<8x16xf32> to vector<1x8x16xf32>
    %10 = vector.broadcast %9 : vector<1x8x16xf32> to vector<16x8x16xf32>
    %c0_9 = arith.constant 0 : index
    %c0_10 = arith.constant 0 : index
    %11 = vector.load %arg3[%c0_9, %c0_10] : memref<8x1xf32, #tpu.memory_space<vmem>>, vector<8x1xf32>
    %c0_11 = arith.constant 0 : index
    %c0_12 = arith.constant 0 : index
    %c0_13 = arith.constant 0 : index
    %12 = vector.load %arg2[%c0_11, %c0_12, %c0_13] : memref<8x4x8xf32, #tpu.memory_space<vmem>>, vector<1x4x8xf32>
    %13 = vector.shape_cast %12 : vector<1x4x8xf32> to vector<4x8xf32>
    %cst = arith.constant dense<0.000000e+00> : vector<128x8xf32>
    %14 = tpu.matmul %2, %13, %cst {dimension_numbers = #tpu.dot_dimension_numbers<[0], [0], [1], [1], [0, 1, 1, 1], [], []>} : vector<4x128xf32>, vector<4x8xf32>, vector<128x8xf32> -> vector<128x8xf32>
    %15 = vector.shape_cast %14 : vector<128x8xf32> to vector<16x8x8xf32>
    %cst_14 = arith.constant dense<0.000000e+00> : vector<16x8x16xf32>
    %16 = tpu.matmul %15, %6, %cst_14 {dimension_numbers = #tpu.dot_dimension_numbers<[1], [1], [2], [2], [0, 0, 0, 2, 1, 2], [0], [0]>} : vector<16x8x8xf32>, vector<16x8x16xf32>, vector<16x8x16xf32> -> vector<16x8x16xf32>
    %c1_15 = arith.constant 1 : index
    %c0_16 = arith.constant 0 : index
    %c0_17 = arith.constant 0 : index
    %17 = vector.load %arg2[%c1_15, %c0_16, %c0_17] : memref<8x4x8xf32, #tpu.memory_space<vmem>>, vector<1x4x8xf32>
    %18 = vector.shape_cast %17 : vector<1x4x8xf32> to vector<4x8xf32>
    %cst_18 = arith.constant dense<0.000000e+00> : vector<128x8xf32>
    %19 = tpu.matmul %2, %18, %cst_18 {dimension_numbers = #tpu.dot_dimension_numbers<[0], [0], [1], [1], [0, 1, 1, 1], [], []>} : vector<4x128xf32>, vector<4x8xf32>, vector<128x8xf32> -> vector<128x8xf32>
    %20 = vector.shape_cast %19 : vector<128x8xf32> to vector<16x8x8xf32>
    %cst_19 = arith.constant dense<0.000000e+00> : vector<16x8x16xf32>
    %21 = tpu.matmul %20, %10, %cst_19 {dimension_numbers = #tpu.dot_dimension_numbers<[1], [1], [2], [2], [0, 0, 0, 2, 1, 2], [0], [0]>} : vector<16x8x8xf32>, vector<16x8x16xf32>, vector<16x8x16xf32> -> vector<16x8x16xf32>
    %22 = arith.addf %16, %21 : vector<16x8x16xf32>
    %23 = vector.shape_cast %11 : vector<8x1xf32> to vector<1x8x1xf32>
    %24 = vector.broadcast %23 : vector<1x8x1xf32> to vector<16x8x16xf32>
    %25 = arith.addf %22, %24 : vector<16x8x16xf32>
    %26 = tpu.transpose %25, [1, 0, 2] : vector<16x8x16xf32> -> vector<8x16x16xf32>
    %c0_20 = arith.constant 0 : index
    %c0_21 = arith.constant 0 : index
    %c0_22 = arith.constant 0 : index
    %c0_23 = arith.constant 0 : index
    %c0_24 = arith.constant 0 : index
    %c0_25 = arith.constant 0 : index
    %27 = vector.load %arg6[%c0_20, %c0_21, %c0_22, %c0_23, %c0_24, %c0_25] : memref<1x8x1x2x16x32xf32, #tpu.memory_space<vmem>>, vector<1x8x1x1x16x16xf32>
    %28 = vector.shape_cast %27 : vector<1x8x1x1x16x16xf32> to vector<8x16x16xf32>
    %29 = vector.shape_cast %26 : vector<8x16x16xf32> to vector<1x8x1x1x16x16xf32>
    tpu.vector_store %arg6[%c0_20, %c0_21, %c0_22, %c0_23, %c0_24, %c0_25], %29 {strides = array<i32>} : memref<1x8x1x2x16x32xf32, #tpu.memory_space<vmem>>, vector<1x8x1x1x16x16xf32>,
    %c2 = arith.constant 2 : index
    %c0_26 = arith.constant 0 : index
    %c0_27 = arith.constant 0 : index
    %30 = vector.load %arg2[%c2, %c0_26, %c0_27] : memref<8x4x8xf32, #tpu.memory_space<vmem>>, vector<1x4x8xf32>
    %31 = vector.shape_cast %30 : vector<1x4x8xf32> to vector<4x8xf32>
    %cst_28 = arith.constant dense<0.000000e+00> : vector<128x8xf32>
    %32 = tpu.matmul %2, %31, %cst_28 {dimension_numbers = #tpu.dot_dimension_numbers<[0], [0], [1], [1], [0, 1, 1, 1], [], []>} : vector<4x128xf32>, vector<4x8xf32>, vector<128x8xf32> -> vector<128x8xf32>
    %33 = vector.shape_cast %32 : vector<128x8xf32> to vector<16x8x8xf32>
    %cst_29 = arith.constant dense<0.000000e+00> : vector<16x8x16xf32>
    %34 = tpu.matmul %33, %6, %cst_29 {dimension_numbers = #tpu.dot_dimension_numbers<[1], [1], [2], [2], [0, 0, 0, 2, 1, 2], [0], [0]>} : vector<16x8x8xf32>, vector<16x8x16xf32>, vector<16x8x16xf32> -> vector<16x8x16xf32>
    %c3 = arith.constant 3 : index
    %c0_30 = arith.constant 0 : index
    %c0_31 = arith.constant 0 : index
    %35 = vector.load %arg2[%c3, %c0_30, %c0_31] : memref<8x4x8xf32, #tpu.memory_space<vmem>>, vector<1x4x8xf32>
    %36 = vector.shape_cast %35 : vector<1x4x8xf32> to vector<4x8xf32>
    %cst_32 = arith.constant dense<0.000000e+00> : vector<128x8xf32>
    %37 = tpu.matmul %2, %36, %cst_32 {dimension_numbers = #tpu.dot_dimension_numbers<[0], [0], [1], [1], [0, 1, 1, 1], [], []>} : vector<4x128xf32>, vector<4x8xf32>, vector<128x8xf32> -> vector<128x8xf32>
    %38 = vector.shape_cast %37 : vector<128x8xf32> to vector<16x8x8xf32>
    %cst_33 = arith.constant dense<0.000000e+00> : vector<16x8x16xf32>
    %39 = tpu.matmul %38, %10, %cst_33 {dimension_numbers = #tpu.dot_dimension_numbers<[1], [1], [2], [2], [0, 0, 0, 2, 1, 2], [0], [0]>} : vector<16x8x8xf32>, vector<16x8x16xf32>, vector<16x8x16xf32> -> vector<16x8x16xf32>
    %40 = arith.addf %34, %39 : vector<16x8x16xf32>
    %41 = vector.shape_cast %11 : vector<8x1xf32> to vector<1x8x1xf32>
    %42 = vector.broadcast %41 : vector<1x8x1xf32> to vector<16x8x16xf32>
    %43 = arith.addf %40, %42 : vector<16x8x16xf32>
    %44 = tpu.transpose %43, [1, 0, 2] : vector<16x8x16xf32> -> vector<8x16x16xf32>
    %c0_34 = arith.constant 0 : index
    %c0_35 = arith.constant 0 : index
    %c0_36 = arith.constant 0 : index
    %c0_37 = arith.constant 0 : index
    %c0_38 = arith.constant 0 : index
    %c16 = arith.constant 16 : index
    %45 = vector.load %arg6[%c0_34, %c0_35, %c0_36, %c0_37, %c0_38, %c16] : memref<1x8x1x2x16x32xf32, #tpu.memory_space<vmem>>, vector<1x8x1x1x16x16xf32>
    %46 = vector.shape_cast %45 : vector<1x8x1x1x16x16xf32> to vector<8x16x16xf32>
    %47 = vector.shape_cast %44 : vector<8x16x16xf32> to vector<1x8x1x1x16x16xf32>
    tpu.vector_store %arg6[%c0_34, %c0_35, %c0_36, %c0_37, %c0_38, %c16], %47 {strides = array<i32>} : memref<1x8x1x2x16x32xf32, #tpu.memory_space<vmem>>, vector<1x8x1x1x16x16xf32>,
    %c4 = arith.constant 4 : index
    %c0_39 = arith.constant 0 : index
    %c0_40 = arith.constant 0 : index
    %48 = vector.load %arg2[%c4, %c0_39, %c0_40] : memref<8x4x8xf32, #tpu.memory_space<vmem>>, vector<1x4x8xf32>
    %49 = vector.shape_cast %48 : vector<1x4x8xf32> to vector<4x8xf32>
    %cst_41 = arith.constant dense<0.000000e+00> : vector<128x8xf32>
    %50 = tpu.matmul %2, %49, %cst_41 {dimension_numbers = #tpu.dot_dimension_numbers<[0], [0], [1], [1], [0, 1, 1, 1], [], []>} : vector<4x128xf32>, vector<4x8xf32>, vector<128x8xf32> -> vector<128x8xf32>
    %51 = vector.shape_cast %50 : vector<128x8xf32> to vector<16x8x8xf32>
    %cst_42 = arith.constant dense<0.000000e+00> : vector<16x8x16xf32>
    %52 = tpu.matmul %51, %6, %cst_42 {dimension_numbers = #tpu.dot_dimension_numbers<[1], [1], [2], [2], [0, 0, 0, 2, 1, 2], [0], [0]>} : vector<16x8x8xf32>, vector<16x8x16xf32>, vector<16x8x16xf32> -> vector<16x8x16xf32>
    %c5 = arith.constant 5 : index
    %c0_43 = arith.constant 0 : index
    %c0_44 = arith.constant 0 : index
    %53 = vector.load %arg2[%c5, %c0_43, %c0_44] : memref<8x4x8xf32, #tpu.memory_space<vmem>>, vector<1x4x8xf32>
    %54 = vector.shape_cast %53 : vector<1x4x8xf32> to vector<4x8xf32>
    %cst_45 = arith.constant dense<0.000000e+00> : vector<128x8xf32>
    %55 = tpu.matmul %2, %54, %cst_45 {dimension_numbers = #tpu.dot_dimension_numbers<[0], [0], [1], [1], [0, 1, 1, 1], [], []>} : vector<4x128xf32>, vector<4x8xf32>, vector<128x8xf32> -> vector<128x8xf32>
    %56 = vector.shape_cast %55 : vector<128x8xf32> to vector<16x8x8xf32>
    %cst_46 = arith.constant dense<0.000000e+00> : vector<16x8x16xf32>
    %57 = tpu.matmul %56, %10, %cst_46 {dimension_numbers = #tpu.dot_dimension_numbers<[1], [1], [2], [2], [0, 0, 0, 2, 1, 2], [0], [0]>} : vector<16x8x8xf32>, vector<16x8x16xf32>, vector<16x8x16xf32> -> vector<16x8x16xf32>
    %58 = arith.addf %52, %57 : vector<16x8x16xf32>
    %59 = vector.shape_cast %11 : vector<8x1xf32> to vector<1x8x1xf32>
    %60 = vector.broadcast %59 : vector<1x8x1xf32> to vector<16x8x16xf32>
    %61 = arith.addf %58, %60 : vector<16x8x16xf32>
    %62 = tpu.transpose %61, [1, 0, 2] : vector<16x8x16xf32> -> vector<8x16x16xf32>
    %c0_47 = arith.constant 0 : index
    %c0_48 = arith.constant 0 : index
    %c0_49 = arith.constant 0 : index
    %c1_50 = arith.constant 1 : index
    %c0_51 = arith.constant 0 : index
    %c0_52 = arith.constant 0 : index
    %63 = vector.load %arg6[%c0_47, %c0_48, %c0_49, %c1_50, %c0_51, %c0_52] : memref<1x8x1x2x16x32xf32, #tpu.memory_space<vmem>>, vector<1x8x1x1x16x16xf32>
    %64 = vector.shape_cast %63 : vector<1x8x1x1x16x16xf32> to vector<8x16x16xf32>
    %65 = vector.shape_cast %62 : vector<8x16x16xf32> to vector<1x8x1x1x16x16xf32>
    tpu.vector_store %arg6[%c0_47, %c0_48, %c0_49, %c1_50, %c0_51, %c0_52], %65 {strides = array<i32>} : memref<1x8x1x2x16x32xf32, #tpu.memory_space<vmem>>, vector<1x8x1x1x16x16xf32>,
    %c6 = arith.constant 6 : index
    %c0_53 = arith.constant 0 : index
    %c0_54 = arith.constant 0 : index
    %66 = vector.load %arg2[%c6, %c0_53, %c0_54] : memref<8x4x8xf32, #tpu.memory_space<vmem>>, vector<1x4x8xf32>
    %67 = vector.shape_cast %66 : vector<1x4x8xf32> to vector<4x8xf32>
    %cst_55 = arith.constant dense<0.000000e+00> : vector<128x8xf32>
    %68 = tpu.matmul %2, %67, %cst_55 {dimension_numbers = #tpu.dot_dimension_numbers<[0], [0], [1], [1], [0, 1, 1, 1], [], []>} : vector<4x128xf32>, vector<4x8xf32>, vector<128x8xf32> -> vector<128x8xf32>
    %69 = vector.shape_cast %68 : vector<128x8xf32> to vector<16x8x8xf32>
    %cst_56 = arith.constant dense<0.000000e+00> : vector<16x8x16xf32>
    %70 = tpu.matmul %69, %6, %cst_56 {dimension_numbers = #tpu.dot_dimension_numbers<[1], [1], [2], [2], [0, 0, 0, 2, 1, 2], [0], [0]>} : vector<16x8x8xf32>, vector<16x8x16xf32>, vector<16x8x16xf32> -> vector<16x8x16xf32>
    %c7 = arith.constant 7 : index
    %c0_57 = arith.constant 0 : index
    %c0_58 = arith.constant 0 : index
    %71 = vector.load %arg2[%c7, %c0_57, %c0_58] : memref<8x4x8xf32, #tpu.memory_space<vmem>>, vector<1x4x8xf32>
    %72 = vector.shape_cast %71 : vector<1x4x8xf32> to vector<4x8xf32>
    %cst_59 = arith.constant dense<0.000000e+00> : vector<128x8xf32>
    %73 = tpu.matmul %2, %72, %cst_59 {dimension_numbers = #tpu.dot_dimension_numbers<[0], [0], [1], [1], [0, 1, 1, 1], [], []>} : vector<4x128xf32>, vector<4x8xf32>, vector<128x8xf32> -> vector<128x8xf32>
    %74 = vector.shape_cast %73 : vector<128x8xf32> to vector<16x8x8xf32>
    %cst_60 = arith.constant dense<0.000000e+00> : vector<16x8x16xf32>
    %75 = tpu.matmul %74, %10, %cst_60 {dimension_numbers = #tpu.dot_dimension_numbers<[1], [1], [2], [2], [0, 0, 0, 2, 1, 2], [0], [0]>} : vector<16x8x8xf32>, vector<16x8x16xf32>, vector<16x8x16xf32> -> vector<16x8x16xf32>
    %76 = arith.addf %70, %75 : vector<16x8x16xf32>
    %77 = vector.shape_cast %11 : vector<8x1xf32> to vector<1x8x1xf32>
    %78 = vector.broadcast %77 : vector<1x8x1xf32> to vector<16x8x16xf32>
    %79 = arith.addf %76, %78 : vector<16x8x16xf32>
    %80 = tpu.transpose %79, [1, 0, 2] : vector<16x8x16xf32> -> vector<8x16x16xf32>
    %c0_61 = arith.constant 0 : index
    %c0_62 = arith.constant 0 : index
    %c0_63 = arith.constant 0 : index
    %c1_64 = arith.constant 1 : index
    %c0_65 = arith.constant 0 : index
    %c16_66 = arith.constant 16 : index
    %81 = vector.load %arg6[%c0_61, %c0_62, %c0_63, %c1_64, %c0_65, %c16_66] : memref<1x8x1x2x16x32xf32, #tpu.memory_space<vmem>>, vector<1x8x1x1x16x16xf32>
    %82 = vector.shape_cast %81 : vector<1x8x1x1x16x16xf32> to vector<8x16x16xf32>
    %83 = vector.shape_cast %80 : vector<8x16x16xf32> to vector<1x8x1x1x16x16xf32>
    tpu.vector_store %arg6[%c0_61, %c0_62, %c0_63, %c1_64, %c0_65, %c16_66], %83 {strides = array<i32>} : memref<1x8x1x2x16x32xf32, #tpu.memory_space<vmem>>, vector<1x8x1x1x16x16xf32>,
    return
  }
  func.func @transform_0(%arg0: i32, %arg1: i32) -> (i32, i32, i32) {
    %c0_i32 = arith.constant 0 : i32
    %c0_i32_0 = arith.constant 0 : i32
    %c0_i32_1 = arith.constant 0 : i32
    %c0_i32_2 = arith.constant 0 : i32
    return %c0_i32, %c0_i32_0, %c0_i32_1 : i32, i32, i32
  }
  func.func @transform_1(%arg0: i32, %arg1: i32) -> (i32, i32) {
    %c0_i32 = arith.constant 0 : i32
    %c0_i32_0 = arith.constant 0 : i32
    %c0_i32_1 = arith.constant 0 : i32
    return %c0_i32, %c0_i32_0 : i32, i32
  }
  func.func @transform_2(%arg0: i32, %arg1: i32) -> (i32, i32, i32) {
    %c0_i32 = arith.constant 0 : i32
    %c0_i32_0 = arith.constant 0 : i32
    %c0_i32_1 = arith.constant 0 : i32
    %c0_i32_2 = arith.constant 0 : i32
    return %c0_i32, %c0_i32_0, %c0_i32_1 : i32, i32, i32
  }
  func.func @transform_3(%arg0: i32, %arg1: i32) -> (i32, i32, i32, i32, i32) {
    %c0_i32 = arith.constant 0 : i32
    %c0_i32_0 = arith.constant 0 : i32
    %c0_i32_1 = arith.constant 0 : i32
    %c0_i32_2 = arith.constant 0 : i32
    return %arg0, %c0_i32, %arg1, %c0_i32_0, %c0_i32_1 : i32, i32, i32, i32, i32
  }
  func.func @transform_4(%arg0: i32, %arg1: i32) -> (i32, i32, i32, i32, i32, i32) {
    %c0_i32 = arith.constant 0 : i32
    %c0_i32_0 = arith.constant 0 : i32
    %c0_i32_1 = arith.constant 0 : i32
    %c0_i32_2 = arith.constant 0 : i32
    %c0_i32_3 = arith.constant 0 : i32
    return %arg0, %c0_i32, %arg1, %c0_i32_0, %c0_i32_1, %c0_i32_2 : i32, i32, i32, i32, i32, i32
  }
}

module attributes {stable_mosaic.version = 11 : i64} {
  func.func @_fallback_kernel(%arg0: i32, %arg1: i32, %arg2: memref<64x4xf32, #tpu.memory_space<vmem>>, %arg3: memref<64x1xf32, #tpu.memory_space<vmem>>, %arg4: memref<1x4x2048xf32, #tpu.memory_space<vmem>>, %arg5: memref<1x64x2048xf32, #tpu.memory_space<vmem>>) attributes {dimension_semantics = [#tpu.dimension_semantics<parallel>, #tpu.dimension_semantics<parallel>], iteration_bounds = array<i64: 2, 1>, scalar_prefetch = 0 : i64, scratch_operands = 0 : i64, tpu.core_type = #tpu.core_type<tc>, window_params = [{pipeline_mode = #tpu.pipeline_mode<synchronous>, transform_indices = @transform_0, window_bounds = array<i64: 64, 4>}, {pipeline_mode = #tpu.pipeline_mode<synchronous>, transform_indices = @transform_1, window_bounds = array<i64: 64, 1>}, {transform_indices = @transform_2, window_bounds = array<i64: 1, 4, 2048>}, {transform_indices = @transform_3, window_bounds = array<i64: 1, 64, 2048>}]} {
    %c0 = arith.constant 0 : index
    %c0_0 = arith.constant 0 : index
    %0 = vector.load %arg2[%c0, %c0_0] : memref<64x4xf32, #tpu.memory_space<vmem>>, vector<64x4xf32>
    %c0_1 = arith.constant 0 : index
    %c0_2 = arith.constant 0 : index
    %c0_3 = arith.constant 0 : index
    %1 = vector.load %arg4[%c0_1, %c0_2, %c0_3] : memref<1x4x2048xf32, #tpu.memory_space<vmem>>, vector<1x4x2048xf32>
    %2 = vector.shape_cast %1 : vector<1x4x2048xf32> to vector<4x2048xf32>
    %cst = arith.constant dense<0.000000e+00> : vector<64x2048xf32>
    %3 = tpu.matmul %0, %2, %cst {dimension_numbers = #tpu.dot_dimension_numbers<[1], [0], [0], [1], [0, 0, 1, 1], [], []>} : vector<64x4xf32>, vector<4x2048xf32>, vector<64x2048xf32> -> vector<64x2048xf32>
    %c0_4 = arith.constant 0 : index
    %c0_5 = arith.constant 0 : index
    %4 = vector.load %arg3[%c0_4, %c0_5] : memref<64x1xf32, #tpu.memory_space<vmem>>, vector<64x1xf32>
    %5 = vector.broadcast %4 : vector<64x1xf32> to vector<64x2048xf32>
    %6 = arith.addf %3, %5 : vector<64x2048xf32>
    %c0_6 = arith.constant 0 : index
    %c0_7 = arith.constant 0 : index
    %c0_8 = arith.constant 0 : index
    %7 = vector.load %arg5[%c0_6, %c0_7, %c0_8] : memref<1x64x2048xf32, #tpu.memory_space<vmem>>, vector<1x64x2048xf32>
    %8 = vector.shape_cast %7 : vector<1x64x2048xf32> to vector<64x2048xf32>
    %9 = vector.shape_cast %6 : vector<64x2048xf32> to vector<1x64x2048xf32>
    tpu.vector_store %arg5[%c0_6, %c0_7, %c0_8], %9 {strides = array<i32>} : memref<1x64x2048xf32, #tpu.memory_space<vmem>>, vector<1x64x2048xf32>,
    return
  }
  func.func @transform_0(%arg0: i32, %arg1: i32) -> (i32, i32) {
    %c0_i32 = arith.constant 0 : i32
    %c0_i32_0 = arith.constant 0 : i32
    %c0_i32_1 = arith.constant 0 : i32
    return %c0_i32, %c0_i32_0 : i32, i32
  }
  func.func @transform_1(%arg0: i32, %arg1: i32) -> (i32, i32) {
    %c0_i32 = arith.constant 0 : i32
    %c0_i32_0 = arith.constant 0 : i32
    %c0_i32_1 = arith.constant 0 : i32
    return %c0_i32, %c0_i32_0 : i32, i32
  }
  func.func @transform_2(%arg0: i32, %arg1: i32) -> (i32, i32, i32) {
    %c0_i32 = arith.constant 0 : i32
    %c0_i32_0 = arith.constant 0 : i32
    return %arg0, %c0_i32, %arg1 : i32, i32, i32
  }
  func.func @transform_3(%arg0: i32, %arg1: i32) -> (i32, i32, i32) {
    %c0_i32 = arith.constant 0 : i32
    %c0_i32_0 = arith.constant 0 : i32
    return %arg0, %c0_i32, %arg1 : i32, i32, i32
  }
}

</mosaic_0001>

<llo_original>
// kernel: deconv3d_k2s2.1
$region0: #{deconv3d_k2s2.1}
  #allocation0 [shape = 'u32[]', space=smem, size = 0x4, offset = 0x4, fixed_abs, tag = 'smem constant byte address 0x4 - core index']
  #allocation1 [shape = 'u32[72,128]{1,0:T(1,128)}', space=vmem, size = 0x9000, scoped, tag = 'internal scratch']
  %s0 = inlined_call_operand.vmem [shape: f32[8,4,8], index: 0, kind: input, shape index: {}]
  %s1 = inlined_call_operand.vmem [shape: f32[8,1], index: 1, kind: input, shape index: {}]
  %s2 = inlined_call_operand.vmem [shape: f32[2,8,16], index: 2, kind: input, shape index: {}]
  %s3 = inlined_call_operand.vmem [shape: f32[2,4,16,16,8], index: 3, kind: input, shape index: {}]
  %s4 = inlined_call_operand.vmem [shape: f32[2,8,16,2,16,32], index: 4, kind: output, shape index: {}]
  %s5 = sld [smem:[#allocation0]]
  $region121: #{deconv3d_k2s2.1} parent=0
    _
  %s7 = ssub.s32 1, %s5
  %s8 = scalar_select 0, %s7, %s5
  $region1: #{deconv3d_k2s2.1} parent=0
    #allocation2 [shape = 'u8[65536]{0}', space=vmem, size = 0x10000, scoped, tag = 'input window, operand 3']
    #allocation3 [shape = 'u8[262144]{0}', space=vmem, size = 0x40000, scoped, tag = 'output window, operand 0']
    loop: start=0, step=1, limit=34
    $region2: #{deconv3d_k2s2.1} parent=1 // loop_pre_header
      _
    $region3: #{deconv3d_k2s2.1} parent=1 // loop_header
      %s10 = sphi 0, %s14
      %p11 = scmp.ge.s32.totalorder %s10, 34
      %s17 = sphi 0, %s29
      %s18 = sphi 0, %s25
      %s19 = sphi 0, %s17
      %s20 = sphi 0, %s18
      %s21 = sphi 0, %s19
      %s22 = sphi 0, %s20
      %s30 = sphi 0, %s30
      %s32 = sphi 0, %s30
      %s33 = sphi 0, %s32
      %s47 = sphi 0, %s33
      %s51 = sphi 0, %s51
      %s53 = sphi 0, %s51
      %s54 = sphi 0, %s53
      %s68 = sphi 0, %s54
      %s72 = sphi 0, %s72
      %s74 = sphi 0, %s72
      %s75 = sphi 0, %s74
      %s89 = sphi 0, %s75
      %s97 = sphi 0, %s99
      %s100 = sphi 0, %s97
      %s101 = sphi 0, %s100
      %s117 = sphi 0, %s101
      %s125 = sphi 0, %s127
      %s128 = sphi 0, %s125
      %s129 = sphi 0, %s128
      %s145 = sphi 0, %s129
    $region4: #{deconv3d_k2s2.1} parent=1 // loop_header_branch
      %13 = sbr.rel (%p11) target = $region8
    $region5: #{deconv3d_k2s2.1} parent=1 // loop_body
      %s15 = ssub.s32 %s10, 1
      %s16 = ssub.s32 %s10, 2
      %s23 = sadd.s32 1, %s18
      %p24 = scmp.ge.s32.totalorder %s23, 16
      %s25 = scalar_select %p24, 0, %s23
      %s26 = sadd.s32 1, %s17
      %s27 = scalar_select %p24, %s26, %s17
      %p28 = scmp.ge.s32.totalorder %s27, 2
      %s29 = scalar_select %p28, 0, %s27
      %s31 = sadd.s32 %s30, 1
      %p34 = scmp.eq.s32.totalorder %s10, 31
      %p35 = scmp.ne.s32.totalorder %s30, %s32
      %p36 = scmp.eq.s32.totalorder %s10, 0
      %p37 = por %p35, %p36
      %p38 = scmp.ne.s32.totalorder %s30, %s32
      %p39 = scmp.eq.s32.totalorder %s15, 31
      %p40 = por %p38, %p39
      %p41 = scmp.ne.s32.totalorder %s32, %s33
      %p42 = scmp.eq.s32.totalorder %s15, 0
      %p43 = por %p41, %p42
      %p44 = scmp.ne.s32.totalorder %s32, %s33
      %p45 = scmp.eq.s32.totalorder %s16, 31
      %p46 = por %p44, %p45
      %p48 = scmp.ne.s32.totalorder %s33, %s47
      %p49 = scmp.eq.s32.totalorder %s16, 0
      %p50 = por %p48, %p49
      %s52 = sadd.s32 %s51, 1
      %p55 = scmp.eq.s32.totalorder %s10, 31
      %p56 = scmp.ne.s32.totalorder %s51, %s53
      %p57 = scmp.eq.s32.totalorder %s10, 0
      %p58 = por %p56, %p57
      %p59 = scmp.ne.s32.totalorder %s51, %s53
      %p60 = scmp.eq.s32.totalorder %s15, 31
      %p61 = por %p59, %p60
      %p62 = scmp.ne.s32.totalorder %s53, %s54
      %p63 = scmp.eq.s32.totalorder %s15, 0
      %p64 = por %p62, %p63
      %p65 = scmp.ne.s32.totalorder %s53, %s54
      %p66 = scmp.eq.s32.totalorder %s16, 31
      %p67 = por %p65, %p66
      %p69 = scmp.ne.s32.totalorder %s54, %s68
      %p70 = scmp.eq.s32.totalorder %s16, 0
      %p71 = por %p69, %p70
      %s73 = sadd.s32 %s72, 1
      %p76 = scmp.eq.s32.totalorder %s10, 31
      %p77 = scmp.ne.s32.totalorder %s72, %s74
      %p78 = scmp.eq.s32.totalorder %s10, 0
      %p79 = por %p77, %p78
      %p80 = scmp.ne.s32.totalorder %s72, %s74
      %p81 = scmp.eq.s32.totalorder %s15, 31
      %p82 = por %p80, %p81
      %p83 = scmp.ne.s32.totalorder %s74, %s75
      %p84 = scmp.eq.s32.totalorder %s15, 0
      %p85 = por %p83, %p84
      %p86 = scmp.ne.s32.totalorder %s74, %s75
      %p87 = scmp.eq.s32.totalorder %s16, 31
      %p88 = por %p86, %p87
      %p90 = scmp.ne.s32.totalorder %s75, %s89
      %p91 = scmp.eq.s32.totalorder %s16, 0
      %p92 = por %p90, %p91
      %s93 = ssub.s32 %s17, %s29
      %s94 = ssub.s32 %s18, %s25
      %s95 = sor.u32 %s93, %s94
      %p96 = scmp.eq.s32.totalorder %s95, 0
      %s98 = sadd.s32 %s97, 1
      %s99 = scalar_select %p96, %s97, %s98
      %p102 = pneg %p96
      %p103 = scmp.eq.s32.totalorder %s10, 31
      %p104 = por %p102, %p103
      %p105 = scmp.ne.s32.totalorder %s97, %s100
      %p106 = scmp.eq.s32.totalorder %s10, 0
      %p107 = por %p105, %p106
      %p108 = scmp.ne.s32.totalorder %s97, %s100
      %p109 = scmp.eq.s32.totalorder %s15, 31
      %p110 = por %p108, %p109
      %p111 = scmp.ne.s32.totalorder %s100, %s101
      %p112 = scmp.eq.s32.totalorder %s15, 0
      %p113 = por %p111, %p112
      %p114 = scmp.ne.s32.totalorder %s100, %s101
      %p115 = scmp.eq.s32.totalorder %s16, 31
      %p116 = por %p114, %p115
      %p118 = scmp.ne.s32.totalorder %s101, %s117
      %p119 = scmp.eq.s32.totalorder %s16, 0
      %p120 = por %p118, %p119
      %s121 = ssub.s32 %s17, %s29
      %s122 = ssub.s32 %s18, %s25
      %s123 = sor.u32 %s121, %s122
      %p124 = scmp.eq.s32.totalorder %s123, 0
      %s126 = sadd.s32 %s125, 1
      %s127 = scalar_select %p124, %s125, %s126
      %p130 = pneg %p124
      %p131 = scmp.eq.s32.totalorder %s10, 31
      %p132 = por %p130, %p131
      %p133 = scmp.ne.s32.totalorder %s125, %s128
      %p134 = scmp.eq.s32.totalorder %s10, 0
      %p135 = por %p133, %p134
      %p136 = scmp.ne.s32.totalorder %s125, %s128
      %p137 = scmp.eq.s32.totalorder %s15, 31
      %p138 = por %p136, %p137
      %p139 = scmp.ne.s32.totalorder %s128, %s129
      %p140 = scmp.eq.s32.totalorder %s15, 0
      %p141 = por %p139, %p140
      %p142 = scmp.ne.s32.totalorder %s128, %s129
      %p143 = scmp.eq.s32.totalorder %s16, 31
      %p144 = por %p142, %p143
      %p146 = scmp.ne.s32.totalorder %s129, %s145
      %p147 = scmp.eq.s32.totalorder %s16, 0
      %p148 = por %p146, %p147
      %p149 = scmp.le.s32.totalorder 1, %s10
      %p150 = scmp.lt.s32.totalorder %s10, 33
      %p151 = pnand %p149, %p150
      %p152 = pneg %p151
      // Predicated region
      $region9: #{deconv3d_k2s2.1} parent=5 // pred_check
        _
      $region10: #{deconv3d_k2s2.1} parent=5 // pred_check_branch
        %154 = sbr.rel (%p151) target = $region12
      $region11: #{deconv3d_k2s2.1} parent=5 // pred_region
        %s155 = ssub.s32 %s10, 1
        // Predicated region
        $region13: #{deconv3d_k2s2.1} parent=11 // pred_check
          %p156 = pneg %p43
        $region14: #{deconv3d_k2s2.1} parent=11 // pred_check_branch
          %158 = sbr.rel (%p156) target = $region16
        $region15: #{deconv3d_k2s2.1} parent=11 // pred_region
          _
        $region16: #{deconv3d_k2s2.1} parent=11 // pred_fallthru
          _
        // Predicated region
        $region17: #{deconv3d_k2s2.1} parent=11 // pred_check
          %p159 = pneg %p64
        $region18: #{deconv3d_k2s2.1} parent=11 // pred_check_branch
          %161 = sbr.rel (%p159) target = $region20
        $region19: #{deconv3d_k2s2.1} parent=11 // pred_region
          _
        $region20: #{deconv3d_k2s2.1} parent=11 // pred_fallthru
          _
        // Predicated region
        $region21: #{deconv3d_k2s2.1} parent=11 // pred_check
          %p162 = pneg %p85
        $region22: #{deconv3d_k2s2.1} parent=11 // pred_check_branch
          %164 = sbr.rel (%p162) target = $region24
        $region23: #{deconv3d_k2s2.1} parent=11 // pred_region
          _
        $region24: #{deconv3d_k2s2.1} parent=11 // pred_fallthru
          _
      $region12: #{deconv3d_k2s2.1} parent=5 // pred_fallthru
        _
      %p165 = scmp.lt.s32.totalorder %s10, 32
      // Predicated region
      $region25: #{deconv3d_k2s2.1} parent=5 // pred_check
        %p166 = pneg %p165
      $region26: #{deconv3d_k2s2.1} parent=5 // pred_check_branch
        %168 = sbr.rel (%p166) target = $region28
      $region27: #{deconv3d_k2s2.1} parent=5 // pred_region
        // Predicated region
        $region29: #{deconv3d_k2s2.1} parent=27 // pred_check
          %p169 = pneg %p107
        $region30: #{deconv3d_k2s2.1} parent=27 // pred_check_branch
          %171 = sbr.rel (%p169) target = $region32
        $region31: #{deconv3d_k2s2.1} parent=27 // pred_region
          %s172 = sand.u32 %s97, 1
          %s173 = sand.u32 %s97, 1
          %s174 = smul.addr %s173, 64
          %s175 = scalar_lea.vmem [#allocation2], %s174
          %s176 = smul.addr %s18, 2
          %s177 = smul.addr %s17, 128
          %s178 = sadd.s32 %s176, %s177
          %s179 = smul.addr %s178, 8
          %s180 = scalar_lea.vmem %s3, %s179
          // Predicated region
          $region33: #{deconv3d_k2s2.1} parent=31 // pred_check
            _
          $region34: #{deconv3d_k2s2.1} parent=31 // pred_check_branch
            %182 = sbr.rel (0) target = $region36
          $region35: #{deconv3d_k2s2.1} parent=31 // pred_region
            // Predicated region
            $region37: #{deconv3d_k2s2.1} parent=35 // pred_check
              _
            $region38: #{deconv3d_k2s2.1} parent=35 // pred_check_branch
              %184 = sbr.rel (0) target = $region40
            $region39: #{deconv3d_k2s2.1} parent=35 // pred_region
              // Predicated region
              $region52: #{deconv3d_k2s2.1} parent=39 // pred_check
                _
              $region53: #{deconv3d_k2s2.1} parent=39 // pred_check_branch
                %214 = sbr.rel (0) target = $region55
              $region54: #{deconv3d_k2s2.1} parent=39 // pred_region
                loop: start=0, step=1, limit=1
                $region56: #{deconv3d_k2s2.1} parent=54 // loop_pre_header
                  _
                $region57: #{deconv3d_k2s2.1} parent=54 // loop_header
                  %s216 = sphi 0, %s220
                  %p217 = scmp.ge.s32.totalorder %s216, 1
                  %s221 = sphi %s180, %s180
                  %s222 = sphi %s175, %s175
                $region58: #{deconv3d_k2s2.1} parent=54 // loop_header_branch
                  %219 = sbr.rel (%p217) target = $region62
                $region59: #{deconv3d_k2s2.1} parent=54 // loop_body
                  %v223 = vld [vmem:[%s221] sm:$0xff]
                  %224 = vst [vmem:[%s222] sm:$0xff] %v223
                  %v225 = vld [vmem:[%s221 + $0x8] sm:$0xff]
                  %226 = vst [vmem:[%s222 + $0x8] sm:$0xff] %v225
                  %v227 = vld [vmem:[%s221 + $0x100] sm:$0xff]
                  %228 = vst [vmem:[%s222 + $0x10] sm:$0xff] %v227
                  %v229 = vld [vmem:[%s221 + $0x108] sm:$0xff]
                  %230 = vst [vmem:[%s222 + $0x18] sm:$0xff] %v229
                  %v231 = vld [vmem:[%s221 + $0x200] sm:$0xff]
                  %232 = vst [vmem:[%s222 + $0x20] sm:$0xff] %v231
                  %v233 = vld [vmem:[%s221 + $0x208] sm:$0xff]
                  %234 = vst [vmem:[%s222 + $0x28] sm:$0xff] %v233
                  %v235 = vld [vmem:[%s221 + $0x300] sm:$0xff]
                  %236 = vst [vmem:[%s222 + $0x30] sm:$0xff] %v235
                  %v237 = vld [vmem:[%s221 + $0x308] sm:$0xff]
                  %238 = vst [vmem:[%s222 + $0x38] sm:$0xff] %v237
                $region60: #{deconv3d_k2s2.1} parent=54 // loop_footer
                  %s220 = sadd.s32 1, %s216
                $region61: #{deconv3d_k2s2.1} parent=54 // loop_footer_branch
                  %215 = sbr.rel target = $region57
                $region62: #{deconv3d_k2s2.1} parent=54 // loop_exit
                  _
              $region55: #{deconv3d_k2s2.1} parent=39 // pred_fallthru
                _
              // Predicated region
              $region63: #{deconv3d_k2s2.1} parent=39 // pred_check
                _
              $region64: #{deconv3d_k2s2.1} parent=39 // pred_check_branch
                %240 = sbr.rel target = $region66
              $region65: #{deconv3d_k2s2.1} parent=39 // pred_region
                _
              $region66: #{deconv3d_k2s2.1} parent=39 // pred_fallthru
                _
            $region40: #{deconv3d_k2s2.1} parent=35 // pred_fallthru
              _
            // Predicated region
            $region41: #{deconv3d_k2s2.1} parent=35 // pred_check
              _
            $region42: #{deconv3d_k2s2.1} parent=35 // pred_check_branch
              %186 = sbr.rel target = $region44
            $region43: #{deconv3d_k2s2.1} parent=35 // pred_region
              %s188 = ssub.s32 256, 1
              loop: start=0, step=1, limit=1
              $region45: #{deconv3d_k2s2.1} parent=43 // loop_pre_header
                _
              $region46: #{deconv3d_k2s2.1} parent=43 // loop_header
                %s190 = sphi 0, %s194
                %p191 = scmp.ge.s32.totalorder %s190, 1
                %s195 = sphi %s180, %s180
                %s196 = sphi %s175, %s175
              $region47: #{deconv3d_k2s2.1} parent=43 // loop_header_branch
                %193 = sbr.rel (%p191) target = $region51
              $region48: #{deconv3d_k2s2.1} parent=43 // loop_body
                %v197 = vld [vmem:[%s195] sm:%s188]
                %198 = vst [vmem:[%s196] sm:%s188] %v197
                %v199 = vld [vmem:[%s195 + $0x8] sm:%s188]
                %200 = vst [vmem:[%s196 + $0x8] sm:%s188] %v199
                %v201 = vld [vmem:[%s195 + $0x100] sm:%s188]
                %202 = vst [vmem:[%s196 + $0x10] sm:%s188] %v201
                %v203 = vld [vmem:[%s195 + $0x108] sm:%s188]
                %204 = vst [vmem:[%s196 + $0x18] sm:%s188] %v203
                %v205 = vld [vmem:[%s195 + $0x200] sm:%s188]
                %206 = vst [vmem:[%s196 + $0x20] sm:%s188] %v205
                %v207 = vld [vmem:[%s195 + $0x208] sm:%s188]
                %208 = vst [vmem:[%s196 + $0x28] sm:%s188] %v207
                %v209 = vld [vmem:[%s195 + $0x300] sm:%s188]
                %210 = vst [vmem:[%s196 + $0x30] sm:%s188] %v209
                %v211 = vld [vmem:[%s195 + $0x308] sm:%s188]
                %212 = vst [vmem:[%s196 + $0x38] sm:%s188] %v211
              $region49: #{deconv3d_k2s2.1} parent=43 // loop_footer
                %s194 = sadd.s32 1, %s190
              $region50: #{deconv3d_k2s2.1} parent=43 // loop_footer_branch
                %189 = sbr.rel target = $region46
              $region51: #{deconv3d_k2s2.1} parent=43 // loop_exit
                _
            $region44: #{deconv3d_k2s2.1} parent=35 // pred_fallthru
              _
          $region36: #{deconv3d_k2s2.1} parent=31 // pred_fallthru
            _
          %241 = vnop
        $region32: #{deconv3d_k2s2.1} parent=27 // pred_fallthru
          _
      $region28: #{deconv3d_k2s2.1} parent=5 // pred_fallthru
        _
      %p242 = scmp.le.s32.totalorder 1, %s10
      %p243 = scmp.lt.s32.totalorder %s10, 33
      %p244 = pnand %p242, %p243
      %p245 = pneg %p244
      // Predicated region
      $region67: #{deconv3d_k2s2.1} parent=5 // pred_check
        _
      $region68: #{deconv3d_k2s2.1} parent=5 // pred_check_branch
        %247 = sbr.rel (%p244) target = $region70
      $region69: #{deconv3d_k2s2.1} parent=5 // pred_region
        %s248 = ssub.s32 %s10, 1
        %s249 = sand.u32 %s100, 1
        %s250 = sand.u32 %s100, 1
        %s251 = smul.addr %s250, 64
        %s252 = scalar_lea.vmem [#allocation2], %s251
        // Predicated region
        $region71: #{deconv3d_k2s2.1} parent=69 // pred_check
          %p253 = pneg %p113
        $region72: #{deconv3d_k2s2.1} parent=69 // pred_check_branch
          %255 = sbr.rel (%p253) target = $region74
        $region73: #{deconv3d_k2s2.1} parent=69 // pred_region
          _
        $region74: #{deconv3d_k2s2.1} parent=69 // pred_fallthru
          _
        %p256 = pneg %p43
        %p257 = pneg %p40
        %p258 = pneg %p64
        %p259 = pneg %p61
        %p260 = pneg %p85
        %p261 = pneg %p82
        %s262 = sand.u32 %s100, 1
        %s263 = sand.u32 %s100, 1
        %s264 = smul.addr %s263, 64
        %s265 = scalar_lea.vmem [#allocation2], %s264
        %p266 = pneg %p113
        %p267 = pneg %p110
        %p268 = pneg %p141
        %p269 = pneg %p138
        %s270 = sand.u32 %s128, 1
        %s271 = sand.u32 %s128, 1
        %s272 = smul.addr %s271, 256
        %s273 = scalar_lea.vmem [#allocation3], %s272
        %v274 = vld [vmem:[%s252] sm:$0xff]
        %v275 = vld [vmem:[%s252 + $0x8] sm:$0xff]
        %v276 = vld [vmem:[%s252 + $0x10] sm:$0xff]
        %v277 = vld [vmem:[%s252 + $0x18] sm:$0xff]
        %v278 = vld [vmem:[%s252 + $0x20] sm:$0xff]
        %v279 = vld [vmem:[%s252 + $0x28] sm:$0xff]
        %v280 = vld [vmem:[%s252 + $0x30] sm:$0xff]
        %v281 = vld [vmem:[%s252 + $0x38] sm:$0xff]
        %v282 = vrot.slane %v278, 4
        %vm283 = vcmask 1047556
        %v284 = vsel %vm283, %v282, %v274
        %v285 = vrot.slane %v274, 4
        %v286 = vsel %vm283, %v278, %v285
        %v288 = vunpack.c.l.s4 1983009808
        %v289 = vunpack.c.0.s8 %v288
        %v290 = vperm.slane %v284, %v289
        %v292 = vunpack.c.l.s4 1983009808
        %v293 = vunpack.c.0.s8 %v292
        %v294 = vperm.slane %v286, %v293
        %v295 = vrot.slane %v280, 4
        %v296 = vsel %vm283, %v295, %v276
        %v297 = vrot.slane %v276, 4
        %v298 = vsel %vm283, %v280, %v297
        %v300 = vunpack.c.l.s4 1983009808
        %v301 = vunpack.c.0.s8 %v300
        %v302 = vperm.slane %v296, %v301
        %v304 = vunpack.c.l.s4 1983009808
        %v305 = vunpack.c.0.s8 %v304
        %v306 = vperm.slane %v298, %v305
        %v307 = vrot.slane %v302, 4
        %v308 = vsel %vm283, %v307, %v290
        %v309 = vrot.slane %v290, 4
        %v310 = vsel %vm283, %v302, %v309
        %v312 = vunpack.c.l.s4 1934713408
        %v313 = vunpack.c.0.s8 %v312
        %v314 = vperm.slane %v308, %v313
        %v316 = vunpack.c.l.s4 1934713408
        %v317 = vunpack.c.0.s8 %v316
        %v318 = vperm.slane %v310, %v317
        %v319 = vrot.slane %v306, 4
        %v320 = vsel %vm283, %v319, %v294
        %v321 = vrot.slane %v294, 4
        %v322 = vsel %vm283, %v306, %v321
        %v324 = vunpack.c.l.s4 1934713408
        %v325 = vunpack.c.0.s8 %v324
        %v326 = vperm.slane %v320, %v325
        %v328 = vunpack.c.l.s4 1934713408
        %v329 = vunpack.c.0.s8 %v328
        %v330 = vperm.slane %v322, %v329
        %v331 = vrot.slane %v314, 4
        %v332 = vsel %vm283, 0.0, %v331
        %v333 = vrot.slane %v318, 4
        %v334 = vsel %vm283, 0.0, %v333
        %v335 = vrot.slane %v326, 4
        %v336 = vsel %vm283, 0.0, %v335
        %v337 = vrot.slane %v330, 4
        %v338 = vsel %vm283, 0.0, %v337
        %v339 = vrot.slane %v279, 4
        %v340 = vsel %vm283, %v339, %v275
        %v341 = vrot.slane %v275, 4
        %v342 = vsel %vm283, %v279, %v341
        %v344 = vunpack.c.l.s4 1983009808
        %v345 = vunpack.c.0.s8 %v344
        %v346 = vperm.slane %v340, %v345
        %v348 = vunpack.c.l.s4 1983009808
        %v349 = vunpack.c.0.s8 %v348
        %v350 = vperm.slane %v342, %v349
        %v351 = vrot.slane %v281, 4
        %v352 = vsel %vm283, %v351, %v277
        %v353 = vrot.slane %v277, 4
        %v354 = vsel %vm283, %v281, %v353
        %v356 = vunpack.c.l.s4 1983009808
        %v357 = vunpack.c.0.s8 %v356
        %v358 = vperm.slane %v352, %v357
        %v360 = vunpack.c.l.s4 1983009808
        %v361 = vunpack.c.0.s8 %v360
        %v362 = vperm.slane %v354, %v361
        %v363 = vrot.slane %v358, 4
        %v364 = vsel %vm283, %v363, %v346
        %v365 = vrot.slane %v346, 4
        %v366 = vsel %vm283, %v358, %v365
        %v368 = vunpack.c.l.s4 1934713408
        %v369 = vunpack.c.0.s8 %v368
        %v370 = vperm.slane %v364, %v369
        %v372 = vunpack.c.l.s4 1934713408
        %v373 = vunpack.c.0.s8 %v372
        %v374 = vperm.slane %v366, %v373
        %v375 = vrot.slane %v362, 4
        %v376 = vsel %vm283, %v375, %v350
        %v377 = vrot.slane %v350, 4
        %v378 = vsel %vm283, %v362, %v377
        %v380 = vunpack.c.l.s4 1934713408
        %v381 = vunpack.c.0.s8 %v380
        %v382 = vperm.slane %v376, %v381
        %v384 = vunpack.c.l.s4 1934713408
        %v385 = vunpack.c.0.s8 %v384
        %v386 = vperm.slane %v378, %v385
        %v387 = vrot.slane %v370, 4
        %v388 = vsel %vm283, 0.0, %v387
        %v389 = vrot.slane %v374, 4
        %v390 = vsel %vm283, 0.0, %v389
        %v391 = vrot.slane %v382, 4
        %v392 = vsel %vm283, 0.0, %v391
        %v393 = vrot.slane %v386, 4
        %v394 = vsel %vm283, 0.0, %v393
        %396 = vrot.lane.b32.xlu0 %v332, 8
        %v397 = vpop.permute.xlu0 %396
        %400 = vrot.lane.b32.xlu0 %v318, 16
        %v401 = vpop.permute.xlu0 %400
        %404 = vrot.lane.b32.xlu0 %v334, 24
        %v405 = vpop.permute.xlu0 %404
        %408 = vrot.lane.b32.xlu0 %v326, 32
        %v409 = vpop.permute.xlu0 %408
        %412 = vrot.lane.b32.xlu0 %v336, 40
        %v413 = vpop.permute.xlu0 %412
        %416 = vrot.lane.b32.xlu0 %v330, 48
        %v417 = vpop.permute.xlu0 %416
        %420 = vrot.lane.b32.xlu0 %v338, 56
        %v421 = vpop.permute.xlu0 %420
        %424 = vrot.lane.b32.xlu0 %v370, 64
        %v425 = vpop.permute.xlu0 %424
        %428 = vrot.lane.b32.xlu0 %v388, 72
        %v429 = vpop.permute.xlu0 %428
        %432 = vrot.lane.b32.xlu0 %v374, 80
        %v433 = vpop.permute.xlu0 %432
        %436 = vrot.lane.b32.xlu0 %v390, 88
        %v437 = vpop.permute.xlu0 %436
        %440 = vrot.lane.b32.xlu0 %v382, 96
        %v441 = vpop.permute.xlu0 %440
        %444 = vrot.lane.b32.xlu0 %v392, 104
        %v445 = vpop.permute.xlu0 %444
        %448 = vrot.lane.b32.xlu0 %v386, 112
        %v449 = vpop.permute.xlu0 %448
        %452 = vrot.lane.b32.xlu0 %v394, 120
        %v453 = vpop.permute.xlu0 %452
        %vm455 = vcmask 64512
        %v456 = vsel %vm455, %v314, %v397
        %vm457 = vcmask 130048
        %v458 = vsel %vm457, %v456, %v401
        %vm459 = vcmask 195584
        %v460 = vsel %vm459, %v458, %v405
        %vm461 = vcmask 261120
        %v462 = vsel %vm461, %v460, %v409
        %vm463 = vcmask 326656
        %v464 = vsel %vm463, %v462, %v413
        %vm465 = vcmask 392192
        %v466 = vsel %vm465, %v464, %v417
        %vm467 = vcmask 457728
        %v468 = vsel %vm467, %v466, %v421
        %vm469 = vcmask 523264
        %v470 = vsel %vm469, %v468, %v425
        %vm471 = vcmask 588800
        %v472 = vsel %vm471, %v470, %v429
        %vm473 = vcmask 654336
        %v474 = vsel %vm473, %v472, %v433
        %vm475 = vcmask 719872
        %v476 = vsel %vm475, %v474, %v437
        %vm477 = vcmask 785408
        %v478 = vsel %vm477, %v476, %v441
        %vm479 = vcmask 850944
        %v480 = vsel %vm479, %v478, %v445
        %vm481 = vcmask 916480
        %v482 = vsel %vm481, %v480, %v449
        %vm483 = vcmask 982016
        %v484 = vsel %vm483, %v482, %v453
        %v485 = vld [vmem:[%s2] sm:$0xff]
        %s486 = scalar_lea.vmem %s2, 8
        %v487 = vld [vmem:[%s486] sm:$0xff]
        %v488 = vld [vmem:[%s1] sm:$0xff]
        %v489 = vld [vmem:[%s0] sm:$0xf]
        %490 = vxpose.xlu0.b32.start [1/16] %v484, 128
        %491 = vxpose.xlu0.b32.cont [2/16] 0.0, 128
        %492 = vxpose.xlu0.b32.cont [3/16] 0.0, 128
        %493 = vxpose.xlu0.b32.cont [4/16] 0.0, 128
        %494 = vxpose.xlu0.b32.cont [5/16] 0.0, 128
        %495 = vxpose.xlu0.b32.cont [6/16] 0.0, 128
        %496 = vxpose.xlu0.b32.cont [7/16] 0.0, 128
        %497 = vxpose.xlu0.b32.cont [8/16] 0.0, 128
        %498 = vxpose.xlu0.b32.cont [9/16] 0.0, 128
        %499 = vxpose.xlu0.b32.cont [10/16] 0.0, 128
        %500 = vxpose.xlu0.b32.cont [11/16] 0.0, 128
        %501 = vxpose.xlu0.b32.cont [12/16] 0.0, 128
        %502 = vxpose.xlu0.b32.cont [13/16] 0.0, 128
        %503 = vxpose.xlu0.b32.cont [14/16] 0.0, 128
        %504 = vxpose.xlu0.b32.cont [15/16] 0.0, 128
        %505 = vxpose.xlu0.b32.end [16/16] 0.0, 128
        %v506 = vpop.trf.xlu0
        %v507 = vpop.trf.xlu0
        %v508 = vpop.trf.xlu0
        %v509 = vpop.trf.xlu0
        %v510 = vpop.trf.xlu0
        %v511 = vpop.trf.xlu0
        %v512 = vpop.trf.xlu0
        %v513 = vpop.trf.xlu0
        %v514 = vpop.trf.xlu0
        %v515 = vpop.trf.xlu0
        %v516 = vpop.trf.xlu0
        %v517 = vpop.trf.xlu0
        %v518 = vpop.trf.xlu0
        %v519 = vpop.trf.xlu0
        %v520 = vpop.trf.xlu0
        %v521 = vpop.trf.xlu0
        %vm522 = vcmask 31744
        %v524 = vsel %vm522, %v506, 0
        %v527 = vsel %vm522, %v507, 0
        %v530 = vsel %vm522, %v508, 0
        %v533 = vsel %vm522, %v509, 0
        %v536 = vsel %vm522, %v510, 0
        %v539 = vsel %vm522, %v511, 0
        %v542 = vsel %vm522, %v512, 0
        %v545 = vsel %vm522, %v513, 0
        %v548 = vsel %vm522, %v514, 0
        %v551 = vsel %vm522, %v515, 0
        %v554 = vsel %vm522, %v516, 0
        %v557 = vsel %vm522, %v517, 0
        %v560 = vsel %vm522, %v518, 0
        %v563 = vsel %vm522, %v519, 0
        %v566 = vsel %vm522, %v520, 0
        %v569 = vsel %vm522, %v521, 0
        %vm571 = vcmask 1043456
        %v573 = vsel %vm571, %v489, 0
        %575 = vmatpush.msra.mxu0 0.0
        %576 = vmatpush.msra.mxu0 0.0
        %577 = vmatpush.msra.mxu0 0.0
        %578 = vmatpush.msra.mxu0 0.0
        %579 = vmatpush.msra.mxu0 0.0
        %580 = vmatpush.msra.mxu0 0.0
        %581 = vmatpush.msra.mxu0 0.0
        %582 = vmatpush.msra.mxu0 0.0
        %583 = vmatpush.msra.mxu0 0.0
        %584 = vmatpush.msra.mxu0 0.0
        %585 = vmatpush.msra.mxu0 0.0
        %586 = vmatpush.msra.mxu0 0.0
        %587 = vmatpush.msra.mxu0 0.0
        %588 = vmatpush.msra.mxu0 0.0
        %589 = vmatpush.msra.mxu0 0.0
        %590 = vmatpush.msra.mxu0 %v573
        %591 = vmatmul.f32.gmra.mxu0 %v524
        %v592 = vpop.f32.mrf.mxu0
        %v593 = vadd.f32 0.0, %v592
        %594 = vmatmul.f32.gmra.mxu0 %v527
        %v595 = vpop.f32.mrf.mxu0
        %v596 = vadd.f32 0.0, %v595
        %597 = vmatmul.f32.gmra.mxu0 %v530
        %v598 = vpop.f32.mrf.mxu0
        %v599 = vadd.f32 0.0, %v598
        %600 = vmatmul.f32.gmra.mxu0 %v533
        %v601 = vpop.f32.mrf.mxu0
        %v602 = vadd.f32 0.0, %v601
        %603 = vmatmul.f32.gmra.mxu0 %v536
        %v604 = vpop.f32.mrf.mxu0
        %v605 = vadd.f32 0.0, %v604
        %606 = vmatmul.f32.gmra.mxu0 %v539
        %v607 = vpop.f32.mrf.mxu0
        %v608 = vadd.f32 0.0, %v607
        %609 = vmatmul.f32.gmra.mxu0 %v542
        %v610 = vpop.f32.mrf.mxu0
        %v611 = vadd.f32 0.0, %v610
        %612 = vmatmul.f32.gmra.mxu0 %v545
        %v613 = vpop.f32.mrf.mxu0
        %v614 = vadd.f32 0.0, %v613
        %615 = vmatmul.f32.gmra.mxu0 %v548
        %v616 = vpop.f32.mrf.mxu0
        %v617 = vadd.f32 0.0, %v616
        %618 = vmatmul.f32.gmra.mxu0 %v551
        %v619 = vpop.f32.mrf.mxu0
        %v620 = vadd.f32 0.0, %v619
        %621 = vmatmul.f32.gmra.mxu0 %v554
        %v622 = vpop.f32.mrf.mxu0
        %v623 = vadd.f32 0.0, %v622
        %624 = vmatmul.f32.gmra.mxu0 %v557
        %v625 = vpop.f32.mrf.mxu0
        %v626 = vadd.f32 0.0, %v625
        %627 = vmatmul.f32.gmra.mxu0 %v560
        %v628 = vpop.f32.mrf.mxu0
        %v629 = vadd.f32 0.0, %v628
        %630 = vmatmul.f32.gmra.mxu0 %v563
        %v631 = vpop.f32.mrf.mxu0
        %v632 = vadd.f32 0.0, %v631
        %633 = vmatmul.f32.gmra.mxu0 %v566
        %v634 = vpop.f32.mrf.mxu0
        %v635 = vadd.f32 0.0, %v634
        %636 = vmatmul.f32.gmra.mxu0 %v569
        %v637 = vpop.f32.mrf.mxu0
        %v638 = vadd.f32 0.0, %v637
        %639 = vdwg.mxu0
        %s640 = scalar_lea.vmem %s0, 4
        %v641 = vld [vmem:[%s640] sm:$0xf]
        %v643 = vsel %vm571, %v641, 0
        %645 = vmatpush.msra.mxu0 0.0
        %646 = vmatpush.msra.mxu0 0.0
        %647 = vmatpush.msra.mxu0 0.0
        %648 = vmatpush.msra.mxu0 0.0
        %649 = vmatpush.msra.mxu0 0.0
        %650 = vmatpush.msra.mxu0 0.0
        %651 = vmatpush.msra.mxu0 0.0
        %652 = vmatpush.msra.mxu0 0.0
        %653 = vmatpush.msra.mxu0 0.0
        %654 = vmatpush.msra.mxu0 0.0
        %655 = vmatpush.msra.mxu0 0.0
        %656 = vmatpush.msra.mxu0 0.0
        %657 = vmatpush.msra.mxu0 0.0
        %658 = vmatpush.msra.mxu0 0.0
        %659 = vmatpush.msra.mxu0 0.0
        %660 = vmatpush.msra.mxu0 %v643
        %661 = vmatmul.f32.gmra.mxu0 %v524
        %v662 = vpop.f32.mrf.mxu0
        %v663 = vadd.f32 0.0, %v662
        %664 = vmatmul.f32.gmra.mxu0 %v527
        %v665 = vpop.f32.mrf.mxu0
        %v666 = vadd.f32 0.0, %v665
        %667 = vmatmul.f32.gmra.mxu0 %v530
        %v668 = vpop.f32.mrf.mxu0
        %v669 = vadd.f32 0.0, %v668
        %670 = vmatmul.f32.gmra.mxu0 %v533
        %v671 = vpop.f32.mrf.mxu0
        %v672 = vadd.f32 0.0, %v671
        %673 = vmatmul.f32.gmra.mxu0 %v536
        %v674 = vpop.f32.mrf.mxu0
        %v675 = vadd.f32 0.0, %v674
        %676 = vmatmul.f32.gmra.mxu0 %v539
        %v677 = vpop.f32.mrf.mxu0
        %v678 = vadd.f32 0.0, %v677
        %679 = vmatmul.f32.gmra.mxu0 %v542
        %v680 = vpop.f32.mrf.mxu0
        %v681 = vadd.f32 0.0, %v680
        %682 = vmatmul.f32.gmra.mxu0 %v545
        %v683 = vpop.f32.mrf.mxu0
        %v684 = vadd.f32 0.0, %v683
        %685 = vmatmul.f32.gmra.mxu0 %v548
        %v686 = vpop.f32.mrf.mxu0
        %v687 = vadd.f32 0.0, %v686
        %688 = vmatmul.f32.gmra.mxu0 %v551
        %v689 = vpop.f32.mrf.mxu0
        %v690 = vadd.f32 0.0, %v689
        %691 = vmatmul.f32.gmra.mxu0 %v554
        %v692 = vpop.f32.mrf.mxu0
        %v693 = vadd.f32 0.0, %v692
        %694 = vmatmul.f32.gmra.mxu0 %v557
        %v695 = vpop.f32.mrf.mxu0
        %v696 = vadd.f32 0.0, %v695
        %697 = vmatmul.f32.gmra.mxu0 %v560
        %v698 = vpop.f32.mrf.mxu0
        %v699 = vadd.f32 0.0, %v698
        %700 = vmatmul.f32.gmra.mxu0 %v563
        %v701 = vpop.f32.mrf.mxu0
        %v702 = vadd.f32 0.0, %v701
        %703 = vmatmul.f32.gmra.mxu0 %v566
        %v704 = vpop.f32.mrf.mxu0
        %v705 = vadd.f32 0.0, %v704
        %706 = vmatmul.f32.gmra.mxu0 %v569
        %v707 = vpop.f32.mrf.mxu0
        %v708 = vadd.f32 0.0, %v707
        %709 = vdwg.mxu0
        %710 = vxpose.xlu0.b32.start [1/16] %v663, 128
        %711 = vxpose.xlu0.b32.cont [2/16] 0.0, 128
        %712 = vxpose.xlu0.b32.cont [3/16] 0.0, 128
        %713 = vxpose.xlu0.b32.cont [4/16] 0.0, 128
        %714 = vxpose.xlu0.b32.cont [5/16] 0.0, 128
        %715 = vxpose.xlu0.b32.cont [6/16] 0.0, 128
        %716 = vxpose.xlu0.b32.cont [7/16] 0.0, 128
        %717 = vxpose.xlu0.b32.cont [8/16] 0.0, 128
        %718 = vxpose.xlu0.b32.cont [9/16] 0.0, 128
        %719 = vxpose.xlu0.b32.cont [10/16] 0.0, 128
        %720 = vxpose.xlu0.b32.cont [11/16] 0.0, 128
        %721 = vxpose.xlu0.b32.cont [12/16] 0.0, 128
        %722 = vxpose.xlu0.b32.cont [13/16] 0.0, 128
        %723 = vxpose.xlu0.b32.cont [14/16] 0.0, 128
        %724 = vxpose.xlu0.b32.cont [15/16] 0.0, 128
        %725 = vxpose.xlu0.b32.end [16/16] 0.0, 128
        %v726 = vpop.trf.xlu0
        %v727 = vpop.trf.xlu0
        %v728 = vpop.trf.xlu0
        %v729 = vpop.trf.xlu0
        %v730 = vpop.trf.xlu0
        %v731 = vpop.trf.xlu0
        %v732 = vpop.trf.xlu0
        %v733 = vpop.trf.xlu0
        %v734 = vpop.trf.xlu0
        %v735 = vpop.trf.xlu0
        %v736 = vpop.trf.xlu0
        %v737 = vpop.trf.xlu0
        %v738 = vpop.trf.xlu0
        %v739 = vpop.trf.xlu0
        %v740 = vpop.trf.xlu0
        %v741 = vpop.trf.xlu0
        %v743 = vsel %vm455, %v726, 0
        %745 = vmatpush.msra.mxu0 0.0
        %746 = vmatpush.msra.mxu0 0.0
        %747 = vmatpush.msra.mxu0 0.0
        %748 = vmatpush.msra.mxu0 0.0
        %749 = vmatpush.msra.mxu0 0.0
        %750 = vmatpush.msra.mxu0 0.0
        %751 = vmatpush.msra.mxu0 0.0
        %752 = vmatpush.msra.mxu0 0.0
        %753 = vmatpush.msra.mxu0 0.0
        %754 = vmatpush.msra.mxu0 0.0
        %755 = vmatpush.msra.mxu0 0.0
        %756 = vmatpush.msra.mxu0 0.0
        %757 = vmatpush.msra.mxu0 0.0
        %758 = vmatpush.msra.mxu0 0.0
        %759 = vmatpush.msra.mxu0 0.0
        %760 = vmatpush.msra.mxu0 %v487
        %761 = vmatmul.f32.gmra.mxu0 %v743
        %v762 = vpop.f32.mrf.mxu0
        %v763 = vadd.f32 0.0, %v762
        %764 = vdwg.mxu0
        %765 = vxpose.xlu0.b32.start [1/16] %v666, 128
        %766 = vxpose.xlu0.b32.cont [2/16] 0.0, 128
        %767 = vxpose.xlu0.b32.cont [3/16] 0.0, 128
        %768 = vxpose.xlu0.b32.cont [4/16] 0.0, 128
        %769 = vxpose.xlu0.b32.cont [5/16] 0.0, 128
        %770 = vxpose.xlu0.b32.cont [6/16] 0.0, 128
        %771 = vxpose.xlu0.b32.cont [7/16] 0.0, 128
        %772 = vxpose.xlu0.b32.cont [8/16] 0.0, 128
        %773 = vxpose.xlu0.b32.cont [9/16] 0.0, 128
        %774 = vxpose.xlu0.b32.cont [10/16] 0.0, 128
        %775 = vxpose.xlu0.b32.cont [11/16] 0.0, 128
        %776 = vxpose.xlu0.b32.cont [12/16] 0.0, 128
        %777 = vxpose.xlu0.b32.cont [13/16] 0.0, 128
        %778 = vxpose.xlu0.b32.cont [14/16] 0.0, 128
        %779 = vxpose.xlu0.b32.cont [15/16] 0.0, 128
        %780 = vxpose.xlu0.b32.end [16/16] 0.0, 128
        %v781 = vpop.trf.xlu0
        %v782 = vpop.trf.xlu0
        %v783 = vpop.trf.xlu0
        %v784 = vpop.trf.xlu0
        %v785 = vpop.trf.xlu0
        %v786 = vpop.trf.xlu0
        %v787 = vpop.trf.xlu0
        %v788 = vpop.trf.xlu0
        %v789 = vpop.trf.xlu0
        %v790 = vpop.trf.xlu0
        %v791 = vpop.trf.xlu0
        %v792 = vpop.trf.xlu0
        %v793 = vpop.trf.xlu0
        %v794 = vpop.trf.xlu0
        %v795 = vpop.trf.xlu0
        %v796 = vpop.trf.xlu0
        %v798 = vsel %vm455, %v781, 0
        %800 = vmatpush.msra.mxu0 0.0
        %801 = vmatpush.msra.mxu0 0.0
        %802 = vmatpush.msra.mxu0 0.0
        %803 = vmatpush.msra.mxu0 0.0
        %804 = vmatpush.msra.mxu0 0.0
        %805 = vmatpush.msra.mxu0 0.0
        %806 = vmatpush.msra.mxu0 0.0
        %807 = vmatpush.msra.mxu0 0.0
        %808 = vmatpush.msra.mxu0 0.0
        %809 = vmatpush.msra.mxu0 0.0
        %810 = vmatpush.msra.mxu0 0.0
        %811 = vmatpush.msra.mxu0 0.0
        %812 = vmatpush.msra.mxu0 0.0
        %813 = vmatpush.msra.mxu0 0.0
        %814 = vmatpush.msra.mxu0 0.0
        %815 = vmatpush.msra.mxu0 %v487
        %816 = vmatmul.f32.gmra.mxu0 %v798
        %v817 = vpop.f32.mrf.mxu0
        %v818 = vadd.f32 0.0, %v817
        %819 = vdwg.mxu0
        %820 = vxpose.xlu0.b32.start [1/16] %v669, 128
        %821 = vxpose.xlu0.b32.cont [2/16] 0.0, 128
        %822 = vxpose.xlu0.b32.cont [3/16] 0.0, 128
        %823 = vxpose.xlu0.b32.cont [4/16] 0.0, 128
        %824 = vxpose.xlu0.b32.cont [5/16] 0.0, 128
        %825 = vxpose.xlu0.b32.cont [6/16] 0.0, 128
        %826 = vxpose.xlu0.b32.cont [7/16] 0.0, 128
        %827 = vxpose.xlu0.b32.cont [8/16] 0.0, 128
        %828 = vxpose.xlu0.b32.cont [9/16] 0.0, 128
        %829 = vxpose.xlu0.b32.cont [10/16] 0.0, 128
        %830 = vxpose.xlu0.b32.cont [11/16] 0.0, 128
        %831 = vxpose.xlu0.b32.cont [12/16] 0.0, 128
        %832 = vxpose.xlu0.b32.cont [13/16] 0.0, 128
        %833 = vxpose.xlu0.b32.cont [14/16] 0.0, 128
        %834 = vxpose.xlu0.b32.cont [15/16] 0.0, 128
        %835 = vxpose.xlu0.b32.end [16/16] 0.0, 128
        %v836 = vpop.trf.xlu0
        %v837 = vpop.trf.xlu0
        %v838 = vpop.trf.xlu0
        %v839 = vpop.trf.xlu0
        %v840 = vpop.trf.xlu0
        %v841 = vpop.trf.xlu0
        %v842 = vpop.trf.xlu0
        %v843 = vpop.trf.xlu0
        %v844 = vpop.trf.xlu0
        %v845 = vpop.trf.xlu0
        %v846 = vpop.trf.xlu0
        %v847 = vpop.trf.xlu0
        %v848 = vpop.trf.xlu0
        %v849 = vpop.trf.xlu0
        %v850 = vpop.trf.xlu0
        %v851 = vpop.trf.xlu0
        %v853 = vsel %vm455, %v836, 0
        %855 = vmatpush.msra.mxu0 0.0
        %856 = vmatpush.msra.mxu0 0.0
        %857 = vmatpush.msra.mxu0 0.0
        %858 = vmatpush.msra.mxu0 0.0
        %859 = vmatpush.msra.mxu0 0.0
        %860 = vmatpush.msra.mxu0 0.0
        %861 = vmatpush.msra.mxu0 0.0
        %862 = vmatpush.msra.mxu0 0.0
        %863 = vmatpush.msra.mxu0 0.0
        %864 = vmatpush.msra.mxu0 0.0
        %865 = vmatpush.msra.mxu0 0.0
        %866 = vmatpush.msra.mxu0 0.0
        %867 = vmatpush.msra.mxu0 0.0
        %868 = vmatpush.msra.mxu0 0.0
        %869 = vmatpush.msra.mxu0 0.0
        %870 = vmatpush.msra.mxu0 %v487
        %871 = vmatmul.f32.gmra.mxu0 %v853
        %v872 = vpop.f32.mrf.mxu0
        %v873 = vadd.f32 0.0, %v872
        %874 = vdwg.mxu0
        %875 = vxpose.xlu0.b32.start [1/16] %v672, 128
        %876 = vxpose.xlu0.b32.cont [2/16] 0.0, 128
        %877 = vxpose.xlu0.b32.cont [3/16] 0.0, 128
        %878 = vxpose.xlu0.b32.cont [4/16] 0.0, 128
        %879 = vxpose.xlu0.b32.cont [5/16] 0.0, 128
        %880 = vxpose.xlu0.b32.cont [6/16] 0.0, 128
        %881 = vxpose.xlu0.b32.cont [7/16] 0.0, 128
        %882 = vxpose.xlu0.b32.cont [8/16] 0.0, 128
        %883 = vxpose.xlu0.b32.cont [9/16] 0.0, 128
        %884 = vxpose.xlu0.b32.cont [10/16] 0.0, 128
        %885 = vxpose.xlu0.b32.cont [11/16] 0.0, 128
        %886 = vxpose.xlu0.b32.cont [12/16] 0.0, 128
        %887 = vxpose.xlu0.b32.cont [13/16] 0.0, 128
        %888 = vxpose.xlu0.b32.cont [14/16] 0.0, 128
        %889 = vxpose.xlu0.b32.cont [15/16] 0.0, 128
        %890 = vxpose.xlu0.b32.end [16/16] 0.0, 128
        %v891 = vpop.trf.xlu0
        %v892 = vpop.trf.xlu0
        %v893 = vpop.trf.xlu0
        %v894 = vpop.trf.xlu0
        %v895 = vpop.trf.xlu0
        %v896 = vpop.trf.xlu0
        %v897 = vpop.trf.xlu0
        %v898 = vpop.trf.xlu0
        %v899 = vpop.trf.xlu0
        %v900 = vpop.trf.xlu0
        %v901 = vpop.trf.xlu0
        %v902 = vpop.trf.xlu0
        %v903 = vpop.trf.xlu0
        %v904 = vpop.trf.xlu0
        %v905 = vpop.trf.xlu0
        %v906 = vpop.trf.xlu0
        %v908 = vsel %vm455, %v891, 0
        %910 = vmatpush.msra.mxu0 0.0
        %911 = vmatpush.msra.mxu0 0.0
        %912 = vmatpush.msra.mxu0 0.0
        %913 = vmatpush.msra.mxu0 0.0
        %914 = vmatpush.msra.mxu0 0.0
        %915 = vmatpush.msra.mxu0 0.0
        %916 = vmatpush.msra.mxu0 0.0
        %917 = vmatpush.msra.mxu0 0.0
        %918 = vmatpush.msra.mxu0 0.0
        %919 = vmatpush.msra.mxu0 0.0
        %920 = vmatpush.msra.mxu0 0.0
        %921 = vmatpush.msra.mxu0 0.0
        %922 = vmatpush.msra.mxu0 0.0
        %923 = vmatpush.msra.mxu0 0.0
        %924 = vmatpush.msra.mxu0 0.0
        %925 = vmatpush.msra.mxu0 %v487
        %926 = vmatmul.f32.gmra.mxu0 %v908
        %v927 = vpop.f32.mrf.mxu0
        %v928 = vadd.f32 0.0, %v927
        %929 = vdwg.mxu0
        %930 = vxpose.xlu0.b32.start [1/16] %v675, 128
        %931 = vxpose.xlu0.b32.cont [2/16] 0.0, 128
        %932 = vxpose.xlu0.b32.cont [3/16] 0.0, 128
        %933 = vxpose.xlu0.b32.cont [4/16] 0.0, 128
        %934 = vxpose.xlu0.b32.cont [5/16] 0.0, 128
        %935 = vxpose.xlu0.b32.cont [6/16] 0.0, 128
        %936 = vxpose.xlu0.b32.cont [7/16] 0.0, 128
        %937 = vxpose.xlu0.b32.cont [8/16] 0.0, 128
        %938 = vxpose.xlu0.b32.cont [9/16] 0.0, 128
        %939 = vxpose.xlu0.b32.cont [10/16] 0.0, 128
        %940 = vxpose.xlu0.b32.cont [11/16] 0.0, 128
        %941 = vxpose.xlu0.b32.cont [12/16] 0.0, 128
        %942 = vxpose.xlu0.b32.cont [13/16] 0.0, 128
        %943 = vxpose.xlu0.b32.cont [14/16] 0.0, 128
        %944 = vxpose.xlu0.b32.cont [15/16] 0.0, 128
        %945 = vxpose.xlu0.b32.end [16/16] 0.0, 128
        %v946 = vpop.trf.xlu0
        %v947 = vpop.trf.xlu0
        %v948 = vpop.trf.xlu0
        %v949 = vpop.trf.xlu0
        %v950 = vpop.trf.xlu0
        %v951 = vpop.trf.xlu0
        %v952 = vpop.trf.xlu0
        %v953 = vpop.trf.xlu0
        %v954 = vpop.trf.xlu0
        %v955 = vpop.trf.xlu0
        %v956 = vpop.trf.xlu0
        %v957 = vpop.trf.xlu0
        %v958 = vpop.trf.xlu0
        %v959 = vpop.trf.xlu0
        %v960 = vpop.trf.xlu0
        %v961 = vpop.trf.xlu0
        %v963 = vsel %vm455, %v946, 0
        %965 = vmatpush.msra.mxu0 0.0
        %966 = vmatpush.msra.mxu0 0.0
        %967 = vmatpush.msra.mxu0 0.0
        %968 = vmatpush.msra.mxu0 0.0
        %969 = vmatpush.msra.mxu0 0.0
        %970 = vmatpush.msra.mxu0 0.0
        %971 = vmatpush.msra.mxu0 0.0
        %972 = vmatpush.msra.mxu0 0.0
        %973 = vmatpush.msra.mxu0 0.0
        %974 = vmatpush.msra.mxu0 0.0
        %975 = vmatpush.msra.mxu0 0.0
        %976 = vmatpush.msra.mxu0 0.0
        %977 = vmatpush.msra.mxu0 0.0
        %978 = vmatpush.msra.mxu0 0.0
        %979 = vmatpush.msra.mxu0 0.0
        %980 = vmatpush.msra.mxu0 %v487
        %981 = vmatmul.f32.gmra.mxu0 %v963
        %v982 = vpop.f32.mrf.mxu0
        %v983 = vadd.f32 0.0, %v982
        %984 = vdwg.mxu0
        %985 = vxpose.xlu0.b32.start [1/16] %v678, 128
        %986 = vxpose.xlu0.b32.cont [2/16] 0.0, 128
        %987 = vxpose.xlu0.b32.cont [3/16] 0.0, 128
        %988 = vxpose.xlu0.b32.cont [4/16] 0.0, 128
        %989 = vxpose.xlu0.b32.cont [5/16] 0.0, 128
        %990 = vxpose.xlu0.b32.cont [6/16] 0.0, 128
        %991 = vxpose.xlu0.b32.cont [7/16] 0.0, 128
        %992 = vxpose.xlu0.b32.cont [8/16] 0.0, 128
        %993 = vxpose.xlu0.b32.cont [9/16] 0.0, 128
        %994 = vxpose.xlu0.b32.cont [10/16] 0.0, 128
        %995 = vxpose.xlu0.b32.cont [11/16] 0.0, 128
        %996 = vxpose.xlu0.b32.cont [12/16] 0.0, 128
        %997 = vxpose.xlu0.b32.cont [13/16] 0.0, 128
        %998 = vxpose.xlu0.b32.cont [14/16] 0.0, 128
        %999 = vxpose.xlu0.b32.cont [15/16] 0.0, 128
        %1000 = vxpose.xlu0.b32.end [16/16] 0.0, 128
        %v1001 = vpop.trf.xlu0
        %v1002 = vpop.trf.xlu0
        %v1003 = vpop.trf.xlu0
        %v1004 = vpop.trf.xlu0
        %v1005 = vpop.trf.xlu0
        %v1006 = vpop.trf.xlu0
        %v1007 = vpop.trf.xlu0
        %v1008 = vpop.trf.xlu0
        %v1009 = vpop.trf.xlu0
        %v1010 = vpop.trf.xlu0
        %v1011 = vpop.trf.xlu0
        %v1012 = vpop.trf.xlu0
        %v1013 = vpop.trf.xlu0
        %v1014 = vpop.trf.xlu0
        %v1015 = vpop.trf.xlu0
        %v1016 = vpop.trf.xlu0
        %v1018 = vsel %vm455, %v1001, 0
        %1020 = vmatpush.msra.mxu0 0.0
        %1021 = vmatpush.msra.mxu0 0.0
        %1022 = vmatpush.msra.mxu0 0.0
        %1023 = vmatpush.msra.mxu0 0.0
        %1024 = vmatpush.msra.mxu0 0.0
        %1025 = vmatpush.msra.mxu0 0.0
        %1026 = vmatpush.msra.mxu0 0.0
        %1027 = vmatpush.msra.mxu0 0.0
        %1028 = vmatpush.msra.mxu0 0.0
        %1029 = vmatpush.msra.mxu0 0.0
        %1030 = vmatpush.msra.mxu0 0.0
        %1031 = vmatpush.msra.mxu0 0.0
        %1032 = vmatpush.msra.mxu0 0.0
        %1033 = vmatpush.msra.mxu0 0.0
        %1034 = vmatpush.msra.mxu0 0.0
        %1035 = vmatpush.msra.mxu0 %v487
        %1036 = vmatmul.f32.gmra.mxu0 %v1018
        %v1037 = vpop.f32.mrf.mxu0
        %v1038 = vadd.f32 0.0, %v1037
        %1039 = vdwg.mxu0
        %1040 = vxpose.xlu0.b32.start [1/16] %v681, 128
        %1041 = vxpose.xlu0.b32.cont [2/16] 0.0, 128
        %1042 = vxpose.xlu0.b32.cont [3/16] 0.0, 128
        %1043 = vxpose.xlu0.b32.cont [4/16] 0.0, 128
        %1044 = vxpose.xlu0.b32.cont [5/16] 0.0, 128
        %1045 = vxpose.xlu0.b32.cont [6/16] 0.0, 128
        %1046 = vxpose.xlu0.b32.cont [7/16] 0.0, 128
        %1047 = vxpose.xlu0.b32.cont [8/16] 0.0, 128
        %1048 = vxpose.xlu0.b32.cont [9/16] 0.0, 128
        %1049 = vxpose.xlu0.b32.cont [10/16] 0.0, 128
        %1050 = vxpose.xlu0.b32.cont [11/16] 0.0, 128
        %1051 = vxpose.xlu0.b32.cont [12/16] 0.0, 128
        %1052 = vxpose.xlu0.b32.cont [13/16] 0.0, 128
        %1053 = vxpose.xlu0.b32.cont [14/16] 0.0, 128
        %1054 = vxpose.xlu0.b32.cont [15/16] 0.0, 128
        %1055 = vxpose.xlu0.b32.end [16/16] 0.0, 128
        %v1056 = vpop.trf.xlu0
        %v1057 = vpop.trf.xlu0
        %v1058 = vpop.trf.xlu0
        %v1059 = vpop.trf.xlu0
        %v1060 = vpop.trf.xlu0
        %v1061 = vpop.trf.xlu0
        %v1062 = vpop.trf.xlu0
        %v1063 = vpop.trf.xlu0
        %v1064 = vpop.trf.xlu0
        %v1065 = vpop.trf.xlu0
        %v1066 = vpop.trf.xlu0
        %v1067 = vpop.trf.xlu0
        %v1068 = vpop.trf.xlu0
        %v1069 = vpop.trf.xlu0
        %v1070 = vpop.trf.xlu0
        %v1071 = vpop.trf.xlu0
        %v1073 = vsel %vm455, %v1056, 0
        %1075 = vmatpush.msra.mxu0 0.0
        %1076 = vmatpush.msra.mxu0 0.0
        %1077 = vmatpush.msra.mxu0 0.0
        %1078 = vmatpush.msra.mxu0 0.0
        %1079 = vmatpush.msra.mxu0 0.0
        %1080 = vmatpush.msra.mxu0 0.0
        %1081 = vmatpush.msra.mxu0 0.0
        %1082 = vmatpush.msra.mxu0 0.0
        %1083 = vmatpush.msra.mxu0 0.0
        %1084 = vmatpush.msra.mxu0 0.0
        %1085 = vmatpush.msra.mxu0 0.0
        %1086 = vmatpush.msra.mxu0 0.0
        %1087 = vmatpush.msra.mxu0 0.0
        %1088 = vmatpush.msra.mxu0 0.0
        %1089 = vmatpush.msra.mxu0 0.0
        %1090 = vmatpush.msra.mxu0 %v487
        %1091 = vmatmul.f32.gmra.mxu0 %v1073
        %v1092 = vpop.f32.mrf.mxu0
        %v1093 = vadd.f32 0.0, %v1092
        %1094 = vdwg.mxu0
        %1095 = vxpose.xlu0.b32.start [1/16] %v684, 128
        %1096 = vxpose.xlu0.b32.cont [2/16] 0.0, 128
        %1097 = vxpose.xlu0.b32.cont [3/16] 0.0, 128
        %1098 = vxpose.xlu0.b32.cont [4/16] 0.0, 128
        %1099 = vxpose.xlu0.b32.cont [5/16] 0.0, 128
        %1100 = vxpose.xlu0.b32.cont [6/16] 0.0, 128
        %1101 = vxpose.xlu0.b32.cont [7/16] 0.0, 128
        %1102 = vxpose.xlu0.b32.cont [8/16] 0.0, 128
        %1103 = vxpose.xlu0.b32.cont [9/16] 0.0, 128
        %1104 = vxpose.xlu0.b32.cont [10/16] 0.0, 128
        %1105 = vxpose.xlu0.b32.cont [11/16] 0.0, 128
        %1106 = vxpose.xlu0.b32.cont [12/16] 0.0, 128
        %1107 = vxpose.xlu0.b32.cont [13/16] 0.0, 128
        %1108 = vxpose.xlu0.b32.cont [14/16] 0.0, 128
        %1109 = vxpose.xlu0.b32.cont [15/16] 0.0, 128
        %1110 = vxpose.xlu0.b32.end [16/16] 0.0, 128
        %v1111 = vpop.trf.xlu0
        %v1112 = vpop.trf.xlu0
        %v1113 = vpop.trf.xlu0
        %v1114 = vpop.trf.xlu0
        %v1115 = vpop.trf.xlu0
        %v1116 = vpop.trf.xlu0
        %v1117 = vpop.trf.xlu0
        %v1118 = vpop.trf.xlu0
        %v1119 = vpop.trf.xlu0
        %v1120 = vpop.trf.xlu0
        %v1121 = vpop.trf.xlu0
        %v1122 = vpop.trf.xlu0
        %v1123 = vpop.trf.xlu0
        %v1124 = vpop.trf.xlu0
        %v1125 = vpop.trf.xlu0
        %v1126 = vpop.trf.xlu0
        %v1128 = vsel %vm455, %v1111, 0
        %1130 = vmatpush.msra.mxu0 0.0
        %1131 = vmatpush.msra.mxu0 0.0
        %1132 = vmatpush.msra.mxu0 0.0
        %1133 = vmatpush.msra.mxu0 0.0
        %1134 = vmatpush.msra.mxu0 0.0
        %1135 = vmatpush.msra.mxu0 0.0
        %1136 = vmatpush.msra.mxu0 0.0
        %1137 = vmatpush.msra.mxu0 0.0
        %1138 = vmatpush.msra.mxu0 0.0
        %1139 = vmatpush.msra.mxu0 0.0
        %1140 = vmatpush.msra.mxu0 0.0
        %1141 = vmatpush.msra.mxu0 0.0
        %1142 = vmatpush.msra.mxu0 0.0
        %1143 = vmatpush.msra.mxu0 0.0
        %1144 = vmatpush.msra.mxu0 0.0
        %1145 = vmatpush.msra.mxu0 %v487
        %1146 = vmatmul.f32.gmra.mxu0 %v1128
        %v1147 = vpop.f32.mrf.mxu0
        %v1148 = vadd.f32 0.0, %v1147
        %1149 = vdwg.mxu0
        %1150 = vxpose.xlu0.b32.start [1/16] %v687, 128
        %1151 = vxpose.xlu0.b32.cont [2/16] 0.0, 128
        %1152 = vxpose.xlu0.b32.cont [3/16] 0.0, 128
        %1153 = vxpose.xlu0.b32.cont [4/16] 0.0, 128
        %1154 = vxpose.xlu0.b32.cont [5/16] 0.0, 128
        %1155 = vxpose.xlu0.b32.cont [6/16] 0.0, 128
        %1156 = vxpose.xlu0.b32.cont [7/16] 0.0, 128
        %1157 = vxpose.xlu0.b32.cont [8/16] 0.0, 128
        %1158 = vxpose.xlu0.b32.cont [9/16] 0.0, 128
        %1159 = vxpose.xlu0.b32.cont [10/16] 0.0, 128
        %1160 = vxpose.xlu0.b32.cont [11/16] 0.0, 128
        %1161 = vxpose.xlu0.b32.cont [12/16] 0.0, 128
        %1162 = vxpose.xlu0.b32.cont [13/16] 0.0, 128
        %1163 = vxpose.xlu0.b32.cont [14/16] 0.0, 128
        %1164 = vxpose.xlu0.b32.cont [15/16] 0.0, 128
        %1165 = vxpose.xlu0.b32.end [16/16] 0.0, 128
        %v1166 = vpop.trf.xlu0
        %v1167 = vpop.trf.xlu0
        %v1168 = vpop.trf.xlu0
        %v1169 = vpop.trf.xlu0
        %v1170 = vpop.trf.xlu0
        %v1171 = vpop.trf.xlu0
        %v1172 = vpop.trf.xlu0
        %v1173 = vpop.trf.xlu0
        %v1174 = vpop.trf.xlu0
        %v1175 = vpop.trf.xlu0
        %v1176 = vpop.trf.xlu0
        %v1177 = vpop.trf.xlu0
        %v1178 = vpop.trf.xlu0
        %v1179 = vpop.trf.xlu0
        %v1180 = vpop.trf.xlu0
        %v1181 = vpop.trf.xlu0
        %v1183 = vsel %vm455, %v1166, 0
        %1185 = vmatpush.msra.mxu0 0.0
        %1186 = vmatpush.msra.mxu0 0.0
        %1187 = vmatpush.msra.mxu0 0.0
        %1188 = vmatpush.msra.mxu0 0.0
        %1189 = vmatpush.msra.mxu0 0.0
        %1190 = vmatpush.msra.mxu0 0.0
        %1191 = vmatpush.msra.mxu0 0.0
        %1192 = vmatpush.msra.mxu0 0.0
        %1193 = vmatpush.msra.mxu0 0.0
        %1194 = vmatpush.msra.mxu0 0.0
        %1195 = vmatpush.msra.mxu0 0.0
        %1196 = vmatpush.msra.mxu0 0.0
        %1197 = vmatpush.msra.mxu0 0.0
        %1198 = vmatpush.msra.mxu0 0.0
        %1199 = vmatpush.msra.mxu0 0.0
        %1200 = vmatpush.msra.mxu0 %v487
        %1201 = vmatmul.f32.gmra.mxu0 %v1183
        %v1202 = vpop.f32.mrf.mxu0
        %v1203 = vadd.f32 0.0, %v1202
        %1204 = vdwg.mxu0
        %1205 = vxpose.xlu0.b32.start [1/16] %v690, 128
        %1206 = vxpose.xlu0.b32.cont [2/16] 0.0, 128
        %1207 = vxpose.xlu0.b32.cont [3/16] 0.0, 128
        %1208 = vxpose.xlu0.b32.cont [4/16] 0.0, 128
        %1209 = vxpose.xlu0.b32.cont [5/16] 0.0, 128
        %1210 = vxpose.xlu0.b32.cont [6/16] 0.0, 128
        %1211 = vxpose.xlu0.b32.cont [7/16] 0.0, 128
        %1212 = vxpose.xlu0.b32.cont [8/16] 0.0, 128
        %1213 = vxpose.xlu0.b32.cont [9/16] 0.0, 128
        %1214 = vxpose.xlu0.b32.cont [10/16] 0.0, 128
        %1215 = vxpose.xlu0.b32.cont [11/16] 0.0, 128
        %1216 = vxpose.xlu0.b32.cont [12/16] 0.0, 128
        %1217 = vxpose.xlu0.b32.cont [13/16] 0.0, 128
        %1218 = vxpose.xlu0.b32.cont [14/16] 0.0, 128
        %1219 = vxpose.xlu0.b32.cont [15/16] 0.0, 128
        %1220 = vxpose.xlu0.b32.end [16/16] 0.0, 128
        %v1221 = vpop.trf.xlu0
        %v1222 = vpop.trf.xlu0
        %v1223 = vpop.trf.xlu0
        %v1224 = vpop.trf.xlu0
        %v1225 = vpop.trf.xlu0
        %v1226 = vpop.trf.xlu0
        %v1227 = vpop.trf.xlu0
        %v1228 = vpop.trf.xlu0
        %v1229 = vpop.trf.xlu0
        %v1230 = vpop.trf.xlu0
        %v1231 = vpop.trf.xlu0
        %v1232 = vpop.trf.xlu0
        %v1233 = vpop.trf.xlu0
        %v1234 = vpop.trf.xlu0
        %v1235 = vpop.trf.xlu0
        %v1236 = vpop.trf.xlu0
        %v1238 = vsel %vm455, %v1221, 0
        %1240 = vmatpush.msra.mxu0 0.0
        %1241 = vmatpush.msra.mxu0 0.0
        %1242 = vmatpush.msra.mxu0 0.0
        %1243 = vmatpush.msra.mxu0 0.0
        %1244 = vmatpush.msra.mxu0 0.0
        %1245 = vmatpush.msra.mxu0 0.0
        %1246 = vmatpush.msra.mxu0 0.0
        %1247 = vmatpush.msra.mxu0 0.0
        %1248 = vmatpush.msra.mxu0 0.0
        %1249 = vmatpush.msra.mxu0 0.0
        %1250 = vmatpush.msra.mxu0 0.0
        %1251 = vmatpush.msra.mxu0 0.0
        %1252 = vmatpush.msra.mxu0 0.0
        %1253 = vmatpush.msra.mxu0 0.0
        %1254 = vmatpush.msra.mxu0 0.0
        %1255 = vmatpush.msra.mxu0 %v487
        %1256 = vmatmul.f32.gmra.mxu0 %v1238
        %v1257 = vpop.f32.mrf.mxu0
        %v1258 = vadd.f32 0.0, %v1257
        %1259 = vdwg.mxu0
        %1260 = vxpose.xlu0.b32.start [1/16] %v693, 128
        %1261 = vxpose.xlu0.b32.cont [2/16] 0.0, 128
        %1262 = vxpose.xlu0.b32.cont [3/16] 0.0, 128
        %1263 = vxpose.xlu0.b32.cont [4/16] 0.0, 128
        %1264 = vxpose.xlu0.b32.cont [5/16] 0.0, 128
        %1265 = vxpose.xlu0.b32.cont [6/16] 0.0, 128
        %1266 = vxpose.xlu0.b32.cont [7/16] 0.0, 128
        %1267 = vxpose.xlu0.b32.cont [8/16] 0.0, 128
        %1268 = vxpose.xlu0.b32.cont [9/16] 0.0, 128
        %1269 = vxpose.xlu0.b32.cont [10/16] 0.0, 128
        %1270 = vxpose.xlu0.b32.cont [11/16] 0.0, 128
        %1271 = vxpose.xlu0.b32.cont [12/16] 0.0, 128
        %1272 = vxpose.xlu0.b32.cont [13/16] 0.0, 128
        %1273 = vxpose.xlu0.b32.cont [14/16] 0.0, 128
        %1274 = vxpose.xlu0.b32.cont [15/16] 0.0, 128
        %1275 = vxpose.xlu0.b32.end [16/16] 0.0, 128
        %v1276 = vpop.trf.xlu0
        %v1277 = vpop.trf.xlu0
        %v1278 = vpop.trf.xlu0
        %v1279 = vpop.trf.xlu0
        %v1280 = vpop.trf.xlu0
        %v1281 = vpop.trf.xlu0
        %v1282 = vpop.trf.xlu0
        %v1283 = vpop.trf.xlu0
        %v1284 = vpop.trf.xlu0
        %v1285 = vpop.trf.xlu0
        %v1286 = vpop.trf.xlu0
        %v1287 = vpop.trf.xlu0
        %v1288 = vpop.trf.xlu0
        %v1289 = vpop.trf.xlu0
        %v1290 = vpop.trf.xlu0
        %v1291 = vpop.trf.xlu0
        %v1293 = vsel %vm455, %v1276, 0
        %1295 = vmatpush.msra.mxu0 0.0
        %1296 = vmatpush.msra.mxu0 0.0
        %1297 = vmatpush.msra.mxu0 0.0
        %1298 = vmatpush.msra.mxu0 0.0
        %1299 = vmatpush.msra.mxu0 0.0
        %1300 = vmatpush.msra.mxu0 0.0
        %1301 = vmatpush.msra.mxu0 0.0
        %1302 = vmatpush.msra.mxu0 0.0
        %1303 = vmatpush.msra.mxu0 0.0
        %1304 = vmatpush.msra.mxu0 0.0
        %1305 = vmatpush.msra.mxu0 0.0
        %1306 = vmatpush.msra.mxu0 0.0
        %1307 = vmatpush.msra.mxu0 0.0
        %1308 = vmatpush.msra.mxu0 0.0
        %1309 = vmatpush.msra.mxu0 0.0
        %1310 = vmatpush.msra.mxu0 %v487
        %1311 = vmatmul.f32.gmra.mxu0 %v1293
        %v1312 = vpop.f32.mrf.mxu0
        %v1313 = vadd.f32 0.0, %v1312
        %1314 = vdwg.mxu0
        %1315 = vxpose.xlu0.b32.start [1/16] %v696, 128
        %1316 = vxpose.xlu0.b32.cont [2/16] 0.0, 128
        %1317 = vxpose.xlu0.b32.cont [3/16] 0.0, 128
        %1318 = vxpose.xlu0.b32.cont [4/16] 0.0, 128
        %1319 = vxpose.xlu0.b32.cont [5/16] 0.0, 128
        %1320 = vxpose.xlu0.b32.cont [6/16] 0.0, 128
        %1321 = vxpose.xlu0.b32.cont [7/16] 0.0, 128
        %1322 = vxpose.xlu0.b32.cont [8/16] 0.0, 128
        %1323 = vxpose.xlu0.b32.cont [9/16] 0.0, 128
        %1324 = vxpose.xlu0.b32.cont [10/16] 0.0, 128
        %1325 = vxpose.xlu0.b32.cont [11/16] 0.0, 128
        %1326 = vxpose.xlu0.b32.cont [12/16] 0.0, 128
        %1327 = vxpose.xlu0.b32.cont [13/16] 0.0, 128
        %1328 = vxpose.xlu0.b32.cont [14/16] 0.0, 128
        %1329 = vxpose.xlu0.b32.cont [15/16] 0.0, 128
        %1330 = vxpose.xlu0.b32.end [16/16] 0.0, 128
        %v1331 = vpop.trf.xlu0
        %v1332 = vpop.trf.xlu0
        %v1333 = vpop.trf.xlu0
        %v1334 = vpop.trf.xlu0
        %v1335 = vpop.trf.xlu0
        %v1336 = vpop.trf.xlu0
        %v1337 = vpop.trf.xlu0
        %v1338 = vpop.trf.xlu0
        %v1339 = vpop.trf.xlu0
        %v1340 = vpop.trf.xlu0
        %v1341 = vpop.trf.xlu0
        %v1342 = vpop.trf.xlu0
        %v1343 = vpop.trf.xlu0
        %v1344 = vpop.trf.xlu0
        %v1345 = vpop.trf.xlu0
        %v1346 = vpop.trf.xlu0
        %v1348 = vsel %vm455, %v1331, 0
        %1350 = vmatpush.msra.mxu0 0.0
        %1351 = vmatpush.msra.mxu0 0.0
        %1352 = vmatpush.msra.mxu0 0.0
        %1353 = vmatpush.msra.mxu0 0.0
        %1354 = vmatpush.msra.mxu0 0.0
        %1355 = vmatpush.msra.mxu0 0.0
        %1356 = vmatpush.msra.mxu0 0.0
        %1357 = vmatpush.msra.mxu0 0.0
        %1358 = vmatpush.msra.mxu0 0.0
        %1359 = vmatpush.msra.mxu0 0.0
        %1360 = vmatpush.msra.mxu0 0.0
        %1361 = vmatpush.msra.mxu0 0.0
        %1362 = vmatpush.msra.mxu0 0.0
        %1363 = vmatpush.msra.mxu0 0.0
        %1364 = vmatpush.msra.mxu0 0.0
        %1365 = vmatpush.msra.mxu0 %v487
        %1366 = vmatmul.f32.gmra.mxu0 %v1348
        %v1367 = vpop.f32.mrf.mxu0
        %v1368 = vadd.f32 0.0, %v1367
        %1369 = vdwg.mxu0
        %1370 = vxpose.xlu0.b32.start [1/16] %v699, 128
        %1371 = vxpose.xlu0.b32.cont [2/16] 0.0, 128
        %1372 = vxpose.xlu0.b32.cont [3/16] 0.0, 128
        %1373 = vxpose.xlu0.b32.cont [4/16] 0.0, 128
        %1374 = vxpose.xlu0.b32.cont [5/16] 0.0, 128
        %1375 = vxpose.xlu0.b32.cont [6/16] 0.0, 128
        %1376 = vxpose.xlu0.b32.cont [7/16] 0.0, 128
        %1377 = vxpose.xlu0.b32.cont [8/16] 0.0, 128
        %1378 = vxpose.xlu0.b32.cont [9/16] 0.0, 128
        %1379 = vxpose.xlu0.b32.cont [10/16] 0.0, 128
        %1380 = vxpose.xlu0.b32.cont [11/16] 0.0, 128
        %1381 = vxpose.xlu0.b32.cont [12/16] 0.0, 128
        %1382 = vxpose.xlu0.b32.cont [13/16] 0.0, 128
        %1383 = vxpose.xlu0.b32.cont [14/16] 0.0, 128
        %1384 = vxpose.xlu0.b32.cont [15/16] 0.0, 128
        %1385 = vxpose.xlu0.b32.end [16/16] 0.0, 128
        %v1386 = vpop.trf.xlu0
        %v1387 = vpop.trf.xlu0
        %v1388 = vpop.trf.xlu0
        %v1389 = vpop.trf.xlu0
        %v1390 = vpop.trf.xlu0
        %v1391 = vpop.trf.xlu0
        %v1392 = vpop.trf.xlu0
        %v1393 = vpop.trf.xlu0
        %v1394 = vpop.trf.xlu0
        %v1395 = vpop.trf.xlu0
        %v1396 = vpop.trf.xlu0
        %v1397 = vpop.trf.xlu0
        %v1398 = vpop.trf.xlu0
        %v1399 = vpop.trf.xlu0
        %v1400 = vpop.trf.xlu0
        %v1401 = vpop.trf.xlu0
        %v1403 = vsel %vm455, %v1386, 0
        %1405 = vmatpush.msra.mxu0 0.0
        %1406 = vmatpush.msra.mxu0 0.0
        %1407 = vmatpush.msra.mxu0 0.0
        %1408 = vmatpush.msra.mxu0 0.0
        %1409 = vmatpush.msra.mxu0 0.0
        %1410 = vmatpush.msra.mxu0 0.0
        %1411 = vmatpush.msra.mxu0 0.0
        %1412 = vmatpush.msra.mxu0 0.0
        %1413 = vmatpush.msra.mxu0 0.0
        %1414 = vmatpush.msra.mxu0 0.0
        %1415 = vmatpush.msra.mxu0 0.0
        %1416 = vmatpush.msra.mxu0 0.0
        %1417 = vmatpush.msra.mxu0 0.0
        %1418 = vmatpush.msra.mxu0 0.0
        %1419 = vmatpush.msra.mxu0 0.0
        %1420 = vmatpush.msra.mxu0 %v487
        %1421 = vmatmul.f32.gmra.mxu0 %v1403
        %v1422 = vpop.f32.mrf.mxu0
        %v1423 = vadd.f32 0.0, %v1422
        %1424 = vdwg.mxu0
        %1425 = vxpose.xlu0.b32.start [1/16] %v702, 128
        %1426 = vxpose.xlu0.b32.cont [2/16] 0.0, 128
        %1427 = vxpose.xlu0.b32.cont [3/16] 0.0, 128
        %1428 = vxpose.xlu0.b32.cont [4/16] 0.0, 128
        %1429 = vxpose.xlu0.b32.cont [5/16] 0.0, 128
        %1430 = vxpose.xlu0.b32.cont [6/16] 0.0, 128
        %1431 = vxpose.xlu0.b32.cont [7/16] 0.0, 128
        %1432 = vxpose.xlu0.b32.cont [8/16] 0.0, 128
        %1433 = vxpose.xlu0.b32.cont [9/16] 0.0, 128
        %1434 = vxpose.xlu0.b32.cont [10/16] 0.0, 128
        %1435 = vxpose.xlu0.b32.cont [11/16] 0.0, 128
        %1436 = vxpose.xlu0.b32.cont [12/16] 0.0, 128
        %1437 = vxpose.xlu0.b32.cont [13/16] 0.0, 128
        %1438 = vxpose.xlu0.b32.cont [14/16] 0.0, 128
        %1439 = vxpose.xlu0.b32.cont [15/16] 0.0, 128
        %1440 = vxpose.xlu0.b32.end [16/16] 0.0, 128
        %v1441 = vpop.trf.xlu0
        %v1442 = vpop.trf.xlu0
        %v1443 = vpop.trf.xlu0
        %v1444 = vpop.trf.xlu0
        %v1445 = vpop.trf.xlu0
        %v1446 = vpop.trf.xlu0
        %v1447 = vpop.trf.xlu0
        %v1448 = vpop.trf.xlu0
        %v1449 = vpop.trf.xlu0
        %v1450 = vpop.trf.xlu0
        %v1451 = vpop.trf.xlu0
        %v1452 = vpop.trf.xlu0
        %v1453 = vpop.trf.xlu0
        %v1454 = vpop.trf.xlu0
        %v1455 = vpop.trf.xlu0
        %v1456 = vpop.trf.xlu0
        %v1458 = vsel %vm455, %v1441, 0
        %1460 = vmatpush.msra.mxu0 0.0
        %1461 = vmatpush.msra.mxu0 0.0
        %1462 = vmatpush.msra.mxu0 0.0
        %1463 = vmatpush.msra.mxu0 0.0
        %1464 = vmatpush.msra.mxu0 0.0
        %1465 = vmatpush.msra.mxu0 0.0
        %1466 = vmatpush.msra.mxu0 0.0
        %1467 = vmatpush.msra.mxu0 0.0
        %1468 = vmatpush.msra.mxu0 0.0
        %1469 = vmatpush.msra.mxu0 0.0
        %1470 = vmatpush.msra.mxu0 0.0
        %1471 = vmatpush.msra.mxu0 0.0
        %1472 = vmatpush.msra.mxu0 0.0
        %1473 = vmatpush.msra.mxu0 0.0
        %1474 = vmatpush.msra.mxu0 0.0
        %1475 = vmatpush.msra.mxu0 %v487
        %1476 = vmatmul.f32.gmra.mxu0 %v1458
        %v1477 = vpop.f32.mrf.mxu0
        %v1478 = vadd.f32 0.0, %v1477
        %1479 = vdwg.mxu0
        %1480 = vxpose.xlu0.b32.start [1/16] %v705, 128
        %1481 = vxpose.xlu0.b32.cont [2/16] 0.0, 128
        %1482 = vxpose.xlu0.b32.cont [3/16] 0.0, 128
        %1483 = vxpose.xlu0.b32.cont [4/16] 0.0, 128
        %1484 = vxpose.xlu0.b32.cont [5/16] 0.0, 128
        %1485 = vxpose.xlu0.b32.cont [6/16] 0.0, 128
        %1486 = vxpose.xlu0.b32.cont [7/16] 0.0, 128
        %1487 = vxpose.xlu0.b32.cont [8/16] 0.0, 128
        %1488 = vxpose.xlu0.b32.cont [9/16] 0.0, 128
        %1489 = vxpose.xlu0.b32.cont [10/16] 0.0, 128
        %1490 = vxpose.xlu0.b32.cont [11/16] 0.0, 128
        %1491 = vxpose.xlu0.b32.cont [12/16] 0.0, 128
        %1492 = vxpose.xlu0.b32.cont [13/16] 0.0, 128
        %1493 = vxpose.xlu0.b32.cont [14/16] 0.0, 128
        %1494 = vxpose.xlu0.b32.cont [15/16] 0.0, 128
        %1495 = vxpose.xlu0.b32.end [16/16] 0.0, 128
        %v1496 = vpop.trf.xlu0
        %v1497 = vpop.trf.xlu0
        %v1498 = vpop.trf.xlu0
        %v1499 = vpop.trf.xlu0
        %v1500 = vpop.trf.xlu0
        %v1501 = vpop.trf.xlu0
        %v1502 = vpop.trf.xlu0
        %v1503 = vpop.trf.xlu0
        %v1504 = vpop.trf.xlu0
        %v1505 = vpop.trf.xlu0
        %v1506 = vpop.trf.xlu0
        %v1507 = vpop.trf.xlu0
        %v1508 = vpop.trf.xlu0
        %v1509 = vpop.trf.xlu0
        %v1510 = vpop.trf.xlu0
        %v1511 = vpop.trf.xlu0
        %v1513 = vsel %vm455, %v1496, 0
        %1515 = vmatpush.msra.mxu0 0.0
        %1516 = vmatpush.msra.mxu0 0.0
        %1517 = vmatpush.msra.mxu0 0.0
        %1518 = vmatpush.msra.mxu0 0.0
        %1519 = vmatpush.msra.mxu0 0.0
        %1520 = vmatpush.msra.mxu0 0.0
        %1521 = vmatpush.msra.mxu0 0.0
        %1522 = vmatpush.msra.mxu0 0.0
        %1523 = vmatpush.msra.mxu0 0.0
        %1524 = vmatpush.msra.mxu0 0.0
        %1525 = vmatpush.msra.mxu0 0.0
        %1526 = vmatpush.msra.mxu0 0.0
        %1527 = vmatpush.msra.mxu0 0.0
        %1528 = vmatpush.msra.mxu0 0.0
        %1529 = vmatpush.msra.mxu0 0.0
        %1530 = vmatpush.msra.mxu0 %v487
        %1531 = vmatmul.f32.gmra.mxu0 %v1513
        %v1532 = vpop.f32.mrf.mxu0
        %v1533 = vadd.f32 0.0, %v1532
        %1534 = vdwg.mxu0
        %1535 = vxpose.xlu0.b32.start [1/16] %v708, 128
        %1536 = vxpose.xlu0.b32.cont [2/16] 0.0, 128
        %1537 = vxpose.xlu0.b32.cont [3/16] 0.0, 128
        %1538 = vxpose.xlu0.b32.cont [4/16] 0.0, 128
        %1539 = vxpose.xlu0.b32.cont [5/16] 0.0, 128
        %1540 = vxpose.xlu0.b32.cont [6/16] 0.0, 128
        %1541 = vxpose.xlu0.b32.cont [7/16] 0.0, 128
        %1542 = vxpose.xlu0.b32.cont [8/16] 0.0, 128
        %1543 = vxpose.xlu0.b32.cont [9/16] 0.0, 128
        %1544 = vxpose.xlu0.b32.cont [10/16] 0.0, 128
        %1545 = vxpose.xlu0.b32.cont [11/16] 0.0, 128
        %1546 = vxpose.xlu0.b32.cont [12/16] 0.0, 128
        %1547 = vxpose.xlu0.b32.cont [13/16] 0.0, 128
        %1548 = vxpose.xlu0.b32.cont [14/16] 0.0, 128
        %1549 = vxpose.xlu0.b32.cont [15/16] 0.0, 128
        %1550 = vxpose.xlu0.b32.end [16/16] 0.0, 128
        %v1551 = vpop.trf.xlu0
        %v1552 = vpop.trf.xlu0
        %v1553 = vpop.trf.xlu0
        %v1554 = vpop.trf.xlu0
        %v1555 = vpop.trf.xlu0
        %v1556 = vpop.trf.xlu0
        %v1557 = vpop.trf.xlu0
        %v1558 = vpop.trf.xlu0
        %v1559 = vpop.trf.xlu0
        %v1560 = vpop.trf.xlu0
        %v1561 = vpop.trf.xlu0
        %v1562 = vpop.trf.xlu0
        %v1563 = vpop.trf.xlu0
        %v1564 = vpop.trf.xlu0
        %v1565 = vpop.trf.xlu0
        %v1566 = vpop.trf.xlu0
        %v1568 = vsel %vm455, %v1551, 0
        %1570 = vmatpush.msra.mxu0 0.0
        %1571 = vmatpush.msra.mxu0 0.0
        %1572 = vmatpush.msra.mxu0 0.0
        %1573 = vmatpush.msra.mxu0 0.0
        %1574 = vmatpush.msra.mxu0 0.0
        %1575 = vmatpush.msra.mxu0 0.0
        %1576 = vmatpush.msra.mxu0 0.0
        %1577 = vmatpush.msra.mxu0 0.0
        %1578 = vmatpush.msra.mxu0 0.0
        %1579 = vmatpush.msra.mxu0 0.0
        %1580 = vmatpush.msra.mxu0 0.0
        %1581 = vmatpush.msra.mxu0 0.0
        %1582 = vmatpush.msra.mxu0 0.0
        %1583 = vmatpush.msra.mxu0 0.0
        %1584 = vmatpush.msra.mxu0 0.0
        %1585 = vmatpush.msra.mxu0 %v487
        %1586 = vmatmul.f32.gmra.mxu0 %v1568
        %v1587 = vpop.f32.mrf.mxu0
        %v1588 = vadd.f32 0.0, %v1587
        %1589 = vdwg.mxu0
        %1590 = vxpose.xlu0.b32.start [1/16] %v593, 128
        %1591 = vxpose.xlu0.b32.cont [2/16] 0.0, 128
        %1592 = vxpose.xlu0.b32.cont [3/16] 0.0, 128
        %1593 = vxpose.xlu0.b32.cont [4/16] 0.0, 128
        %1594 = vxpose.xlu0.b32.cont [5/16] 0.0, 128
        %1595 = vxpose.xlu0.b32.cont [6/16] 0.0, 128
        %1596 = vxpose.xlu0.b32.cont [7/16] 0.0, 128
        %1597 = vxpose.xlu0.b32.cont [8/16] 0.0, 128
        %1598 = vxpose.xlu0.b32.cont [9/16] 0.0, 128
        %1599 = vxpose.xlu0.b32.cont [10/16] 0.0, 128
        %1600 = vxpose.xlu0.b32.cont [11/16] 0.0, 128
        %1601 = vxpose.xlu0.b32.cont [12/16] 0.0, 128
        %1602 = vxpose.xlu0.b32.cont [13/16] 0.0, 128
        %1603 = vxpose.xlu0.b32.cont [14/16] 0.0, 128
        %1604 = vxpose.xlu0.b32.cont [15/16] 0.0, 128
        %1605 = vxpose.xlu0.b32.end [16/16] 0.0, 128
        %v1606 = vpop.trf.xlu0
        %v1607 = vpop.trf.xlu0
        %v1608 = vpop.trf.xlu0
        %v1609 = vpop.trf.xlu0
        %v1610 = vpop.trf.xlu0
        %v1611 = vpop.trf.xlu0
        %v1612 = vpop.trf.xlu0
        %v1613 = vpop.trf.xlu0
        %v1614 = vpop.trf.xlu0
        %v1615 = vpop.trf.xlu0
        %v1616 = vpop.trf.xlu0
        %v1617 = vpop.trf.xlu0
        %v1618 = vpop.trf.xlu0
        %v1619 = vpop.trf.xlu0
        %v1620 = vpop.trf.xlu0
        %v1621 = vpop.trf.xlu0
        %v1623 = vsel %vm455, %v1606, 0
        %1625 = vmatpush.msra.mxu0 0.0
        %1626 = vmatpush.msra.mxu0 0.0
        %1627 = vmatpush.msra.mxu0 0.0
        %1628 = vmatpush.msra.mxu0 0.0
        %1629 = vmatpush.msra.mxu0 0.0
        %1630 = vmatpush.msra.mxu0 0.0
        %1631 = vmatpush.msra.mxu0 0.0
        %1632 = vmatpush.msra.mxu0 0.0
        %1633 = vmatpush.msra.mxu0 0.0
        %1634 = vmatpush.msra.mxu0 0.0
        %1635 = vmatpush.msra.mxu0 0.0
        %1636 = vmatpush.msra.mxu0 0.0
        %1637 = vmatpush.msra.mxu0 0.0
        %1638 = vmatpush.msra.mxu0 0.0
        %1639 = vmatpush.msra.mxu0 0.0
        %1640 = vmatpush.msra.mxu0 %v485
        %1641 = vmatmul.f32.gmra.mxu0 %v1623
        %v1642 = vpop.f32.mrf.mxu0
        %v1643 = vadd.f32 %v763, %v1642
        %1644 = vdwg.mxu0
        %1645 = vxpose.xlu0.b32.start [1/16] %v596, 128
        %1646 = vxpose.xlu0.b32.cont [2/16] 0.0, 128
        %1647 = vxpose.xlu0.b32.cont [3/16] 0.0, 128
        %1648 = vxpose.xlu0.b32.cont [4/16] 0.0, 128
        %1649 = vxpose.xlu0.b32.cont [5/16] 0.0, 128
        %1650 = vxpose.xlu0.b32.cont [6/16] 0.0, 128
        %1651 = vxpose.xlu0.b32.cont [7/16] 0.0, 128
        %1652 = vxpose.xlu0.b32.cont [8/16] 0.0, 128
        %1653 = vxpose.xlu0.b32.cont [9/16] 0.0, 128
        %1654 = vxpose.xlu0.b32.cont [10/16] 0.0, 128
        %1655 = vxpose.xlu0.b32.cont [11/16] 0.0, 128
        %1656 = vxpose.xlu0.b32.cont [12/16] 0.0, 128
        %1657 = vxpose.xlu0.b32.cont [13/16] 0.0, 128
        %1658 = vxpose.xlu0.b32.cont [14/16] 0.0, 128
        %1659 = vxpose.xlu0.b32.cont [15/16] 0.0, 128
        %1660 = vxpose.xlu0.b32.end [16/16] 0.0, 128
        %v1661 = vpop.trf.xlu0
        %v1662 = vpop.trf.xlu0
        %v1663 = vpop.trf.xlu0
        %v1664 = vpop.trf.xlu0
        %v1665 = vpop.trf.xlu0
        %v1666 = vpop.trf.xlu0
        %v1667 = vpop.trf.xlu0
        %v1668 = vpop.trf.xlu0
        %v1669 = vpop.trf.xlu0
        %v1670 = vpop.trf.xlu0
        %v1671 = vpop.trf.xlu0
        %v1672 = vpop.trf.xlu0
        %v1673 = vpop.trf.xlu0
        %v1674 = vpop.trf.xlu0
        %v1675 = vpop.trf.xlu0
        %v1676 = vpop.trf.xlu0
        %v1678 = vsel %vm455, %v1661, 0
        %1680 = vmatpush.msra.mxu0 0.0
        %1681 = vmatpush.msra.mxu0 0.0
        %1682 = vmatpush.msra.mxu0 0.0
        %1683 = vmatpush.msra.mxu0 0.0
        %1684 = vmatpush.msra.mxu0 0.0
        %1685 = vmatpush.msra.mxu0 0.0
        %1686 = vmatpush.msra.mxu0 0.0
        %1687 = vmatpush.msra.mxu0 0.0
        %1688 = vmatpush.msra.mxu0 0.0
        %1689 = vmatpush.msra.mxu0 0.0
        %1690 = vmatpush.msra.mxu0 0.0
        %1691 = vmatpush.msra.mxu0 0.0
        %1692 = vmatpush.msra.mxu0 0.0
        %1693 = vmatpush.msra.mxu0 0.0
        %1694 = vmatpush.msra.mxu0 0.0
        %1695 = vmatpush.msra.mxu0 %v485
        %1696 = vmatmul.f32.gmra.mxu0 %v1678
        %v1697 = vpop.f32.mrf.mxu0
        %v1698 = vadd.f32 %v818, %v1697
        %1699 = vdwg.mxu0
        %1700 = vxpose.xlu0.b32.start [1/16] %v599, 128
        %1701 = vxpose.xlu0.b32.cont [2/16] 0.0, 128
        %1702 = vxpose.xlu0.b32.cont [3/16] 0.0, 128
        %1703 = vxpose.xlu0.b32.cont [4/16] 0.0, 128
        %1704 = vxpose.xlu0.b32.cont [5/16] 0.0, 128
        %1705 = vxpose.xlu0.b32.cont [6/16] 0.0, 128
        %1706 = vxpose.xlu0.b32.cont [7/16] 0.0, 128
        %1707 = vxpose.xlu0.b32.cont [8/16] 0.0, 128
        %1708 = vxpose.xlu0.b32.cont [9/16] 0.0, 128
        %1709 = vxpose.xlu0.b32.cont [10/16] 0.0, 128
        %1710 = vxpose.xlu0.b32.cont [11/16] 0.0, 128
        %1711 = vxpose.xlu0.b32.cont [12/16] 0.0, 128
        %1712 = vxpose.xlu0.b32.cont [13/16] 0.0, 128
        %1713 = vxpose.xlu0.b32.cont [14/16] 0.0, 128
        %1714 = vxpose.xlu0.b32.cont [15/16] 0.0, 128
        %1715 = vxpose.xlu0.b32.end [16/16] 0.0, 128
        %v1716 = vpop.trf.xlu0
        %v1717 = vpop.trf.xlu0
        %v1718 = vpop.trf.xlu0
        %v1719 = vpop.trf.xlu0
        %v1720 = vpop.trf.xlu0
        %v1721 = vpop.trf.xlu0
        %v1722 = vpop.trf.xlu0
        %v1723 = vpop.trf.xlu0
        %v1724 = vpop.trf.xlu0
        %v1725 = vpop.trf.xlu0
        %v1726 = vpop.trf.xlu0
        %v1727 = vpop.trf.xlu0
        %v1728 = vpop.trf.xlu0
        %v1729 = vpop.trf.xlu0
        %v1730 = vpop.trf.xlu0
        %v1731 = vpop.trf.xlu0
        %v1733 = vsel %vm455, %v1716, 0
        %1735 = vmatpush.msra.mxu0 0.0
        %1736 = vmatpush.msra.mxu0 0.0
        %1737 = vmatpush.msra.mxu0 0.0
        %1738 = vmatpush.msra.mxu0 0.0
        %1739 = vmatpush.msra.mxu0 0.0
        %1740 = vmatpush.msra.mxu0 0.0
        %1741 = vmatpush.msra.mxu0 0.0
        %1742 = vmatpush.msra.mxu0 0.0
        %1743 = vmatpush.msra.mxu0 0.0
        %1744 = vmatpush.msra.mxu0 0.0
        %1745 = vmatpush.msra.mxu0 0.0
        %1746 = vmatpush.msra.mxu0 0.0
        %1747 = vmatpush.msra.mxu0 0.0
        %1748 = vmatpush.msra.mxu0 0.0
        %1749 = vmatpush.msra.mxu0 0.0
        %1750 = vmatpush.msra.mxu0 %v485
        %1751 = vmatmul.f32.gmra.mxu0 %v1733
        %v1752 = vpop.f32.mrf.mxu0
        %v1753 = vadd.f32 %v873, %v1752
        %1754 = vdwg.mxu0
        %1755 = vxpose.xlu0.b32.start [1/16] %v602, 128
        %1756 = vxpose.xlu0.b32.cont [2/16] 0.0, 128
        %1757 = vxpose.xlu0.b32.cont [3/16] 0.0, 128
        %1758 = vxpose.xlu0.b32.cont [4/16] 0.0, 128
        %1759 = vxpose.xlu0.b32.cont [5/16] 0.0, 128
        %1760 = vxpose.xlu0.b32.cont [6/16] 0.0, 128
        %1761 = vxpose.xlu0.b32.cont [7/16] 0.0, 128
        %1762 = vxpose.xlu0.b32.cont [8/16] 0.0, 128
        %1763 = vxpose.xlu0.b32.cont [9/16] 0.0, 128
        %1764 = vxpose.xlu0.b32.cont [10/16] 0.0, 128
        %1765 = vxpose.xlu0.b32.cont [11/16] 0.0, 128
        %1766 = vxpose.xlu0.b32.cont [12/16] 0.0, 128
        %1767 = vxpose.xlu0.b32.cont [13/16] 0.0, 128
        %1768 = vxpose.xlu0.b32.cont [14/16] 0.0, 128
        %1769 = vxpose.xlu0.b32.cont [15/16] 0.0, 128
        %1770 = vxpose.xlu0.b32.end [16/16] 0.0, 128
        %v1771 = vpop.trf.xlu0
        %v1772 = vpop.trf.xlu0
        %v1773 = vpop.trf.xlu0
        %v1774 = vpop.trf.xlu0
        %v1775 = vpop.trf.xlu0
        %v1776 = vpop.trf.xlu0
        %v1777 = vpop.trf.xlu0
        %v1778 = vpop.trf.xlu0
        %v1779 = vpop.trf.xlu0
        %v1780 = vpop.trf.xlu0
        %v1781 = vpop.trf.xlu0
        %v1782 = vpop.trf.xlu0
        %v1783 = vpop.trf.xlu0
        %v1784 = vpop.trf.xlu0
        %v1785 = vpop.trf.xlu0
        %v1786 = vpop.trf.xlu0
        %v1788 = vsel %vm455, %v1771, 0
        %1790 = vmatpush.msra.mxu0 0.0
        %1791 = vmatpush.msra.mxu0 0.0
        %1792 = vmatpush.msra.mxu0 0.0
        %1793 = vmatpush.msra.mxu0 0.0
        %1794 = vmatpush.msra.mxu0 0.0
        %1795 = vmatpush.msra.mxu0 0.0
        %1796 = vmatpush.msra.mxu0 0.0
        %1797 = vmatpush.msra.mxu0 0.0
        %1798 = vmatpush.msra.mxu0 0.0
        %1799 = vmatpush.msra.mxu0 0.0
        %1800 = vmatpush.msra.mxu0 0.0
        %1801 = vmatpush.msra.mxu0 0.0
        %1802 = vmatpush.msra.mxu0 0.0
        %1803 = vmatpush.msra.mxu0 0.0
        %1804 = vmatpush.msra.mxu0 0.0
        %1805 = vmatpush.msra.mxu0 %v485
        %1806 = vmatmul.f32.gmra.mxu0 %v1788
        %v1807 = vpop.f32.mrf.mxu0
        %v1808 = vadd.f32 %v928, %v1807
        %1809 = vdwg.mxu0
        %1810 = vxpose.xlu0.b32.start [1/16] %v605, 128
        %1811 = vxpose.xlu0.b32.cont [2/16] 0.0, 128
        %1812 = vxpose.xlu0.b32.cont [3/16] 0.0, 128
        %1813 = vxpose.xlu0.b32.cont [4/16] 0.0, 128
        %1814 = vxpose.xlu0.b32.cont [5/16] 0.0, 128
        %1815 = vxpose.xlu0.b32.cont [6/16] 0.0, 128
        %1816 = vxpose.xlu0.b32.cont [7/16] 0.0, 128
        %1817 = vxpose.xlu0.b32.cont [8/16] 0.0, 128
        %1818 = vxpose.xlu0.b32.cont [9/16] 0.0, 128
        %1819 = vxpose.xlu0.b32.cont [10/16] 0.0, 128
        %1820 = vxpose.xlu0.b32.cont [11/16] 0.0, 128
        %1821 = vxpose.xlu0.b32.cont [12/16] 0.0, 128
        %1822 = vxpose.xlu0.b32.cont [13/16] 0.0, 128
        %1823 = vxpose.xlu0.b32.cont [14/16] 0.0, 128
        %1824 = vxpose.xlu0.b32.cont [15/16] 0.0, 128
        %1825 = vxpose.xlu0.b32.end [16/16] 0.0, 128
        %v1826 = vpop.trf.xlu0
        %v1827 = vpop.trf.xlu0
        %v1828 = vpop.trf.xlu0
        %v1829 = vpop.trf.xlu0
        %v1830 = vpop.trf.xlu0
        %v1831 = vpop.trf.xlu0
        %v1832 = vpop.trf.xlu0
        %v1833 = vpop.trf.xlu0
        %v1834 = vpop.trf.xlu0
        %v1835 = vpop.trf.xlu0
        %v1836 = vpop.trf.xlu0
        %v1837 = vpop.trf.xlu0
        %v1838 = vpop.trf.xlu0
        %v1839 = vpop.trf.xlu0
        %v1840 = vpop.trf.xlu0
        %v1841 = vpop.trf.xlu0
        %v1843 = vsel %vm455, %v1826, 0
        %1845 = vmatpush.msra.mxu0 0.0
        %1846 = vmatpush.msra.mxu0 0.0
        %1847 = vmatpush.msra.mxu0 0.0
        %1848 = vmatpush.msra.mxu0 0.0
        %1849 = vmatpush.msra.mxu0 0.0
        %1850 = vmatpush.msra.mxu0 0.0
        %1851 = vmatpush.msra.mxu0 0.0
        %1852 = vmatpush.msra.mxu0 0.0
        %1853 = vmatpush.msra.mxu0 0.0
        %1854 = vmatpush.msra.mxu0 0.0
        %1855 = vmatpush.msra.mxu0 0.0
        %1856 = vmatpush.msra.mxu0 0.0
        %1857 = vmatpush.msra.mxu0 0.0
        %1858 = vmatpush.msra.mxu0 0.0
        %1859 = vmatpush.msra.mxu0 0.0
        %1860 = vmatpush.msra.mxu0 %v485
        %1861 = vmatmul.f32.gmra.mxu0 %v1843
        %v1862 = vpop.f32.mrf.mxu0
        %v1863 = vadd.f32 %v983, %v1862
        %1864 = vdwg.mxu0
        %1865 = vxpose.xlu0.b32.start [1/16] %v608, 128
        %1866 = vxpose.xlu0.b32.cont [2/16] 0.0, 128
        %1867 = vxpose.xlu0.b32.cont [3/16] 0.0, 128
        %1868 = vxpose.xlu0.b32.cont [4/16] 0.0, 128
        %1869 = vxpose.xlu0.b32.cont [5/16] 0.0, 128
        %1870 = vxpose.xlu0.b32.cont [6/16] 0.0, 128
        %1871 = vxpose.xlu0.b32.cont [7/16] 0.0, 128
        %1872 = vxpose.xlu0.b32.cont [8/16] 0.0, 128
        %1873 = vxpose.xlu0.b32.cont [9/16] 0.0, 128
        %1874 = vxpose.xlu0.b32.cont [10/16] 0.0, 128
        %1875 = vxpose.xlu0.b32.cont [11/16] 0.0, 128
        %1876 = vxpose.xlu0.b32.cont [12/16] 0.0, 128
        %1877 = vxpose.xlu0.b32.cont [13/16] 0.0, 128
        %1878 = vxpose.xlu0.b32.cont [14/16] 0.0, 128
        %1879 = vxpose.xlu0.b32.cont [15/16] 0.0, 128
        %1880 = vxpose.xlu0.b32.end [16/16] 0.0, 128
        %v1881 = vpop.trf.xlu0
        %v1882 = vpop.trf.xlu0
        %v1883 = vpop.trf.xlu0
        %v1884 = vpop.trf.xlu0
        %v1885 = vpop.trf.xlu0
        %v1886 = vpop.trf.xlu0
        %v1887 = vpop.trf.xlu0
        %v1888 = vpop.trf.xlu0
        %v1889 = vpop.trf.xlu0
        %v1890 = vpop.trf.xlu0
        %v1891 = vpop.trf.xlu0
        %v1892 = vpop.trf.xlu0
        %v1893 = vpop.trf.xlu0
        %v1894 = vpop.trf.xlu0
        %v1895 = vpop.trf.xlu0
        %v1896 = vpop.trf.xlu0
        %v1898 = vsel %vm455, %v1881, 0
        %1900 = vmatpush.msra.mxu0 0.0
        %1901 = vmatpush.msra.mxu0 0.0
        %1902 = vmatpush.msra.mxu0 0.0
        %1903 = vmatpush.msra.mxu0 0.0
        %1904 = vmatpush.msra.mxu0 0.0
        %1905 = vmatpush.msra.mxu0 0.0
        %1906 = vmatpush.msra.mxu0 0.0
        %1907 = vmatpush.msra.mxu0 0.0
        %1908 = vmatpush.msra.mxu0 0.0
        %1909 = vmatpush.msra.mxu0 0.0
        %1910 = vmatpush.msra.mxu0 0.0
        %1911 = vmatpush.msra.mxu0 0.0
        %1912 = vmatpush.msra.mxu0 0.0
        %1913 = vmatpush.msra.mxu0 0.0
        %1914 = vmatpush.msra.mxu0 0.0
        %1915 = vmatpush.msra.mxu0 %v485
        %1916 = vmatmul.f32.gmra.mxu0 %v1898
        %v1917 = vpop.f32.mrf.mxu0
        %v1918 = vadd.f32 %v1038, %v1917
        %1919 = vdwg.mxu0
        %1920 = vxpose.xlu0.b32.start [1/16] %v611, 128
        %1921 = vxpose.xlu0.b32.cont [2/16] 0.0, 128
        %1922 = vxpose.xlu0.b32.cont [3/16] 0.0, 128
        %1923 = vxpose.xlu0.b32.cont [4/16] 0.0, 128
        %1924 = vxpose.xlu0.b32.cont [5/16] 0.0, 128
        %1925 = vxpose.xlu0.b32.cont [6/16] 0.0, 128
        %1926 = vxpose.xlu0.b32.cont [7/16] 0.0, 128
        %1927 = vxpose.xlu0.b32.cont [8/16] 0.0, 128
        %1928 = vxpose.xlu0.b32.cont [9/16] 0.0, 128
        %1929 = vxpose.xlu0.b32.cont [10/16] 0.0, 128
        %1930 = vxpose.xlu0.b32.cont [11/16] 0.0, 128
        %1931 = vxpose.xlu0.b32.cont [12/16] 0.0, 128
        %1932 = vxpose.xlu0.b32.cont [13/16] 0.0, 128
        %1933 = vxpose.xlu0.b32.cont [14/16] 0.0, 128
        %1934 = vxpose.xlu0.b32.cont [15/16] 0.0, 128
        %1935 = vxpose.xlu0.b32.end [16/16] 0.0, 128
        %v1936 = vpop.trf.xlu0
        %v1937 = vpop.trf.xlu0
        %v1938 = vpop.trf.xlu0
        %v1939 = vpop.trf.xlu0
        %v1940 = vpop.trf.xlu0
        %v1941 = vpop.trf.xlu0
        %v1942 = vpop.trf.xlu0
        %v1943 = vpop.trf.xlu0
        %v1944 = vpop.trf.xlu0
        %v1945 = vpop.trf.xlu0
        %v1946 = vpop.trf.xlu0
        %v1947 = vpop.trf.xlu0
        %v1948 = vpop.trf.xlu0
        %v1949 = vpop.trf.xlu0
        %v1950 = vpop.trf.xlu0
        %v1951 = vpop.trf.xlu0
        %v1953 = vsel %vm455, %v1936, 0
        %1955 = vmatpush.msra.mxu0 0.0
        %1956 = vmatpush.msra.mxu0 0.0
        %1957 = vmatpush.msra.mxu0 0.0
        %1958 = vmatpush.msra.mxu0 0.0
        %1959 = vmatpush.msra.mxu0 0.0
        %1960 = vmatpush.msra.mxu0 0.0
        %1961 = vmatpush.msra.mxu0 0.0
        %1962 = vmatpush.msra.mxu0 0.0
        %1963 = vmatpush.msra.mxu0 0.0
        %1964 = vmatpush.msra.mxu0 0.0
        %1965 = vmatpush.msra.mxu0 0.0
        %1966 = vmatpush.msra.mxu0 0.0
        %1967 = vmatpush.msra.mxu0 0.0
        %1968 = vmatpush.msra.mxu0 0.0
        %1969 = vmatpush.msra.mxu0 0.0
        %1970 = vmatpush.msra.mxu0 %v485
        %1971 = vmatmul.f32.gmra.mxu0 %v1953
        %v1972 = vpop.f32.mrf.mxu0
        %v1973 = vadd.f32 %v1093, %v1972
        %1974 = vdwg.mxu0
        %1975 = vxpose.xlu0.b32.start [1/16] %v614, 128
        %1976 = vxpose.xlu0.b32.cont [2/16] 0.0, 128
        %1977 = vxpose.xlu0.b32.cont [3/16] 0.0, 128
        %1978 = vxpose.xlu0.b32.cont [4/16] 0.0, 128
        %1979 = vxpose.xlu0.b32.cont [5/16] 0.0, 128
        %1980 = vxpose.xlu0.b32.cont [6/16] 0.0, 128
        %1981 = vxpose.xlu0.b32.cont [7/16] 0.0, 128
        %1982 = vxpose.xlu0.b32.cont [8/16] 0.0, 128
        %1983 = vxpose.xlu0.b32.cont [9/16] 0.0, 128
        %1984 = vxpose.xlu0.b32.cont [10/16] 0.0, 128
        %1985 = vxpose.xlu0.b32.cont [11/16] 0.0, 128
        %1986 = vxpose.xlu0.b32.cont [12/16] 0.0, 128
        %1987 = vxpose.xlu0.b32.cont [13/16] 0.0, 128
        %1988 = vxpose.xlu0.b32.cont [14/16] 0.0, 128
        %1989 = vxpose.xlu0.b32.cont [15/16] 0.0, 128
        %1990 = vxpose.xlu0.b32.end [16/16] 0.0, 128
        %v1991 = vpop.trf.xlu0
        %v1992 = vpop.trf.xlu0
        %v1993 = vpop.trf.xlu0
        %v1994 = vpop.trf.xlu0
        %v1995 = vpop.trf.xlu0
        %v1996 = vpop.trf.xlu0
        %v1997 = vpop.trf.xlu0
        %v1998 = vpop.trf.xlu0
        %v1999 = vpop.trf.xlu0
        %v2000 = vpop.trf.xlu0
        %v2001 = vpop.trf.xlu0
        %v2002 = vpop.trf.xlu0
        %v2003 = vpop.trf.xlu0
        %v2004 = vpop.trf.xlu0
        %v2005 = vpop.trf.xlu0
        %v2006 = vpop.trf.xlu0
        %v2008 = vsel %vm455, %v1991, 0
        %2010 = vmatpush.msra.mxu0 0.0
        %2011 = vmatpush.msra.mxu0 0.0
        %2012 = vmatpush.msra.mxu0 0.0
        %2013 = vmatpush.msra.mxu0 0.0
        %2014 = vmatpush.msra.mxu0 0.0
        %2015 = vmatpush.msra.mxu0 0.0
        %2016 = vmatpush.msra.mxu0 0.0
        %2017 = vmatpush.msra.mxu0 0.0
        %2018 = vmatpush.msra.mxu0 0.0
        %2019 = vmatpush.msra.mxu0 0.0
        %2020 = vmatpush.msra.mxu0 0.0
        %2021 = vmatpush.msra.mxu0 0.0
        %2022 = vmatpush.msra.mxu0 0.0
        %2023 = vmatpush.msra.mxu0 0.0
        %2024 = vmatpush.msra.mxu0 0.0
        %2025 = vmatpush.msra.mxu0 %v485
        %2026 = vmatmul.f32.gmra.mxu0 %v2008
        %v2027 = vpop.f32.mrf.mxu0
        %v2028 = vadd.f32 %v1148, %v2027
        %2029 = vdwg.mxu0
        %2030 = vxpose.xlu0.b32.start [1/16] %v617, 128
        %2031 = vxpose.xlu0.b32.cont [2/16] 0.0, 128
        %2032 = vxpose.xlu0.b32.cont [3/16] 0.0, 128
        %2033 = vxpose.xlu0.b32.cont [4/16] 0.0, 128
        %2034 = vxpose.xlu0.b32.cont [5/16] 0.0, 128
        %2035 = vxpose.xlu0.b32.cont [6/16] 0.0, 128
        %2036 = vxpose.xlu0.b32.cont [7/16] 0.0, 128
        %2037 = vxpose.xlu0.b32.cont [8/16] 0.0, 128
        %2038 = vxpose.xlu0.b32.cont [9/16] 0.0, 128
        %2039 = vxpose.xlu0.b32.cont [10/16] 0.0, 128
        %2040 = vxpose.xlu0.b32.cont [11/16] 0.0, 128
        %2041 = vxpose.xlu0.b32.cont [12/16] 0.0, 128
        %2042 = vxpose.xlu0.b32.cont [13/16] 0.0, 128
        %2043 = vxpose.xlu0.b32.cont [14/16] 0.0, 128
        %2044 = vxpose.xlu0.b32.cont [15/16] 0.0, 128
        %2045 = vxpose.xlu0.b32.end [16/16] 0.0, 128
        %v2046 = vpop.trf.xlu0
        %v2047 = vpop.trf.xlu0
        %v2048 = vpop.trf.xlu0
        %v2049 = vpop.trf.xlu0
        %v2050 = vpop.trf.xlu0
        %v2051 = vpop.trf.xlu0
        %v2052 = vpop.trf.xlu0
        %v2053 = vpop.trf.xlu0
        %v2054 = vpop.trf.xlu0
        %v2055 = vpop.trf.xlu0
        %v2056 = vpop.trf.xlu0
        %v2057 = vpop.trf.xlu0
        %v2058 = vpop.trf.xlu0
        %v2059 = vpop.trf.xlu0
        %v2060 = vpop.trf.xlu0
        %v2061 = vpop.trf.xlu0
        %v2063 = vsel %vm455, %v2046, 0
        %2065 = vmatpush.msra.mxu0 0.0
        %2066 = vmatpush.msra.mxu0 0.0
        %2067 = vmatpush.msra.mxu0 0.0
        %2068 = vmatpush.msra.mxu0 0.0
        %2069 = vmatpush.msra.mxu0 0.0
        %2070 = vmatpush.msra.mxu0 0.0
        %2071 = vmatpush.msra.mxu0 0.0
        %2072 = vmatpush.msra.mxu0 0.0
        %2073 = vmatpush.msra.mxu0 0.0
        %2074 = vmatpush.msra.mxu0 0.0
        %2075 = vmatpush.msra.mxu0 0.0
        %2076 = vmatpush.msra.mxu0 0.0
        %2077 = vmatpush.msra.mxu0 0.0
        %2078 = vmatpush.msra.mxu0 0.0
        %2079 = vmatpush.msra.mxu0 0.0
        %2080 = vmatpush.msra.mxu0 %v485
        %2081 = vmatmul.f32.gmra.mxu0 %v2063
        %v2082 = vpop.f32.mrf.mxu0
        %v2083 = vadd.f32 %v1203, %v2082
        %2084 = vdwg.mxu0
        %2085 = vxpose.xlu0.b32.start [1/16] %v620, 128
        %2086 = vxpose.xlu0.b32.cont [2/16] 0.0, 128
        %2087 = vxpose.xlu0.b32.cont [3/16] 0.0, 128
        %2088 = vxpose.xlu0.b32.cont [4/16] 0.0, 128
        %2089 = vxpose.xlu0.b32.cont [5/16] 0.0, 128
        %2090 = vxpose.xlu0.b32.cont [6/16] 0.0, 128
        %2091 = vxpose.xlu0.b32.cont [7/16] 0.0, 128
        %2092 = vxpose.xlu0.b32.cont [8/16] 0.0, 128
        %2093 = vxpose.xlu0.b32.cont [9/16] 0.0, 128
        %2094 = vxpose.xlu0.b32.cont [10/16] 0.0, 128
        %2095 = vxpose.xlu0.b32.cont [11/16] 0.0, 128
        %2096 = vxpose.xlu0.b32.cont [12/16] 0.0, 128
        %2097 = vxpose.xlu0.b32.cont [13/16] 0.0, 128
        %2098 = vxpose.xlu0.b32.cont [14/16] 0.0, 128
        %2099 = vxpose.xlu0.b32.cont [15/16] 0.0, 128
        %2100 = vxpose.xlu0.b32.end [16/16] 0.0, 128
        %v2101 = vpop.trf.xlu0
        %v2102 = vpop.trf.xlu0
        %v2103 = vpop.trf.xlu0
        %v2104 = vpop.trf.xlu0
        %v2105 = vpop.trf.xlu0
        %v2106 = vpop.trf.xlu0
        %v2107 = vpop.trf.xlu0
        %v2108 = vpop.trf.xlu0
        %v2109 = vpop.trf.xlu0
        %v2110 = vpop.trf.xlu0
        %v2111 = vpop.trf.xlu0
        %v2112 = vpop.trf.xlu0
        %v2113 = vpop.trf.xlu0
        %v2114 = vpop.trf.xlu0
        %v2115 = vpop.trf.xlu0
        %v2116 = vpop.trf.xlu0
        %v2118 = vsel %vm455, %v2101, 0
        %2120 = vmatpush.msra.mxu0 0.0
        %2121 = vmatpush.msra.mxu0 0.0
        %2122 = vmatpush.msra.mxu0 0.0
        %2123 = vmatpush.msra.mxu0 0.0
        %2124 = vmatpush.msra.mxu0 0.0
        %2125 = vmatpush.msra.mxu0 0.0
        %2126 = vmatpush.msra.mxu0 0.0
        %2127 = vmatpush.msra.mxu0 0.0
        %2128 = vmatpush.msra.mxu0 0.0
        %2129 = vmatpush.msra.mxu0 0.0
        %2130 = vmatpush.msra.mxu0 0.0
        %2131 = vmatpush.msra.mxu0 0.0
        %2132 = vmatpush.msra.mxu0 0.0
        %2133 = vmatpush.msra.mxu0 0.0
        %2134 = vmatpush.msra.mxu0 0.0
        %2135 = vmatpush.msra.mxu0 %v485
        %2136 = vmatmul.f32.gmra.mxu0 %v2118
        %v2137 = vpop.f32.mrf.mxu0
        %v2138 = vadd.f32 %v1258, %v2137
        %2139 = vdwg.mxu0
        %2140 = vxpose.xlu0.b32.start [1/16] %v623, 128
        %2141 = vxpose.xlu0.b32.cont [2/16] 0.0, 128
        %2142 = vxpose.xlu0.b32.cont [3/16] 0.0, 128
        %2143 = vxpose.xlu0.b32.cont [4/16] 0.0, 128
        %2144 = vxpose.xlu0.b32.cont [5/16] 0.0, 128
        %2145 = vxpose.xlu0.b32.cont [6/16] 0.0, 128
        %2146 = vxpose.xlu0.b32.cont [7/16] 0.0, 128
        %2147 = vxpose.xlu0.b32.cont [8/16] 0.0, 128
        %2148 = vxpose.xlu0.b32.cont [9/16] 0.0, 128
        %2149 = vxpose.xlu0.b32.cont [10/16] 0.0, 128
        %2150 = vxpose.xlu0.b32.cont [11/16] 0.0, 128
        %2151 = vxpose.xlu0.b32.cont [12/16] 0.0, 128
        %2152 = vxpose.xlu0.b32.cont [13/16] 0.0, 128
        %2153 = vxpose.xlu0.b32.cont [14/16] 0.0, 128
        %2154 = vxpose.xlu0.b32.cont [15/16] 0.0, 128
        %2155 = vxpose.xlu0.b32.end [16/16] 0.0, 128
        %v2156 = vpop.trf.xlu0
        %v2157 = vpop.trf.xlu0
        %v2158 = vpop.trf.xlu0
        %v2159 = vpop.trf.xlu0
        %v2160 = vpop.trf.xlu0
        %v2161 = vpop.trf.xlu0
        %v2162 = vpop.trf.xlu0
        %v2163 = vpop.trf.xlu0
        %v2164 = vpop.trf.xlu0
        %v2165 = vpop.trf.xlu0
        %v2166 = vpop.trf.xlu0
        %v2167 = vpop.trf.xlu0
        %v2168 = vpop.trf.xlu0
        %v2169 = vpop.trf.xlu0
        %v2170 = vpop.trf.xlu0
        %v2171 = vpop.trf.xlu0
        %v2173 = vsel %vm455, %v2156, 0
        %2175 = vmatpush.msra.mxu0 0.0
        %2176 = vmatpush.msra.mxu0 0.0
        %2177 = vmatpush.msra.mxu0 0.0
        %2178 = vmatpush.msra.mxu0 0.0
        %2179 = vmatpush.msra.mxu0 0.0
        %2180 = vmatpush.msra.mxu0 0.0
        %2181 = vmatpush.msra.mxu0 0.0
        %2182 = vmatpush.msra.mxu0 0.0
        %2183 = vmatpush.msra.mxu0 0.0
        %2184 = vmatpush.msra.mxu0 0.0
        %2185 = vmatpush.msra.mxu0 0.0
        %2186 = vmatpush.msra.mxu0 0.0
        %2187 = vmatpush.msra.mxu0 0.0
        %2188 = vmatpush.msra.mxu0 0.0
        %2189 = vmatpush.msra.mxu0 0.0
        %2190 = vmatpush.msra.mxu0 %v485
        %2191 = vmatmul.f32.gmra.mxu0 %v2173
        %v2192 = vpop.f32.mrf.mxu0
        %v2193 = vadd.f32 %v1313, %v2192
        %2194 = vdwg.mxu0
        %2195 = vxpose.xlu0.b32.start [1/16] %v626, 128
        %2196 = vxpose.xlu0.b32.cont [2/16] 0.0, 128
        %2197 = vxpose.xlu0.b32.cont [3/16] 0.0, 128
        %2198 = vxpose.xlu0.b32.cont [4/16] 0.0, 128
        %2199 = vxpose.xlu0.b32.cont [5/16] 0.0, 128
        %2200 = vxpose.xlu0.b32.cont [6/16] 0.0, 128
        %2201 = vxpose.xlu0.b32.cont [7/16] 0.0, 128
        %2202 = vxpose.xlu0.b32.cont [8/16] 0.0, 128
        %2203 = vxpose.xlu0.b32.cont [9/16] 0.0, 128
        %2204 = vxpose.xlu0.b32.cont [10/16] 0.0, 128
        %2205 = vxpose.xlu0.b32.cont [11/16] 0.0, 128
        %2206 = vxpose.xlu0.b32.cont [12/16] 0.0, 128
        %2207 = vxpose.xlu0.b32.cont [13/16] 0.0, 128
        %2208 = vxpose.xlu0.b32.cont [14/16] 0.0, 128
        %2209 = vxpose.xlu0.b32.cont [15/16] 0.0, 128
        %2210 = vxpose.xlu0.b32.end [16/16] 0.0, 128
        %v2211 = vpop.trf.xlu0
        %v2212 = vpop.trf.xlu0
        %v2213 = vpop.trf.xlu0
        %v2214 = vpop.trf.xlu0
        %v2215 = vpop.trf.xlu0
        %v2216 = vpop.trf.xlu0
        %v2217 = vpop.trf.xlu0
        %v2218 = vpop.trf.xlu0
        %v2219 = vpop.trf.xlu0
        %v2220 = vpop.trf.xlu0
        %v2221 = vpop.trf.xlu0
        %v2222 = vpop.trf.xlu0
        %v2223 = vpop.trf.xlu0
        %v2224 = vpop.trf.xlu0
        %v2225 = vpop.trf.xlu0
        %v2226 = vpop.trf.xlu0
        %v2228 = vsel %vm455, %v2211, 0
        %2230 = vmatpush.msra.mxu0 0.0
        %2231 = vmatpush.msra.mxu0 0.0
        %2232 = vmatpush.msra.mxu0 0.0
        %2233 = vmatpush.msra.mxu0 0.0
        %2234 = vmatpush.msra.mxu0 0.0
        %2235 = vmatpush.msra.mxu0 0.0
        %2236 = vmatpush.msra.mxu0 0.0
        %2237 = vmatpush.msra.mxu0 0.0
        %2238 = vmatpush.msra.mxu0 0.0
        %2239 = vmatpush.msra.mxu0 0.0
        %2240 = vmatpush.msra.mxu0 0.0
        %2241 = vmatpush.msra.mxu0 0.0
        %2242 = vmatpush.msra.mxu0 0.0
        %2243 = vmatpush.msra.mxu0 0.0
        %2244 = vmatpush.msra.mxu0 0.0
        %2245 = vmatpush.msra.mxu0 %v485
        %2246 = vmatmul.f32.gmra.mxu0 %v2228
        %v2247 = vpop.f32.mrf.mxu0
        %v2248 = vadd.f32 %v1368, %v2247
        %2249 = vdwg.mxu0
        %2250 = vxpose.xlu0.b32.start [1/16] %v629, 128
        %2251 = vxpose.xlu0.b32.cont [2/16] 0.0, 128
        %2252 = vxpose.xlu0.b32.cont [3/16] 0.0, 128
        %2253 = vxpose.xlu0.b32.cont [4/16] 0.0, 128
        %2254 = vxpose.xlu0.b32.cont [5/16] 0.0, 128
        %2255 = vxpose.xlu0.b32.cont [6/16] 0.0, 128
        %2256 = vxpose.xlu0.b32.cont [7/16] 0.0, 128
        %2257 = vxpose.xlu0.b32.cont [8/16] 0.0, 128
        %2258 = vxpose.xlu0.b32.cont [9/16] 0.0, 128
        %2259 = vxpose.xlu0.b32.cont [10/16] 0.0, 128
        %2260 = vxpose.xlu0.b32.cont [11/16] 0.0, 128
        %2261 = vxpose.xlu0.b32.cont [12/16] 0.0, 128
        %2262 = vxpose.xlu0.b32.cont [13/16] 0.0, 128
        %2263 = vxpose.xlu0.b32.cont [14/16] 0.0, 128
        %2264 = vxpose.xlu0.b32.cont [15/16] 0.0, 128
        %2265 = vxpose.xlu0.b32.end [16/16] 0.0, 128
        %v2266 = vpop.trf.xlu0
        %v2267 = vpop.trf.xlu0
        %v2268 = vpop.trf.xlu0
        %v2269 = vpop.trf.xlu0
        %v2270 = vpop.trf.xlu0
        %v2271 = vpop.trf.xlu0
        %v2272 = vpop.trf.xlu0
        %v2273 = vpop.trf.xlu0
        %v2274 = vpop.trf.xlu0
        %v2275 = vpop.trf.xlu0
        %v2276 = vpop.trf.xlu0
        %v2277 = vpop.trf.xlu0
        %v2278 = vpop.trf.xlu0
        %v2279 = vpop.trf.xlu0
        %v2280 = vpop.trf.xlu0
        %v2281 = vpop.trf.xlu0
        %v2283 = vsel %vm455, %v2266, 0
        %2285 = vmatpush.msra.mxu0 0.0
        %2286 = vmatpush.msra.mxu0 0.0
        %2287 = vmatpush.msra.mxu0 0.0
        %2288 = vmatpush.msra.mxu0 0.0
        %2289 = vmatpush.msra.mxu0 0.0
        %2290 = vmatpush.msra.mxu0 0.0
        %2291 = vmatpush.msra.mxu0 0.0
        %2292 = vmatpush.msra.mxu0 0.0
        %2293 = vmatpush.msra.mxu0 0.0
        %2294 = vmatpush.msra.mxu0 0.0
        %2295 = vmatpush.msra.mxu0 0.0
        %2296 = vmatpush.msra.mxu0 0.0
        %2297 = vmatpush.msra.mxu0 0.0
        %2298 = vmatpush.msra.mxu0 0.0
        %2299 = vmatpush.msra.mxu0 0.0
        %2300 = vmatpush.msra.mxu0 %v485
        %2301 = vmatmul.f32.gmra.mxu0 %v2283
        %v2302 = vpop.f32.mrf.mxu0
        %v2303 = vadd.f32 %v1423, %v2302
        %2304 = vdwg.mxu0
        %2305 = vxpose.xlu0.b32.start [1/16] %v632, 128
        %2306 = vxpose.xlu0.b32.cont [2/16] 0.0, 128
        %2307 = vxpose.xlu0.b32.cont [3/16] 0.0, 128
        %2308 = vxpose.xlu0.b32.cont [4/16] 0.0, 128
        %2309 = vxpose.xlu0.b32.cont [5/16] 0.0, 128
        %2310 = vxpose.xlu0.b32.cont [6/16] 0.0, 128
        %2311 = vxpose.xlu0.b32.cont [7/16] 0.0, 128
        %2312 = vxpose.xlu0.b32.cont [8/16] 0.0, 128
        %2313 = vxpose.xlu0.b32.cont [9/16] 0.0, 128
        %2314 = vxpose.xlu0.b32.cont [10/16] 0.0, 128
        %2315 = vxpose.xlu0.b32.cont [11/16] 0.0, 128
        %2316 = vxpose.xlu0.b32.cont [12/16] 0.0, 128
        %2317 = vxpose.xlu0.b32.cont [13/16] 0.0, 128
        %2318 = vxpose.xlu0.b32.cont [14/16] 0.0, 128
        %2319 = vxpose.xlu0.b32.cont [15/16] 0.0, 128
        %2320 = vxpose.xlu0.b32.end [16/16] 0.0, 128
        %v2321 = vpop.trf.xlu0
        %v2322 = vpop.trf.xlu0
        %v2323 = vpop.trf.xlu0
        %v2324 = vpop.trf.xlu0
        %v2325 = vpop.trf.xlu0
        %v2326 = vpop.trf.xlu0
        %v2327 = vpop.trf.xlu0
        %v2328 = vpop.trf.xlu0
        %v2329 = vpop.trf.xlu0
        %v2330 = vpop.trf.xlu0
        %v2331 = vpop.trf.xlu0
        %v2332 = vpop.trf.xlu0
        %v2333 = vpop.trf.xlu0
        %v2334 = vpop.trf.xlu0
        %v2335 = vpop.trf.xlu0
        %v2336 = vpop.trf.xlu0
        %v2338 = vsel %vm455, %v2321, 0
        %2340 = vmatpush.msra.mxu0 0.0
        %2341 = vmatpush.msra.mxu0 0.0
        %2342 = vmatpush.msra.mxu0 0.0
        %2343 = vmatpush.msra.mxu0 0.0
        %2344 = vmatpush.msra.mxu0 0.0
        %2345 = vmatpush.msra.mxu0 0.0
        %2346 = vmatpush.msra.mxu0 0.0
        %2347 = vmatpush.msra.mxu0 0.0
        %2348 = vmatpush.msra.mxu0 0.0
        %2349 = vmatpush.msra.mxu0 0.0
        %2350 = vmatpush.msra.mxu0 0.0
        %2351 = vmatpush.msra.mxu0 0.0
        %2352 = vmatpush.msra.mxu0 0.0
        %2353 = vmatpush.msra.mxu0 0.0
        %2354 = vmatpush.msra.mxu0 0.0
        %2355 = vmatpush.msra.mxu0 %v485
        %2356 = vmatmul.f32.gmra.mxu0 %v2338
        %v2357 = vpop.f32.mrf.mxu0
        %v2358 = vadd.f32 %v1478, %v2357
        %2359 = vdwg.mxu0
        %2360 = vxpose.xlu0.b32.start [1/16] %v635, 128
        %2361 = vxpose.xlu0.b32.cont [2/16] 0.0, 128
        %2362 = vxpose.xlu0.b32.cont [3/16] 0.0, 128
        %2363 = vxpose.xlu0.b32.cont [4/16] 0.0, 128
        %2364 = vxpose.xlu0.b32.cont [5/16] 0.0, 128
        %2365 = vxpose.xlu0.b32.cont [6/16] 0.0, 128
        %2366 = vxpose.xlu0.b32.cont [7/16] 0.0, 128
        %2367 = vxpose.xlu0.b32.cont [8/16] 0.0, 128
        %2368 = vxpose.xlu0.b32.cont [9/16] 0.0, 128
        %2369 = vxpose.xlu0.b32.cont [10/16] 0.0, 128
        %2370 = vxpose.xlu0.b32.cont [11/16] 0.0, 128
        %2371 = vxpose.xlu0.b32.cont [12/16] 0.0, 128
        %2372 = vxpose.xlu0.b32.cont [13/16] 0.0, 128
        %2373 = vxpose.xlu0.b32.cont [14/16] 0.0, 128
        %2374 = vxpose.xlu0.b32.cont [15/16] 0.0, 128
        %2375 = vxpose.xlu0.b32.end [16/16] 0.0, 128
        %v2376 = vpop.trf.xlu0
        %v2377 = vpop.trf.xlu0
        %v2378 = vpop.trf.xlu0
        %v2379 = vpop.trf.xlu0
        %v2380 = vpop.trf.xlu0
        %v2381 = vpop.trf.xlu0
        %v2382 = vpop.trf.xlu0
        %v2383 = vpop.trf.xlu0
        %v2384 = vpop.trf.xlu0
        %v2385 = vpop.trf.xlu0
        %v2386 = vpop.trf.xlu0
        %v2387 = vpop.trf.xlu0
        %v2388 = vpop.trf.xlu0
        %v2389 = vpop.trf.xlu0
        %v2390 = vpop.trf.xlu0
        %v2391 = vpop.trf.xlu0
        %v2393 = vsel %vm455, %v2376, 0
        %2395 = vmatpush.msra.mxu0 0.0
        %2396 = vmatpush.msra.mxu0 0.0
        %2397 = vmatpush.msra.mxu0 0.0
        %2398 = vmatpush.msra.mxu0 0.0
        %2399 = vmatpush.msra.mxu0 0.0
        %2400 = vmatpush.msra.mxu0 0.0
        %2401 = vmatpush.msra.mxu0 0.0
        %2402 = vmatpush.msra.mxu0 0.0
        %2403 = vmatpush.msra.mxu0 0.0
        %2404 = vmatpush.msra.mxu0 0.0
        %2405 = vmatpush.msra.mxu0 0.0
        %2406 = vmatpush.msra.mxu0 0.0
        %2407 = vmatpush.msra.mxu0 0.0
        %2408 = vmatpush.msra.mxu0 0.0
        %2409 = vmatpush.msra.mxu0 0.0
        %2410 = vmatpush.msra.mxu0 %v485
        %2411 = vmatmul.f32.gmra.mxu0 %v2393
        %v2412 = vpop.f32.mrf.mxu0
        %v2413 = vadd.f32 %v1533, %v2412
        %2414 = vdwg.mxu0
        %2415 = vxpose.xlu0.b32.start [1/16] %v638, 128
        %2416 = vxpose.xlu0.b32.cont [2/16] 0.0, 128
        %2417 = vxpose.xlu0.b32.cont [3/16] 0.0, 128
        %2418 = vxpose.xlu0.b32.cont [4/16] 0.0, 128
        %2419 = vxpose.xlu0.b32.cont [5/16] 0.0, 128
        %2420 = vxpose.xlu0.b32.cont [6/16] 0.0, 128
        %2421 = vxpose.xlu0.b32.cont [7/16] 0.0, 128
        %2422 = vxpose.xlu0.b32.cont [8/16] 0.0, 128
        %2423 = vxpose.xlu0.b32.cont [9/16] 0.0, 128
        %2424 = vxpose.xlu0.b32.cont [10/16] 0.0, 128
        %2425 = vxpose.xlu0.b32.cont [11/16] 0.0, 128
        %2426 = vxpose.xlu0.b32.cont [12/16] 0.0, 128
        %2427 = vxpose.xlu0.b32.cont [13/16] 0.0, 128
        %2428 = vxpose.xlu0.b32.cont [14/16] 0.0, 128
        %2429 = vxpose.xlu0.b32.cont [15/16] 0.0, 128
        %2430 = vxpose.xlu0.b32.end [16/16] 0.0, 128
        %v2431 = vpop.trf.xlu0
        %v2432 = vpop.trf.xlu0
        %v2433 = vpop.trf.xlu0
        %v2434 = vpop.trf.xlu0
        %v2435 = vpop.trf.xlu0
        %v2436 = vpop.trf.xlu0
        %v2437 = vpop.trf.xlu0
        %v2438 = vpop.trf.xlu0
        %v2439 = vpop.trf.xlu0
        %v2440 = vpop.trf.xlu0
        %v2441 = vpop.trf.xlu0
        %v2442 = vpop.trf.xlu0
        %v2443 = vpop.trf.xlu0
        %v2444 = vpop.trf.xlu0
        %v2445 = vpop.trf.xlu0
        %v2446 = vpop.trf.xlu0
        %v2448 = vsel %vm455, %v2431, 0
        %2450 = vmatpush.msra.mxu0 0.0
        %2451 = vmatpush.msra.mxu0 0.0
        %2452 = vmatpush.msra.mxu0 0.0
        %2453 = vmatpush.msra.mxu0 0.0
        %2454 = vmatpush.msra.mxu0 0.0
        %2455 = vmatpush.msra.mxu0 0.0
        %2456 = vmatpush.msra.mxu0 0.0
        %2457 = vmatpush.msra.mxu0 0.0
        %2458 = vmatpush.msra.mxu0 0.0
        %2459 = vmatpush.msra.mxu0 0.0
        %2460 = vmatpush.msra.mxu0 0.0
        %2461 = vmatpush.msra.mxu0 0.0
        %2462 = vmatpush.msra.mxu0 0.0
        %2463 = vmatpush.msra.mxu0 0.0
        %2464 = vmatpush.msra.mxu0 0.0
        %2465 = vmatpush.msra.mxu0 %v485
        %2466 = vmatmul.f32.gmra.mxu0 %v2448
        %v2467 = vpop.f32.mrf.mxu0
        %v2468 = vadd.f32 %v1588, %v2467
        %2469 = vdwg.mxu0
        %2471 = vset.pattern.permute.xlu0 0
        %2472 = vperm.xlu0 %2471, %v488
        %v2473 = vpop.permute.xlu0 %2472
        %v2475 = vadd.f32 %v1643, %v2473
        %v2476 = vadd.f32 %v1698, %v2473
        %v2477 = vadd.f32 %v1753, %v2473
        %v2478 = vadd.f32 %v1808, %v2473
        %v2479 = vadd.f32 %v1863, %v2473
        %v2480 = vadd.f32 %v1918, %v2473
        %v2481 = vadd.f32 %v1973, %v2473
        %v2482 = vadd.f32 %v2028, %v2473
        %v2483 = vadd.f32 %v2083, %v2473
        %v2484 = vadd.f32 %v2138, %v2473
        %v2485 = vadd.f32 %v2193, %v2473
        %v2486 = vadd.f32 %v2248, %v2473
        %v2487 = vadd.f32 %v2303, %v2473
        %v2488 = vadd.f32 %v2358, %v2473
        %v2489 = vadd.f32 %v2413, %v2473
        %v2490 = vadd.f32 %v2468, %v2473
        %v2491 = vrot.slane %v2477, 4
        %v2492 = vsel %vm283, %v2491, %v2475
        %v2493 = vrot.slane %v2475, 4
        %v2494 = vsel %vm283, %v2477, %v2493
        %v2496 = vunpack.c.l.s4 1983009808
        %v2497 = vunpack.c.0.s8 %v2496
        %v2498 = vperm.slane %v2492, %v2497
        %v2500 = vunpack.c.l.s4 1983009808
        %v2501 = vunpack.c.0.s8 %v2500
        %v2502 = vperm.slane %v2494, %v2501
        %v2503 = vrot.slane %v2478, 4
        %v2504 = vsel %vm283, %v2503, %v2476
        %v2505 = vrot.slane %v2476, 4
        %v2506 = vsel %vm283, %v2478, %v2505
        %v2508 = vunpack.c.l.s4 1983009808
        %v2509 = vunpack.c.0.s8 %v2508
        %v2510 = vperm.slane %v2504, %v2509
        %v2512 = vunpack.c.l.s4 1983009808
        %v2513 = vunpack.c.0.s8 %v2512
        %v2514 = vperm.slane %v2506, %v2513
        %v2515 = vrot.slane %v2481, 4
        %v2516 = vsel %vm283, %v2515, %v2479
        %v2517 = vrot.slane %v2479, 4
        %v2518 = vsel %vm283, %v2481, %v2517
        %v2520 = vunpack.c.l.s4 1983009808
        %v2521 = vunpack.c.0.s8 %v2520
        %v2522 = vperm.slane %v2516, %v2521
        %v2524 = vunpack.c.l.s4 1983009808
        %v2525 = vunpack.c.0.s8 %v2524
        %v2526 = vperm.slane %v2518, %v2525
        %v2527 = vrot.slane %v2482, 4
        %v2528 = vsel %vm283, %v2527, %v2480
        %v2529 = vrot.slane %v2480, 4
        %v2530 = vsel %vm283, %v2482, %v2529
        %v2532 = vunpack.c.l.s4 1983009808
        %v2533 = vunpack.c.0.s8 %v2532
        %v2534 = vperm.slane %v2528, %v2533
        %v2536 = vunpack.c.l.s4 1983009808
        %v2537 = vunpack.c.0.s8 %v2536
        %v2538 = vperm.slane %v2530, %v2537
        %v2539 = vrot.slane %v2510, 4
        %v2540 = vsel %vm283, %v2539, %v2498
        %v2541 = vrot.slane %v2498, 4
        %v2542 = vsel %vm283, %v2510, %v2541
        %v2544 = vunpack.c.l.s4 1934713408
        %v2545 = vunpack.c.0.s8 %v2544
        %v2546 = vperm.slane %v2540, %v2545
        %v2548 = vunpack.c.l.s4 1934713408
        %v2549 = vunpack.c.0.s8 %v2548
        %v2550 = vperm.slane %v2542, %v2549
        %v2551 = vrot.slane %v2514, 4
        %v2552 = vsel %vm283, %v2551, %v2502
        %v2553 = vrot.slane %v2502, 4
        %v2554 = vsel %vm283, %v2514, %v2553
        %v2556 = vunpack.c.l.s4 1934713408
        %v2557 = vunpack.c.0.s8 %v2556
        %v2558 = vperm.slane %v2552, %v2557
        %v2560 = vunpack.c.l.s4 1934713408
        %v2561 = vunpack.c.0.s8 %v2560
        %v2562 = vperm.slane %v2554, %v2561
        %v2563 = vrot.slane %v2534, 4
        %v2564 = vsel %vm283, %v2563, %v2522
        %v2565 = vrot.slane %v2522, 4
        %v2566 = vsel %vm283, %v2534, %v2565
        %v2568 = vunpack.c.l.s4 1934713408
        %v2569 = vunpack.c.0.s8 %v2568
        %v2570 = vperm.slane %v2564, %v2569
        %v2572 = vunpack.c.l.s4 1934713408
        %v2573 = vunpack.c.0.s8 %v2572
        %v2574 = vperm.slane %v2566, %v2573
        %v2575 = vrot.slane %v2538, 4
        %v2576 = vsel %vm283, %v2575, %v2526
        %v2577 = vrot.slane %v2526, 4
        %v2578 = vsel %vm283, %v2538, %v2577
        %v2580 = vunpack.c.l.s4 1934713408
        %v2581 = vunpack.c.0.s8 %v2580
        %v2582 = vperm.slane %v2576, %v2581
        %v2584 = vunpack.c.l.s4 1934713408
        %v2585 = vunpack.c.0.s8 %v2584
        %v2586 = vperm.slane %v2578, %v2585
        %v2587 = vrot.slane %v2570, 4
        %v2588 = vsel %vm283, %v2587, %v2546
        %v2589 = vrot.slane %v2546, 4
        %v2590 = vsel %vm283, %v2570, %v2589
        %v2591 = vrot.slane %v2574, 4
        %v2592 = vsel %vm283, %v2591, %v2550
        %v2593 = vrot.slane %v2550, 4
        %v2594 = vsel %vm283, %v2574, %v2593
        %v2595 = vrot.slane %v2582, 4
        %v2596 = vsel %vm283, %v2595, %v2558
        %v2597 = vrot.slane %v2558, 4
        %v2598 = vsel %vm283, %v2582, %v2597
        %v2599 = vrot.slane %v2586, 4
        %v2600 = vsel %vm283, %v2599, %v2562
        %v2601 = vrot.slane %v2562, 4
        %v2602 = vsel %vm283, %v2586, %v2601
        %v2603 = vrot.slane %v2485, 4
        %v2604 = vsel %vm283, %v2603, %v2483
        %v2605 = vrot.slane %v2483, 4
        %v2606 = vsel %vm283, %v2485, %v2605
        %v2608 = vunpack.c.l.s4 1983009808
        %v2609 = vunpack.c.0.s8 %v2608
        %v2610 = vperm.slane %v2604, %v2609
        %v2612 = vunpack.c.l.s4 1983009808
        %v2613 = vunpack.c.0.s8 %v2612
        %v2614 = vperm.slane %v2606, %v2613
        %v2615 = vrot.slane %v2486, 4
        %v2616 = vsel %vm283, %v2615, %v2484
        %v2617 = vrot.slane %v2484, 4
        %v2618 = vsel %vm283, %v2486, %v2617
        %v2620 = vunpack.c.l.s4 1983009808
        %v2621 = vunpack.c.0.s8 %v2620
        %v2622 = vperm.slane %v2616, %v2621
        %v2624 = vunpack.c.l.s4 1983009808
        %v2625 = vunpack.c.0.s8 %v2624
        %v2626 = vperm.slane %v2618, %v2625
        %v2627 = vrot.slane %v2489, 4
        %v2628 = vsel %vm283, %v2627, %v2487
        %v2629 = vrot.slane %v2487, 4
        %v2630 = vsel %vm283, %v2489, %v2629
        %v2632 = vunpack.c.l.s4 1983009808
        %v2633 = vunpack.c.0.s8 %v2632
        %v2634 = vperm.slane %v2628, %v2633
        %v2636 = vunpack.c.l.s4 1983009808
        %v2637 = vunpack.c.0.s8 %v2636
        %v2638 = vperm.slane %v2630, %v2637
        %v2639 = vrot.slane %v2490, 4
        %v2640 = vsel %vm283, %v2639, %v2488
        %v2641 = vrot.slane %v2488, 4
        %v2642 = vsel %vm283, %v2490, %v2641
        %v2644 = vunpack.c.l.s4 1983009808
        %v2645 = vunpack.c.0.s8 %v2644
        %v2646 = vperm.slane %v2640, %v2645
        %v2648 = vunpack.c.l.s4 1983009808
        %v2649 = vunpack.c.0.s8 %v2648
        %v2650 = vperm.slane %v2642, %v2649
        %v2651 = vrot.slane %v2622, 4
        %v2652 = vsel %vm283, %v2651, %v2610
        %v2653 = vrot.slane %v2610, 4
        %v2654 = vsel %vm283, %v2622, %v2653
        %v2656 = vunpack.c.l.s4 1934713408
        %v2657 = vunpack.c.0.s8 %v2656
        %v2658 = vperm.slane %v2652, %v2657
        %v2660 = vunpack.c.l.s4 1934713408
        %v2661 = vunpack.c.0.s8 %v2660
        %v2662 = vperm.slane %v2654, %v2661
        %v2663 = vrot.slane %v2626, 4
        %v2664 = vsel %vm283, %v2663, %v2614
        %v2665 = vrot.slane %v2614, 4
        %v2666 = vsel %vm283, %v2626, %v2665
        %v2668 = vunpack.c.l.s4 1934713408
        %v2669 = vunpack.c.0.s8 %v2668
        %v2670 = vperm.slane %v2664, %v2669
        %v2672 = vunpack.c.l.s4 1934713408
        %v2673 = vunpack.c.0.s8 %v2672
        %v2674 = vperm.slane %v2666, %v2673
        %v2675 = vrot.slane %v2646, 4
        %v2676 = vsel %vm283, %v2675, %v2634
        %v2677 = vrot.slane %v2634, 4
        %v2678 = vsel %vm283, %v2646, %v2677
        %v2680 = vunpack.c.l.s4 1934713408
        %v2681 = vunpack.c.0.s8 %v2680
        %v2682 = vperm.slane %v2676, %v2681
        %v2684 = vunpack.c.l.s4 1934713408
        %v2685 = vunpack.c.0.s8 %v2684
        %v2686 = vperm.slane %v2678, %v2685
        %v2687 = vrot.slane %v2650, 4
        %v2688 = vsel %vm283, %v2687, %v2638
        %v2689 = vrot.slane %v2638, 4
        %v2690 = vsel %vm283, %v2650, %v2689
        %v2692 = vunpack.c.l.s4 1934713408
        %v2693 = vunpack.c.0.s8 %v2692
        %v2694 = vperm.slane %v2688, %v2693
        %v2696 = vunpack.c.l.s4 1934713408
        %v2697 = vunpack.c.0.s8 %v2696
        %v2698 = vperm.slane %v2690, %v2697
        %v2699 = vrot.slane %v2682, 4
        %v2700 = vsel %vm283, %v2699, %v2658
        %v2701 = vrot.slane %v2658, 4
        %v2702 = vsel %vm283, %v2682, %v2701
        %v2703 = vrot.slane %v2686, 4
        %v2704 = vsel %vm283, %v2703, %v2662
        %v2705 = vrot.slane %v2662, 4
        %v2706 = vsel %vm283, %v2686, %v2705
        %v2707 = vrot.slane %v2694, 4
        %v2708 = vsel %vm283, %v2707, %v2670
        %v2709 = vrot.slane %v2670, 4
        %v2710 = vsel %vm283, %v2694, %v2709
        %v2711 = vrot.slane %v2698, 4
        %v2712 = vsel %vm283, %v2711, %v2674
        %v2713 = vrot.slane %v2674, 4
        %v2714 = vsel %vm283, %v2698, %v2713
        %2715 = vst.msk [vmem:[%s273] sm:$0xff] %vm457, %v2588
        %2716 = vst.msk [vmem:[%s273 + $0x8] sm:$0xff] %vm457, %v2700
        %2717 = vst.msk [vmem:[%s273 + $0x20] sm:$0xff] %vm457, %v2590
        %2718 = vst.msk [vmem:[%s273 + $0x28] sm:$0xff] %vm457, %v2702
        %2719 = vst.msk [vmem:[%s273 + $0x40] sm:$0xff] %vm457, %v2592
        %2720 = vst.msk [vmem:[%s273 + $0x48] sm:$0xff] %vm457, %v2704
        %2721 = vst.msk [vmem:[%s273 + $0x60] sm:$0xff] %vm457, %v2594
        %2722 = vst.msk [vmem:[%s273 + $0x68] sm:$0xff] %vm457, %v2706
        %2723 = vst.msk [vmem:[%s273 + $0x80] sm:$0xff] %vm457, %v2596
        %2724 = vst.msk [vmem:[%s273 + $0x88] sm:$0xff] %vm457, %v2708
        %2725 = vst.msk [vmem:[%s273 + $0xa0] sm:$0xff] %vm457, %v2598
        %2726 = vst.msk [vmem:[%s273 + $0xa8] sm:$0xff] %vm457, %v2710
        %2727 = vst.msk [vmem:[%s273 + $0xc0] sm:$0xff] %vm457, %v2600
        %2728 = vst.msk [vmem:[%s273 + $0xc8] sm:$0xff] %vm457, %v2712
        %2729 = vst.msk [vmem:[%s273 + $0xe0] sm:$0xff] %vm457, %v2602
        %2730 = vst.msk [vmem:[%s273 + $0xe8] sm:$0xff] %vm457, %v2714
        %s2731 = scalar_lea.vmem %s0, 8
        %v2732 = vld [vmem:[%s2731] sm:$0xf]
        %v2734 = vsel %vm571, %v2732, 0
        %2736 = vmatpush.msra.mxu0 0.0
        %2737 = vmatpush.msra.mxu0 0.0
        %2738 = vmatpush.msra.mxu0 0.0
        %2739 = vmatpush.msra.mxu0 0.0
        %2740 = vmatpush.msra.mxu0 0.0
        %2741 = vmatpush.msra.mxu0 0.0
        %2742 = vmatpush.msra.mxu0 0.0
        %2743 = vmatpush.msra.mxu0 0.0
        %2744 = vmatpush.msra.mxu0 0.0
        %2745 = vmatpush.msra.mxu0 0.0
        %2746 = vmatpush.msra.mxu0 0.0
        %2747 = vmatpush.msra.mxu0 0.0
        %2748 = vmatpush.msra.mxu0 0.0
        %2749 = vmatpush.msra.mxu0 0.0
        %2750 = vmatpush.msra.mxu0 0.0
        %2751 = vmatpush.msra.mxu0 %v2734
        %2752 = vmatmul.f32.gmra.mxu0 %v524
        %v2753 = vpop.f32.mrf.mxu0
        %v2754 = vadd.f32 0.0, %v2753
        %2755 = vmatmul.f32.gmra.mxu0 %v527
        %v2756 = vpop.f32.mrf.mxu0
        %v2757 = vadd.f32 0.0, %v2756
        %2758 = vmatmul.f32.gmra.mxu0 %v530
        %v2759 = vpop.f32.mrf.mxu0
        %v2760 = vadd.f32 0.0, %v2759
        %2761 = vmatmul.f32.gmra.mxu0 %v533
        %v2762 = vpop.f32.mrf.mxu0
        %v2763 = vadd.f32 0.0, %v2762
        %2764 = vmatmul.f32.gmra.mxu0 %v536
        %v2765 = vpop.f32.mrf.mxu0
        %v2766 = vadd.f32 0.0, %v2765
        %2767 = vmatmul.f32.gmra.mxu0 %v539
        %v2768 = vpop.f32.mrf.mxu0
        %v2769 = vadd.f32 0.0, %v2768
        %2770 = vmatmul.f32.gmra.mxu0 %v542
        %v2771 = vpop.f32.mrf.mxu0
        %v2772 = vadd.f32 0.0, %v2771
        %2773 = vmatmul.f32.gmra.mxu0 %v545
        %v2774 = vpop.f32.mrf.mxu0
        %v2775 = vadd.f32 0.0, %v2774
        %2776 = vmatmul.f32.gmra.mxu0 %v548
        %v2777 = vpop.f32.mrf.mxu0
        %v2778 = vadd.f32 0.0, %v2777
        %2779 = vmatmul.f32.gmra.mxu0 %v551
        %v2780 = vpop.f32.mrf.mxu0
        %v2781 = vadd.f32 0.0, %v2780
        %2782 = vmatmul.f32.gmra.mxu0 %v554
        %v2783 = vpop.f32.mrf.mxu0
        %v2784 = vadd.f32 0.0, %v2783
        %2785 = vmatmul.f32.gmra.mxu0 %v557
        %v2786 = vpop.f32.mrf.mxu0
        %v2787 = vadd.f32 0.0, %v2786
        %2788 = vmatmul.f32.gmra.mxu0 %v560
        %v2789 = vpop.f32.mrf.mxu0
        %v2790 = vadd.f32 0.0, %v2789
        %2791 = vmatmul.f32.gmra.mxu0 %v563
        %v2792 = vpop.f32.mrf.mxu0
        %v2793 = vadd.f32 0.0, %v2792
        %2794 = vmatmul.f32.gmra.mxu0 %v566
        %v2795 = vpop.f32.mrf.mxu0
        %v2796 = vadd.f32 0.0, %v2795
        %2797 = vmatmul.f32.gmra.mxu0 %v569
        %v2798 = vpop.f32.mrf.mxu0
        %v2799 = vadd.f32 0.0, %v2798
        %2800 = vdwg.mxu0
        %s2801 = scalar_lea.vmem %s0, 12
        %v2802 = vld [vmem:[%s2801] sm:$0xf]
        %v2804 = vsel %vm571, %v2802, 0
        %2806 = vmatpush.msra.mxu0 0.0
        %2807 = vmatpush.msra.mxu0 0.0
        %2808 = vmatpush.msra.mxu0 0.0
        %2809 = vmatpush.msra.mxu0 0.0
        %2810 = vmatpush.msra.mxu0 0.0
        %2811 = vmatpush.msra.mxu0 0.0
        %2812 = vmatpush.msra.mxu0 0.0
        %2813 = vmatpush.msra.mxu0 0.0
        %2814 = vmatpush.msra.mxu0 0.0
        %2815 = vmatpush.msra.mxu0 0.0
        %2816 = vmatpush.msra.mxu0 0.0
        %2817 = vmatpush.msra.mxu0 0.0
        %2818 = vmatpush.msra.mxu0 0.0
        %2819 = vmatpush.msra.mxu0 0.0
        %2820 = vmatpush.msra.mxu0 0.0
        %2821 = vmatpush.msra.mxu0 %v2804
        %2822 = vmatmul.f32.gmra.mxu0 %v524
        %v2823 = vpop.f32.mrf.mxu0
        %v2824 = vadd.f32 0.0, %v2823
        %2825 = vmatmul.f32.gmra.mxu0 %v527
        %v2826 = vpop.f32.mrf.mxu0
        %v2827 = vadd.f32 0.0, %v2826
        %2828 = vmatmul.f32.gmra.mxu0 %v530
        %v2829 = vpop.f32.mrf.mxu0
        %v2830 = vadd.f32 0.0, %v2829
        %2831 = vmatmul.f32.gmra.mxu0 %v533
        %v2832 = vpop.f32.mrf.mxu0
        %v2833 = vadd.f32 0.0, %v2832
        %2834 = vmatmul.f32.gmra.mxu0 %v536
        %v2835 = vpop.f32.mrf.mxu0
        %v2836 = vadd.f32 0.0, %v2835
        %2837 = vmatmul.f32.gmra.mxu0 %v539
        %v2838 = vpop.f32.mrf.mxu0
        %v2839 = vadd.f32 0.0, %v2838
        %2840 = vmatmul.f32.gmra.mxu0 %v542
        %v2841 = vpop.f32.mrf.mxu0
        %v2842 = vadd.f32 0.0, %v2841
        %2843 = vmatmul.f32.gmra.mxu0 %v545
        %v2844 = vpop.f32.mrf.mxu0
        %v2845 = vadd.f32 0.0, %v2844
        %2846 = vmatmul.f32.gmra.mxu0 %v548
        %v2847 = vpop.f32.mrf.mxu0
        %v2848 = vadd.f32 0.0, %v2847
        %2849 = vmatmul.f32.gmra.mxu0 %v551
        %v2850 = vpop.f32.mrf.mxu0
        %v2851 = vadd.f32 0.0, %v2850
        %2852 = vmatmul.f32.gmra.mxu0 %v554
        %v2853 = vpop.f32.mrf.mxu0
        %v2854 = vadd.f32 0.0, %v2853
        %2855 = vmatmul.f32.gmra.mxu0 %v557
        %v2856 = vpop.f32.mrf.mxu0
        %v2857 = vadd.f32 0.0, %v2856
        %2858 = vmatmul.f32.gmra.mxu0 %v560
        %v2859 = vpop.f32.mrf.mxu0
        %v2860 = vadd.f32 0.0, %v2859
        %2861 = vmatmul.f32.gmra.mxu0 %v563
        %v2862 = vpop.f32.mrf.mxu0
        %v2863 = vadd.f32 0.0, %v2862
        %2864 = vmatmul.f32.gmra.mxu0 %v566
        %v2865 = vpop.f32.mrf.mxu0
        %v2866 = vadd.f32 0.0, %v2865
        %2867 = vmatmul.f32.gmra.mxu0 %v569
        %v2868 = vpop.f32.mrf.mxu0
        %v2869 = vadd.f32 0.0, %v2868
        %2870 = vdwg.mxu0
        %2871 = vxpose.xlu0.b32.start [1/16] %v2824, 128
        %2872 = vxpose.xlu0.b32.cont [2/16] 0.0, 128
        %2873 = vxpose.xlu0.b32.cont [3/16] 0.0, 128
        %2874 = vxpose.xlu0.b32.cont [4/16] 0.0, 128
        %2875 = vxpose.xlu0.b32.cont [5/16] 0.0, 128
        %2876 = vxpose.xlu0.b32.cont [6/16] 0.0, 128
        %2877 = vxpose.xlu0.b32.cont [7/16] 0.0, 128
        %2878 = vxpose.xlu0.b32.cont [8/16] 0.0, 128
        %2879 = vxpose.xlu0.b32.cont [9/16] 0.0, 128
        %2880 = vxpose.xlu0.b32.cont [10/16] 0.0, 128
        %2881 = vxpose.xlu0.b32.cont [11/16] 0.0, 128
        %2882 = vxpose.xlu0.b32.cont [12/16] 0.0, 128
        %2883 = vxpose.xlu0.b32.cont [13/16] 0.0, 128
        %2884 = vxpose.xlu0.b32.cont [14/16] 0.0, 128
        %2885 = vxpose.xlu0.b32.cont [15/16] 0.0, 128
        %2886 = vxpose.xlu0.b32.end [16/16] 0.0, 128
        %v2887 = vpop.trf.xlu0
        %v2888 = vpop.trf.xlu0
        %v2889 = vpop.trf.xlu0
        %v2890 = vpop.trf.xlu0
        %v2891 = vpop.trf.xlu0
        %v2892 = vpop.trf.xlu0
        %v2893 = vpop.trf.xlu0
        %v2894 = vpop.trf.xlu0
        %v2895 = vpop.trf.xlu0
        %v2896 = vpop.trf.xlu0
        %v2897 = vpop.trf.xlu0
        %v2898 = vpop.trf.xlu0
        %v2899 = vpop.trf.xlu0
        %v2900 = vpop.trf.xlu0
        %v2901 = vpop.trf.xlu0
        %v2902 = vpop.trf.xlu0
        %v2904 = vsel %vm455, %v2887, 0
        %2906 = vmatpush.msra.mxu0 0.0
        %2907 = vmatpush.msra.mxu0 0.0
        %2908 = vmatpush.msra.mxu0 0.0
        %2909 = vmatpush.msra.mxu0 0.0
        %2910 = vmatpush.msra.mxu0 0.0
        %2911 = vmatpush.msra.mxu0 0.0
        %2912 = vmatpush.msra.mxu0 0.0
        %2913 = vmatpush.msra.mxu0 0.0
        %2914 = vmatpush.msra.mxu0 0.0
        %2915 = vmatpush.msra.mxu0 0.0
        %2916 = vmatpush.msra.mxu0 0.0
        %2917 = vmatpush.msra.mxu0 0.0
        %2918 = vmatpush.msra.mxu0 0.0
        %2919 = vmatpush.msra.mxu0 0.0
        %2920 = vmatpush.msra.mxu0 0.0
        %2921 = vmatpush.msra.mxu0 %v487
        %2922 = vmatmul.f32.gmra.mxu0 %v2904
        %v2923 = vpop.f32.mrf.mxu0
        %v2924 = vadd.f32 0.0, %v2923
        %2925 = vdwg.mxu0
        %2926 = vxpose.xlu0.b32.start [1/16] %v2827, 128
        %2927 = vxpose.xlu0.b32.cont [2/16] 0.0, 128
        %2928 = vxpose.xlu0.b32.cont [3/16] 0.0, 128
        %2929 = vxpose.xlu0.b32.cont [4/16] 0.0, 128
        %2930 = vxpose.xlu0.b32.cont [5/16] 0.0, 128
        %2931 = vxpose.xlu0.b32.cont [6/16] 0.0, 128
        %2932 = vxpose.xlu0.b32.cont [7/16] 0.0, 128
        %2933 = vxpose.xlu0.b32.cont [8/16] 0.0, 128
        %2934 = vxpose.xlu0.b32.cont [9/16] 0.0, 128
        %2935 = vxpose.xlu0.b32.cont [10/16] 0.0, 128
        %2936 = vxpose.xlu0.b32.cont [11/16] 0.0, 128
        %2937 = vxpose.xlu0.b32.cont [12/16] 0.0, 128
        %2938 = vxpose.xlu0.b32.cont [13/16] 0.0, 128
        %2939 = vxpose.xlu0.b32.cont [14/16] 0.0, 128
        %2940 = vxpose.xlu0.b32.cont [15/16] 0.0, 128
        %2941 = vxpose.xlu0.b32.end [16/16] 0.0, 128
        %v2942 = vpop.trf.xlu0
        %v2943 = vpop.trf.xlu0
        %v2944 = vpop.trf.xlu0
        %v2945 = vpop.trf.xlu0
        %v2946 = vpop.trf.xlu0
        %v2947 = vpop.trf.xlu0
        %v2948 = vpop.trf.xlu0
        %v2949 = vpop.trf.xlu0
        %v2950 = vpop.trf.xlu0
        %v2951 = vpop.trf.xlu0
        %v2952 = vpop.trf.xlu0
        %v2953 = vpop.trf.xlu0
        %v2954 = vpop.trf.xlu0
        %v2955 = vpop.trf.xlu0
        %v2956 = vpop.trf.xlu0
        %v2957 = vpop.trf.xlu0
        %v2959 = vsel %vm455, %v2942, 0
        %2961 = vmatpush.msra.mxu0 0.0
        %2962 = vmatpush.msra.mxu0 0.0
        %2963 = vmatpush.msra.mxu0 0.0
        %2964 = vmatpush.msra.mxu0 0.0
        %2965 = vmatpush.msra.mxu0 0.0
        %2966 = vmatpush.msra.mxu0 0.0
        %2967 = vmatpush.msra.mxu0 0.0
        %2968 = vmatpush.msra.mxu0 0.0
        %2969 = vmatpush.msra.mxu0 0.0
        %2970 = vmatpush.msra.mxu0 0.0
        %2971 = vmatpush.msra.mxu0 0.0
        %2972 = vmatpush.msra.mxu0 0.0
        %2973 = vmatpush.msra.mxu0 0.0
        %2974 = vmatpush.msra.mxu0 0.0
        %2975 = vmatpush.msra.mxu0 0.0
        %2976 = vmatpush.msra.mxu0 %v487
        %2977 = vmatmul.f32.gmra.mxu0 %v2959
        %v2978 = vpop.f32.mrf.mxu0
        %v2979 = vadd.f32 0.0, %v2978
        %2980 = vdwg.mxu0
        %2981 = vxpose.xlu0.b32.start [1/16] %v2830, 128
        %2982 = vxpose.xlu0.b32.cont [2/16] 0.0, 128
        %2983 = vxpose.xlu0.b32.cont [3/16] 0.0, 128
        %2984 = vxpose.xlu0.b32.cont [4/16] 0.0, 128
        %2985 = vxpose.xlu0.b32.cont [5/16] 0.0, 128
        %2986 = vxpose.xlu0.b32.cont [6/16] 0.0, 128
        %2987 = vxpose.xlu0.b32.cont [7/16] 0.0, 128
        %2988 = vxpose.xlu0.b32.cont [8/16] 0.0, 128
        %2989 = vxpose.xlu0.b32.cont [9/16] 0.0, 128
        %2990 = vxpose.xlu0.b32.cont [10/16] 0.0, 128
        %2991 = vxpose.xlu0.b32.cont [11/16] 0.0, 128
        %2992 = vxpose.xlu0.b32.cont [12/16] 0.0, 128
        %2993 = vxpose.xlu0.b32.cont [13/16] 0.0, 128
        %2994 = vxpose.xlu0.b32.cont [14/16] 0.0, 128
        %2995 = vxpose.xlu0.b32.cont [15/16] 0.0, 128
        %2996 = vxpose.xlu0.b32.end [16/16] 0.0, 128
        %v2997 = vpop.trf.xlu0
        %v2998 = vpop.trf.xlu0
        %v2999 = vpop.trf.xlu0
        %v3000 = vpop.trf.xlu0
        %v3001 = vpop.trf.xlu0
        %v3002 = vpop.trf.xlu0
        %v3003 = vpop.trf.xlu0
        %v3004 = vpop.trf.xlu0
        %v3005 = vpop.trf.xlu0
        %v3006 = vpop.trf.xlu0
        %v3007 = vpop.trf.xlu0
        %v3008 = vpop.trf.xlu0
        %v3009 = vpop.trf.xlu0
        %v3010 = vpop.trf.xlu0
        %v3011 = vpop.trf.xlu0
        %v3012 = vpop.trf.xlu0
        %v3014 = vsel %vm455, %v2997, 0
        %3016 = vmatpush.msra.mxu0 0.0
        %3017 = vmatpush.msra.mxu0 0.0
        %3018 = vmatpush.msra.mxu0 0.0
        %3019 = vmatpush.msra.mxu0 0.0
        %3020 = vmatpush.msra.mxu0 0.0
        %3021 = vmatpush.msra.mxu0 0.0
        %3022 = vmatpush.msra.mxu0 0.0
        %3023 = vmatpush.msra.mxu0 0.0
        %3024 = vmatpush.msra.mxu0 0.0
        %3025 = vmatpush.msra.mxu0 0.0
        %3026 = vmatpush.msra.mxu0 0.0
        %3027 = vmatpush.msra.mxu0 0.0
        %3028 = vmatpush.msra.mxu0 0.0
        %3029 = vmatpush.msra.mxu0 0.0
        %3030 = vmatpush.msra.mxu0 0.0
        %3031 = vmatpush.msra.mxu0 %v487
        %3032 = vmatmul.f32.gmra.mxu0 %v3014
        %v3033 = vpop.f32.mrf.mxu0
        %v3034 = vadd.f32 0.0, %v3033
        %3035 = vdwg.mxu0
        %3036 = vxpose.xlu0.b32.start [1/16] %v2833, 128
        %3037 = vxpose.xlu0.b32.cont [2/16] 0.0, 128
        %3038 = vxpose.xlu0.b32.cont [3/16] 0.0, 128
        %3039 = vxpose.xlu0.b32.cont [4/16] 0.0, 128
        %3040 = vxpose.xlu0.b32.cont [5/16] 0.0, 128
        %3041 = vxpose.xlu0.b32.cont [6/16] 0.0, 128
        %3042 = vxpose.xlu0.b32.cont [7/16] 0.0, 128
        %3043 = vxpose.xlu0.b32.cont [8/16] 0.0, 128
        %3044 = vxpose.xlu0.b32.cont [9/16] 0.0, 128
        %3045 = vxpose.xlu0.b32.cont [10/16] 0.0, 128
        %3046 = vxpose.xlu0.b32.cont [11/16] 0.0, 128
        %3047 = vxpose.xlu0.b32.cont [12/16] 0.0, 128
        %3048 = vxpose.xlu0.b32.cont [13/16] 0.0, 128
        %3049 = vxpose.xlu0.b32.cont [14/16] 0.0, 128
        %3050 = vxpose.xlu0.b32.cont [15/16] 0.0, 128
        %3051 = vxpose.xlu0.b32.end [16/16] 0.0, 128
        %v3052 = vpop.trf.xlu0
        %v3053 = vpop.trf.xlu0
        %v3054 = vpop.trf.xlu0
        %v3055 = vpop.trf.xlu0
        %v3056 = vpop.trf.xlu0
        %v3057 = vpop.trf.xlu0
        %v3058 = vpop.trf.xlu0
        %v3059 = vpop.trf.xlu0
        %v3060 = vpop.trf.xlu0
        %v3061 = vpop.trf.xlu0
        %v3062 = vpop.trf.xlu0
        %v3063 = vpop.trf.xlu0
        %v3064 = vpop.trf.xlu0
        %v3065 = vpop.trf.xlu0
        %v3066 = vpop.trf.xlu0
        %v3067 = vpop.trf.xlu0
        %v3069 = vsel %vm455, %v3052, 0
        %3071 = vmatpush.msra.mxu0 0.0
        %3072 = vmatpush.msra.mxu0 0.0
        %3073 = vmatpush.msra.mxu0 0.0
        %3074 = vmatpush.msra.mxu0 0.0
        %3075 = vmatpush.msra.mxu0 0.0
        %3076 = vmatpush.msra.mxu0 0.0
        %3077 = vmatpush.msra.mxu0 0.0
        %3078 = vmatpush.msra.mxu0 0.0
        %3079 = vmatpush.msra.mxu0 0.0
        %3080 = vmatpush.msra.mxu0 0.0
        %3081 = vmatpush.msra.mxu0 0.0
        %3082 = vmatpush.msra.mxu0 0.0
        %3083 = vmatpush.msra.mxu0 0.0
        %3084 = vmatpush.msra.mxu0 0.0
        %3085 = vmatpush.msra.mxu0 0.0
        %3086 = vmatpush.msra.mxu0 %v487
        %3087 = vmatmul.f32.gmra.mxu0 %v3069
        %v3088 = vpop.f32.mrf.mxu0
        %v3089 = vadd.f32 0.0, %v3088
        %3090 = vdwg.mxu0
        %3091 = vxpose.xlu0.b32.start [1/16] %v2836, 128
        %3092 = vxpose.xlu0.b32.cont [2/16] 0.0, 128
        %3093 = vxpose.xlu0.b32.cont [3/16] 0.0, 128
        %3094 = vxpose.xlu0.b32.cont [4/16] 0.0, 128
        %3095 = vxpose.xlu0.b32.cont [5/16] 0.0, 128
        %3096 = vxpose.xlu0.b32.cont [6/16] 0.0, 128
        %3097 = vxpose.xlu0.b32.cont [7/16] 0.0, 128
        %3098 = vxpose.xlu0.b32.cont [8/16] 0.0, 128
        %3099 = vxpose.xlu0.b32.cont [9/16] 0.0, 128
        %3100 = vxpose.xlu0.b32.cont [10/16] 0.0, 128
        %3101 = vxpose.xlu0.b32.cont [11/16] 0.0, 128
        %3102 = vxpose.xlu0.b32.cont [12/16] 0.0, 128
        %3103 = vxpose.xlu0.b32.cont [13/16] 0.0, 128
        %3104 = vxpose.xlu0.b32.cont [14/16] 0.0, 128
        %3105 = vxpose.xlu0.b32.cont [15/16] 0.0, 128
        %3106 = vxpose.xlu0.b32.end [16/16] 0.0, 128
        %v3107 = vpop.trf.xlu0
        %v3108 = vpop.trf.xlu0
        %v3109 = vpop.trf.xlu0
        %v3110 = vpop.trf.xlu0
        %v3111 = vpop.trf.xlu0
        %v3112 = vpop.trf.xlu0
        %v3113 = vpop.trf.xlu0
        %v3114 = vpop.trf.xlu0
        %v3115 = vpop.trf.xlu0
        %v3116 = vpop.trf.xlu0
        %v3117 = vpop.trf.xlu0
        %v3118 = vpop.trf.xlu0
        %v3119 = vpop.trf.xlu0
        %v3120 = vpop.trf.xlu0
        %v3121 = vpop.trf.xlu0
        %v3122 = vpop.trf.xlu0
        %v3124 = vsel %vm455, %v3107, 0
        %3126 = vmatpush.msra.mxu0 0.0
        %3127 = vmatpush.msra.mxu0 0.0
        %3128 = vmatpush.msra.mxu0 0.0
        %3129 = vmatpush.msra.mxu0 0.0
        %3130 = vmatpush.msra.mxu0 0.0
        %3131 = vmatpush.msra.mxu0 0.0
        %3132 = vmatpush.msra.mxu0 0.0
        %3133 = vmatpush.msra.mxu0 0.0
        %3134 = vmatpush.msra.mxu0 0.0
        %3135 = vmatpush.msra.mxu0 0.0
        %3136 = vmatpush.msra.mxu0 0.0
        %3137 = vmatpush.msra.mxu0 0.0
        %3138 = vmatpush.msra.mxu0 0.0
        %3139 = vmatpush.msra.mxu0 0.0
        %3140 = vmatpush.msra.mxu0 0.0
        %3141 = vmatpush.msra.mxu0 %v487
        %3142 = vmatmul.f32.gmra.mxu0 %v3124
        %v3143 = vpop.f32.mrf.mxu0
        %v3144 = vadd.f32 0.0, %v3143
        %3145 = vdwg.mxu0
        %3146 = vxpose.xlu0.b32.start [1/16] %v2839, 128
        %3147 = vxpose.xlu0.b32.cont [2/16] 0.0, 128
        %3148 = vxpose.xlu0.b32.cont [3/16] 0.0, 128
        %3149 = vxpose.xlu0.b32.cont [4/16] 0.0, 128
        %3150 = vxpose.xlu0.b32.cont [5/16] 0.0, 128
        %3151 = vxpose.xlu0.b32.cont [6/16] 0.0, 128
        %3152 = vxpose.xlu0.b32.cont [7/16] 0.0, 128
        %3153 = vxpose.xlu0.b32.cont [8/16] 0.0, 128
        %3154 = vxpose.xlu0.b32.cont [9/16] 0.0, 128
        %3155 = vxpose.xlu0.b32.cont [10/16] 0.0, 128
        %3156 = vxpose.xlu0.b32.cont [11/16] 0.0, 128
        %3157 = vxpose.xlu0.b32.cont [12/16] 0.0, 128
        %3158 = vxpose.xlu0.b32.cont [13/16] 0.0, 128
        %3159 = vxpose.xlu0.b32.cont [14/16] 0.0, 128
        %3160 = vxpose.xlu0.b32.cont [15/16] 0.0, 128
        %3161 = vxpose.xlu0.b32.end [16/16] 0.0, 128
        %v3162 = vpop.trf.xlu0
        %v3163 = vpop.trf.xlu0
        %v3164 = vpop.trf.xlu0
        %v3165 = vpop.trf.xlu0
        %v3166 = vpop.trf.xlu0
        %v3167 = vpop.trf.xlu0
        %v3168 = vpop.trf.xlu0
        %v3169 = vpop.trf.xlu0
        %v3170 = vpop.trf.xlu0
        %v3171 = vpop.trf.xlu0
        %v3172 = vpop.trf.xlu0
        %v3173 = vpop.trf.xlu0
        %v3174 = vpop.trf.xlu0
        %v3175 = vpop.trf.xlu0
        %v3176 = vpop.trf.xlu0
        %v3177 = vpop.trf.xlu0
        %v3179 = vsel %vm455, %v3162, 0
        %3181 = vmatpush.msra.mxu0 0.0
        %3182 = vmatpush.msra.mxu0 0.0
        %3183 = vmatpush.msra.mxu0 0.0
        %3184 = vmatpush.msra.mxu0 0.0
        %3185 = vmatpush.msra.mxu0 0.0
        %3186 = vmatpush.msra.mxu0 0.0
        %3187 = vmatpush.msra.mxu0 0.0
        %3188 = vmatpush.msra.mxu0 0.0
        %3189 = vmatpush.msra.mxu0 0.0
        %3190 = vmatpush.msra.mxu0 0.0
        %3191 = vmatpush.msra.mxu0 0.0
        %3192 = vmatpush.msra.mxu0 0.0
        %3193 = vmatpush.msra.mxu0 0.0
        %3194 = vmatpush.msra.mxu0 0.0
        %3195 = vmatpush.msra.mxu0 0.0
        %3196 = vmatpush.msra.mxu0 %v487
        %3197 = vmatmul.f32.gmra.mxu0 %v3179
        %v3198 = vpop.f32.mrf.mxu0
        %v3199 = vadd.f32 0.0, %v3198
        %3200 = vdwg.mxu0
        %3201 = vxpose.xlu0.b32.start [1/16] %v2842, 128
        %3202 = vxpose.xlu0.b32.cont [2/16] 0.0, 128
        %3203 = vxpose.xlu0.b32.cont [3/16] 0.0, 128
        %3204 = vxpose.xlu0.b32.cont [4/16] 0.0, 128
        %3205 = vxpose.xlu0.b32.cont [5/16] 0.0, 128
        %3206 = vxpose.xlu0.b32.cont [6/16] 0.0, 128
        %3207 = vxpose.xlu0.b32.cont [7/16] 0.0, 128
        %3208 = vxpose.xlu0.b32.cont [8/16] 0.0, 128
        %3209 = vxpose.xlu0.b32.cont [9/16] 0.0, 128
        %3210 = vxpose.xlu0.b32.cont [10/16] 0.0, 128
        %3211 = vxpose.xlu0.b32.cont [11/16] 0.0, 128
        %3212 = vxpose.xlu0.b32.cont [12/16] 0.0, 128
        %3213 = vxpose.xlu0.b32.cont [13/16] 0.0, 128
        %3214 = vxpose.xlu0.b32.cont [14/16] 0.0, 128
        %3215 = vxpose.xlu0.b32.cont [15/16] 0.0, 128
        %3216 = vxpose.xlu0.b32.end [16/16] 0.0, 128
        %v3217 = vpop.trf.xlu0
        %v3218 = vpop.trf.xlu0
        %v3219 = vpop.trf.xlu0
        %v3220 = vpop.trf.xlu0
        %v3221 = vpop.trf.xlu0
        %v3222 = vpop.trf.xlu0
        %v3223 = vpop.trf.xlu0
        %v3224 = vpop.trf.xlu0
        %v3225 = vpop.trf.xlu0
        %v3226 = vpop.trf.xlu0
        %v3227 = vpop.trf.xlu0
        %v3228 = vpop.trf.xlu0
        %v3229 = vpop.trf.xlu0
        %v3230 = vpop.trf.xlu0
        %v3231 = vpop.trf.xlu0
        %v3232 = vpop.trf.xlu0
        %v3234 = vsel %vm455, %v3217, 0
        %3236 = vmatpush.msra.mxu0 0.0
        %3237 = vmatpush.msra.mxu0 0.0
        %3238 = vmatpush.msra.mxu0 0.0
        %3239 = vmatpush.msra.mxu0 0.0
        %3240 = vmatpush.msra.mxu0 0.0
        %3241 = vmatpush.msra.mxu0 0.0
        %3242 = vmatpush.msra.mxu0 0.0
        %3243 = vmatpush.msra.mxu0 0.0
        %3244 = vmatpush.msra.mxu0 0.0
        %3245 = vmatpush.msra.mxu0 0.0
        %3246 = vmatpush.msra.mxu0 0.0
        %3247 = vmatpush.msra.mxu0 0.0
        %3248 = vmatpush.msra.mxu0 0.0
        %3249 = vmatpush.msra.mxu0 0.0
        %3250 = vmatpush.msra.mxu0 0.0
        %3251 = vmatpush.msra.mxu0 %v487
        %3252 = vmatmul.f32.gmra.mxu0 %v3234
        %v3253 = vpop.f32.mrf.mxu0
        %v3254 = vadd.f32 0.0, %v3253
        %3255 = vdwg.mxu0
        %3256 = vxpose.xlu0.b32.start [1/16] %v2845, 128
        %3257 = vxpose.xlu0.b32.cont [2/16] 0.0, 128
        %3258 = vxpose.xlu0.b32.cont [3/16] 0.0, 128
        %3259 = vxpose.xlu0.b32.cont [4/16] 0.0, 128
        %3260 = vxpose.xlu0.b32.cont [5/16] 0.0, 128
        %3261 = vxpose.xlu0.b32.cont [6/16] 0.0, 128
        %3262 = vxpose.xlu0.b32.cont [7/16] 0.0, 128
        %3263 = vxpose.xlu0.b32.cont [8/16] 0.0, 128
        %3264 = vxpose.xlu0.b32.cont [9/16] 0.0, 128
        %3265 = vxpose.xlu0.b32.cont [10/16] 0.0, 128
        %3266 = vxpose.xlu0.b32.cont [11/16] 0.0, 128
        %3267 = vxpose.xlu0.b32.cont [12/16] 0.0, 128
        %3268 = vxpose.xlu0.b32.cont [13/16] 0.0, 128
        %3269 = vxpose.xlu0.b32.cont [14/16] 0.0, 128
        %3270 = vxpose.xlu0.b32.cont [15/16] 0.0, 128
        %3271 = vxpose.xlu0.b32.end [16/16] 0.0, 128
        %v3272 = vpop.trf.xlu0
        %v3273 = vpop.trf.xlu0
        %v3274 = vpop.trf.xlu0
        %v3275 = vpop.trf.xlu0
        %v3276 = vpop.trf.xlu0
        %v3277 = vpop.trf.xlu0
        %v3278 = vpop.trf.xlu0
        %v3279 = vpop.trf.xlu0
        %v3280 = vpop.trf.xlu0
        %v3281 = vpop.trf.xlu0
        %v3282 = vpop.trf.xlu0
        %v3283 = vpop.trf.xlu0
        %v3284 = vpop.trf.xlu0
        %v3285 = vpop.trf.xlu0
        %v3286 = vpop.trf.xlu0
        %v3287 = vpop.trf.xlu0
        %v3289 = vsel %vm455, %v3272, 0
        %3291 = vmatpush.msra.mxu0 0.0
        %3292 = vmatpush.msra.mxu0 0.0
        %3293 = vmatpush.msra.mxu0 0.0
        %3294 = vmatpush.msra.mxu0 0.0
        %3295 = vmatpush.msra.mxu0 0.0
        %3296 = vmatpush.msra.mxu0 0.0
        %3297 = vmatpush.msra.mxu0 0.0
        %3298 = vmatpush.msra.mxu0 0.0
        %3299 = vmatpush.msra.mxu0 0.0
        %3300 = vmatpush.msra.mxu0 0.0
        %3301 = vmatpush.msra.mxu0 0.0
        %3302 = vmatpush.msra.mxu0 0.0
        %3303 = vmatpush.msra.mxu0 0.0
        %3304 = vmatpush.msra.mxu0 0.0
        %3305 = vmatpush.msra.mxu0 0.0
        %3306 = vmatpush.msra.mxu0 %v487
        %3307 = vmatmul.f32.gmra.mxu0 %v3289
        %v3308 = vpop.f32.mrf.mxu0
        %v3309 = vadd.f32 0.0, %v3308
        %3310 = vdwg.mxu0
        %3311 = vxpose.xlu0.b32.start [1/16] %v2848, 128
        %3312 = vxpose.xlu0.b32.cont [2/16] 0.0, 128
        %3313 = vxpose.xlu0.b32.cont [3/16] 0.0, 128
        %3314 = vxpose.xlu0.b32.cont [4/16] 0.0, 128
        %3315 = vxpose.xlu0.b32.cont [5/16] 0.0, 128
        %3316 = vxpose.xlu0.b32.cont [6/16] 0.0, 128
        %3317 = vxpose.xlu0.b32.cont [7/16] 0.0, 128
        %3318 = vxpose.xlu0.b32.cont [8/16] 0.0, 128
        %3319 = vxpose.xlu0.b32.cont [9/16] 0.0, 128
        %3320 = vxpose.xlu0.b32.cont [10/16] 0.0, 128
        %3321 = vxpose.xlu0.b32.cont [11/16] 0.0, 128
        %3322 = vxpose.xlu0.b32.cont [12/16] 0.0, 128
        %3323 = vxpose.xlu0.b32.cont [13/16] 0.0, 128
        %3324 = vxpose.xlu0.b32.cont [14/16] 0.0, 128
        %3325 = vxpose.xlu0.b32.cont [15/16] 0.0, 128
        %3326 = vxpose.xlu0.b32.end [16/16] 0.0, 128
        %v3327 = vpop.trf.xlu0
        %v3328 = vpop.trf.xlu0
        %v3329 = vpop.trf.xlu0
        %v3330 = vpop.trf.xlu0
        %v3331 = vpop.trf.xlu0
        %v3332 = vpop.trf.xlu0
        %v3333 = vpop.trf.xlu0
        %v3334 = vpop.trf.xlu0
        %v3335 = vpop.trf.xlu0
        %v3336 = vpop.trf.xlu0
        %v3337 = vpop.trf.xlu0
        %v3338 = vpop.trf.xlu0
        %v3339 = vpop.trf.xlu0
        %v3340 = vpop.trf.xlu0
        %v3341 = vpop.trf.xlu0
        %v3342 = vpop.trf.xlu0
        %v3344 = vsel %vm455, %v3327, 0
        %3346 = vmatpush.msra.mxu0 0.0
        %3347 = vmatpush.msra.mxu0 0.0
        %3348 = vmatpush.msra.mxu0 0.0
        %3349 = vmatpush.msra.mxu0 0.0
        %3350 = vmatpush.msra.mxu0 0.0
        %3351 = vmatpush.msra.mxu0 0.0
        %3352 = vmatpush.msra.mxu0 0.0
        %3353 = vmatpush.msra.mxu0 0.0
        %3354 = vmatpush.msra.mxu0 0.0
        %3355 = vmatpush.msra.mxu0 0.0
        %3356 = vmatpush.msra.mxu0 0.0
        %3357 = vmatpush.msra.mxu0 0.0
        %3358 = vmatpush.msra.mxu0 0.0
        %3359 = vmatpush.msra.mxu0 0.0
        %3360 = vmatpush.msra.mxu0 0.0
        %3361 = vmatpush.msra.mxu0 %v487
        %3362 = vmatmul.f32.gmra.mxu0 %v3344
        %v3363 = vpop.f32.mrf.mxu0
        %v3364 = vadd.f32 0.0, %v3363
        %3365 = vdwg.mxu0
        %3366 = vxpose.xlu0.b32.start [1/16] %v2851, 128
        %3367 = vxpose.xlu0.b32.cont [2/16] 0.0, 128
        %3368 = vxpose.xlu0.b32.cont [3/16] 0.0, 128
        %3369 = vxpose.xlu0.b32.cont [4/16] 0.0, 128
        %3370 = vxpose.xlu0.b32.cont [5/16] 0.0, 128
        %3371 = vxpose.xlu0.b32.cont [6/16] 0.0, 128
        %3372 = vxpose.xlu0.b32.cont [7/16] 0.0, 128
        %3373 = vxpose.xlu0.b32.cont [8/16] 0.0, 128
        %3374 = vxpose.xlu0.b32.cont [9/16] 0.0, 128
        %3375 = vxpose.xlu0.b32.cont [10/16] 0.0, 128
        %3376 = vxpose.xlu0.b32.cont [11/16] 0.0, 128
        %3377 = vxpose.xlu0.b32.cont [12/16] 0.0, 128
        %3378 = vxpose.xlu0.b32.cont [13/16] 0.0, 128
        %3379 = vxpose.xlu0.b32.cont [14/16] 0.0, 128
        %3380 = vxpose.xlu0.b32.cont [15/16] 0.0, 128
        %3381 = vxpose.xlu0.b32.end [16/16] 0.0, 128
        %v3382 = vpop.trf.xlu0
        %v3383 = vpop.trf.xlu0
        %v3384 = vpop.trf.xlu0
        %v3385 = vpop.trf.xlu0
        %v3386 = vpop.trf.xlu0
        %v3387 = vpop.trf.xlu0
        %v3388 = vpop.trf.xlu0
        %v3389 = vpop.trf.xlu0
        %v3390 = vpop.trf.xlu0
        %v3391 = vpop.trf.xlu0
        %v3392 = vpop.trf.xlu0
        %v3393 = vpop.trf.xlu0
        %v3394 = vpop.trf.xlu0
        %v3395 = vpop.trf.xlu0
        %v3396 = vpop.trf.xlu0
        %v3397 = vpop.trf.xlu0
        %v3399 = vsel %vm455, %v3382, 0
        %3401 = vmatpush.msra.mxu0 0.0
        %3402 = vmatpush.msra.mxu0 0.0
        %3403 = vmatpush.msra.mxu0 0.0
        %3404 = vmatpush.msra.mxu0 0.0
        %3405 = vmatpush.msra.mxu0 0.0
        %3406 = vmatpush.msra.mxu0 0.0
        %3407 = vmatpush.msra.mxu0 0.0
        %3408 = vmatpush.msra.mxu0 0.0
        %3409 = vmatpush.msra.mxu0 0.0
        %3410 = vmatpush.msra.mxu0 0.0
        %3411 = vmatpush.msra.mxu0 0.0
        %3412 = vmatpush.msra.mxu0 0.0
        %3413 = vmatpush.msra.mxu0 0.0
        %3414 = vmatpush.msra.mxu0 0.0
        %3415 = vmatpush.msra.mxu0 0.0
        %3416 = vmatpush.msra.mxu0 %v487
        %3417 = vmatmul.f32.gmra.mxu0 %v3399
        %v3418 = vpop.f32.mrf.mxu0
        %v3419 = vadd.f32 0.0, %v3418
        %3420 = vdwg.mxu0
        %3421 = vxpose.xlu0.b32.start [1/16] %v2854, 128
        %3422 = vxpose.xlu0.b32.cont [2/16] 0.0, 128
        %3423 = vxpose.xlu0.b32.cont [3/16] 0.0, 128
        %3424 = vxpose.xlu0.b32.cont [4/16] 0.0, 128
        %3425 = vxpose.xlu0.b32.cont [5/16] 0.0, 128
        %3426 = vxpose.xlu0.b32.cont [6/16] 0.0, 128
        %3427 = vxpose.xlu0.b32.cont [7/16] 0.0, 128
        %3428 = vxpose.xlu0.b32.cont [8/16] 0.0, 128
        %3429 = vxpose.xlu0.b32.cont [9/16] 0.0, 128
        %3430 = vxpose.xlu0.b32.cont [10/16] 0.0, 128
        %3431 = vxpose.xlu0.b32.cont [11/16] 0.0, 128
        %3432 = vxpose.xlu0.b32.cont [12/16] 0.0, 128
        %3433 = vxpose.xlu0.b32.cont [13/16] 0.0, 128
        %3434 = vxpose.xlu0.b32.cont [14/16] 0.0, 128
        %3435 = vxpose.xlu0.b32.cont [15/16] 0.0, 128
        %3436 = vxpose.xlu0.b32.end [16/16] 0.0, 128
        %v3437 = vpop.trf.xlu0
        %v3438 = vpop.trf.xlu0
        %v3439 = vpop.trf.xlu0
        %v3440 = vpop.trf.xlu0
        %v3441 = vpop.trf.xlu0
        %v3442 = vpop.trf.xlu0
        %v3443 = vpop.trf.xlu0
        %v3444 = vpop.trf.xlu0
        %v3445 = vpop.trf.xlu0
        %v3446 = vpop.trf.xlu0
        %v3447 = vpop.trf.xlu0
        %v3448 = vpop.trf.xlu0
        %v3449 = vpop.trf.xlu0
        %v3450 = vpop.trf.xlu0
        %v3451 = vpop.trf.xlu0
        %v3452 = vpop.trf.xlu0
        %v3454 = vsel %vm455, %v3437, 0
        %3456 = vmatpush.msra.mxu0 0.0
        %3457 = vmatpush.msra.mxu0 0.0
        %3458 = vmatpush.msra.mxu0 0.0
        %3459 = vmatpush.msra.mxu0 0.0
        %3460 = vmatpush.msra.mxu0 0.0
        %3461 = vmatpush.msra.mxu0 0.0
        %3462 = vmatpush.msra.mxu0 0.0
        %3463 = vmatpush.msra.mxu0 0.0
        %3464 = vmatpush.msra.mxu0 0.0
        %3465 = vmatpush.msra.mxu0 0.0
        %3466 = vmatpush.msra.mxu0 0.0
        %3467 = vmatpush.msra.mxu0 0.0
        %3468 = vmatpush.msra.mxu0 0.0
        %3469 = vmatpush.msra.mxu0 0.0
        %3470 = vmatpush.msra.mxu0 0.0
        %3471 = vmatpush.msra.mxu0 %v487
        %3472 = vmatmul.f32.gmra.mxu0 %v3454
        %v3473 = vpop.f32.mrf.mxu0
        %v3474 = vadd.f32 0.0, %v3473
        %3475 = vdwg.mxu0
        %3476 = vxpose.xlu0.b32.start [1/16] %v2857, 128
        %3477 = vxpose.xlu0.b32.cont [2/16] 0.0, 128
        %3478 = vxpose.xlu0.b32.cont [3/16] 0.0, 128
        %3479 = vxpose.xlu0.b32.cont [4/16] 0.0, 128
        %3480 = vxpose.xlu0.b32.cont [5/16] 0.0, 128
        %3481 = vxpose.xlu0.b32.cont [6/16] 0.0, 128
        %3482 = vxpose.xlu0.b32.cont [7/16] 0.0, 128
        %3483 = vxpose.xlu0.b32.cont [8/16] 0.0, 128
        %3484 = vxpose.xlu0.b32.cont [9/16] 0.0, 128
        %3485 = vxpose.xlu0.b32.cont [10/16] 0.0, 128
        %3486 = vxpose.xlu0.b32.cont [11/16] 0.0, 128
        %3487 = vxpose.xlu0.b32.cont [12/16] 0.0, 128
        %3488 = vxpose.xlu0.b32.cont [13/16] 0.0, 128
        %3489 = vxpose.xlu0.b32.cont [14/16] 0.0, 128
        %3490 = vxpose.xlu0.b32.cont [15/16] 0.0, 128
        %3491 = vxpose.xlu0.b32.end [16/16] 0.0, 128
        %v3492 = vpop.trf.xlu0
        %v3493 = vpop.trf.xlu0
        %v3494 = vpop.trf.xlu0
        %v3495 = vpop.trf.xlu0
        %v3496 = vpop.trf.xlu0
        %v3497 = vpop.trf.xlu0
        %v3498 = vpop.trf.xlu0
        %v3499 = vpop.trf.xlu0
        %v3500 = vpop.trf.xlu0
        %v3501 = vpop.trf.xlu0
        %v3502 = vpop.trf.xlu0
        %v3503 = vpop.trf.xlu0
        %v3504 = vpop.trf.xlu0
        %v3505 = vpop.trf.xlu0
        %v3506 = vpop.trf.xlu0
        %v3507 = vpop.trf.xlu0
        %v3509 = vsel %vm455, %v3492, 0
        %3511 = vmatpush.msra.mxu0 0.0
        %3512 = vmatpush.msra.mxu0 0.0
        %3513 = vmatpush.msra.mxu0 0.0
        %3514 = vmatpush.msra.mxu0 0.0
        %3515 = vmatpush.msra.mxu0 0.0
        %3516 = vmatpush.msra.mxu0 0.0
        %3517 = vmatpush.msra.mxu0 0.0
        %3518 = vmatpush.msra.mxu0 0.0
        %3519 = vmatpush.msra.mxu0 0.0
        %3520 = vmatpush.msra.mxu0 0.0
        %3521 = vmatpush.msra.mxu0 0.0
        %3522 = vmatpush.msra.mxu0 0.0
        %3523 = vmatpush.msra.mxu0 0.0
        %3524 = vmatpush.msra.mxu0 0.0
        %3525 = vmatpush.msra.mxu0 0.0
        %3526 = vmatpush.msra.mxu0 %v487
        %3527 = vmatmul.f32.gmra.mxu0 %v3509
        %v3528 = vpop.f32.mrf.mxu0
        %v3529 = vadd.f32 0.0, %v3528
        %3530 = vdwg.mxu0
        %3531 = vxpose.xlu0.b32.start [1/16] %v2860, 128
        %3532 = vxpose.xlu0.b32.cont [2/16] 0.0, 128
        %3533 = vxpose.xlu0.b32.cont [3/16] 0.0, 128
        %3534 = vxpose.xlu0.b32.cont [4/16] 0.0, 128
        %3535 = vxpose.xlu0.b32.cont [5/16] 0.0, 128
        %3536 = vxpose.xlu0.b32.cont [6/16] 0.0, 128
        %3537 = vxpose.xlu0.b32.cont [7/16] 0.0, 128
        %3538 = vxpose.xlu0.b32.cont [8/16] 0.0, 128
        %3539 = vxpose.xlu0.b32.cont [9/16] 0.0, 128
        %3540 = vxpose.xlu0.b32.cont [10/16] 0.0, 128
        %3541 = vxpose.xlu0.b32.cont [11/16] 0.0, 128
        %3542 = vxpose.xlu0.b32.cont [12/16] 0.0, 128
        %3543 = vxpose.xlu0.b32.cont [13/16] 0.0, 128
        %3544 = vxpose.xlu0.b32.cont [14/16] 0.0, 128
        %3545 = vxpose.xlu0.b32.cont [15/16] 0.0, 128
        %3546 = vxpose.xlu0.b32.end [16/16] 0.0, 128
        %v3547 = vpop.trf.xlu0
        %v3548 = vpop.trf.xlu0
        %v3549 = vpop.trf.xlu0
        %v3550 = vpop.trf.xlu0
        %v3551 = vpop.trf.xlu0
        %v3552 = vpop.trf.xlu0
        %v3553 = vpop.trf.xlu0
        %v3554 = vpop.trf.xlu0
        %v3555 = vpop.trf.xlu0
        %v3556 = vpop.trf.xlu0
        %v3557 = vpop.trf.xlu0
        %v3558 = vpop.trf.xlu0
        %v3559 = vpop.trf.xlu0
        %v3560 = vpop.trf.xlu0
        %v3561 = vpop.trf.xlu0
        %v3562 = vpop.trf.xlu0
        %v3564 = vsel %vm455, %v3547, 0
        %3566 = vmatpush.msra.mxu0 0.0
        %3567 = vmatpush.msra.mxu0 0.0
        %3568 = vmatpush.msra.mxu0 0.0
        %3569 = vmatpush.msra.mxu0 0.0
        %3570 = vmatpush.msra.mxu0 0.0
        %3571 = vmatpush.msra.mxu0 0.0
        %3572 = vmatpush.msra.mxu0 0.0
        %3573 = vmatpush.msra.mxu0 0.0
        %3574 = vmatpush.msra.mxu0 0.0
        %3575 = vmatpush.msra.mxu0 0.0
        %3576 = vmatpush.msra.mxu0 0.0
        %3577 = vmatpush.msra.mxu0 0.0
        %3578 = vmatpush.msra.mxu0 0.0
        %3579 = vmatpush.msra.mxu0 0.0
        %3580 = vmatpush.msra.mxu0 0.0
        %3581 = vmatpush.msra.mxu0 %v487
        %3582 = vmatmul.f32.gmra.mxu0 %v3564
        %v3583 = vpop.f32.mrf.mxu0
        %v3584 = vadd.f32 0.0, %v3583
        %3585 = vdwg.mxu0
        %3586 = vxpose.xlu0.b32.start [1/16] %v2863, 128
        %3587 = vxpose.xlu0.b32.cont [2/16] 0.0, 128
        %3588 = vxpose.xlu0.b32.cont [3/16] 0.0, 128
        %3589 = vxpose.xlu0.b32.cont [4/16] 0.0, 128
        %3590 = vxpose.xlu0.b32.cont [5/16] 0.0, 128
        %3591 = vxpose.xlu0.b32.cont [6/16] 0.0, 128
        %3592 = vxpose.xlu0.b32.cont [7/16] 0.0, 128
        %3593 = vxpose.xlu0.b32.cont [8/16] 0.0, 128
        %3594 = vxpose.xlu0.b32.cont [9/16] 0.0, 128
        %3595 = vxpose.xlu0.b32.cont [10/16] 0.0, 128
        %3596 = vxpose.xlu0.b32.cont [11/16] 0.0, 128
        %3597 = vxpose.xlu0.b32.cont [12/16] 0.0, 128
        %3598 = vxpose.xlu0.b32.cont [13/16] 0.0, 128
        %3599 = vxpose.xlu0.b32.cont [14/16] 0.0, 128
        %3600 = vxpose.xlu0.b32.cont [15/16] 0.0, 128
        %3601 = vxpose.xlu0.b32.end [16/16] 0.0, 128
        %v3602 = vpop.trf.xlu0
        %v3603 = vpop.trf.xlu0
        %v3604 = vpop.trf.xlu0
        %v3605 = vpop.trf.xlu0
        %v3606 = vpop.trf.xlu0
        %v3607 = vpop.trf.xlu0
        %v3608 = vpop.trf.xlu0
        %v3609 = vpop.trf.xlu0
        %v3610 = vpop.trf.xlu0
        %v3611 = vpop.trf.xlu0
        %v3612 = vpop.trf.xlu0
        %v3613 = vpop.trf.xlu0
        %v3614 = vpop.trf.xlu0
        %v3615 = vpop.trf.xlu0
        %v3616 = vpop.trf.xlu0
        %v3617 = vpop.trf.xlu0
        %v3619 = vsel %vm455, %v3602, 0
        %3621 = vmatpush.msra.mxu0 0.0
        %3622 = vmatpush.msra.mxu0 0.0
        %3623 = vmatpush.msra.mxu0 0.0
        %3624 = vmatpush.msra.mxu0 0.0
        %3625 = vmatpush.msra.mxu0 0.0
        %3626 = vmatpush.msra.mxu0 0.0
        %3627 = vmatpush.msra.mxu0 0.0
        %3628 = vmatpush.msra.mxu0 0.0
        %3629 = vmatpush.msra.mxu0 0.0
        %3630 = vmatpush.msra.mxu0 0.0
        %3631 = vmatpush.msra.mxu0 0.0
        %3632 = vmatpush.msra.mxu0 0.0
        %3633 = vmatpush.msra.mxu0 0.0
        %3634 = vmatpush.msra.mxu0 0.0
        %3635 = vmatpush.msra.mxu0 0.0
        %3636 = vmatpush.msra.mxu0 %v487
        %3637 = vmatmul.f32.gmra.mxu0 %v3619
        %v3638 = vpop.f32.mrf.mxu0
        %v3639 = vadd.f32 0.0, %v3638
        %3640 = vdwg.mxu0
        %3641 = vxpose.xlu0.b32.start [1/16] %v2866, 128
        %3642 = vxpose.xlu0.b32.cont [2/16] 0.0, 128
        %3643 = vxpose.xlu0.b32.cont [3/16] 0.0, 128
        %3644 = vxpose.xlu0.b32.cont [4/16] 0.0, 128
        %3645 = vxpose.xlu0.b32.cont [5/16] 0.0, 128
        %3646 = vxpose.xlu0.b32.cont [6/16] 0.0, 128
        %3647 = vxpose.xlu0.b32.cont [7/16] 0.0, 128
        %3648 = vxpose.xlu0.b32.cont [8/16] 0.0, 128
        %3649 = vxpose.xlu0.b32.cont [9/16] 0.0, 128
        %3650 = vxpose.xlu0.b32.cont [10/16] 0.0, 128
        %3651 = vxpose.xlu0.b32.cont [11/16] 0.0, 128
        %3652 = vxpose.xlu0.b32.cont [12/16] 0.0, 128
        %3653 = vxpose.xlu0.b32.cont [13/16] 0.0, 128
        %3654 = vxpose.xlu0.b32.cont [14/16] 0.0, 128
        %3655 = vxpose.xlu0.b32.cont [15/16] 0.0, 128
        %3656 = vxpose.xlu0.b32.end [16/16] 0.0, 128
        %v3657 = vpop.trf.xlu0
        %v3658 = vpop.trf.xlu0
        %v3659 = vpop.trf.xlu0
        %v3660 = vpop.trf.xlu0
        %v3661 = vpop.trf.xlu0
        %v3662 = vpop.trf.xlu0
        %v3663 = vpop.trf.xlu0
        %v3664 = vpop.trf.xlu0
        %v3665 = vpop.trf.xlu0
        %v3666 = vpop.trf.xlu0
        %v3667 = vpop.trf.xlu0
        %v3668 = vpop.trf.xlu0
        %v3669 = vpop.trf.xlu0
        %v3670 = vpop.trf.xlu0
        %v3671 = vpop.trf.xlu0
        %v3672 = vpop.trf.xlu0
        %v3674 = vsel %vm455, %v3657, 0
        %3676 = vmatpush.msra.mxu0 0.0
        %3677 = vmatpush.msra.mxu0 0.0
        %3678 = vmatpush.msra.mxu0 0.0
        %3679 = vmatpush.msra.mxu0 0.0
        %3680 = vmatpush.msra.mxu0 0.0
        %3681 = vmatpush.msra.mxu0 0.0
        %3682 = vmatpush.msra.mxu0 0.0
        %3683 = vmatpush.msra.mxu0 0.0
        %3684 = vmatpush.msra.mxu0 0.0
        %3685 = vmatpush.msra.mxu0 0.0
        %3686 = vmatpush.msra.mxu0 0.0
        %3687 = vmatpush.msra.mxu0 0.0
        %3688 = vmatpush.msra.mxu0 0.0
        %3689 = vmatpush.msra.mxu0 0.0
        %3690 = vmatpush.msra.mxu0 0.0
        %3691 = vmatpush.msra.mxu0 %v487
        %3692 = vmatmul.f32.gmra.mxu0 %v3674
        %v3693 = vpop.f32.mrf.mxu0
        %v3694 = vadd.f32 0.0, %v3693
        %3695 = vdwg.mxu0
        %3696 = vxpose.xlu0.b32.start [1/16] %v2869, 128
        %3697 = vxpose.xlu0.b32.cont [2/16] 0.0, 128
        %3698 = vxpose.xlu0.b32.cont [3/16] 0.0, 128
        %3699 = vxpose.xlu0.b32.cont [4/16] 0.0, 128
        %3700 = vxpose.xlu0.b32.cont [5/16] 0.0, 128
        %3701 = vxpose.xlu0.b32.cont [6/16] 0.0, 128
        %3702 = vxpose.xlu0.b32.cont [7/16] 0.0, 128
        %3703 = vxpose.xlu0.b32.cont [8/16] 0.0, 128
        %3704 = vxpose.xlu0.b32.cont [9/16] 0.0, 128
        %3705 = vxpose.xlu0.b32.cont [10/16] 0.0, 128
        %3706 = vxpose.xlu0.b32.cont [11/16] 0.0, 128
        %3707 = vxpose.xlu0.b32.cont [12/16] 0.0, 128
        %3708 = vxpose.xlu0.b32.cont [13/16] 0.0, 128
        %3709 = vxpose.xlu0.b32.cont [14/16] 0.0, 128
        %3710 = vxpose.xlu0.b32.cont [15/16] 0.0, 128
        %3711 = vxpose.xlu0.b32.end [16/16] 0.0, 128
        %v3712 = vpop.trf.xlu0
        %v3713 = vpop.trf.xlu0
        %v3714 = vpop.trf.xlu0
        %v3715 = vpop.trf.xlu0
        %v3716 = vpop.trf.xlu0
        %v3717 = vpop.trf.xlu0
        %v3718 = vpop.trf.xlu0
        %v3719 = vpop.trf.xlu0
        %v3720 = vpop.trf.xlu0
        %v3721 = vpop.trf.xlu0
        %v3722 = vpop.trf.xlu0
        %v3723 = vpop.trf.xlu0
        %v3724 = vpop.trf.xlu0
        %v3725 = vpop.trf.xlu0
        %v3726 = vpop.trf.xlu0
        %v3727 = vpop.trf.xlu0
        %v3729 = vsel %vm455, %v3712, 0
        %3731 = vmatpush.msra.mxu0 0.0
        %3732 = vmatpush.msra.mxu0 0.0
        %3733 = vmatpush.msra.mxu0 0.0
        %3734 = vmatpush.msra.mxu0 0.0
        %3735 = vmatpush.msra.mxu0 0.0
        %3736 = vmatpush.msra.mxu0 0.0
        %3737 = vmatpush.msra.mxu0 0.0
        %3738 = vmatpush.msra.mxu0 0.0
        %3739 = vmatpush.msra.mxu0 0.0
        %3740 = vmatpush.msra.mxu0 0.0
        %3741 = vmatpush.msra.mxu0 0.0
        %3742 = vmatpush.msra.mxu0 0.0
        %3743 = vmatpush.msra.mxu0 0.0
        %3744 = vmatpush.msra.mxu0 0.0
        %3745 = vmatpush.msra.mxu0 0.0
        %3746 = vmatpush.msra.mxu0 %v487
        %3747 = vmatmul.f32.gmra.mxu0 %v3729
        %v3748 = vpop.f32.mrf.mxu0
        %v3749 = vadd.f32 0.0, %v3748
        %3750 = vdwg.mxu0
        %3751 = vxpose.xlu0.b32.start [1/16] %v2754, 128
        %3752 = vxpose.xlu0.b32.cont [2/16] 0.0, 128
        %3753 = vxpose.xlu0.b32.cont [3/16] 0.0, 128
        %3754 = vxpose.xlu0.b32.cont [4/16] 0.0, 128
        %3755 = vxpose.xlu0.b32.cont [5/16] 0.0, 128
        %3756 = vxpose.xlu0.b32.cont [6/16] 0.0, 128
        %3757 = vxpose.xlu0.b32.cont [7/16] 0.0, 128
        %3758 = vxpose.xlu0.b32.cont [8/16] 0.0, 128
        %3759 = vxpose.xlu0.b32.cont [9/16] 0.0, 128
        %3760 = vxpose.xlu0.b32.cont [10/16] 0.0, 128
        %3761 = vxpose.xlu0.b32.cont [11/16] 0.0, 128
        %3762 = vxpose.xlu0.b32.cont [12/16] 0.0, 128
        %3763 = vxpose.xlu0.b32.cont [13/16] 0.0, 128
        %3764 = vxpose.xlu0.b32.cont [14/16] 0.0, 128
        %3765 = vxpose.xlu0.b32.cont [15/16] 0.0, 128
        %3766 = vxpose.xlu0.b32.end [16/16] 0.0, 128
        %v3767 = vpop.trf.xlu0
        %v3768 = vpop.trf.xlu0
        %v3769 = vpop.trf.xlu0
        %v3770 = vpop.trf.xlu0
        %v3771 = vpop.trf.xlu0
        %v3772 = vpop.trf.xlu0
        %v3773 = vpop.trf.xlu0
        %v3774 = vpop.trf.xlu0
        %v3775 = vpop.trf.xlu0
        %v3776 = vpop.trf.xlu0
        %v3777 = vpop.trf.xlu0
        %v3778 = vpop.trf.xlu0
        %v3779 = vpop.trf.xlu0
        %v3780 = vpop.trf.xlu0
        %v3781 = vpop.trf.xlu0
        %v3782 = vpop.trf.xlu0
        %v3784 = vsel %vm455, %v3767, 0
        %3786 = vmatpush.msra.mxu0 0.0
        %3787 = vmatpush.msra.mxu0 0.0
        %3788 = vmatpush.msra.mxu0 0.0
        %3789 = vmatpush.msra.mxu0 0.0
        %3790 = vmatpush.msra.mxu0 0.0
        %3791 = vmatpush.msra.mxu0 0.0
        %3792 = vmatpush.msra.mxu0 0.0
        %3793 = vmatpush.msra.mxu0 0.0
        %3794 = vmatpush.msra.mxu0 0.0
        %3795 = vmatpush.msra.mxu0 0.0
        %3796 = vmatpush.msra.mxu0 0.0
        %3797 = vmatpush.msra.mxu0 0.0
        %3798 = vmatpush.msra.mxu0 0.0
        %3799 = vmatpush.msra.mxu0 0.0
        %3800 = vmatpush.msra.mxu0 0.0
        %3801 = vmatpush.msra.mxu0 %v485
        %3802 = vmatmul.f32.gmra.mxu0 %v3784
        %v3803 = vpop.f32.mrf.mxu0
        %v3804 = vadd.f32 %v2924, %v3803
        %3805 = vdwg.mxu0
        %3806 = vxpose.xlu0.b32.start [1/16] %v2757, 128
        %3807 = vxpose.xlu0.b32.cont [2/16] 0.0, 128
        %3808 = vxpose.xlu0.b32.cont [3/16] 0.0, 128
        %3809 = vxpose.xlu0.b32.cont [4/16] 0.0, 128
        %3810 = vxpose.xlu0.b32.cont [5/16] 0.0, 128
        %3811 = vxpose.xlu0.b32.cont [6/16] 0.0, 128
        %3812 = vxpose.xlu0.b32.cont [7/16] 0.0, 128
        %3813 = vxpose.xlu0.b32.cont [8/16] 0.0, 128
        %3814 = vxpose.xlu0.b32.cont [9/16] 0.0, 128
        %3815 = vxpose.xlu0.b32.cont [10/16] 0.0, 128
        %3816 = vxpose.xlu0.b32.cont [11/16] 0.0, 128
        %3817 = vxpose.xlu0.b32.cont [12/16] 0.0, 128
        %3818 = vxpose.xlu0.b32.cont [13/16] 0.0, 128
        %3819 = vxpose.xlu0.b32.cont [14/16] 0.0, 128
        %3820 = vxpose.xlu0.b32.cont [15/16] 0.0, 128
        %3821 = vxpose.xlu0.b32.end [16/16] 0.0, 128
        %v3822 = vpop.trf.xlu0
        %v3823 = vpop.trf.xlu0
        %v3824 = vpop.trf.xlu0
        %v3825 = vpop.trf.xlu0
        %v3826 = vpop.trf.xlu0
        %v3827 = vpop.trf.xlu0
        %v3828 = vpop.trf.xlu0
        %v3829 = vpop.trf.xlu0
        %v3830 = vpop.trf.xlu0
        %v3831 = vpop.trf.xlu0
        %v3832 = vpop.trf.xlu0
        %v3833 = vpop.trf.xlu0
        %v3834 = vpop.trf.xlu0
        %v3835 = vpop.trf.xlu0
        %v3836 = vpop.trf.xlu0
        %v3837 = vpop.trf.xlu0
        %v3839 = vsel %vm455, %v3822, 0
        %3841 = vmatpush.msra.mxu0 0.0
        %3842 = vmatpush.msra.mxu0 0.0
        %3843 = vmatpush.msra.mxu0 0.0
        %3844 = vmatpush.msra.mxu0 0.0
        %3845 = vmatpush.msra.mxu0 0.0
        %3846 = vmatpush.msra.mxu0 0.0
        %3847 = vmatpush.msra.mxu0 0.0
        %3848 = vmatpush.msra.mxu0 0.0
        %3849 = vmatpush.msra.mxu0 0.0
        %3850 = vmatpush.msra.mxu0 0.0
        %3851 = vmatpush.msra.mxu0 0.0
        %3852 = vmatpush.msra.mxu0 0.0
        %3853 = vmatpush.msra.mxu0 0.0
        %3854 = vmatpush.msra.mxu0 0.0
        %3855 = vmatpush.msra.mxu0 0.0
        %3856 = vmatpush.msra.mxu0 %v485
        %3857 = vmatmul.f32.gmra.mxu0 %v3839
        %v3858 = vpop.f32.mrf.mxu0
        %v3859 = vadd.f32 %v2979, %v3858
        %3860 = vdwg.mxu0
        %3861 = vxpose.xlu0.b32.start [1/16] %v2760, 128
        %3862 = vxpose.xlu0.b32.cont [2/16] 0.0, 128
        %3863 = vxpose.xlu0.b32.cont [3/16] 0.0, 128
        %3864 = vxpose.xlu0.b32.cont [4/16] 0.0, 128
        %3865 = vxpose.xlu0.b32.cont [5/16] 0.0, 128
        %3866 = vxpose.xlu0.b32.cont [6/16] 0.0, 128
        %3867 = vxpose.xlu0.b32.cont [7/16] 0.0, 128
        %3868 = vxpose.xlu0.b32.cont [8/16] 0.0, 128
        %3869 = vxpose.xlu0.b32.cont [9/16] 0.0, 128
        %3870 = vxpose.xlu0.b32.cont [10/16] 0.0, 128
        %3871 = vxpose.xlu0.b32.cont [11/16] 0.0, 128
        %3872 = vxpose.xlu0.b32.cont [12/16] 0.0, 128
        %3873 = vxpose.xlu0.b32.cont [13/16] 0.0, 128
        %3874 = vxpose.xlu0.b32.cont [14/16] 0.0, 128
        %3875 = vxpose.xlu0.b32.cont [15/16] 0.0, 128
        %3876 = vxpose.xlu0.b32.end [16/16] 0.0, 128
        %v3877 = vpop.trf.xlu0
        %v3878 = vpop.trf.xlu0
        %v3879 = vpop.trf.xlu0
        %v3880 = vpop.trf.xlu0
        %v3881 = vpop.trf.xlu0
        %v3882 = vpop.trf.xlu0
        %v3883 = vpop.trf.xlu0
        %v3884 = vpop.trf.xlu0
        %v3885 = vpop.trf.xlu0
        %v3886 = vpop.trf.xlu0
        %v3887 = vpop.trf.xlu0
        %v3888 = vpop.trf.xlu0
        %v3889 = vpop.trf.xlu0
        %v3890 = vpop.trf.xlu0
        %v3891 = vpop.trf.xlu0
        %v3892 = vpop.trf.xlu0
        %v3894 = vsel %vm455, %v3877, 0
        %3896 = vmatpush.msra.mxu0 0.0
        %3897 = vmatpush.msra.mxu0 0.0
        %3898 = vmatpush.msra.mxu0 0.0
        %3899 = vmatpush.msra.mxu0 0.0
        %3900 = vmatpush.msra.mxu0 0.0
        %3901 = vmatpush.msra.mxu0 0.0
        %3902 = vmatpush.msra.mxu0 0.0
        %3903 = vmatpush.msra.mxu0 0.0
        %3904 = vmatpush.msra.mxu0 0.0
        %3905 = vmatpush.msra.mxu0 0.0
        %3906 = vmatpush.msra.mxu0 0.0
        %3907 = vmatpush.msra.mxu0 0.0
        %3908 = vmatpush.msra.mxu0 0.0
        %3909 = vmatpush.msra.mxu0 0.0
        %3910 = vmatpush.msra.mxu0 0.0
        %3911 = vmatpush.msra.mxu0 %v485
        %3912 = vmatmul.f32.gmra.mxu0 %v3894
        %v3913 = vpop.f32.mrf.mxu0
        %v3914 = vadd.f32 %v3034, %v3913
        %3915 = vdwg.mxu0
        %3916 = vxpose.xlu0.b32.start [1/16] %v2763, 128
        %3917 = vxpose.xlu0.b32.cont [2/16] 0.0, 128
        %3918 = vxpose.xlu0.b32.cont [3/16] 0.0, 128
        %3919 = vxpose.xlu0.b32.cont [4/16] 0.0, 128
        %3920 = vxpose.xlu0.b32.cont [5/16] 0.0, 128
        %3921 = vxpose.xlu0.b32.cont [6/16] 0.0, 128
        %3922 = vxpose.xlu0.b32.cont [7/16] 0.0, 128
        %3923 = vxpose.xlu0.b32.cont [8/16] 0.0, 128
        %3924 = vxpose.xlu0.b32.cont [9/16] 0.0, 128
        %3925 = vxpose.xlu0.b32.cont [10/16] 0.0, 128
        %3926 = vxpose.xlu0.b32.cont [11/16] 0.0, 128
        %3927 = vxpose.xlu0.b32.cont [12/16] 0.0, 128
        %3928 = vxpose.xlu0.b32.cont [13/16] 0.0, 128
        %3929 = vxpose.xlu0.b32.cont [14/16] 0.0, 128
        %3930 = vxpose.xlu0.b32.cont [15/16] 0.0, 128
        %3931 = vxpose.xlu0.b32.end [16/16] 0.0, 128
        %v3932 = vpop.trf.xlu0
        %v3933 = vpop.trf.xlu0
        %v3934 = vpop.trf.xlu0
        %v3935 = vpop.trf.xlu0
        %v3936 = vpop.trf.xlu0
        %v3937 = vpop.trf.xlu0
        %v3938 = vpop.trf.xlu0
        %v3939 = vpop.trf.xlu0
        %v3940 = vpop.trf.xlu0
        %v3941 = vpop.trf.xlu0
        %v3942 = vpop.trf.xlu0
        %v3943 = vpop.trf.xlu0
        %v3944 = vpop.trf.xlu0
        %v3945 = vpop.trf.xlu0
        %v3946 = vpop.trf.xlu0
        %v3947 = vpop.trf.xlu0
        %v3949 = vsel %vm455, %v3932, 0
        %3951 = vmatpush.msra.mxu0 0.0
        %3952 = vmatpush.msra.mxu0 0.0
        %3953 = vmatpush.msra.mxu0 0.0
        %3954 = vmatpush.msra.mxu0 0.0
        %3955 = vmatpush.msra.mxu0 0.0
        %3956 = vmatpush.msra.mxu0 0.0
        %3957 = vmatpush.msra.mxu0 0.0
        %3958 = vmatpush.msra.mxu0 0.0
        %3959 = vmatpush.msra.mxu0 0.0
        %3960 = vmatpush.msra.mxu0 0.0
        %3961 = vmatpush.msra.mxu0 0.0
        %3962 = vmatpush.msra.mxu0 0.0
        %3963 = vmatpush.msra.mxu0 0.0
        %3964 = vmatpush.msra.mxu0 0.0
        %3965 = vmatpush.msra.mxu0 0.0
        %3966 = vmatpush.msra.mxu0 %v485
        %3967 = vmatmul.f32.gmra.mxu0 %v3949
        %v3968 = vpop.f32.mrf.mxu0
        %v3969 = vadd.f32 %v3089, %v3968
        %3970 = vdwg.mxu0
        %3971 = vxpose.xlu0.b32.start [1/16] %v2766, 128
        %3972 = vxpose.xlu0.b32.cont [2/16] 0.0, 128
        %3973 = vxpose.xlu0.b32.cont [3/16] 0.0, 128
        %3974 = vxpose.xlu0.b32.cont [4/16] 0.0, 128
        %3975 = vxpose.xlu0.b32.cont [5/16] 0.0, 128
        %3976 = vxpose.xlu0.b32.cont [6/16] 0.0, 128
        %3977 = vxpose.xlu0.b32.cont [7/16] 0.0, 128
        %3978 = vxpose.xlu0.b32.cont [8/16] 0.0, 128
        %3979 = vxpose.xlu0.b32.cont [9/16] 0.0, 128
        %3980 = vxpose.xlu0.b32.cont [10/16] 0.0, 128
        %3981 = vxpose.xlu0.b32.cont [11/16] 0.0, 128
        %3982 = vxpose.xlu0.b32.cont [12/16] 0.0, 128
        %3983 = vxpose.xlu0.b32.cont [13/16] 0.0, 128
        %3984 = vxpose.xlu0.b32.cont [14/16] 0.0, 128
        %3985 = vxpose.xlu0.b32.cont [15/16] 0.0, 128
        %3986 = vxpose.xlu0.b32.end [16/16] 0.0, 128
        %v3987 = vpop.trf.xlu0
        %v3988 = vpop.trf.xlu0
        %v3989 = vpop.trf.xlu0
        %v3990 = vpop.trf.xlu0
        %v3991 = vpop.trf.xlu0
        %v3992 = vpop.trf.xlu0
        %v3993 = vpop.trf.xlu0
        %v3994 = vpop.trf.xlu0
        %v3995 = vpop.trf.xlu0
        %v3996 = vpop.trf.xlu0
        %v3997 = vpop.trf.xlu0
        %v3998 = vpop.trf.xlu0
        %v3999 = vpop.trf.xlu0
        %v4000 = vpop.trf.xlu0
        %v4001 = vpop.trf.xlu0
        %v4002 = vpop.trf.xlu0
        %v4004 = vsel %vm455, %v3987, 0
        %4006 = vmatpush.msra.mxu0 0.0
        %4007 = vmatpush.msra.mxu0 0.0
        %4008 = vmatpush.msra.mxu0 0.0
        %4009 = vmatpush.msra.mxu0 0.0
        %4010 = vmatpush.msra.mxu0 0.0
        %4011 = vmatpush.msra.mxu0 0.0
        %4012 = vmatpush.msra.mxu0 0.0
        %4013 = vmatpush.msra.mxu0 0.0
        %4014 = vmatpush.msra.mxu0 0.0
        %4015 = vmatpush.msra.mxu0 0.0
        %4016 = vmatpush.msra.mxu0 0.0
        %4017 = vmatpush.msra.mxu0 0.0
        %4018 = vmatpush.msra.mxu0 0.0
        %4019 = vmatpush.msra.mxu0 0.0
        %4020 = vmatpush.msra.mxu0 0.0
        %4021 = vmatpush.msra.mxu0 %v485
        %4022 = vmatmul.f32.gmra.mxu0 %v4004
        %v4023 = vpop.f32.mrf.mxu0
        %v4024 = vadd.f32 %v3144, %v4023
        %4025 = vdwg.mxu0
        %4026 = vxpose.xlu0.b32.start [1/16] %v2769, 128
        %4027 = vxpose.xlu0.b32.cont [2/16] 0.0, 128
        %4028 = vxpose.xlu0.b32.cont [3/16] 0.0, 128
        %4029 = vxpose.xlu0.b32.cont [4/16] 0.0, 128
        %4030 = vxpose.xlu0.b32.cont [5/16] 0.0, 128
        %4031 = vxpose.xlu0.b32.cont [6/16] 0.0, 128
        %4032 = vxpose.xlu0.b32.cont [7/16] 0.0, 128
        %4033 = vxpose.xlu0.b32.cont [8/16] 0.0, 128
        %4034 = vxpose.xlu0.b32.cont [9/16] 0.0, 128
        %4035 = vxpose.xlu0.b32.cont [10/16] 0.0, 128
        %4036 = vxpose.xlu0.b32.cont [11/16] 0.0, 128
        %4037 = vxpose.xlu0.b32.cont [12/16] 0.0, 128
        %4038 = vxpose.xlu0.b32.cont [13/16] 0.0, 128
        %4039 = vxpose.xlu0.b32.cont [14/16] 0.0, 128
        %4040 = vxpose.xlu0.b32.cont [15/16] 0.0, 128
        %4041 = vxpose.xlu0.b32.end [16/16] 0.0, 128
        %v4042 = vpop.trf.xlu0
        %v4043 = vpop.trf.xlu0
        %v4044 = vpop.trf.xlu0
        %v4045 = vpop.trf.xlu0
        %v4046 = vpop.trf.xlu0
        %v4047 = vpop.trf.xlu0
        %v4048 = vpop.trf.xlu0
        %v4049 = vpop.trf.xlu0
        %v4050 = vpop.trf.xlu0
        %v4051 = vpop.trf.xlu0
        %v4052 = vpop.trf.xlu0
        %v4053 = vpop.trf.xlu0
        %v4054 = vpop.trf.xlu0
        %v4055 = vpop.trf.xlu0
        %v4056 = vpop.trf.xlu0
        %v4057 = vpop.trf.xlu0
        %v4059 = vsel %vm455, %v4042, 0
        %4061 = vmatpush.msra.mxu0 0.0
        %4062 = vmatpush.msra.mxu0 0.0
        %4063 = vmatpush.msra.mxu0 0.0
        %4064 = vmatpush.msra.mxu0 0.0
        %4065 = vmatpush.msra.mxu0 0.0
        %4066 = vmatpush.msra.mxu0 0.0
        %4067 = vmatpush.msra.mxu0 0.0
        %4068 = vmatpush.msra.mxu0 0.0
        %4069 = vmatpush.msra.mxu0 0.0
        %4070 = vmatpush.msra.mxu0 0.0
        %4071 = vmatpush.msra.mxu0 0.0
        %4072 = vmatpush.msra.mxu0 0.0
        %4073 = vmatpush.msra.mxu0 0.0
        %4074 = vmatpush.msra.mxu0 0.0
        %4075 = vmatpush.msra.mxu0 0.0
        %4076 = vmatpush.msra.mxu0 %v485
        %4077 = vmatmul.f32.gmra.mxu0 %v4059
        %v4078 = vpop.f32.mrf.mxu0
        %v4079 = vadd.f32 %v3199, %v4078
        %4080 = vdwg.mxu0
        %4081 = vxpose.xlu0.b32.start [1/16] %v2772, 128
        %4082 = vxpose.xlu0.b32.cont [2/16] 0.0, 128
        %4083 = vxpose.xlu0.b32.cont [3/16] 0.0, 128
        %4084 = vxpose.xlu0.b32.cont [4/16] 0.0, 128
        %4085 = vxpose.xlu0.b32.cont [5/16] 0.0, 128
        %4086 = vxpose.xlu0.b32.cont [6/16] 0.0, 128
        %4087 = vxpose.xlu0.b32.cont [7/16] 0.0, 128
        %4088 = vxpose.xlu0.b32.cont [8/16] 0.0, 128
        %4089 = vxpose.xlu0.b32.cont [9/16] 0.0, 128
        %4090 = vxpose.xlu0.b32.cont [10/16] 0.0, 128
        %4091 = vxpose.xlu0.b32.cont [11/16] 0.0, 128
        %4092 = vxpose.xlu0.b32.cont [12/16] 0.0, 128
        %4093 = vxpose.xlu0.b32.cont [13/16] 0.0, 128
        %4094 = vxpose.xlu0.b32.cont [14/16] 0.0, 128
        %4095 = vxpose.xlu0.b32.cont [15/16] 0.0, 128
        %4096 = vxpose.xlu0.b32.end [16/16] 0.0, 128
        %v4097 = vpop.trf.xlu0
        %v4098 = vpop.trf.xlu0
        %v4099 = vpop.trf.xlu0
        %v4100 = vpop.trf.xlu0
        %v4101 = vpop.trf.xlu0
        %v4102 = vpop.trf.xlu0
        %v4103 = vpop.trf.xlu0
        %v4104 = vpop.trf.xlu0
        %v4105 = vpop.trf.xlu0
        %v4106 = vpop.trf.xlu0
        %v4107 = vpop.trf.xlu0
        %v4108 = vpop.trf.xlu0
        %v4109 = vpop.trf.xlu0
        %v4110 = vpop.trf.xlu0
        %v4111 = vpop.trf.xlu0
        %v4112 = vpop.trf.xlu0
        %v4114 = vsel %vm455, %v4097, 0
        %4116 = vmatpush.msra.mxu0 0.0
        %4117 = vmatpush.msra.mxu0 0.0
        %4118 = vmatpush.msra.mxu0 0.0
        %4119 = vmatpush.msra.mxu0 0.0
        %4120 = vmatpush.msra.mxu0 0.0
        %4121 = vmatpush.msra.mxu0 0.0
        %4122 = vmatpush.msra.mxu0 0.0
        %4123 = vmatpush.msra.mxu0 0.0
        %4124 = vmatpush.msra.mxu0 0.0
        %4125 = vmatpush.msra.mxu0 0.0
        %4126 = vmatpush.msra.mxu0 0.0
        %4127 = vmatpush.msra.mxu0 0.0
        %4128 = vmatpush.msra.mxu0 0.0
        %4129 = vmatpush.msra.mxu0 0.0
        %4130 = vmatpush.msra.mxu0 0.0
        %4131 = vmatpush.msra.mxu0 %v485
        %4132 = vmatmul.f32.gmra.mxu0 %v4114
        %v4133 = vpop.f32.mrf.mxu0
        %v4134 = vadd.f32 %v3254, %v4133
        %4135 = vdwg.mxu0
        %4136 = vxpose.xlu0.b32.start [1/16] %v2775, 128
        %4137 = vxpose.xlu0.b32.cont [2/16] 0.0, 128
        %4138 = vxpose.xlu0.b32.cont [3/16] 0.0, 128
        %4139 = vxpose.xlu0.b32.cont [4/16] 0.0, 128
        %4140 = vxpose.xlu0.b32.cont [5/16] 0.0, 128
        %4141 = vxpose.xlu0.b32.cont [6/16] 0.0, 128
        %4142 = vxpose.xlu0.b32.cont [7/16] 0.0, 128
        %4143 = vxpose.xlu0.b32.cont [8/16] 0.0, 128
        %4144 = vxpose.xlu0.b32.cont [9/16] 0.0, 128
        %4145 = vxpose.xlu0.b32.cont [10/16] 0.0, 128
        %4146 = vxpose.xlu0.b32.cont [11/16] 0.0, 128
        %4147 = vxpose.xlu0.b32.cont [12/16] 0.0, 128
        %4148 = vxpose.xlu0.b32.cont [13/16] 0.0, 128
        %4149 = vxpose.xlu0.b32.cont [14/16] 0.0, 128
        %4150 = vxpose.xlu0.b32.cont [15/16] 0.0, 128
        %4151 = vxpose.xlu0.b32.end [16/16] 0.0, 128
        %v4152 = vpop.trf.xlu0
        %v4153 = vpop.trf.xlu0
        %v4154 = vpop.trf.xlu0
        %v4155 = vpop.trf.xlu0
        %v4156 = vpop.trf.xlu0
        %v4157 = vpop.trf.xlu0
        %v4158 = vpop.trf.xlu0
        %v4159 = vpop.trf.xlu0
        %v4160 = vpop.trf.xlu0
        %v4161 = vpop.trf.xlu0
        %v4162 = vpop.trf.xlu0
        %v4163 = vpop.trf.xlu0
        %v4164 = vpop.trf.xlu0
        %v4165 = vpop.trf.xlu0
        %v4166 = vpop.trf.xlu0
        %v4167 = vpop.trf.xlu0
        %v4169 = vsel %vm455, %v4152, 0
        %4171 = vmatpush.msra.mxu0 0.0
        %4172 = vmatpush.msra.mxu0 0.0
        %4173 = vmatpush.msra.mxu0 0.0
        %4174 = vmatpush.msra.mxu0 0.0
        %4175 = vmatpush.msra.mxu0 0.0
        %4176 = vmatpush.msra.mxu0 0.0
        %4177 = vmatpush.msra.mxu0 0.0
        %4178 = vmatpush.msra.mxu0 0.0
        %4179 = vmatpush.msra.mxu0 0.0
        %4180 = vmatpush.msra.mxu0 0.0
        %4181 = vmatpush.msra.mxu0 0.0
        %4182 = vmatpush.msra.mxu0 0.0
        %4183 = vmatpush.msra.mxu0 0.0
        %4184 = vmatpush.msra.mxu0 0.0
        %4185 = vmatpush.msra.mxu0 0.0
        %4186 = vmatpush.msra.mxu0 %v485
        %4187 = vmatmul.f32.gmra.mxu0 %v4169
        %v4188 = vpop.f32.mrf.mxu0
        %v4189 = vadd.f32 %v3309, %v4188
        %4190 = vdwg.mxu0
        %4191 = vxpose.xlu0.b32.start [1/16] %v2778, 128
        %4192 = vxpose.xlu0.b32.cont [2/16] 0.0, 128
        %4193 = vxpose.xlu0.b32.cont [3/16] 0.0, 128
        %4194 = vxpose.xlu0.b32.cont [4/16] 0.0, 128
        %4195 = vxpose.xlu0.b32.cont [5/16] 0.0, 128
        %4196 = vxpose.xlu0.b32.cont [6/16] 0.0, 128
        %4197 = vxpose.xlu0.b32.cont [7/16] 0.0, 128
        %4198 = vxpose.xlu0.b32.cont [8/16] 0.0, 128
        %4199 = vxpose.xlu0.b32.cont [9/16] 0.0, 128
        %4200 = vxpose.xlu0.b32.cont [10/16] 0.0, 128
        %4201 = vxpose.xlu0.b32.cont [11/16] 0.0, 128
        %4202 = vxpose.xlu0.b32.cont [12/16] 0.0, 128
        %4203 = vxpose.xlu0.b32.cont [13/16] 0.0, 128
        %4204 = vxpose.xlu0.b32.cont [14/16] 0.0, 128
        %4205 = vxpose.xlu0.b32.cont [15/16] 0.0, 128
        %4206 = vxpose.xlu0.b32.end [16/16] 0.0, 128
        %v4207 = vpop.trf.xlu0
        %v4208 = vpop.trf.xlu0
        %v4209 = vpop.trf.xlu0
        %v4210 = vpop.trf.xlu0
        %v4211 = vpop.trf.xlu0
        %v4212 = vpop.trf.xlu0
        %v4213 = vpop.trf.xlu0
        %v4214 = vpop.trf.xlu0
        %v4215 = vpop.trf.xlu0
        %v4216 = vpop.trf.xlu0
        %v4217 = vpop.trf.xlu0
        %v4218 = vpop.trf.xlu0
        %v4219 = vpop.trf.xlu0
        %v4220 = vpop.trf.xlu0
        %v4221 = vpop.trf.xlu0
        %v4222 = vpop.trf.xlu0
        %v4224 = vsel %vm455, %v4207, 0
        %4226 = vmatpush.msra.mxu0 0.0
        %4227 = vmatpush.msra.mxu0 0.0
        %4228 = vmatpush.msra.mxu0 0.0
        %4229 = vmatpush.msra.mxu0 0.0
        %4230 = vmatpush.msra.mxu0 0.0
        %4231 = vmatpush.msra.mxu0 0.0
        %4232 = vmatpush.msra.mxu0 0.0
        %4233 = vmatpush.msra.mxu0 0.0
        %4234 = vmatpush.msra.mxu0 0.0
        %4235 = vmatpush.msra.mxu0 0.0
        %4236 = vmatpush.msra.mxu0 0.0
        %4237 = vmatpush.msra.mxu0 0.0
        %4238 = vmatpush.msra.mxu0 0.0
        %4239 = vmatpush.msra.mxu0 0.0
        %4240 = vmatpush.msra.mxu0 0.0
        %4241 = vmatpush.msra.mxu0 %v485
        %4242 = vmatmul.f32.gmra.mxu0 %v4224
        %v4243 = vpop.f32.mrf.mxu0
        %v4244 = vadd.f32 %v3364, %v4243
        %4245 = vdwg.mxu0
        %4246 = vxpose.xlu0.b32.start [1/16] %v2781, 128
        %4247 = vxpose.xlu0.b32.cont [2/16] 0.0, 128
        %4248 = vxpose.xlu0.b32.cont [3/16] 0.0, 128
        %4249 = vxpose.xlu0.b32.cont [4/16] 0.0, 128
        %4250 = vxpose.xlu0.b32.cont [5/16] 0.0, 128
        %4251 = vxpose.xlu0.b32.cont [6/16] 0.0, 128
        %4252 = vxpose.xlu0.b32.cont [7/16] 0.0, 128
        %4253 = vxpose.xlu0.b32.cont [8/16] 0.0, 128
        %4254 = vxpose.xlu0.b32.cont [9/16] 0.0, 128
        %4255 = vxpose.xlu0.b32.cont [10/16] 0.0, 128
        %4256 = vxpose.xlu0.b32.cont [11/16] 0.0, 128
        %4257 = vxpose.xlu0.b32.cont [12/16] 0.0, 128
        %4258 = vxpose.xlu0.b32.cont [13/16] 0.0, 128
        %4259 = vxpose.xlu0.b32.cont [14/16] 0.0, 128
        %4260 = vxpose.xlu0.b32.cont [15/16] 0.0, 128
        %4261 = vxpose.xlu0.b32.end [16/16] 0.0, 128
        %v4262 = vpop.trf.xlu0
        %v4263 = vpop.trf.xlu0
        %v4264 = vpop.trf.xlu0
        %v4265 = vpop.trf.xlu0
        %v4266 = vpop.trf.xlu0
        %v4267 = vpop.trf.xlu0
        %v4268 = vpop.trf.xlu0
        %v4269 = vpop.trf.xlu0
        %v4270 = vpop.trf.xlu0
        %v4271 = vpop.trf.xlu0
        %v4272 = vpop.trf.xlu0
        %v4273 = vpop.trf.xlu0
        %v4274 = vpop.trf.xlu0
        %v4275 = vpop.trf.xlu0
        %v4276 = vpop.trf.xlu0
        %v4277 = vpop.trf.xlu0
        %v4279 = vsel %vm455, %v4262, 0
        %4281 = vmatpush.msra.mxu0 0.0
        %4282 = vmatpush.msra.mxu0 0.0
        %4283 = vmatpush.msra.mxu0 0.0
        %4284 = vmatpush.msra.mxu0 0.0
        %4285 = vmatpush.msra.mxu0 0.0
        %4286 = vmatpush.msra.mxu0 0.0
        %4287 = vmatpush.msra.mxu0 0.0
        %4288 = vmatpush.msra.mxu0 0.0
        %4289 = vmatpush.msra.mxu0 0.0
        %4290 = vmatpush.msra.mxu0 0.0
        %4291 = vmatpush.msra.mxu0 0.0
        %4292 = vmatpush.msra.mxu0 0.0
        %4293 = vmatpush.msra.mxu0 0.0
        %4294 = vmatpush.msra.mxu0 0.0
        %4295 = vmatpush.msra.mxu0 0.0
        %4296 = vmatpush.msra.mxu0 %v485
        %4297 = vmatmul.f32.gmra.mxu0 %v4279
        %v4298 = vpop.f32.mrf.mxu0
        %v4299 = vadd.f32 %v3419, %v4298
        %4300 = vdwg.mxu0
        %4301 = vxpose.xlu0.b32.start [1/16] %v2784, 128
        %4302 = vxpose.xlu0.b32.cont [2/16] 0.0, 128
        %4303 = vxpose.xlu0.b32.cont [3/16] 0.0, 128
        %4304 = vxpose.xlu0.b32.cont [4/16] 0.0, 128
        %4305 = vxpose.xlu0.b32.cont [5/16] 0.0, 128
        %4306 = vxpose.xlu0.b32.cont [6/16] 0.0, 128
        %4307 = vxpose.xlu0.b32.cont [7/16] 0.0, 128
        %4308 = vxpose.xlu0.b32.cont [8/16] 0.0, 128
        %4309 = vxpose.xlu0.b32.cont [9/16] 0.0, 128
        %4310 = vxpose.xlu0.b32.cont [10/16] 0.0, 128
        %4311 = vxpose.xlu0.b32.cont [11/16] 0.0, 128
        %4312 = vxpose.xlu0.b32.cont [12/16] 0.0, 128
        %4313 = vxpose.xlu0.b32.cont [13/16] 0.0, 128
        %4314 = vxpose.xlu0.b32.cont [14/16] 0.0, 128
        %4315 = vxpose.xlu0.b32.cont [15/16] 0.0, 128
        %4316 = vxpose.xlu0.b32.end [16/16] 0.0, 128
        %v4317 = vpop.trf.xlu0
        %v4318 = vpop.trf.xlu0
        %v4319 = vpop.trf.xlu0
        %v4320 = vpop.trf.xlu0
        %v4321 = vpop.trf.xlu0
        %v4322 = vpop.trf.xlu0
        %v4323 = vpop.trf.xlu0
        %v4324 = vpop.trf.xlu0
        %v4325 = vpop.trf.xlu0
        %v4326 = vpop.trf.xlu0
        %v4327 = vpop.trf.xlu0
        %v4328 = vpop.trf.xlu0
        %v4329 = vpop.trf.xlu0
        %v4330 = vpop.trf.xlu0
        %v4331 = vpop.trf.xlu0
        %v4332 = vpop.trf.xlu0
        %v4334 = vsel %vm455, %v4317, 0
        %4336 = vmatpush.msra.mxu0 0.0
        %4337 = vmatpush.msra.mxu0 0.0
        %4338 = vmatpush.msra.mxu0 0.0
        %4339 = vmatpush.msra.mxu0 0.0
        %4340 = vmatpush.msra.mxu0 0.0
        %4341 = vmatpush.msra.mxu0 0.0
        %4342 = vmatpush.msra.mxu0 0.0
        %4343 = vmatpush.msra.mxu0 0.0
        %4344 = vmatpush.msra.mxu0 0.0
        %4345 = vmatpush.msra.mxu0 0.0
        %4346 = vmatpush.msra.mxu0 0.0
        %4347 = vmatpush.msra.mxu0 0.0
        %4348 = vmatpush.msra.mxu0 0.0
        %4349 = vmatpush.msra.mxu0 0.0
        %4350 = vmatpush.msra.mxu0 0.0
        %4351 = vmatpush.msra.mxu0 %v485
        %4352 = vmatmul.f32.gmra.mxu0 %v4334
        %v4353 = vpop.f32.mrf.mxu0
        %v4354 = vadd.f32 %v3474, %v4353
        %4355 = vdwg.mxu0
        %4356 = vxpose.xlu0.b32.start [1/16] %v2787, 128
        %4357 = vxpose.xlu0.b32.cont [2/16] 0.0, 128
        %4358 = vxpose.xlu0.b32.cont [3/16] 0.0, 128
        %4359 = vxpose.xlu0.b32.cont [4/16] 0.0, 128
        %4360 = vxpose.xlu0.b32.cont [5/16] 0.0, 128
        %4361 = vxpose.xlu0.b32.cont [6/16] 0.0, 128
        %4362 = vxpose.xlu0.b32.cont [7/16] 0.0, 128
        %4363 = vxpose.xlu0.b32.cont [8/16] 0.0, 128
        %4364 = vxpose.xlu0.b32.cont [9/16] 0.0, 128
        %4365 = vxpose.xlu0.b32.cont [10/16] 0.0, 128
        %4366 = vxpose.xlu0.b32.cont [11/16] 0.0, 128
        %4367 = vxpose.xlu0.b32.cont [12/16] 0.0, 128
        %4368 = vxpose.xlu0.b32.cont [13/16] 0.0, 128
        %4369 = vxpose.xlu0.b32.cont [14/16] 0.0, 128
        %4370 = vxpose.xlu0.b32.cont [15/16] 0.0, 128
        %4371 = vxpose.xlu0.b32.end [16/16] 0.0, 128
        %v4372 = vpop.trf.xlu0
        %v4373 = vpop.trf.xlu0
        %v4374 = vpop.trf.xlu0
        %v4375 = vpop.trf.xlu0
        %v4376 = vpop.trf.xlu0
        %v4377 = vpop.trf.xlu0
        %v4378 = vpop.trf.xlu0
        %v4379 = vpop.trf.xlu0
        %v4380 = vpop.trf.xlu0
        %v4381 = vpop.trf.xlu0
        %v4382 = vpop.trf.xlu0
        %v4383 = vpop.trf.xlu0
        %v4384 = vpop.trf.xlu0
        %v4385 = vpop.trf.xlu0
        %v4386 = vpop.trf.xlu0
        %v4387 = vpop.trf.xlu0
        %v4389 = vsel %vm455, %v4372, 0
        %4391 = vmatpush.msra.mxu0 0.0
        %4392 = vmatpush.msra.mxu0 0.0
        %4393 = vmatpush.msra.mxu0 0.0
        %4394 = vmatpush.msra.mxu0 0.0
        %4395 = vmatpush.msra.mxu0 0.0
        %4396 = vmatpush.msra.mxu0 0.0
        %4397 = vmatpush.msra.mxu0 0.0
        %4398 = vmatpush.msra.mxu0 0.0
        %4399 = vmatpush.msra.mxu0 0.0
        %4400 = vmatpush.msra.mxu0 0.0
        %4401 = vmatpush.msra.mxu0 0.0
        %4402 = vmatpush.msra.mxu0 0.0
        %4403 = vmatpush.msra.mxu0 0.0
        %4404 = vmatpush.msra.mxu0 0.0
        %4405 = vmatpush.msra.mxu0 0.0
        %4406 = vmatpush.msra.mxu0 %v485
        %4407 = vmatmul.f32.gmra.mxu0 %v4389
        %v4408 = vpop.f32.mrf.mxu0
        %v4409 = vadd.f32 %v3529, %v4408
        %4410 = vdwg.mxu0
        %4411 = vxpose.xlu0.b32.start [1/16] %v2790, 128
        %4412 = vxpose.xlu0.b32.cont [2/16] 0.0, 128
        %4413 = vxpose.xlu0.b32.cont [3/16] 0.0, 128
        %4414 = vxpose.xlu0.b32.cont [4/16] 0.0, 128
        %4415 = vxpose.xlu0.b32.cont [5/16] 0.0, 128
        %4416 = vxpose.xlu0.b32.cont [6/16] 0.0, 128
        %4417 = vxpose.xlu0.b32.cont [7/16] 0.0, 128
        %4418 = vxpose.xlu0.b32.cont [8/16] 0.0, 128
        %4419 = vxpose.xlu0.b32.cont [9/16] 0.0, 128
        %4420 = vxpose.xlu0.b32.cont [10/16] 0.0, 128
        %4421 = vxpose.xlu0.b32.cont [11/16] 0.0, 128
        %4422 = vxpose.xlu0.b32.cont [12/16] 0.0, 128
        %4423 = vxpose.xlu0.b32.cont [13/16] 0.0, 128
        %4424 = vxpose.xlu0.b32.cont [14/16] 0.0, 128
        %4425 = vxpose.xlu0.b32.cont [15/16] 0.0, 128
        %4426 = vxpose.xlu0.b32.end [16/16] 0.0, 128
        %v4427 = vpop.trf.xlu0
        %v4428 = vpop.trf.xlu0
        %v4429 = vpop.trf.xlu0
        %v4430 = vpop.trf.xlu0
        %v4431 = vpop.trf.xlu0
        %v4432 = vpop.trf.xlu0
        %v4433 = vpop.trf.xlu0
        %v4434 = vpop.trf.xlu0
        %v4435 = vpop.trf.xlu0
        %v4436 = vpop.trf.xlu0
        %v4437 = vpop.trf.xlu0
        %v4438 = vpop.trf.xlu0
        %v4439 = vpop.trf.xlu0
        %v4440 = vpop.trf.xlu0
        %v4441 = vpop.trf.xlu0
        %v4442 = vpop.trf.xlu0
        %v4444 = vsel %vm455, %v4427, 0
        %4446 = vmatpush.msra.mxu0 0.0
        %4447 = vmatpush.msra.mxu0 0.0
        %4448 = vmatpush.msra.mxu0 0.0
        %4449 = vmatpush.msra.mxu0 0.0
        %4450 = vmatpush.msra.mxu0 0.0
        %4451 = vmatpush.msra.mxu0 0.0
        %4452 = vmatpush.msra.mxu0 0.0
        %4453 = vmatpush.msra.mxu0 0.0
        %4454 = vmatpush.msra.mxu0 0.0
        %4455 = vmatpush.msra.mxu0 0.0
        %4456 = vmatpush.msra.mxu0 0.0
        %4457 = vmatpush.msra.mxu0 0.0
        %4458 = vmatpush.msra.mxu0 0.0
        %4459 = vmatpush.msra.mxu0 0.0
        %4460 = vmatpush.msra.mxu0 0.0
        %4461 = vmatpush.msra.mxu0 %v485
        %4462 = vmatmul.f32.gmra.mxu0 %v4444
        %v4463 = vpop.f32.mrf.mxu0
        %v4464 = vadd.f32 %v3584, %v4463
        %4465 = vdwg.mxu0
        %4466 = vxpose.xlu0.b32.start [1/16] %v2793, 128
        %4467 = vxpose.xlu0.b32.cont [2/16] 0.0, 128
        %4468 = vxpose.xlu0.b32.cont [3/16] 0.0, 128
        %4469 = vxpose.xlu0.b32.cont [4/16] 0.0, 128
        %4470 = vxpose.xlu0.b32.cont [5/16] 0.0, 128
        %4471 = vxpose.xlu0.b32.cont [6/16] 0.0, 128
        %4472 = vxpose.xlu0.b32.cont [7/16] 0.0, 128
        %4473 = vxpose.xlu0.b32.cont [8/16] 0.0, 128
        %4474 = vxpose.xlu0.b32.cont [9/16] 0.0, 128
        %4475 = vxpose.xlu0.b32.cont [10/16] 0.0, 128
        %4476 = vxpose.xlu0.b32.cont [11/16] 0.0, 128
        %4477 = vxpose.xlu0.b32.cont [12/16] 0.0, 128
        %4478 = vxpose.xlu0.b32.cont [13/16] 0.0, 128
        %4479 = vxpose.xlu0.b32.cont [14/16] 0.0, 128
        %4480 = vxpose.xlu0.b32.cont [15/16] 0.0, 128
        %4481 = vxpose.xlu0.b32.end [16/16] 0.0, 128
        %v4482 = vpop.trf.xlu0
        %v4483 = vpop.trf.xlu0
        %v4484 = vpop.trf.xlu0
        %v4485 = vpop.trf.xlu0
        %v4486 = vpop.trf.xlu0
        %v4487 = vpop.trf.xlu0
        %v4488 = vpop.trf.xlu0
        %v4489 = vpop.trf.xlu0
        %v4490 = vpop.trf.xlu0
        %v4491 = vpop.trf.xlu0
        %v4492 = vpop.trf.xlu0
        %v4493 = vpop.trf.xlu0
        %v4494 = vpop.trf.xlu0
        %v4495 = vpop.trf.xlu0
        %v4496 = vpop.trf.xlu0
        %v4497 = vpop.trf.xlu0
        %v4499 = vsel %vm455, %v4482, 0
        %4501 = vmatpush.msra.mxu0 0.0
        %4502 = vmatpush.msra.mxu0 0.0
        %4503 = vmatpush.msra.mxu0 0.0
        %4504 = vmatpush.msra.mxu0 0.0
        %4505 = vmatpush.msra.mxu0 0.0
        %4506 = vmatpush.msra.mxu0 0.0
        %4507 = vmatpush.msra.mxu0 0.0
        %4508 = vmatpush.msra.mxu0 0.0
        %4509 = vmatpush.msra.mxu0 0.0
        %4510 = vmatpush.msra.mxu0 0.0
        %4511 = vmatpush.msra.mxu0 0.0
        %4512 = vmatpush.msra.mxu0 0.0
        %4513 = vmatpush.msra.mxu0 0.0
        %4514 = vmatpush.msra.mxu0 0.0
        %4515 = vmatpush.msra.mxu0 0.0
        %4516 = vmatpush.msra.mxu0 %v485
        %4517 = vmatmul.f32.gmra.mxu0 %v4499
        %v4518 = vpop.f32.mrf.mxu0
        %v4519 = vadd.f32 %v3639, %v4518
        %4520 = vdwg.mxu0
        %4521 = vxpose.xlu0.b32.start [1/16] %v2796, 128
        %4522 = vxpose.xlu0.b32.cont [2/16] 0.0, 128
        %4523 = vxpose.xlu0.b32.cont [3/16] 0.0, 128
        %4524 = vxpose.xlu0.b32.cont [4/16] 0.0, 128
        %4525 = vxpose.xlu0.b32.cont [5/16] 0.0, 128
        %4526 = vxpose.xlu0.b32.cont [6/16] 0.0, 128
        %4527 = vxpose.xlu0.b32.cont [7/16] 0.0, 128
        %4528 = vxpose.xlu0.b32.cont [8/16] 0.0, 128
        %4529 = vxpose.xlu0.b32.cont [9/16] 0.0, 128
        %4530 = vxpose.xlu0.b32.cont [10/16] 0.0, 128
        %4531 = vxpose.xlu0.b32.cont [11/16] 0.0, 128
        %4532 = vxpose.xlu0.b32.cont [12/16] 0.0, 128
        %4533 = vxpose.xlu0.b32.cont [13/16] 0.0, 128
        %4534 = vxpose.xlu0.b32.cont [14/16] 0.0, 128
        %4535 = vxpose.xlu0.b32.cont [15/16] 0.0, 128
        %4536 = vxpose.xlu0.b32.end [16/16] 0.0, 128
        %v4537 = vpop.trf.xlu0
        %v4538 = vpop.trf.xlu0
        %v4539 = vpop.trf.xlu0
        %v4540 = vpop.trf.xlu0
        %v4541 = vpop.trf.xlu0
        %v4542 = vpop.trf.xlu0
        %v4543 = vpop.trf.xlu0
        %v4544 = vpop.trf.xlu0
        %v4545 = vpop.trf.xlu0
        %v4546 = vpop.trf.xlu0
        %v4547 = vpop.trf.xlu0
        %v4548 = vpop.trf.xlu0
        %v4549 = vpop.trf.xlu0
        %v4550 = vpop.trf.xlu0
        %v4551 = vpop.trf.xlu0
        %v4552 = vpop.trf.xlu0
        %v4554 = vsel %vm455, %v4537, 0
        %4556 = vmatpush.msra.mxu0 0.0
        %4557 = vmatpush.msra.mxu0 0.0
        %4558 = vmatpush.msra.mxu0 0.0
        %4559 = vmatpush.msra.mxu0 0.0
        %4560 = vmatpush.msra.mxu0 0.0
        %4561 = vmatpush.msra.mxu0 0.0
        %4562 = vmatpush.msra.mxu0 0.0
        %4563 = vmatpush.msra.mxu0 0.0
        %4564 = vmatpush.msra.mxu0 0.0
        %4565 = vmatpush.msra.mxu0 0.0
        %4566 = vmatpush.msra.mxu0 0.0
        %4567 = vmatpush.msra.mxu0 0.0
        %4568 = vmatpush.msra.mxu0 0.0
        %4569 = vmatpush.msra.mxu0 0.0
        %4570 = vmatpush.msra.mxu0 0.0
        %4571 = vmatpush.msra.mxu0 %v485
        %4572 = vmatmul.f32.gmra.mxu0 %v4554
        %v4573 = vpop.f32.mrf.mxu0
        %v4574 = vadd.f32 %v3694, %v4573
        %4575 = vdwg.mxu0
        %4576 = vxpose.xlu0.b32.start [1/16] %v2799, 128
        %4577 = vxpose.xlu0.b32.cont [2/16] 0.0, 128
        %4578 = vxpose.xlu0.b32.cont [3/16] 0.0, 128
        %4579 = vxpose.xlu0.b32.cont [4/16] 0.0, 128
        %4580 = vxpose.xlu0.b32.cont [5/16] 0.0, 128
        %4581 = vxpose.xlu0.b32.cont [6/16] 0.0, 128
        %4582 = vxpose.xlu0.b32.cont [7/16] 0.0, 128
        %4583 = vxpose.xlu0.b32.cont [8/16] 0.0, 128
        %4584 = vxpose.xlu0.b32.cont [9/16] 0.0, 128
        %4585 = vxpose.xlu0.b32.cont [10/16] 0.0, 128
        %4586 = vxpose.xlu0.b32.cont [11/16] 0.0, 128
        %4587 = vxpose.xlu0.b32.cont [12/16] 0.0, 128
        %4588 = vxpose.xlu0.b32.cont [13/16] 0.0, 128
        %4589 = vxpose.xlu0.b32.cont [14/16] 0.0, 128
        %4590 = vxpose.xlu0.b32.cont [15/16] 0.0, 128
        %4591 = vxpose.xlu0.b32.end [16/16] 0.0, 128
        %v4592 = vpop.trf.xlu0
        %v4593 = vpop.trf.xlu0
        %v4594 = vpop.trf.xlu0
        %v4595 = vpop.trf.xlu0
        %v4596 = vpop.trf.xlu0
        %v4597 = vpop.trf.xlu0
        %v4598 = vpop.trf.xlu0
        %v4599 = vpop.trf.xlu0
        %v4600 = vpop.trf.xlu0
        %v4601 = vpop.trf.xlu0
        %v4602 = vpop.trf.xlu0
        %v4603 = vpop.trf.xlu0
        %v4604 = vpop.trf.xlu0
        %v4605 = vpop.trf.xlu0
        %v4606 = vpop.trf.xlu0
        %v4607 = vpop.trf.xlu0
        %v4609 = vsel %vm455, %v4592, 0
        %4611 = vmatpush.msra.mxu0 0.0
        %4612 = vmatpush.msra.mxu0 0.0
        %4613 = vmatpush.msra.mxu0 0.0
        %4614 = vmatpush.msra.mxu0 0.0
        %4615 = vmatpush.msra.mxu0 0.0
        %4616 = vmatpush.msra.mxu0 0.0
        %4617 = vmatpush.msra.mxu0 0.0
        %4618 = vmatpush.msra.mxu0 0.0
        %4619 = vmatpush.msra.mxu0 0.0
        %4620 = vmatpush.msra.mxu0 0.0
        %4621 = vmatpush.msra.mxu0 0.0
        %4622 = vmatpush.msra.mxu0 0.0
        %4623 = vmatpush.msra.mxu0 0.0
        %4624 = vmatpush.msra.mxu0 0.0
        %4625 = vmatpush.msra.mxu0 0.0
        %4626 = vmatpush.msra.mxu0 %v485
        %4627 = vmatmul.f32.gmra.mxu0 %v4609
        %v4628 = vpop.f32.mrf.mxu0
        %v4629 = vadd.f32 %v3749, %v4628
        %4630 = vdwg.mxu0
        %v4631 = vadd.f32 %v3804, %v2473
        %v4632 = vadd.f32 %v3859, %v2473
        %v4633 = vadd.f32 %v3914, %v2473
        %v4634 = vadd.f32 %v3969, %v2473
        %v4635 = vadd.f32 %v4024, %v2473
        %v4636 = vadd.f32 %v4079, %v2473
        %v4637 = vadd.f32 %v4134, %v2473
        %v4638 = vadd.f32 %v4189, %v2473
        %v4639 = vadd.f32 %v4244, %v2473
        %v4640 = vadd.f32 %v4299, %v2473
        %v4641 = vadd.f32 %v4354, %v2473
        %v4642 = vadd.f32 %v4409, %v2473
        %v4643 = vadd.f32 %v4464, %v2473
        %v4644 = vadd.f32 %v4519, %v2473
        %v4645 = vadd.f32 %v4574, %v2473
        %v4646 = vadd.f32 %v4629, %v2473
        %v4647 = vrot.slane %v4633, 4
        %v4648 = vsel %vm283, %v4647, %v4631
        %v4649 = vrot.slane %v4631, 4
        %v4650 = vsel %vm283, %v4633, %v4649
        %v4652 = vunpack.c.l.s4 1983009808
        %v4653 = vunpack.c.0.s8 %v4652
        %v4654 = vperm.slane %v4648, %v4653
        %v4656 = vunpack.c.l.s4 1983009808
        %v4657 = vunpack.c.0.s8 %v4656
        %v4658 = vperm.slane %v4650, %v4657
        %v4659 = vrot.slane %v4634, 4
        %v4660 = vsel %vm283, %v4659, %v4632
        %v4661 = vrot.slane %v4632, 4
        %v4662 = vsel %vm283, %v4634, %v4661
        %v4664 = vunpack.c.l.s4 1983009808
        %v4665 = vunpack.c.0.s8 %v4664
        %v4666 = vperm.slane %v4660, %v4665
        %v4668 = vunpack.c.l.s4 1983009808
        %v4669 = vunpack.c.0.s8 %v4668
        %v4670 = vperm.slane %v4662, %v4669
        %v4671 = vrot.slane %v4637, 4
        %v4672 = vsel %vm283, %v4671, %v4635
        %v4673 = vrot.slane %v4635, 4
        %v4674 = vsel %vm283, %v4637, %v4673
        %v4676 = vunpack.c.l.s4 1983009808
        %v4677 = vunpack.c.0.s8 %v4676
        %v4678 = vperm.slane %v4672, %v4677
        %v4680 = vunpack.c.l.s4 1983009808
        %v4681 = vunpack.c.0.s8 %v4680
        %v4682 = vperm.slane %v4674, %v4681
        %v4683 = vrot.slane %v4638, 4
        %v4684 = vsel %vm283, %v4683, %v4636
        %v4685 = vrot.slane %v4636, 4
        %v4686 = vsel %vm283, %v4638, %v4685
        %v4688 = vunpack.c.l.s4 1983009808
        %v4689 = vunpack.c.0.s8 %v4688
        %v4690 = vperm.slane %v4684, %v4689
        %v4692 = vunpack.c.l.s4 1983009808
        %v4693 = vunpack.c.0.s8 %v4692
        %v4694 = vperm.slane %v4686, %v4693
        %v4695 = vrot.slane %v4666, 4
        %v4696 = vsel %vm283, %v4695, %v4654
        %v4697 = vrot.slane %v4654, 4
        %v4698 = vsel %vm283, %v4666, %v4697
        %v4700 = vunpack.c.l.s4 1934713408
        %v4701 = vunpack.c.0.s8 %v4700
        %v4702 = vperm.slane %v4696, %v4701
        %v4704 = vunpack.c.l.s4 1934713408
        %v4705 = vunpack.c.0.s8 %v4704
        %v4706 = vperm.slane %v4698, %v4705
        %v4707 = vrot.slane %v4670, 4
        %v4708 = vsel %vm283, %v4707, %v4658
        %v4709 = vrot.slane %v4658, 4
        %v4710 = vsel %vm283, %v4670, %v4709
        %v4712 = vunpack.c.l.s4 1934713408
        %v4713 = vunpack.c.0.s8 %v4712
        %v4714 = vperm.slane %v4708, %v4713
        %v4716 = vunpack.c.l.s4 1934713408
        %v4717 = vunpack.c.0.s8 %v4716
        %v4718 = vperm.slane %v4710, %v4717
        %v4719 = vrot.slane %v4690, 4
        %v4720 = vsel %vm283, %v4719, %v4678
        %v4721 = vrot.slane %v4678, 4
        %v4722 = vsel %vm283, %v4690, %v4721
        %v4724 = vunpack.c.l.s4 1934713408
        %v4725 = vunpack.c.0.s8 %v4724
        %v4726 = vperm.slane %v4720, %v4725
        %v4728 = vunpack.c.l.s4 1934713408
        %v4729 = vunpack.c.0.s8 %v4728
        %v4730 = vperm.slane %v4722, %v4729
        %v4731 = vrot.slane %v4694, 4
        %v4732 = vsel %vm283, %v4731, %v4682
        %v4733 = vrot.slane %v4682, 4
        %v4734 = vsel %vm283, %v4694, %v4733
        %v4736 = vunpack.c.l.s4 1934713408
        %v4737 = vunpack.c.0.s8 %v4736
        %v4738 = vperm.slane %v4732, %v4737
        %v4740 = vunpack.c.l.s4 1934713408
        %v4741 = vunpack.c.0.s8 %v4740
        %v4742 = vperm.slane %v4734, %v4741
        %v4743 = vrot.slane %v4726, 4
        %v4744 = vsel %vm283, %v4743, %v4702
        %v4745 = vrot.slane %v4702, 4
        %v4746 = vsel %vm283, %v4726, %v4745
        %v4747 = vrot.slane %v4730, 4
        %v4748 = vsel %vm283, %v4747, %v4706
        %v4749 = vrot.slane %v4706, 4
        %v4750 = vsel %vm283, %v4730, %v4749
        %v4751 = vrot.slane %v4738, 4
        %v4752 = vsel %vm283, %v4751, %v4714
        %v4753 = vrot.slane %v4714, 4
        %v4754 = vsel %vm283, %v4738, %v4753
        %v4755 = vrot.slane %v4742, 4
        %v4756 = vsel %vm283, %v4755, %v4718
        %v4757 = vrot.slane %v4718, 4
        %v4758 = vsel %vm283, %v4742, %v4757
        %v4759 = vrot.slane %v4641, 4
        %v4760 = vsel %vm283, %v4759, %v4639
        %v4761 = vrot.slane %v4639, 4
        %v4762 = vsel %vm283, %v4641, %v4761
        %v4764 = vunpack.c.l.s4 1983009808
        %v4765 = vunpack.c.0.s8 %v4764
        %v4766 = vperm.slane %v4760, %v4765
        %v4768 = vunpack.c.l.s4 1983009808
        %v4769 = vunpack.c.0.s8 %v4768
        %v4770 = vperm.slane %v4762, %v4769
        %v4771 = vrot.slane %v4642, 4
        %v4772 = vsel %vm283, %v4771, %v4640
        %v4773 = vrot.slane %v4640, 4
        %v4774 = vsel %vm283, %v4642, %v4773
        %v4776 = vunpack.c.l.s4 1983009808
        %v4777 = vunpack.c.0.s8 %v4776
        %v4778 = vperm.slane %v4772, %v4777
        %v4780 = vunpack.c.l.s4 1983009808
        %v4781 = vunpack.c.0.s8 %v4780
        %v4782 = vperm.slane %v4774, %v4781
        %v4783 = vrot.slane %v4645, 4
        %v4784 = vsel %vm283, %v4783, %v4643
        %v4785 = vrot.slane %v4643, 4
        %v4786 = vsel %vm283, %v4645, %v4785
        %v4788 = vunpack.c.l.s4 1983009808
        %v4789 = vunpack.c.0.s8 %v4788
        %v4790 = vperm.slane %v4784, %v4789
        %v4792 = vunpack.c.l.s4 1983009808
        %v4793 = vunpack.c.0.s8 %v4792
        %v4794 = vperm.slane %v4786, %v4793
        %v4795 = vrot.slane %v4646, 4
        %v4796 = vsel %vm283, %v4795, %v4644
        %v4797 = vrot.slane %v4644, 4
        %v4798 = vsel %vm283, %v4646, %v4797
        %v4800 = vunpack.c.l.s4 1983009808
        %v4801 = vunpack.c.0.s8 %v4800
        %v4802 = vperm.slane %v4796, %v4801
        %v4804 = vunpack.c.l.s4 1983009808
        %v4805 = vunpack.c.0.s8 %v4804
        %v4806 = vperm.slane %v4798, %v4805
        %v4807 = vrot.slane %v4778, 4
        %v4808 = vsel %vm283, %v4807, %v4766
        %v4809 = vrot.slane %v4766, 4
        %v4810 = vsel %vm283, %v4778, %v4809
        %v4812 = vunpack.c.l.s4 1934713408
        %v4813 = vunpack.c.0.s8 %v4812
        %v4814 = vperm.slane %v4808, %v4813
        %v4816 = vunpack.c.l.s4 1934713408
        %v4817 = vunpack.c.0.s8 %v4816
        %v4818 = vperm.slane %v4810, %v4817
        %v4819 = vrot.slane %v4782, 4
        %v4820 = vsel %vm283, %v4819, %v4770
        %v4821 = vrot.slane %v4770, 4
        %v4822 = vsel %vm283, %v4782, %v4821
        %v4824 = vunpack.c.l.s4 1934713408
        %v4825 = vunpack.c.0.s8 %v4824
        %v4826 = vperm.slane %v4820, %v4825
        %v4828 = vunpack.c.l.s4 1934713408
        %v4829 = vunpack.c.0.s8 %v4828
        %v4830 = vperm.slane %v4822, %v4829
        %v4831 = vrot.slane %v4802, 4
        %v4832 = vsel %vm283, %v4831, %v4790
        %v4833 = vrot.slane %v4790, 4
        %v4834 = vsel %vm283, %v4802, %v4833
        %v4836 = vunpack.c.l.s4 1934713408
        %v4837 = vunpack.c.0.s8 %v4836
        %v4838 = vperm.slane %v4832, %v4837
        %v4840 = vunpack.c.l.s4 1934713408
        %v4841 = vunpack.c.0.s8 %v4840
        %v4842 = vperm.slane %v4834, %v4841
        %v4843 = vrot.slane %v4806, 4
        %v4844 = vsel %vm283, %v4843, %v4794
        %v4845 = vrot.slane %v4794, 4
        %v4846 = vsel %vm283, %v4806, %v4845
        %v4848 = vunpack.c.l.s4 1934713408
        %v4849 = vunpack.c.0.s8 %v4848
        %v4850 = vperm.slane %v4844, %v4849
        %v4852 = vunpack.c.l.s4 1934713408
        %v4853 = vunpack.c.0.s8 %v4852
        %v4854 = vperm.slane %v4846, %v4853
        %v4855 = vrot.slane %v4838, 4
        %v4856 = vsel %vm283, %v4855, %v4814
        %v4857 = vrot.slane %v4814, 4
        %v4858 = vsel %vm283, %v4838, %v4857
        %v4859 = vrot.slane %v4842, 4
        %v4860 = vsel %vm283, %v4859, %v4818
        %v4861 = vrot.slane %v4818, 4
        %v4862 = vsel %vm283, %v4842, %v4861
        %v4863 = vrot.slane %v4850, 4
        %v4864 = vsel %vm283, %v4863, %v4826
        %v4865 = vrot.slane %v4826, 4
        %v4866 = vsel %vm283, %v4850, %v4865
        %v4867 = vrot.slane %v4854, 4
        %v4868 = vsel %vm283, %v4867, %v4830
        %v4869 = vrot.slane %v4830, 4
        %v4870 = vsel %vm283, %v4854, %v4869
        %4887 = vrot.lane.b32.xlu0 %v4744, 16
        %v4888 = vpop.permute.xlu0 %4887
        %4889 = vrot.lane.b32.xlu0 %v4856, 16
        %v4890 = vpop.permute.xlu0 %4889
        %4891 = vrot.lane.b32.xlu0 %v4746, 16
        %v4892 = vpop.permute.xlu0 %4891
        %4893 = vrot.lane.b32.xlu0 %v4858, 16
        %v4894 = vpop.permute.xlu0 %4893
        %4895 = vrot.lane.b32.xlu0 %v4748, 16
        %v4896 = vpop.permute.xlu0 %4895
        %4897 = vrot.lane.b32.xlu0 %v4860, 16
        %v4898 = vpop.permute.xlu0 %4897
        %4899 = vrot.lane.b32.xlu0 %v4750, 16
        %v4900 = vpop.permute.xlu0 %4899
        %4901 = vrot.lane.b32.xlu0 %v4862, 16
        %v4902 = vpop.permute.xlu0 %4901
        %4903 = vrot.lane.b32.xlu0 %v4752, 16
        %v4904 = vpop.permute.xlu0 %4903
        %4905 = vrot.lane.b32.xlu0 %v4864, 16
        %v4906 = vpop.permute.xlu0 %4905
        %4907 = vrot.lane.b32.xlu0 %v4754, 16
        %v4908 = vpop.permute.xlu0 %4907
        %4909 = vrot.lane.b32.xlu0 %v4866, 16
        %v4910 = vpop.permute.xlu0 %4909
        %4911 = vrot.lane.b32.xlu0 %v4756, 16
        %v4912 = vpop.permute.xlu0 %4911
        %4913 = vrot.lane.b32.xlu0 %v4868, 16
        %v4914 = vpop.permute.xlu0 %4913
        %4915 = vrot.lane.b32.xlu0 %v4758, 16
        %v4916 = vpop.permute.xlu0 %4915
        %4917 = vrot.lane.b32.xlu0 %v4870, 16
        %v4918 = vpop.permute.xlu0 %4917
        %vm4935 = vcmask 261248
        %4936 = vst.msk [vmem:[%s273] sm:$0xff] %vm4935, %v4888
        %4937 = vst.msk [vmem:[%s273 + $0x8] sm:$0xff] %vm4935, %v4890
        %4938 = vst.msk [vmem:[%s273 + $0x20] sm:$0xff] %vm4935, %v4892
        %4939 = vst.msk [vmem:[%s273 + $0x28] sm:$0xff] %vm4935, %v4894
        %4940 = vst.msk [vmem:[%s273 + $0x40] sm:$0xff] %vm4935, %v4896
        %4941 = vst.msk [vmem:[%s273 + $0x48] sm:$0xff] %vm4935, %v4898
        %4942 = vst.msk [vmem:[%s273 + $0x60] sm:$0xff] %vm4935, %v4900
        %4943 = vst.msk [vmem:[%s273 + $0x68] sm:$0xff] %vm4935, %v4902
        %4944 = vst.msk [vmem:[%s273 + $0x80] sm:$0xff] %vm4935, %v4904
        %4945 = vst.msk [vmem:[%s273 + $0x88] sm:$0xff] %vm4935, %v4906
        %4946 = vst.msk [vmem:[%s273 + $0xa0] sm:$0xff] %vm4935, %v4908
        %4947 = vst.msk [vmem:[%s273 + $0xa8] sm:$0xff] %vm4935, %v4910
        %4948 = vst.msk [vmem:[%s273 + $0xc0] sm:$0xff] %vm4935, %v4912
        %4949 = vst.msk [vmem:[%s273 + $0xc8] sm:$0xff] %vm4935, %v4914
        %4950 = vst.msk [vmem:[%s273 + $0xe0] sm:$0xff] %vm4935, %v4916
        %4951 = vst.msk [vmem:[%s273 + $0xe8] sm:$0xff] %vm4935, %v4918
        %s4952 = scalar_lea.vmem %s0, 16
        %v4953 = vld [vmem:[%s4952] sm:$0xf]
        %v4955 = vsel %vm571, %v4953, 0
        %4957 = vmatpush.msra.mxu0 0.0
        %4958 = vmatpush.msra.mxu0 0.0
        %4959 = vmatpush.msra.mxu0 0.0
        %4960 = vmatpush.msra.mxu0 0.0
        %4961 = vmatpush.msra.mxu0 0.0
        %4962 = vmatpush.msra.mxu0 0.0
        %4963 = vmatpush.msra.mxu0 0.0
        %4964 = vmatpush.msra.mxu0 0.0
        %4965 = vmatpush.msra.mxu0 0.0
        %4966 = vmatpush.msra.mxu0 0.0
        %4967 = vmatpush.msra.mxu0 0.0
        %4968 = vmatpush.msra.mxu0 0.0
        %4969 = vmatpush.msra.mxu0 0.0
        %4970 = vmatpush.msra.mxu0 0.0
        %4971 = vmatpush.msra.mxu0 0.0
        %4972 = vmatpush.msra.mxu0 %v4955
        %4973 = vmatmul.f32.gmra.mxu0 %v524
        %v4974 = vpop.f32.mrf.mxu0
        %v4975 = vadd.f32 0.0, %v4974
        %4976 = vmatmul.f32.gmra.mxu0 %v527
        %v4977 = vpop.f32.mrf.mxu0
        %v4978 = vadd.f32 0.0, %v4977
        %4979 = vmatmul.f32.gmra.mxu0 %v530
        %v4980 = vpop.f32.mrf.mxu0
        %v4981 = vadd.f32 0.0, %v4980
        %4982 = vmatmul.f32.gmra.mxu0 %v533
        %v4983 = vpop.f32.mrf.mxu0
        %v4984 = vadd.f32 0.0, %v4983
        %4985 = vmatmul.f32.gmra.mxu0 %v536
        %v4986 = vpop.f32.mrf.mxu0
        %v4987 = vadd.f32 0.0, %v4986
        %4988 = vmatmul.f32.gmra.mxu0 %v539
        %v4989 = vpop.f32.mrf.mxu0
        %v4990 = vadd.f32 0.0, %v4989
        %4991 = vmatmul.f32.gmra.mxu0 %v542
        %v4992 = vpop.f32.mrf.mxu0
        %v4993 = vadd.f32 0.0, %v4992
        %4994 = vmatmul.f32.gmra.mxu0 %v545
        %v4995 = vpop.f32.mrf.mxu0
        %v4996 = vadd.f32 0.0, %v4995
        %4997 = vmatmul.f32.gmra.mxu0 %v548
        %v4998 = vpop.f32.mrf.mxu0
        %v4999 = vadd.f32 0.0, %v4998
        %5000 = vmatmul.f32.gmra.mxu0 %v551
        %v5001 = vpop.f32.mrf.mxu0
        %v5002 = vadd.f32 0.0, %v5001
        %5003 = vmatmul.f32.gmra.mxu0 %v554
        %v5004 = vpop.f32.mrf.mxu0
        %v5005 = vadd.f32 0.0, %v5004
        %5006 = vmatmul.f32.gmra.mxu0 %v557
        %v5007 = vpop.f32.mrf.mxu0
        %v5008 = vadd.f32 0.0, %v5007
        %5009 = vmatmul.f32.gmra.mxu0 %v560
        %v5010 = vpop.f32.mrf.mxu0
        %v5011 = vadd.f32 0.0, %v5010
        %5012 = vmatmul.f32.gmra.mxu0 %v563
        %v5013 = vpop.f32.mrf.mxu0
        %v5014 = vadd.f32 0.0, %v5013
        %5015 = vmatmul.f32.gmra.mxu0 %v566
        %v5016 = vpop.f32.mrf.mxu0
        %v5017 = vadd.f32 0.0, %v5016
        %5018 = vmatmul.f32.gmra.mxu0 %v569
        %v5019 = vpop.f32.mrf.mxu0
        %v5020 = vadd.f32 0.0, %v5019
        %5021 = vdwg.mxu0
        %s5022 = scalar_lea.vmem %s0, 20
        %v5023 = vld [vmem:[%s5022] sm:$0xf]
        %v5025 = vsel %vm571, %v5023, 0
        %5027 = vmatpush.msra.mxu0 0.0
        %5028 = vmatpush.msra.mxu0 0.0
        %5029 = vmatpush.msra.mxu0 0.0
        %5030 = vmatpush.msra.mxu0 0.0
        %5031 = vmatpush.msra.mxu0 0.0
        %5032 = vmatpush.msra.mxu0 0.0
        %5033 = vmatpush.msra.mxu0 0.0
        %5034 = vmatpush.msra.mxu0 0.0
        %5035 = vmatpush.msra.mxu0 0.0
        %5036 = vmatpush.msra.mxu0 0.0
        %5037 = vmatpush.msra.mxu0 0.0
        %5038 = vmatpush.msra.mxu0 0.0
        %5039 = vmatpush.msra.mxu0 0.0
        %5040 = vmatpush.msra.mxu0 0.0
        %5041 = vmatpush.msra.mxu0 0.0
        %5042 = vmatpush.msra.mxu0 %v5025
        %5043 = vmatmul.f32.gmra.mxu0 %v524
        %v5044 = vpop.f32.mrf.mxu0
        %v5045 = vadd.f32 0.0, %v5044
        %5046 = vmatmul.f32.gmra.mxu0 %v527
        %v5047 = vpop.f32.mrf.mxu0
        %v5048 = vadd.f32 0.0, %v5047
        %5049 = vmatmul.f32.gmra.mxu0 %v530
        %v5050 = vpop.f32.mrf.mxu0
        %v5051 = vadd.f32 0.0, %v5050
        %5052 = vmatmul.f32.gmra.mxu0 %v533
        %v5053 = vpop.f32.mrf.mxu0
        %v5054 = vadd.f32 0.0, %v5053
        %5055 = vmatmul.f32.gmra.mxu0 %v536
        %v5056 = vpop.f32.mrf.mxu0
        %v5057 = vadd.f32 0.0, %v5056
        %5058 = vmatmul.f32.gmra.mxu0 %v539
        %v5059 = vpop.f32.mrf.mxu0
        %v5060 = vadd.f32 0.0, %v5059
        %5061 = vmatmul.f32.gmra.mxu0 %v542
        %v5062 = vpop.f32.mrf.mxu0
        %v5063 = vadd.f32 0.0, %v5062
        %5064 = vmatmul.f32.gmra.mxu0 %v545
        %v5065 = vpop.f32.mrf.mxu0
        %v5066 = vadd.f32 0.0, %v5065
        %5067 = vmatmul.f32.gmra.mxu0 %v548
        %v5068 = vpop.f32.mrf.mxu0
        %v5069 = vadd.f32 0.0, %v5068
        %5070 = vmatmul.f32.gmra.mxu0 %v551
        %v5071 = vpop.f32.mrf.mxu0
        %v5072 = vadd.f32 0.0, %v5071
        %5073 = vmatmul.f32.gmra.mxu0 %v554
        %v5074 = vpop.f32.mrf.mxu0
        %v5075 = vadd.f32 0.0, %v5074
        %5076 = vmatmul.f32.gmra.mxu0 %v557
        %v5077 = vpop.f32.mrf.mxu0
        %v5078 = vadd.f32 0.0, %v5077
        %5079 = vmatmul.f32.gmra.mxu0 %v560
        %v5080 = vpop.f32.mrf.mxu0
        %v5081 = vadd.f32 0.0, %v5080
        %5082 = vmatmul.f32.gmra.mxu0 %v563
        %v5083 = vpop.f32.mrf.mxu0
        %v5084 = vadd.f32 0.0, %v5083
        %5085 = vmatmul.f32.gmra.mxu0 %v566
        %v5086 = vpop.f32.mrf.mxu0
        %v5087 = vadd.f32 0.0, %v5086
        %5088 = vmatmul.f32.gmra.mxu0 %v569
        %v5089 = vpop.f32.mrf.mxu0
        %v5090 = vadd.f32 0.0, %v5089
        %5091 = vdwg.mxu0
        %5092 = vxpose.xlu0.b32.start [1/16] %v5045, 128
        %5093 = vxpose.xlu0.b32.cont [2/16] 0.0, 128
        %5094 = vxpose.xlu0.b32.cont [3/16] 0.0, 128
        %5095 = vxpose.xlu0.b32.cont [4/16] 0.0, 128
        %5096 = vxpose.xlu0.b32.cont [5/16] 0.0, 128
        %5097 = vxpose.xlu0.b32.cont [6/16] 0.0, 128
        %5098 = vxpose.xlu0.b32.cont [7/16] 0.0, 128
        %5099 = vxpose.xlu0.b32.cont [8/16] 0.0, 128
        %5100 = vxpose.xlu0.b32.cont [9/16] 0.0, 128
        %5101 = vxpose.xlu0.b32.cont [10/16] 0.0, 128
        %5102 = vxpose.xlu0.b32.cont [11/16] 0.0, 128
        %5103 = vxpose.xlu0.b32.cont [12/16] 0.0, 128
        %5104 = vxpose.xlu0.b32.cont [13/16] 0.0, 128
        %5105 = vxpose.xlu0.b32.cont [14/16] 0.0, 128
        %5106 = vxpose.xlu0.b32.cont [15/16] 0.0, 128
        %5107 = vxpose.xlu0.b32.end [16/16] 0.0, 128
        %v5108 = vpop.trf.xlu0
        %v5109 = vpop.trf.xlu0
        %v5110 = vpop.trf.xlu0
        %v5111 = vpop.trf.xlu0
        %v5112 = vpop.trf.xlu0
        %v5113 = vpop.trf.xlu0
        %v5114 = vpop.trf.xlu0
        %v5115 = vpop.trf.xlu0
        %v5116 = vpop.trf.xlu0
        %v5117 = vpop.trf.xlu0
        %v5118 = vpop.trf.xlu0
        %v5119 = vpop.trf.xlu0
        %v5120 = vpop.trf.xlu0
        %v5121 = vpop.trf.xlu0
        %v5122 = vpop.trf.xlu0
        %v5123 = vpop.trf.xlu0
        %v5125 = vsel %vm455, %v5108, 0
        %5127 = vmatpush.msra.mxu0 0.0
        %5128 = vmatpush.msra.mxu0 0.0
        %5129 = vmatpush.msra.mxu0 0.0
        %5130 = vmatpush.msra.mxu0 0.0
        %5131 = vmatpush.msra.mxu0 0.0
        %5132 = vmatpush.msra.mxu0 0.0
        %5133 = vmatpush.msra.mxu0 0.0
        %5134 = vmatpush.msra.mxu0 0.0
        %5135 = vmatpush.msra.mxu0 0.0
        %5136 = vmatpush.msra.mxu0 0.0
        %5137 = vmatpush.msra.mxu0 0.0
        %5138 = vmatpush.msra.mxu0 0.0
        %5139 = vmatpush.msra.mxu0 0.0
        %5140 = vmatpush.msra.mxu0 0.0
        %5141 = vmatpush.msra.mxu0 0.0
        %5142 = vmatpush.msra.mxu0 %v487
        %5143 = vmatmul.f32.gmra.mxu0 %v5125
        %v5144 = vpop.f32.mrf.mxu0
        %v5145 = vadd.f32 0.0, %v5144
        %5146 = vdwg.mxu0
        %5147 = vxpose.xlu0.b32.start [1/16] %v5048, 128
        %5148 = vxpose.xlu0.b32.cont [2/16] 0.0, 128
        %5149 = vxpose.xlu0.b32.cont [3/16] 0.0, 128
        %5150 = vxpose.xlu0.b32.cont [4/16] 0.0, 128
        %5151 = vxpose.xlu0.b32.cont [5/16] 0.0, 128
        %5152 = vxpose.xlu0.b32.cont [6/16] 0.0, 128
        %5153 = vxpose.xlu0.b32.cont [7/16] 0.0, 128
        %5154 = vxpose.xlu0.b32.cont [8/16] 0.0, 128
        %5155 = vxpose.xlu0.b32.cont [9/16] 0.0, 128
        %5156 = vxpose.xlu0.b32.cont [10/16] 0.0, 128
        %5157 = vxpose.xlu0.b32.cont [11/16] 0.0, 128
        %5158 = vxpose.xlu0.b32.cont [12/16] 0.0, 128
        %5159 = vxpose.xlu0.b32.cont [13/16] 0.0, 128
        %5160 = vxpose.xlu0.b32.cont [14/16] 0.0, 128
        %5161 = vxpose.xlu0.b32.cont [15/16] 0.0, 128
        %5162 = vxpose.xlu0.b32.end [16/16] 0.0, 128
        %v5163 = vpop.trf.xlu0
        %v5164 = vpop.trf.xlu0
        %v5165 = vpop.trf.xlu0
        %v5166 = vpop.trf.xlu0
        %v5167 = vpop.trf.xlu0
        %v5168 = vpop.trf.xlu0
        %v5169 = vpop.trf.xlu0
        %v5170 = vpop.trf.xlu0
        %v5171 = vpop.trf.xlu0
        %v5172 = vpop.trf.xlu0
        %v5173 = vpop.trf.xlu0
        %v5174 = vpop.trf.xlu0
        %v5175 = vpop.trf.xlu0
        %v5176 = vpop.trf.xlu0
        %v5177 = vpop.trf.xlu0
        %v5178 = vpop.trf.xlu0
        %v5180 = vsel %vm455, %v5163, 0
        %5182 = vmatpush.msra.mxu0 0.0
        %5183 = vmatpush.msra.mxu0 0.0
        %5184 = vmatpush.msra.mxu0 0.0
        %5185 = vmatpush.msra.mxu0 0.0
        %5186 = vmatpush.msra.mxu0 0.0
        %5187 = vmatpush.msra.mxu0 0.0
        %5188 = vmatpush.msra.mxu0 0.0
        %5189 = vmatpush.msra.mxu0 0.0
        %5190 = vmatpush.msra.mxu0 0.0
        %5191 = vmatpush.msra.mxu0 0.0
        %5192 = vmatpush.msra.mxu0 0.0
        %5193 = vmatpush.msra.mxu0 0.0
        %5194 = vmatpush.msra.mxu0 0.0
        %5195 = vmatpush.msra.mxu0 0.0
        %5196 = vmatpush.msra.mxu0 0.0
        %5197 = vmatpush.msra.mxu0 %v487
        %5198 = vmatmul.f32.gmra.mxu0 %v5180
        %v5199 = vpop.f32.mrf.mxu0
        %v5200 = vadd.f32 0.0, %v5199
        %5201 = vdwg.mxu0
        %5202 = vxpose.xlu0.b32.start [1/16] %v5051, 128
        %5203 = vxpose.xlu0.b32.cont [2/16] 0.0, 128
        %5204 = vxpose.xlu0.b32.cont [3/16] 0.0, 128
        %5205 = vxpose.xlu0.b32.cont [4/16] 0.0, 128
        %5206 = vxpose.xlu0.b32.cont [5/16] 0.0, 128
        %5207 = vxpose.xlu0.b32.cont [6/16] 0.0, 128
        %5208 = vxpose.xlu0.b32.cont [7/16] 0.0, 128
        %5209 = vxpose.xlu0.b32.cont [8/16] 0.0, 128
        %5210 = vxpose.xlu0.b32.cont [9/16] 0.0, 128
        %5211 = vxpose.xlu0.b32.cont [10/16] 0.0, 128
        %5212 = vxpose.xlu0.b32.cont [11/16] 0.0, 128
        %5213 = vxpose.xlu0.b32.cont [12/16] 0.0, 128
        %5214 = vxpose.xlu0.b32.cont [13/16] 0.0, 128
        %5215 = vxpose.xlu0.b32.cont [14/16] 0.0, 128
        %5216 = vxpose.xlu0.b32.cont [15/16] 0.0, 128
        %5217 = vxpose.xlu0.b32.end [16/16] 0.0, 128
        %v5218 = vpop.trf.xlu0
        %v5219 = vpop.trf.xlu0
        %v5220 = vpop.trf.xlu0
        %v5221 = vpop.trf.xlu0
        %v5222 = vpop.trf.xlu0
        %v5223 = vpop.trf.xlu0
        %v5224 = vpop.trf.xlu0
        %v5225 = vpop.trf.xlu0
        %v5226 = vpop.trf.xlu0
        %v5227 = vpop.trf.xlu0
        %v5228 = vpop.trf.xlu0
        %v5229 = vpop.trf.xlu0
        %v5230 = vpop.trf.xlu0
        %v5231 = vpop.trf.xlu0
        %v5232 = vpop.trf.xlu0
        %v5233 = vpop.trf.xlu0
        %v5235 = vsel %vm455, %v5218, 0
        %5237 = vmatpush.msra.mxu0 0.0
        %5238 = vmatpush.msra.mxu0 0.0
        %5239 = vmatpush.msra.mxu0 0.0
        %5240 = vmatpush.msra.mxu0 0.0
        %5241 = vmatpush.msra.mxu0 0.0
        %5242 = vmatpush.msra.mxu0 0.0
        %5243 = vmatpush.msra.mxu0 0.0
        %5244 = vmatpush.msra.mxu0 0.0
        %5245 = vmatpush.msra.mxu0 0.0
        %5246 = vmatpush.msra.mxu0 0.0
        %5247 = vmatpush.msra.mxu0 0.0
        %5248 = vmatpush.msra.mxu0 0.0
        %5249 = vmatpush.msra.mxu0 0.0
        %5250 = vmatpush.msra.mxu0 0.0
        %5251 = vmatpush.msra.mxu0 0.0
        %5252 = vmatpush.msra.mxu0 %v487
        %5253 = vmatmul.f32.gmra.mxu0 %v5235
        %v5254 = vpop.f32.mrf.mxu0
        %v5255 = vadd.f32 0.0, %v5254
        %5256 = vdwg.mxu0
        %5257 = vxpose.xlu0.b32.start [1/16] %v5054, 128
        %5258 = vxpose.xlu0.b32.cont [2/16] 0.0, 128
        %5259 = vxpose.xlu0.b32.cont [3/16] 0.0, 128
        %5260 = vxpose.xlu0.b32.cont [4/16] 0.0, 128
        %5261 = vxpose.xlu0.b32.cont [5/16] 0.0, 128
        %5262 = vxpose.xlu0.b32.cont [6/16] 0.0, 128
        %5263 = vxpose.xlu0.b32.cont [7/16] 0.0, 128
        %5264 = vxpose.xlu0.b32.cont [8/16] 0.0, 128
        %5265 = vxpose.xlu0.b32.cont [9/16] 0.0, 128
        %5266 = vxpose.xlu0.b32.cont [10/16] 0.0, 128
        %5267 = vxpose.xlu0.b32.cont [11/16] 0.0, 128
        %5268 = vxpose.xlu0.b32.cont [12/16] 0.0, 128
        %5269 = vxpose.xlu0.b32.cont [13/16] 0.0, 128
        %5270 = vxpose.xlu0.b32.cont [14/16] 0.0, 128
        %5271 = vxpose.xlu0.b32.cont [15/16] 0.0, 128
        %5272 = vxpose.xlu0.b32.end [16/16] 0.0, 128
        %v5273 = vpop.trf.xlu0
        %v5274 = vpop.trf.xlu0
        %v5275 = vpop.trf.xlu0
        %v5276 = vpop.trf.xlu0
        %v5277 = vpop.trf.xlu0
        %v5278 = vpop.trf.xlu0
        %v5279 = vpop.trf.xlu0
        %v5280 = vpop.trf.xlu0
        %v5281 = vpop.trf.xlu0
        %v5282 = vpop.trf.xlu0
        %v5283 = vpop.trf.xlu0
        %v5284 = vpop.trf.xlu0
        %v5285 = vpop.trf.xlu0
        %v5286 = vpop.trf.xlu0
        %v5287 = vpop.trf.xlu0
        %v5288 = vpop.trf.xlu0
        %v5290 = vsel %vm455, %v5273, 0
        %5292 = vmatpush.msra.mxu0 0.0
        %5293 = vmatpush.msra.mxu0 0.0
        %5294 = vmatpush.msra.mxu0 0.0
        %5295 = vmatpush.msra.mxu0 0.0
        %5296 = vmatpush.msra.mxu0 0.0
        %5297 = vmatpush.msra.mxu0 0.0
        %5298 = vmatpush.msra.mxu0 0.0
        %5299 = vmatpush.msra.mxu0 0.0
        %5300 = vmatpush.msra.mxu0 0.0
        %5301 = vmatpush.msra.mxu0 0.0
        %5302 = vmatpush.msra.mxu0 0.0
        %5303 = vmatpush.msra.mxu0 0.0
        %5304 = vmatpush.msra.mxu0 0.0
        %5305 = vmatpush.msra.mxu0 0.0
        %5306 = vmatpush.msra.mxu0 0.0
        %5307 = vmatpush.msra.mxu0 %v487
        %5308 = vmatmul.f32.gmra.mxu0 %v5290
        %v5309 = vpop.f32.mrf.mxu0
        %v5310 = vadd.f32 0.0, %v5309
        %5311 = vdwg.mxu0
        %5312 = vxpose.xlu0.b32.start [1/16] %v5057, 128
        %5313 = vxpose.xlu0.b32.cont [2/16] 0.0, 128
        %5314 = vxpose.xlu0.b32.cont [3/16] 0.0, 128
        %5315 = vxpose.xlu0.b32.cont [4/16] 0.0, 128
        %5316 = vxpose.xlu0.b32.cont [5/16] 0.0, 128
        %5317 = vxpose.xlu0.b32.cont [6/16] 0.0, 128
        %5318 = vxpose.xlu0.b32.cont [7/16] 0.0, 128
        %5319 = vxpose.xlu0.b32.cont [8/16] 0.0, 128
        %5320 = vxpose.xlu0.b32.cont [9/16] 0.0, 128
        %5321 = vxpose.xlu0.b32.cont [10/16] 0.0, 128
        %5322 = vxpose.xlu0.b32.cont [11/16] 0.0, 128
        %5323 = vxpose.xlu0.b32.cont [12/16] 0.0, 128
        %5324 = vxpose.xlu0.b32.cont [13/16] 0.0, 128
        %5325 = vxpose.xlu0.b32.cont [14/16] 0.0, 128
        %5326 = vxpose.xlu0.b32.cont [15/16] 0.0, 128
        %5327 = vxpose.xlu0.b32.end [16/16] 0.0, 128
        %v5328 = vpop.trf.xlu0
        %v5329 = vpop.trf.xlu0
        %v5330 = vpop.trf.xlu0
        %v5331 = vpop.trf.xlu0
        %v5332 = vpop.trf.xlu0
        %v5333 = vpop.trf.xlu0
        %v5334 = vpop.trf.xlu0
        %v5335 = vpop.trf.xlu0
        %v5336 = vpop.trf.xlu0
        %v5337 = vpop.trf.xlu0
        %v5338 = vpop.trf.xlu0
        %v5339 = vpop.trf.xlu0
        %v5340 = vpop.trf.xlu0
        %v5341 = vpop.trf.xlu0
        %v5342 = vpop.trf.xlu0
        %v5343 = vpop.trf.xlu0
        %v5345 = vsel %vm455, %v5328, 0
        %5347 = vmatpush.msra.mxu0 0.0
        %5348 = vmatpush.msra.mxu0 0.0
        %5349 = vmatpush.msra.mxu0 0.0
        %5350 = vmatpush.msra.mxu0 0.0
        %5351 = vmatpush.msra.mxu0 0.0
        %5352 = vmatpush.msra.mxu0 0.0
        %5353 = vmatpush.msra.mxu0 0.0
        %5354 = vmatpush.msra.mxu0 0.0
        %5355 = vmatpush.msra.mxu0 0.0
        %5356 = vmatpush.msra.mxu0 0.0
        %5357 = vmatpush.msra.mxu0 0.0
        %5358 = vmatpush.msra.mxu0 0.0
        %5359 = vmatpush.msra.mxu0 0.0
        %5360 = vmatpush.msra.mxu0 0.0
        %5361 = vmatpush.msra.mxu0 0.0
        %5362 = vmatpush.msra.mxu0 %v487
        %5363 = vmatmul.f32.gmra.mxu0 %v5345
        %v5364 = vpop.f32.mrf.mxu0
        %v5365 = vadd.f32 0.0, %v5364
        %5366 = vdwg.mxu0
        %5367 = vxpose.xlu0.b32.start [1/16] %v5060, 128
        %5368 = vxpose.xlu0.b32.cont [2/16] 0.0, 128
        %5369 = vxpose.xlu0.b32.cont [3/16] 0.0, 128
        %5370 = vxpose.xlu0.b32.cont [4/16] 0.0, 128
        %5371 = vxpose.xlu0.b32.cont [5/16] 0.0, 128
        %5372 = vxpose.xlu0.b32.cont [6/16] 0.0, 128
        %5373 = vxpose.xlu0.b32.cont [7/16] 0.0, 128
        %5374 = vxpose.xlu0.b32.cont [8/16] 0.0, 128
        %5375 = vxpose.xlu0.b32.cont [9/16] 0.0, 128
        %5376 = vxpose.xlu0.b32.cont [10/16] 0.0, 128
        %5377 = vxpose.xlu0.b32.cont [11/16] 0.0, 128
        %5378 = vxpose.xlu0.b32.cont [12/16] 0.0, 128
        %5379 = vxpose.xlu0.b32.cont [13/16] 0.0, 128
        %5380 = vxpose.xlu0.b32.cont [14/16] 0.0, 128
        %5381 = vxpose.xlu0.b32.cont [15/16] 0.0, 128
        %5382 = vxpose.xlu0.b32.end [16/16] 0.0, 128
        %v5383 = vpop.trf.xlu0
        %v5384 = vpop.trf.xlu0
        %v5385 = vpop.trf.xlu0
        %v5386 = vpop.trf.xlu0
        %v5387 = vpop.trf.xlu0
        %v5388 = vpop.trf.xlu0
        %v5389 = vpop.trf.xlu0
        %v5390 = vpop.trf.xlu0
        %v5391 = vpop.trf.xlu0
        %v5392 = vpop.trf.xlu0
        %v5393 = vpop.trf.xlu0
        %v5394 = vpop.trf.xlu0
        %v5395 = vpop.trf.xlu0
        %v5396 = vpop.trf.xlu0
        %v5397 = vpop.trf.xlu0
        %v5398 = vpop.trf.xlu0
        %v5400 = vsel %vm455, %v5383, 0
        %5402 = vmatpush.msra.mxu0 0.0
        %5403 = vmatpush.msra.mxu0 0.0
        %5404 = vmatpush.msra.mxu0 0.0
        %5405 = vmatpush.msra.mxu0 0.0
        %5406 = vmatpush.msra.mxu0 0.0
        %5407 = vmatpush.msra.mxu0 0.0
        %5408 = vmatpush.msra.mxu0 0.0
        %5409 = vmatpush.msra.mxu0 0.0
        %5410 = vmatpush.msra.mxu0 0.0
        %5411 = vmatpush.msra.mxu0 0.0
        %5412 = vmatpush.msra.mxu0 0.0
        %5413 = vmatpush.msra.mxu0 0.0
        %5414 = vmatpush.msra.mxu0 0.0
        %5415 = vmatpush.msra.mxu0 0.0
        %5416 = vmatpush.msra.mxu0 0.0
        %5417 = vmatpush.msra.mxu0 %v487
        %5418 = vmatmul.f32.gmra.mxu0 %v5400
        %v5419 = vpop.f32.mrf.mxu0
        %v5420 = vadd.f32 0.0, %v5419
        %5421 = vdwg.mxu0
        %5422 = vxpose.xlu0.b32.start [1/16] %v5063, 128
        %5423 = vxpose.xlu0.b32.cont [2/16] 0.0, 128
        %5424 = vxpose.xlu0.b32.cont [3/16] 0.0, 128
        %5425 = vxpose.xlu0.b32.cont [4/16] 0.0, 128
        %5426 = vxpose.xlu0.b32.cont [5/16] 0.0, 128
        %5427 = vxpose.xlu0.b32.cont [6/16] 0.0, 128
        %5428 = vxpose.xlu0.b32.cont [7/16] 0.0, 128
        %5429 = vxpose.xlu0.b32.cont [8/16] 0.0, 128
        %5430 = vxpose.xlu0.b32.cont [9/16] 0.0, 128
        %5431 = vxpose.xlu0.b32.cont [10/16] 0.0, 128
        %5432 = vxpose.xlu0.b32.cont [11/16] 0.0, 128
        %5433 = vxpose.xlu0.b32.cont [12/16] 0.0, 128
        %5434 = vxpose.xlu0.b32.cont [13/16] 0.0, 128
        %5435 = vxpose.xlu0.b32.cont [14/16] 0.0, 128
        %5436 = vxpose.xlu0.b32.cont [15/16] 0.0, 128
        %5437 = vxpose.xlu0.b32.end [16/16] 0.0, 128
        %v5438 = vpop.trf.xlu0
        %v5439 = vpop.trf.xlu0
        %v5440 = vpop.trf.xlu0
        %v5441 = vpop.trf.xlu0
        %v5442 = vpop.trf.xlu0
        %v5443 = vpop.trf.xlu0
        %v5444 = vpop.trf.xlu0
        %v5445 = vpop.trf.xlu0
        %v5446 = vpop.trf.xlu0
        %v5447 = vpop.trf.xlu0
        %v5448 = vpop.trf.xlu0
        %v5449 = vpop.trf.xlu0
        %v5450 = vpop.trf.xlu0
        %v5451 = vpop.trf.xlu0
        %v5452 = vpop.trf.xlu0
        %v5453 = vpop.trf.xlu0
        %v5455 = vsel %vm455, %v5438, 0
        %5457 = vmatpush.msra.mxu0 0.0
        %5458 = vmatpush.msra.mxu0 0.0
        %5459 = vmatpush.msra.mxu0 0.0
        %5460 = vmatpush.msra.mxu0 0.0
        %5461 = vmatpush.msra.mxu0 0.0
        %5462 = vmatpush.msra.mxu0 0.0
        %5463 = vmatpush.msra.mxu0 0.0
        %5464 = vmatpush.msra.mxu0 0.0
        %5465 = vmatpush.msra.mxu0 0.0
        %5466 = vmatpush.msra.mxu0 0.0
        %5467 = vmatpush.msra.mxu0 0.0
        %5468 = vmatpush.msra.mxu0 0.0
        %5469 = vmatpush.msra.mxu0 0.0
        %5470 = vmatpush.msra.mxu0 0.0
        %5471 = vmatpush.msra.mxu0 0.0
        %5472 = vmatpush.msra.mxu0 %v487
        %5473 = vmatmul.f32.gmra.mxu0 %v5455
        %v5474 = vpop.f32.mrf.mxu0
        %v5475 = vadd.f32 0.0, %v5474
        %5476 = vdwg.mxu0
        %5477 = vxpose.xlu0.b32.start [1/16] %v5066, 128
        %5478 = vxpose.xlu0.b32.cont [2/16] 0.0, 128
        %5479 = vxpose.xlu0.b32.cont [3/16] 0.0, 128
        %5480 = vxpose.xlu0.b32.cont [4/16] 0.0, 128
        %5481 = vxpose.xlu0.b32.cont [5/16] 0.0, 128
        %5482 = vxpose.xlu0.b32.cont [6/16] 0.0, 128
        %5483 = vxpose.xlu0.b32.cont [7/16] 0.0, 128
        %5484 = vxpose.xlu0.b32.cont [8/16] 0.0, 128
        %5485 = vxpose.xlu0.b32.cont [9/16] 0.0, 128
        %5486 = vxpose.xlu0.b32.cont [10/16] 0.0, 128
        %5487 = vxpose.xlu0.b32.cont [11/16] 0.0, 128
        %5488 = vxpose.xlu0.b32.cont [12/16] 0.0, 128
        %5489 = vxpose.xlu0.b32.cont [13/16] 0.0, 128
        %5490 = vxpose.xlu0.b32.cont [14/16] 0.0, 128
        %5491 = vxpose.xlu0.b32.cont [15/16] 0.0, 128
        %5492 = vxpose.xlu0.b32.end [16/16] 0.0, 128
        %v5493 = vpop.trf.xlu0
        %v5494 = vpop.trf.xlu0
        %v5495 = vpop.trf.xlu0
        %v5496 = vpop.trf.xlu0
        %v5497 = vpop.trf.xlu0
        %v5498 = vpop.trf.xlu0
        %v5499 = vpop.trf.xlu0
        %v5500 = vpop.trf.xlu0
        %v5501 = vpop.trf.xlu0
        %v5502 = vpop.trf.xlu0
        %v5503 = vpop.trf.xlu0
        %v5504 = vpop.trf.xlu0
        %v5505 = vpop.trf.xlu0
        %v5506 = vpop.trf.xlu0
        %v5507 = vpop.trf.xlu0
        %v5508 = vpop.trf.xlu0
        %v5510 = vsel %vm455, %v5493, 0
        %5512 = vmatpush.msra.mxu0 0.0
        %5513 = vmatpush.msra.mxu0 0.0
        %5514 = vmatpush.msra.mxu0 0.0
        %5515 = vmatpush.msra.mxu0 0.0
        %5516 = vmatpush.msra.mxu0 0.0
        %5517 = vmatpush.msra.mxu0 0.0
        %5518 = vmatpush.msra.mxu0 0.0
        %5519 = vmatpush.msra.mxu0 0.0
        %5520 = vmatpush.msra.mxu0 0.0
        %5521 = vmatpush.msra.mxu0 0.0
        %5522 = vmatpush.msra.mxu0 0.0
        %5523 = vmatpush.msra.mxu0 0.0
        %5524 = vmatpush.msra.mxu0 0.0
        %5525 = vmatpush.msra.mxu0 0.0
        %5526 = vmatpush.msra.mxu0 0.0
        %5527 = vmatpush.msra.mxu0 %v487
        %5528 = vmatmul.f32.gmra.mxu0 %v5510
        %v5529 = vpop.f32.mrf.mxu0
        %v5530 = vadd.f32 0.0, %v5529
        %5531 = vdwg.mxu0
        %5532 = vxpose.xlu0.b32.start [1/16] %v5069, 128
        %5533 = vxpose.xlu0.b32.cont [2/16] 0.0, 128
        %5534 = vxpose.xlu0.b32.cont [3/16] 0.0, 128
        %5535 = vxpose.xlu0.b32.cont [4/16] 0.0, 128
        %5536 = vxpose.xlu0.b32.cont [5/16] 0.0, 128
        %5537 = vxpose.xlu0.b32.cont [6/16] 0.0, 128
        %5538 = vxpose.xlu0.b32.cont [7/16] 0.0, 128
        %5539 = vxpose.xlu0.b32.cont [8/16] 0.0, 128
        %5540 = vxpose.xlu0.b32.cont [9/16] 0.0, 128
        %5541 = vxpose.xlu0.b32.cont [10/16] 0.0, 128
        %5542 = vxpose.xlu0.b32.cont [11/16] 0.0, 128
        %5543 = vxpose.xlu0.b32.cont [12/16] 0.0, 128
        %5544 = vxpose.xlu0.b32.cont [13/16] 0.0, 128
        %5545 = vxpose.xlu0.b32.cont [14/16] 0.0, 128
        %5546 = vxpose.xlu0.b32.cont [15/16] 0.0, 128
        %5547 = vxpose.xlu0.b32.end [16/16] 0.0, 128
        %v5548 = vpop.trf.xlu0
        %v5549 = vpop.trf.xlu0
        %v5550 = vpop.trf.xlu0
        %v5551 = vpop.trf.xlu0
        %v5552 = vpop.trf.xlu0
        %v5553 = vpop.trf.xlu0
        %v5554 = vpop.trf.xlu0
        %v5555 = vpop.trf.xlu0
        %v5556 = vpop.trf.xlu0
        %v5557 = vpop.trf.xlu0
        %v5558 = vpop.trf.xlu0
        %v5559 = vpop.trf.xlu0
        %v5560 = vpop.trf.xlu0
        %v5561 = vpop.trf.xlu0
        %v5562 = vpop.trf.xlu0
        %v5563 = vpop.trf.xlu0
        %v5565 = vsel %vm455, %v5548, 0
        %5567 = vmatpush.msra.mxu0 0.0
        %5568 = vmatpush.msra.mxu0 0.0
        %5569 = vmatpush.msra.mxu0 0.0
        %5570 = vmatpush.msra.mxu0 0.0
        %5571 = vmatpush.msra.mxu0 0.0
        %5572 = vmatpush.msra.mxu0 0.0
        %5573 = vmatpush.msra.mxu0 0.0
        %5574 = vmatpush.msra.mxu0 0.0
        %5575 = vmatpush.msra.mxu0 0.0
        %5576 = vmatpush.msra.mxu0 0.0
        %5577 = vmatpush.msra.mxu0 0.0
        %5578 = vmatpush.msra.mxu0 0.0
        %5579 = vmatpush.msra.mxu0 0.0
        %5580 = vmatpush.msra.mxu0 0.0
        %5581 = vmatpush.msra.mxu0 0.0
        %5582 = vmatpush.msra.mxu0 %v487
        %5583 = vmatmul.f32.gmra.mxu0 %v5565
        %v5584 = vpop.f32.mrf.mxu0
        %v5585 = vadd.f32 0.0, %v5584
        %5586 = vdwg.mxu0
        %5587 = vxpose.xlu0.b32.start [1/16] %v5072, 128
        %5588 = vxpose.xlu0.b32.cont [2/16] 0.0, 128
        %5589 = vxpose.xlu0.b32.cont [3/16] 0.0, 128
        %5590 = vxpose.xlu0.b32.cont [4/16] 0.0, 128
        %5591 = vxpose.xlu0.b32.cont [5/16] 0.0, 128
        %5592 = vxpose.xlu0.b32.cont [6/16] 0.0, 128
        %5593 = vxpose.xlu0.b32.cont [7/16] 0.0, 128
        %5594 = vxpose.xlu0.b32.cont [8/16] 0.0, 128
        %5595 = vxpose.xlu0.b32.cont [9/16] 0.0, 128
        %5596 = vxpose.xlu0.b32.cont [10/16] 0.0, 128
        %5597 = vxpose.xlu0.b32.cont [11/16] 0.0, 128
        %5598 = vxpose.xlu0.b32.cont [12/16] 0.0, 128
        %5599 = vxpose.xlu0.b32.cont [13/16] 0.0, 128
        %5600 = vxpose.xlu0.b32.cont [14/16] 0.0, 128
        %5601 = vxpose.xlu0.b32.cont [15/16] 0.0, 128
        %5602 = vxpose.xlu0.b32.end [16/16] 0.0, 128
        %v5603 = vpop.trf.xlu0
        %v5604 = vpop.trf.xlu0
        %v5605 = vpop.trf.xlu0
        %v5606 = vpop.trf.xlu0
        %v5607 = vpop.trf.xlu0
        %v5608 = vpop.trf.xlu0
        %v5609 = vpop.trf.xlu0
        %v5610 = vpop.trf.xlu0
        %v5611 = vpop.trf.xlu0
        %v5612 = vpop.trf.xlu0
        %v5613 = vpop.trf.xlu0
        %v5614 = vpop.trf.xlu0
        %v5615 = vpop.trf.xlu0
        %v5616 = vpop.trf.xlu0
        %v5617 = vpop.trf.xlu0
        %v5618 = vpop.trf.xlu0
        %v5620 = vsel %vm455, %v5603, 0
        %5622 = vmatpush.msra.mxu0 0.0
        %5623 = vmatpush.msra.mxu0 0.0
        %5624 = vmatpush.msra.mxu0 0.0
        %5625 = vmatpush.msra.mxu0 0.0
        %5626 = vmatpush.msra.mxu0 0.0
        %5627 = vmatpush.msra.mxu0 0.0
        %5628 = vmatpush.msra.mxu0 0.0
        %5629 = vmatpush.msra.mxu0 0.0
        %5630 = vmatpush.msra.mxu0 0.0
        %5631 = vmatpush.msra.mxu0 0.0
        %5632 = vmatpush.msra.mxu0 0.0
        %5633 = vmatpush.msra.mxu0 0.0
        %5634 = vmatpush.msra.mxu0 0.0
        %5635 = vmatpush.msra.mxu0 0.0
        %5636 = vmatpush.msra.mxu0 0.0
        %5637 = vmatpush.msra.mxu0 %v487
        %5638 = vmatmul.f32.gmra.mxu0 %v5620
        %v5639 = vpop.f32.mrf.mxu0
        %v5640 = vadd.f32 0.0, %v5639
        %5641 = vdwg.mxu0
        %5642 = vxpose.xlu0.b32.start [1/16] %v5075, 128
        %5643 = vxpose.xlu0.b32.cont [2/16] 0.0, 128
        %5644 = vxpose.xlu0.b32.cont [3/16] 0.0, 128
        %5645 = vxpose.xlu0.b32.cont [4/16] 0.0, 128
        %5646 = vxpose.xlu0.b32.cont [5/16] 0.0, 128
        %5647 = vxpose.xlu0.b32.cont [6/16] 0.0, 128
        %5648 = vxpose.xlu0.b32.cont [7/16] 0.0, 128
        %5649 = vxpose.xlu0.b32.cont [8/16] 0.0, 128
        %5650 = vxpose.xlu0.b32.cont [9/16] 0.0, 128
        %5651 = vxpose.xlu0.b32.cont [10/16] 0.0, 128
        %5652 = vxpose.xlu0.b32.cont [11/16] 0.0, 128
        %5653 = vxpose.xlu0.b32.cont [12/16] 0.0, 128
        %5654 = vxpose.xlu0.b32.cont [13/16] 0.0, 128
        %5655 = vxpose.xlu0.b32.cont [14/16] 0.0, 128
        %5656 = vxpose.xlu0.b32.cont [15/16] 0.0, 128
        %5657 = vxpose.xlu0.b32.end [16/16] 0.0, 128
        %v5658 = vpop.trf.xlu0
        %v5659 = vpop.trf.xlu0
        %v5660 = vpop.trf.xlu0
        %v5661 = vpop.trf.xlu0
        %v5662 = vpop.trf.xlu0
        %v5663 = vpop.trf.xlu0
        %v5664 = vpop.trf.xlu0
        %v5665 = vpop.trf.xlu0
        %v5666 = vpop.trf.xlu0
        %v5667 = vpop.trf.xlu0
        %v5668 = vpop.trf.xlu0
        %v5669 = vpop.trf.xlu0
        %v5670 = vpop.trf.xlu0
        %v5671 = vpop.trf.xlu0
        %v5672 = vpop.trf.xlu0
        %v5673 = vpop.trf.xlu0
        %v5675 = vsel %vm455, %v5658, 0
        %5677 = vmatpush.msra.mxu0 0.0
        %5678 = vmatpush.msra.mxu0 0.0
        %5679 = vmatpush.msra.mxu0 0.0
        %5680 = vmatpush.msra.mxu0 0.0
        %5681 = vmatpush.msra.mxu0 0.0
        %5682 = vmatpush.msra.mxu0 0.0
        %5683 = vmatpush.msra.mxu0 0.0
        %5684 = vmatpush.msra.mxu0 0.0
        %5685 = vmatpush.msra.mxu0 0.0
        %5686 = vmatpush.msra.mxu0 0.0
        %5687 = vmatpush.msra.mxu0 0.0
        %5688 = vmatpush.msra.mxu0 0.0
        %5689 = vmatpush.msra.mxu0 0.0
        %5690 = vmatpush.msra.mxu0 0.0
        %5691 = vmatpush.msra.mxu0 0.0
        %5692 = vmatpush.msra.mxu0 %v487
        %5693 = vmatmul.f32.gmra.mxu0 %v5675
        %v5694 = vpop.f32.mrf.mxu0
        %v5695 = vadd.f32 0.0, %v5694
        %5696 = vdwg.mxu0
        %5697 = vxpose.xlu0.b32.start [1/16] %v5078, 128
        %5698 = vxpose.xlu0.b32.cont [2/16] 0.0, 128
        %5699 = vxpose.xlu0.b32.cont [3/16] 0.0, 128
        %5700 = vxpose.xlu0.b32.cont [4/16] 0.0, 128
        %5701 = vxpose.xlu0.b32.cont [5/16] 0.0, 128
        %5702 = vxpose.xlu0.b32.cont [6/16] 0.0, 128
        %5703 = vxpose.xlu0.b32.cont [7/16] 0.0, 128
        %5704 = vxpose.xlu0.b32.cont [8/16] 0.0, 128
        %5705 = vxpose.xlu0.b32.cont [9/16] 0.0, 128
        %5706 = vxpose.xlu0.b32.cont [10/16] 0.0, 128
        %5707 = vxpose.xlu0.b32.cont [11/16] 0.0, 128
        %5708 = vxpose.xlu0.b32.cont [12/16] 0.0, 128
        %5709 = vxpose.xlu0.b32.cont [13/16] 0.0, 128
        %5710 = vxpose.xlu0.b32.cont [14/16] 0.0, 128
        %5711 = vxpose.xlu0.b32.cont [15/16] 0.0, 128
        %5712 = vxpose.xlu0.b32.end [16/16] 0.0, 128
        %v5713 = vpop.trf.xlu0
        %v5714 = vpop.trf.xlu0
        %v5715 = vpop.trf.xlu0
        %v5716 = vpop.trf.xlu0
        %v5717 = vpop.trf.xlu0
        %v5718 = vpop.trf.xlu0
        %v5719 = vpop.trf.xlu0
        %v5720 = vpop.trf.xlu0
        %v5721 = vpop.trf.xlu0
        %v5722 = vpop.trf.xlu0
        %v5723 = vpop.trf.xlu0
        %v5724 = vpop.trf.xlu0
        %v5725 = vpop.trf.xlu0
        %v5726 = vpop.trf.xlu0
        %v5727 = vpop.trf.xlu0
        %v5728 = vpop.trf.xlu0
        %v5730 = vsel %vm455, %v5713, 0
        %5732 = vmatpush.msra.mxu0 0.0
        %5733 = vmatpush.msra.mxu0 0.0
        %5734 = vmatpush.msra.mxu0 0.0
        %5735 = vmatpush.msra.mxu0 0.0
        %5736 = vmatpush.msra.mxu0 0.0
        %5737 = vmatpush.msra.mxu0 0.0
        %5738 = vmatpush.msra.mxu0 0.0
        %5739 = vmatpush.msra.mxu0 0.0
        %5740 = vmatpush.msra.mxu0 0.0
        %5741 = vmatpush.msra.mxu0 0.0
        %5742 = vmatpush.msra.mxu0 0.0
        %5743 = vmatpush.msra.mxu0 0.0
        %5744 = vmatpush.msra.mxu0 0.0
        %5745 = vmatpush.msra.mxu0 0.0
        %5746 = vmatpush.msra.mxu0 0.0
        %5747 = vmatpush.msra.mxu0 %v487
        %5748 = vmatmul.f32.gmra.mxu0 %v5730
        %v5749 = vpop.f32.mrf.mxu0
        %v5750 = vadd.f32 0.0, %v5749
        %5751 = vdwg.mxu0
        %5752 = vxpose.xlu0.b32.start [1/16] %v5081, 128
        %5753 = vxpose.xlu0.b32.cont [2/16] 0.0, 128
        %5754 = vxpose.xlu0.b32.cont [3/16] 0.0, 128
        %5755 = vxpose.xlu0.b32.cont [4/16] 0.0, 128
        %5756 = vxpose.xlu0.b32.cont [5/16] 0.0, 128
        %5757 = vxpose.xlu0.b32.cont [6/16] 0.0, 128
        %5758 = vxpose.xlu0.b32.cont [7/16] 0.0, 128
        %5759 = vxpose.xlu0.b32.cont [8/16] 0.0, 128
        %5760 = vxpose.xlu0.b32.cont [9/16] 0.0, 128
        %5761 = vxpose.xlu0.b32.cont [10/16] 0.0, 128
        %5762 = vxpose.xlu0.b32.cont [11/16] 0.0, 128
        %5763 = vxpose.xlu0.b32.cont [12/16] 0.0, 128
        %5764 = vxpose.xlu0.b32.cont [13/16] 0.0, 128
        %5765 = vxpose.xlu0.b32.cont [14/16] 0.0, 128
        %5766 = vxpose.xlu0.b32.cont [15/16] 0.0, 128
        %5767 = vxpose.xlu0.b32.end [16/16] 0.0, 128
        %v5768 = vpop.trf.xlu0
        %v5769 = vpop.trf.xlu0
        %v5770 = vpop.trf.xlu0
        %v5771 = vpop.trf.xlu0
        %v5772 = vpop.trf.xlu0
        %v5773 = vpop.trf.xlu0
        %v5774 = vpop.trf.xlu0
        %v5775 = vpop.trf.xlu0
        %v5776 = vpop.trf.xlu0
        %v5777 = vpop.trf.xlu0
        %v5778 = vpop.trf.xlu0
        %v5779 = vpop.trf.xlu0
        %v5780 = vpop.trf.xlu0
        %v5781 = vpop.trf.xlu0
        %v5782 = vpop.trf.xlu0
        %v5783 = vpop.trf.xlu0
        %v5785 = vsel %vm455, %v5768, 0
        %5787 = vmatpush.msra.mxu0 0.0
        %5788 = vmatpush.msra.mxu0 0.0
        %5789 = vmatpush.msra.mxu0 0.0
        %5790 = vmatpush.msra.mxu0 0.0
        %5791 = vmatpush.msra.mxu0 0.0
        %5792 = vmatpush.msra.mxu0 0.0
        %5793 = vmatpush.msra.mxu0 0.0
        %5794 = vmatpush.msra.mxu0 0.0
        %5795 = vmatpush.msra.mxu0 0.0
        %5796 = vmatpush.msra.mxu0 0.0
        %5797 = vmatpush.msra.mxu0 0.0
        %5798 = vmatpush.msra.mxu0 0.0
        %5799 = vmatpush.msra.mxu0 0.0
        %5800 = vmatpush.msra.mxu0 0.0
        %5801 = vmatpush.msra.mxu0 0.0
        %5802 = vmatpush.msra.mxu0 %v487
        %5803 = vmatmul.f32.gmra.mxu0 %v5785
        %v5804 = vpop.f32.mrf.mxu0
        %v5805 = vadd.f32 0.0, %v5804
        %5806 = vdwg.mxu0
        %5807 = vxpose.xlu0.b32.start [1/16] %v5084, 128
        %5808 = vxpose.xlu0.b32.cont [2/16] 0.0, 128
        %5809 = vxpose.xlu0.b32.cont [3/16] 0.0, 128
        %5810 = vxpose.xlu0.b32.cont [4/16] 0.0, 128
        %5811 = vxpose.xlu0.b32.cont [5/16] 0.0, 128
        %5812 = vxpose.xlu0.b32.cont [6/16] 0.0, 128
        %5813 = vxpose.xlu0.b32.cont [7/16] 0.0, 128
        %5814 = vxpose.xlu0.b32.cont [8/16] 0.0, 128
        %5815 = vxpose.xlu0.b32.cont [9/16] 0.0, 128
        %5816 = vxpose.xlu0.b32.cont [10/16] 0.0, 128
        %5817 = vxpose.xlu0.b32.cont [11/16] 0.0, 128
        %5818 = vxpose.xlu0.b32.cont [12/16] 0.0, 128
        %5819 = vxpose.xlu0.b32.cont [13/16] 0.0, 128
        %5820 = vxpose.xlu0.b32.cont [14/16] 0.0, 128
        %5821 = vxpose.xlu0.b32.cont [15/16] 0.0, 128
        %5822 = vxpose.xlu0.b32.end [16/16] 0.0, 128
        %v5823 = vpop.trf.xlu0
        %v5824 = vpop.trf.xlu0
        %v5825 = vpop.trf.xlu0
        %v5826 = vpop.trf.xlu0
        %v5827 = vpop.trf.xlu0
        %v5828 = vpop.trf.xlu0
        %v5829 = vpop.trf.xlu0
        %v5830 = vpop.trf.xlu0
        %v5831 = vpop.trf.xlu0
        %v5832 = vpop.trf.xlu0
        %v5833 = vpop.trf.xlu0
        %v5834 = vpop.trf.xlu0
        %v5835 = vpop.trf.xlu0
        %v5836 = vpop.trf.xlu0
        %v5837 = vpop.trf.xlu0
        %v5838 = vpop.trf.xlu0
        %v5840 = vsel %vm455, %v5823, 0
        %5842 = vmatpush.msra.mxu0 0.0
        %5843 = vmatpush.msra.mxu0 0.0
        %5844 = vmatpush.msra.mxu0 0.0
        %5845 = vmatpush.msra.mxu0 0.0
        %5846 = vmatpush.msra.mxu0 0.0
        %5847 = vmatpush.msra.mxu0 0.0
        %5848 = vmatpush.msra.mxu0 0.0
        %5849 = vmatpush.msra.mxu0 0.0
        %5850 = vmatpush.msra.mxu0 0.0
        %5851 = vmatpush.msra.mxu0 0.0
        %5852 = vmatpush.msra.mxu0 0.0
        %5853 = vmatpush.msra.mxu0 0.0
        %5854 = vmatpush.msra.mxu0 0.0
        %5855 = vmatpush.msra.mxu0 0.0
        %5856 = vmatpush.msra.mxu0 0.0
        %5857 = vmatpush.msra.mxu0 %v487
        %5858 = vmatmul.f32.gmra.mxu0 %v5840
        %v5859 = vpop.f32.mrf.mxu0
        %v5860 = vadd.f32 0.0, %v5859
        %5861 = vdwg.mxu0
        %5862 = vxpose.xlu0.b32.start [1/16] %v5087, 128
        %5863 = vxpose.xlu0.b32.cont [2/16] 0.0, 128
        %5864 = vxpose.xlu0.b32.cont [3/16] 0.0, 128
        %5865 = vxpose.xlu0.b32.cont [4/16] 0.0, 128
        %5866 = vxpose.xlu0.b32.cont [5/16] 0.0, 128
        %5867 = vxpose.xlu0.b32.cont [6/16] 0.0, 128
        %5868 = vxpose.xlu0.b32.cont [7/16] 0.0, 128
        %5869 = vxpose.xlu0.b32.cont [8/16] 0.0, 128
        %5870 = vxpose.xlu0.b32.cont [9/16] 0.0, 128
        %5871 = vxpose.xlu0.b32.cont [10/16] 0.0, 128
        %5872 = vxpose.xlu0.b32.cont [11/16] 0.0, 128
        %5873 = vxpose.xlu0.b32.cont [12/16] 0.0, 128
        %5874 = vxpose.xlu0.b32.cont [13/16] 0.0, 128
        %5875 = vxpose.xlu0.b32.cont [14/16] 0.0, 128
        %5876 = vxpose.xlu0.b32.cont [15/16] 0.0, 128
        %5877 = vxpose.xlu0.b32.end [16/16] 0.0, 128
        %v5878 = vpop.trf.xlu0
        %v5879 = vpop.trf.xlu0
        %v5880 = vpop.trf.xlu0
        %v5881 = vpop.trf.xlu0
        %v5882 = vpop.trf.xlu0
        %v5883 = vpop.trf.xlu0
        %v5884 = vpop.trf.xlu0
        %v5885 = vpop.trf.xlu0
        %v5886 = vpop.trf.xlu0
        %v5887 = vpop.trf.xlu0
        %v5888 = vpop.trf.xlu0
        %v5889 = vpop.trf.xlu0
        %v5890 = vpop.trf.xlu0
        %v5891 = vpop.trf.xlu0
        %v5892 = vpop.trf.xlu0
        %v5893 = vpop.trf.xlu0
        %v5895 = vsel %vm455, %v5878, 0
        %5897 = vmatpush.msra.mxu0 0.0
        %5898 = vmatpush.msra.mxu0 0.0
        %5899 = vmatpush.msra.mxu0 0.0
        %5900 = vmatpush.msra.mxu0 0.0
        %5901 = vmatpush.msra.mxu0 0.0
        %5902 = vmatpush.msra.mxu0 0.0
        %5903 = vmatpush.msra.mxu0 0.0
        %5904 = vmatpush.msra.mxu0 0.0
        %5905 = vmatpush.msra.mxu0 0.0
        %5906 = vmatpush.msra.mxu0 0.0
        %5907 = vmatpush.msra.mxu0 0.0
        %5908 = vmatpush.msra.mxu0 0.0
        %5909 = vmatpush.msra.mxu0 0.0
        %5910 = vmatpush.msra.mxu0 0.0
        %5911 = vmatpush.msra.mxu0 0.0
        %5912 = vmatpush.msra.mxu0 %v487
        %5913 = vmatmul.f32.gmra.mxu0 %v5895
        %v5914 = vpop.f32.mrf.mxu0
        %v5915 = vadd.f32 0.0, %v5914
        %5916 = vdwg.mxu0
        %5917 = vxpose.xlu0.b32.start [1/16] %v5090, 128
        %5918 = vxpose.xlu0.b32.cont [2/16] 0.0, 128
        %5919 = vxpose.xlu0.b32.cont [3/16] 0.0, 128
        %5920 = vxpose.xlu0.b32.cont [4/16] 0.0, 128
        %5921 = vxpose.xlu0.b32.cont [5/16] 0.0, 128
        %5922 = vxpose.xlu0.b32.cont [6/16] 0.0, 128
        %5923 = vxpose.xlu0.b32.cont [7/16] 0.0, 128
        %5924 = vxpose.xlu0.b32.cont [8/16] 0.0, 128
        %5925 = vxpose.xlu0.b32.cont [9/16] 0.0, 128
        %5926 = vxpose.xlu0.b32.cont [10/16] 0.0, 128
        %5927 = vxpose.xlu0.b32.cont [11/16] 0.0, 128
        %5928 = vxpose.xlu0.b32.cont [12/16] 0.0, 128
        %5929 = vxpose.xlu0.b32.cont [13/16] 0.0, 128
        %5930 = vxpose.xlu0.b32.cont [14/16] 0.0, 128
        %5931 = vxpose.xlu0.b32.cont [15/16] 0.0, 128
        %5932 = vxpose.xlu0.b32.end [16/16] 0.0, 128
        %v5933 = vpop.trf.xlu0
        %v5934 = vpop.trf.xlu0
        %v5935 = vpop.trf.xlu0
        %v5936 = vpop.trf.xlu0
        %v5937 = vpop.trf.xlu0
        %v5938 = vpop.trf.xlu0
        %v5939 = vpop.trf.xlu0
        %v5940 = vpop.trf.xlu0
        %v5941 = vpop.trf.xlu0
        %v5942 = vpop.trf.xlu0
        %v5943 = vpop.trf.xlu0
        %v5944 = vpop.trf.xlu0
        %v5945 = vpop.trf.xlu0
        %v5946 = vpop.trf.xlu0
        %v5947 = vpop.trf.xlu0
        %v5948 = vpop.trf.xlu0
        %v5950 = vsel %vm455, %v5933, 0
        %5952 = vmatpush.msra.mxu0 0.0
        %5953 = vmatpush.msra.mxu0 0.0
        %5954 = vmatpush.msra.mxu0 0.0
        %5955 = vmatpush.msra.mxu0 0.0
        %5956 = vmatpush.msra.mxu0 0.0
        %5957 = vmatpush.msra.mxu0 0.0
        %5958 = vmatpush.msra.mxu0 0.0
        %5959 = vmatpush.msra.mxu0 0.0
        %5960 = vmatpush.msra.mxu0 0.0
        %5961 = vmatpush.msra.mxu0 0.0
        %5962 = vmatpush.msra.mxu0 0.0
        %5963 = vmatpush.msra.mxu0 0.0
        %5964 = vmatpush.msra.mxu0 0.0
        %5965 = vmatpush.msra.mxu0 0.0
        %5966 = vmatpush.msra.mxu0 0.0
        %5967 = vmatpush.msra.mxu0 %v487
        %5968 = vmatmul.f32.gmra.mxu0 %v5950
        %v5969 = vpop.f32.mrf.mxu0
        %v5970 = vadd.f32 0.0, %v5969
        %5971 = vdwg.mxu0
        %5972 = vxpose.xlu0.b32.start [1/16] %v4975, 128
        %5973 = vxpose.xlu0.b32.cont [2/16] 0.0, 128
        %5974 = vxpose.xlu0.b32.cont [3/16] 0.0, 128
        %5975 = vxpose.xlu0.b32.cont [4/16] 0.0, 128
        %5976 = vxpose.xlu0.b32.cont [5/16] 0.0, 128
        %5977 = vxpose.xlu0.b32.cont [6/16] 0.0, 128
        %5978 = vxpose.xlu0.b32.cont [7/16] 0.0, 128
        %5979 = vxpose.xlu0.b32.cont [8/16] 0.0, 128
        %5980 = vxpose.xlu0.b32.cont [9/16] 0.0, 128
        %5981 = vxpose.xlu0.b32.cont [10/16] 0.0, 128
        %5982 = vxpose.xlu0.b32.cont [11/16] 0.0, 128
        %5983 = vxpose.xlu0.b32.cont [12/16] 0.0, 128
        %5984 = vxpose.xlu0.b32.cont [13/16] 0.0, 128
        %5985 = vxpose.xlu0.b32.cont [14/16] 0.0, 128
        %5986 = vxpose.xlu0.b32.cont [15/16] 0.0, 128
        %5987 = vxpose.xlu0.b32.end [16/16] 0.0, 128
        %v5988 = vpop.trf.xlu0
        %v5989 = vpop.trf.xlu0
        %v5990 = vpop.trf.xlu0
        %v5991 = vpop.trf.xlu0
        %v5992 = vpop.trf.xlu0
        %v5993 = vpop.trf.xlu0
        %v5994 = vpop.trf.xlu0
        %v5995 = vpop.trf.xlu0
        %v5996 = vpop.trf.xlu0
        %v5997 = vpop.trf.xlu0
        %v5998 = vpop.trf.xlu0
        %v5999 = vpop.trf.xlu0
        %v6000 = vpop.trf.xlu0
        %v6001 = vpop.trf.xlu0
        %v6002 = vpop.trf.xlu0
        %v6003 = vpop.trf.xlu0
        %v6005 = vsel %vm455, %v5988, 0
        %6007 = vmatpush.msra.mxu0 0.0
        %6008 = vmatpush.msra.mxu0 0.0
        %6009 = vmatpush.msra.mxu0 0.0
        %6010 = vmatpush.msra.mxu0 0.0
        %6011 = vmatpush.msra.mxu0 0.0
        %6012 = vmatpush.msra.mxu0 0.0
        %6013 = vmatpush.msra.mxu0 0.0
        %6014 = vmatpush.msra.mxu0 0.0
        %6015 = vmatpush.msra.mxu0 0.0
        %6016 = vmatpush.msra.mxu0 0.0
        %6017 = vmatpush.msra.mxu0 0.0
        %6018 = vmatpush.msra.mxu0 0.0
        %6019 = vmatpush.msra.mxu0 0.0
        %6020 = vmatpush.msra.mxu0 0.0
        %6021 = vmatpush.msra.mxu0 0.0
        %6022 = vmatpush.msra.mxu0 %v485
        %6023 = vmatmul.f32.gmra.mxu0 %v6005
        %v6024 = vpop.f32.mrf.mxu0
        %v6025 = vadd.f32 %v5145, %v6024
        %6026 = vdwg.mxu0
        %6027 = vxpose.xlu0.b32.start [1/16] %v4978, 128
        %6028 = vxpose.xlu0.b32.cont [2/16] 0.0, 128
        %6029 = vxpose.xlu0.b32.cont [3/16] 0.0, 128
        %6030 = vxpose.xlu0.b32.cont [4/16] 0.0, 128
        %6031 = vxpose.xlu0.b32.cont [5/16] 0.0, 128
        %6032 = vxpose.xlu0.b32.cont [6/16] 0.0, 128
        %6033 = vxpose.xlu0.b32.cont [7/16] 0.0, 128
        %6034 = vxpose.xlu0.b32.cont [8/16] 0.0, 128
        %6035 = vxpose.xlu0.b32.cont [9/16] 0.0, 128
        %6036 = vxpose.xlu0.b32.cont [10/16] 0.0, 128
        %6037 = vxpose.xlu0.b32.cont [11/16] 0.0, 128
        %6038 = vxpose.xlu0.b32.cont [12/16] 0.0, 128
        %6039 = vxpose.xlu0.b32.cont [13/16] 0.0, 128
        %6040 = vxpose.xlu0.b32.cont [14/16] 0.0, 128
        %6041 = vxpose.xlu0.b32.cont [15/16] 0.0, 128
        %6042 = vxpose.xlu0.b32.end [16/16] 0.0, 128
        %v6043 = vpop.trf.xlu0
        %v6044 = vpop.trf.xlu0
        %v6045 = vpop.trf.xlu0
        %v6046 = vpop.trf.xlu0
        %v6047 = vpop.trf.xlu0
        %v6048 = vpop.trf.xlu0
        %v6049 = vpop.trf.xlu0
        %v6050 = vpop.trf.xlu0
        %v6051 = vpop.trf.xlu0
        %v6052 = vpop.trf.xlu0
        %v6053 = vpop.trf.xlu0
        %v6054 = vpop.trf.xlu0
        %v6055 = vpop.trf.xlu0
        %v6056 = vpop.trf.xlu0
        %v6057 = vpop.trf.xlu0
        %v6058 = vpop.trf.xlu0
        %v6060 = vsel %vm455, %v6043, 0
        %6062 = vmatpush.msra.mxu0 0.0
        %6063 = vmatpush.msra.mxu0 0.0
        %6064 = vmatpush.msra.mxu0 0.0
        %6065 = vmatpush.msra.mxu0 0.0
        %6066 = vmatpush.msra.mxu0 0.0
        %6067 = vmatpush.msra.mxu0 0.0
        %6068 = vmatpush.msra.mxu0 0.0
        %6069 = vmatpush.msra.mxu0 0.0
        %6070 = vmatpush.msra.mxu0 0.0
        %6071 = vmatpush.msra.mxu0 0.0
        %6072 = vmatpush.msra.mxu0 0.0
        %6073 = vmatpush.msra.mxu0 0.0
        %6074 = vmatpush.msra.mxu0 0.0
        %6075 = vmatpush.msra.mxu0 0.0
        %6076 = vmatpush.msra.mxu0 0.0
        %6077 = vmatpush.msra.mxu0 %v485
        %6078 = vmatmul.f32.gmra.mxu0 %v6060
        %v6079 = vpop.f32.mrf.mxu0
        %v6080 = vadd.f32 %v5200, %v6079
        %6081 = vdwg.mxu0
        %6082 = vxpose.xlu0.b32.start [1/16] %v4981, 128
        %6083 = vxpose.xlu0.b32.cont [2/16] 0.0, 128
        %6084 = vxpose.xlu0.b32.cont [3/16] 0.0, 128
        %6085 = vxpose.xlu0.b32.cont [4/16] 0.0, 128
        %6086 = vxpose.xlu0.b32.cont [5/16] 0.0, 128
        %6087 = vxpose.xlu0.b32.cont [6/16] 0.0, 128
        %6088 = vxpose.xlu0.b32.cont [7/16] 0.0, 128
        %6089 = vxpose.xlu0.b32.cont [8/16] 0.0, 128
        %6090 = vxpose.xlu0.b32.cont [9/16] 0.0, 128
        %6091 = vxpose.xlu0.b32.cont [10/16] 0.0, 128
        %6092 = vxpose.xlu0.b32.cont [11/16] 0.0, 128
        %6093 = vxpose.xlu0.b32.cont [12/16] 0.0, 128
        %6094 = vxpose.xlu0.b32.cont [13/16] 0.0, 128
        %6095 = vxpose.xlu0.b32.cont [14/16] 0.0, 128
        %6096 = vxpose.xlu0.b32.cont [15/16] 0.0, 128
        %6097 = vxpose.xlu0.b32.end [16/16] 0.0, 128
        %v6098 = vpop.trf.xlu0
        %v6099 = vpop.trf.xlu0
        %v6100 = vpop.trf.xlu0
        %v6101 = vpop.trf.xlu0
        %v6102 = vpop.trf.xlu0
        %v6103 = vpop.trf.xlu0
        %v6104 = vpop.trf.xlu0
        %v6105 = vpop.trf.xlu0
        %v6106 = vpop.trf.xlu0
        %v6107 = vpop.trf.xlu0
        %v6108 = vpop.trf.xlu0
        %v6109 = vpop.trf.xlu0
        %v6110 = vpop.trf.xlu0
        %v6111 = vpop.trf.xlu0
        %v6112 = vpop.trf.xlu0
        %v6113 = vpop.trf.xlu0
        %v6115 = vsel %vm455, %v6098, 0
        %6117 = vmatpush.msra.mxu0 0.0
        %6118 = vmatpush.msra.mxu0 0.0
        %6119 = vmatpush.msra.mxu0 0.0
        %6120 = vmatpush.msra.mxu0 0.0
        %6121 = vmatpush.msra.mxu0 0.0
        %6122 = vmatpush.msra.mxu0 0.0
        %6123 = vmatpush.msra.mxu0 0.0
        %6124 = vmatpush.msra.mxu0 0.0
        %6125 = vmatpush.msra.mxu0 0.0
        %6126 = vmatpush.msra.mxu0 0.0
        %6127 = vmatpush.msra.mxu0 0.0
        %6128 = vmatpush.msra.mxu0 0.0
        %6129 = vmatpush.msra.mxu0 0.0
        %6130 = vmatpush.msra.mxu0 0.0
        %6131 = vmatpush.msra.mxu0 0.0
        %6132 = vmatpush.msra.mxu0 %v485
        %6133 = vmatmul.f32.gmra.mxu0 %v6115
        %v6134 = vpop.f32.mrf.mxu0
        %v6135 = vadd.f32 %v5255, %v6134
        %6136 = vdwg.mxu0
        %6137 = vxpose.xlu0.b32.start [1/16] %v4984, 128
        %6138 = vxpose.xlu0.b32.cont [2/16] 0.0, 128
        %6139 = vxpose.xlu0.b32.cont [3/16] 0.0, 128
        %6140 = vxpose.xlu0.b32.cont [4/16] 0.0, 128
        %6141 = vxpose.xlu0.b32.cont [5/16] 0.0, 128
        %6142 = vxpose.xlu0.b32.cont [6/16] 0.0, 128
        %6143 = vxpose.xlu0.b32.cont [7/16] 0.0, 128
        %6144 = vxpose.xlu0.b32.cont [8/16] 0.0, 128
        %6145 = vxpose.xlu0.b32.cont [9/16] 0.0, 128
        %6146 = vxpose.xlu0.b32.cont [10/16] 0.0, 128
        %6147 = vxpose.xlu0.b32.cont [11/16] 0.0, 128
        %6148 = vxpose.xlu0.b32.cont [12/16] 0.0, 128
        %6149 = vxpose.xlu0.b32.cont [13/16] 0.0, 128
        %6150 = vxpose.xlu0.b32.cont [14/16] 0.0, 128
        %6151 = vxpose.xlu0.b32.cont [15/16] 0.0, 128
        %6152 = vxpose.xlu0.b32.end [16/16] 0.0, 128
        %v6153 = vpop.trf.xlu0
        %v6154 = vpop.trf.xlu0
        %v6155 = vpop.trf.xlu0
        %v6156 = vpop.trf.xlu0
        %v6157 = vpop.trf.xlu0
        %v6158 = vpop.trf.xlu0
        %v6159 = vpop.trf.xlu0
        %v6160 = vpop.trf.xlu0
        %v6161 = vpop.trf.xlu0
        %v6162 = vpop.trf.xlu0
        %v6163 = vpop.trf.xlu0
        %v6164 = vpop.trf.xlu0
        %v6165 = vpop.trf.xlu0
        %v6166 = vpop.trf.xlu0
        %v6167 = vpop.trf.xlu0
        %v6168 = vpop.trf.xlu0
        %v6170 = vsel %vm455, %v6153, 0
        %6172 = vmatpush.msra.mxu0 0.0
        %6173 = vmatpush.msra.mxu0 0.0
        %6174 = vmatpush.msra.mxu0 0.0
        %6175 = vmatpush.msra.mxu0 0.0
        %6176 = vmatpush.msra.mxu0 0.0
        %6177 = vmatpush.msra.mxu0 0.0
        %6178 = vmatpush.msra.mxu0 0.0
        %6179 = vmatpush.msra.mxu0 0.0
        %6180 = vmatpush.msra.mxu0 0.0
        %6181 = vmatpush.msra.mxu0 0.0
        %6182 = vmatpush.msra.mxu0 0.0
        %6183 = vmatpush.msra.mxu0 0.0
        %6184 = vmatpush.msra.mxu0 0.0
        %6185 = vmatpush.msra.mxu0 0.0
        %6186 = vmatpush.msra.mxu0 0.0
        %6187 = vmatpush.msra.mxu0 %v485
        %6188 = vmatmul.f32.gmra.mxu0 %v6170
        %v6189 = vpop.f32.mrf.mxu0
        %v6190 = vadd.f32 %v5310, %v6189
        %6191 = vdwg.mxu0
        %6192 = vxpose.xlu0.b32.start [1/16] %v4987, 128
        %6193 = vxpose.xlu0.b32.cont [2/16] 0.0, 128
        %6194 = vxpose.xlu0.b32.cont [3/16] 0.0, 128
        %6195 = vxpose.xlu0.b32.cont [4/16] 0.0, 128
        %6196 = vxpose.xlu0.b32.cont [5/16] 0.0, 128
        %6197 = vxpose.xlu0.b32.cont [6/16] 0.0, 128
        %6198 = vxpose.xlu0.b32.cont [7/16] 0.0, 128
        %6199 = vxpose.xlu0.b32.cont [8/16] 0.0, 128
        %6200 = vxpose.xlu0.b32.cont [9/16] 0.0, 128
        %6201 = vxpose.xlu0.b32.cont [10/16] 0.0, 128
        %6202 = vxpose.xlu0.b32.cont [11/16] 0.0, 128
        %6203 = vxpose.xlu0.b32.cont [12/16] 0.0, 128
        %6204 = vxpose.xlu0.b32.cont [13/16] 0.0, 128
        %6205 = vxpose.xlu0.b32.cont [14/16] 0.0, 128
        %6206 = vxpose.xlu0.b32.cont [15/16] 0.0, 128
        %6207 = vxpose.xlu0.b32.end [16/16] 0.0, 128
        %v6208 = vpop.trf.xlu0
        %v6209 = vpop.trf.xlu0
        %v6210 = vpop.trf.xlu0
        %v6211 = vpop.trf.xlu0
        %v6212 = vpop.trf.xlu0
        %v6213 = vpop.trf.xlu0
        %v6214 = vpop.trf.xlu0
        %v6215 = vpop.trf.xlu0
        %v6216 = vpop.trf.xlu0
        %v6217 = vpop.trf.xlu0
        %v6218 = vpop.trf.xlu0
        %v6219 = vpop.trf.xlu0
        %v6220 = vpop.trf.xlu0
        %v6221 = vpop.trf.xlu0
        %v6222 = vpop.trf.xlu0
        %v6223 = vpop.trf.xlu0
        %v6225 = vsel %vm455, %v6208, 0
        %6227 = vmatpush.msra.mxu0 0.0
        %6228 = vmatpush.msra.mxu0 0.0
        %6229 = vmatpush.msra.mxu0 0.0
        %6230 = vmatpush.msra.mxu0 0.0
        %6231 = vmatpush.msra.mxu0 0.0
        %6232 = vmatpush.msra.mxu0 0.0
        %6233 = vmatpush.msra.mxu0 0.0
        %6234 = vmatpush.msra.mxu0 0.0
        %6235 = vmatpush.msra.mxu0 0.0
        %6236 = vmatpush.msra.mxu0 0.0
        %6237 = vmatpush.msra.mxu0 0.0
        %6238 = vmatpush.msra.mxu0 0.0
        %6239 = vmatpush.msra.mxu0 0.0
        %6240 = vmatpush.msra.mxu0 0.0
        %6241 = vmatpush.msra.mxu0 0.0
        %6242 = vmatpush.msra.mxu0 %v485
        %6243 = vmatmul.f32.gmra.mxu0 %v6225
        %v6244 = vpop.f32.mrf.mxu0
        %v6245 = vadd.f32 %v5365, %v6244
        %6246 = vdwg.mxu0
        %6247 = vxpose.xlu0.b32.start [1/16] %v4990, 128
        %6248 = vxpose.xlu0.b32.cont [2/16] 0.0, 128
        %6249 = vxpose.xlu0.b32.cont [3/16] 0.0, 128
        %6250 = vxpose.xlu0.b32.cont [4/16] 0.0, 128
        %6251 = vxpose.xlu0.b32.cont [5/16] 0.0, 128
        %6252 = vxpose.xlu0.b32.cont [6/16] 0.0, 128
        %6253 = vxpose.xlu0.b32.cont [7/16] 0.0, 128
        %6254 = vxpose.xlu0.b32.cont [8/16] 0.0, 128
        %6255 = vxpose.xlu0.b32.cont [9/16] 0.0, 128
        %6256 = vxpose.xlu0.b32.cont [10/16] 0.0, 128
        %6257 = vxpose.xlu0.b32.cont [11/16] 0.0, 128
        %6258 = vxpose.xlu0.b32.cont [12/16] 0.0, 128
        %6259 = vxpose.xlu0.b32.cont [13/16] 0.0, 128
        %6260 = vxpose.xlu0.b32.cont [14/16] 0.0, 128
        %6261 = vxpose.xlu0.b32.cont [15/16] 0.0, 128
        %6262 = vxpose.xlu0.b32.end [16/16] 0.0, 128
        %v6263 = vpop.trf.xlu0
        %v6264 = vpop.trf.xlu0
        %v6265 = vpop.trf.xlu0
        %v6266 = vpop.trf.xlu0
        %v6267 = vpop.trf.xlu0
        %v6268 = vpop.trf.xlu0
        %v6269 = vpop.trf.xlu0
        %v6270 = vpop.trf.xlu0
        %v6271 = vpop.trf.xlu0
        %v6272 = vpop.trf.xlu0
        %v6273 = vpop.trf.xlu0
        %v6274 = vpop.trf.xlu0
        %v6275 = vpop.trf.xlu0
        %v6276 = vpop.trf.xlu0
        %v6277 = vpop.trf.xlu0
        %v6278 = vpop.trf.xlu0
        %v6280 = vsel %vm455, %v6263, 0
        %6282 = vmatpush.msra.mxu0 0.0
        %6283 = vmatpush.msra.mxu0 0.0
        %6284 = vmatpush.msra.mxu0 0.0
        %6285 = vmatpush.msra.mxu0 0.0
        %6286 = vmatpush.msra.mxu0 0.0
        %6287 = vmatpush.msra.mxu0 0.0
        %6288 = vmatpush.msra.mxu0 0.0
        %6289 = vmatpush.msra.mxu0 0.0
        %6290 = vmatpush.msra.mxu0 0.0
        %6291 = vmatpush.msra.mxu0 0.0
        %6292 = vmatpush.msra.mxu0 0.0
        %6293 = vmatpush.msra.mxu0 0.0
        %6294 = vmatpush.msra.mxu0 0.0
        %6295 = vmatpush.msra.mxu0 0.0
        %6296 = vmatpush.msra.mxu0 0.0
        %6297 = vmatpush.msra.mxu0 %v485
        %6298 = vmatmul.f32.gmra.mxu0 %v6280
        %v6299 = vpop.f32.mrf.mxu0
        %v6300 = vadd.f32 %v5420, %v6299
        %6301 = vdwg.mxu0
        %6302 = vxpose.xlu0.b32.start [1/16] %v4993, 128
        %6303 = vxpose.xlu0.b32.cont [2/16] 0.0, 128
        %6304 = vxpose.xlu0.b32.cont [3/16] 0.0, 128
        %6305 = vxpose.xlu0.b32.cont [4/16] 0.0, 128
        %6306 = vxpose.xlu0.b32.cont [5/16] 0.0, 128
        %6307 = vxpose.xlu0.b32.cont [6/16] 0.0, 128
        %6308 = vxpose.xlu0.b32.cont [7/16] 0.0, 128
        %6309 = vxpose.xlu0.b32.cont [8/16] 0.0, 128
        %6310 = vxpose.xlu0.b32.cont [9/16] 0.0, 128
        %6311 = vxpose.xlu0.b32.cont [10/16] 0.0, 128
        %6312 = vxpose.xlu0.b32.cont [11/16] 0.0, 128
        %6313 = vxpose.xlu0.b32.cont [12/16] 0.0, 128
        %6314 = vxpose.xlu0.b32.cont [13/16] 0.0, 128
        %6315 = vxpose.xlu0.b32.cont [14/16] 0.0, 128
        %6316 = vxpose.xlu0.b32.cont [15/16] 0.0, 128
        %6317 = vxpose.xlu0.b32.end [16/16] 0.0, 128
        %v6318 = vpop.trf.xlu0
        %v6319 = vpop.trf.xlu0
        %v6320 = vpop.trf.xlu0
        %v6321 = vpop.trf.xlu0
        %v6322 = vpop.trf.xlu0
        %v6323 = vpop.trf.xlu0
        %v6324 = vpop.trf.xlu0
        %v6325 = vpop.trf.xlu0
        %v6326 = vpop.trf.xlu0
        %v6327 = vpop.trf.xlu0
        %v6328 = vpop.trf.xlu0
        %v6329 = vpop.trf.xlu0
        %v6330 = vpop.trf.xlu0
        %v6331 = vpop.trf.xlu0
        %v6332 = vpop.trf.xlu0
        %v6333 = vpop.trf.xlu0
        %v6335 = vsel %vm455, %v6318, 0
        %6337 = vmatpush.msra.mxu0 0.0
        %6338 = vmatpush.msra.mxu0 0.0
        %6339 = vmatpush.msra.mxu0 0.0
        %6340 = vmatpush.msra.mxu0 0.0
        %6341 = vmatpush.msra.mxu0 0.0
        %6342 = vmatpush.msra.mxu0 0.0
        %6343 = vmatpush.msra.mxu0 0.0
        %6344 = vmatpush.msra.mxu0 0.0
        %6345 = vmatpush.msra.mxu0 0.0
        %6346 = vmatpush.msra.mxu0 0.0
        %6347 = vmatpush.msra.mxu0 0.0
        %6348 = vmatpush.msra.mxu0 0.0
        %6349 = vmatpush.msra.mxu0 0.0
        %6350 = vmatpush.msra.mxu0 0.0
        %6351 = vmatpush.msra.mxu0 0.0
        %6352 = vmatpush.msra.mxu0 %v485
        %6353 = vmatmul.f32.gmra.mxu0 %v6335
        %v6354 = vpop.f32.mrf.mxu0
        %v6355 = vadd.f32 %v5475, %v6354
        %6356 = vdwg.mxu0
        %6357 = vxpose.xlu0.b32.start [1/16] %v4996, 128
        %6358 = vxpose.xlu0.b32.cont [2/16] 0.0, 128
        %6359 = vxpose.xlu0.b32.cont [3/16] 0.0, 128
        %6360 = vxpose.xlu0.b32.cont [4/16] 0.0, 128
        %6361 = vxpose.xlu0.b32.cont [5/16] 0.0, 128
        %6362 = vxpose.xlu0.b32.cont [6/16] 0.0, 128
        %6363 = vxpose.xlu0.b32.cont [7/16] 0.0, 128
        %6364 = vxpose.xlu0.b32.cont [8/16] 0.0, 128
        %6365 = vxpose.xlu0.b32.cont [9/16] 0.0, 128
        %6366 = vxpose.xlu0.b32.cont [10/16] 0.0, 128
        %6367 = vxpose.xlu0.b32.cont [11/16] 0.0, 128
        %6368 = vxpose.xlu0.b32.cont [12/16] 0.0, 128
        %6369 = vxpose.xlu0.b32.cont [13/16] 0.0, 128
        %6370 = vxpose.xlu0.b32.cont [14/16] 0.0, 128
        %6371 = vxpose.xlu0.b32.cont [15/16] 0.0, 128
        %6372 = vxpose.xlu0.b32.end [16/16] 0.0, 128
        %v6373 = vpop.trf.xlu0
        %v6374 = vpop.trf.xlu0
        %v6375 = vpop.trf.xlu0
        %v6376 = vpop.trf.xlu0
        %v6377 = vpop.trf.xlu0
        %v6378 = vpop.trf.xlu0
        %v6379 = vpop.trf.xlu0
        %v6380 = vpop.trf.xlu0
        %v6381 = vpop.trf.xlu0
        %v6382 = vpop.trf.xlu0
        %v6383 = vpop.trf.xlu0
        %v6384 = vpop.trf.xlu0
        %v6385 = vpop.trf.xlu0
        %v6386 = vpop.trf.xlu0
        %v6387 = vpop.trf.xlu0
        %v6388 = vpop.trf.xlu0
        %v6390 = vsel %vm455, %v6373, 0
        %6392 = vmatpush.msra.mxu0 0.0
        %6393 = vmatpush.msra.mxu0 0.0
        %6394 = vmatpush.msra.mxu0 0.0
        %6395 = vmatpush.msra.mxu0 0.0
        %6396 = vmatpush.msra.mxu0 0.0
        %6397 = vmatpush.msra.mxu0 0.0
        %6398 = vmatpush.msra.mxu0 0.0
        %6399 = vmatpush.msra.mxu0 0.0
        %6400 = vmatpush.msra.mxu0 0.0
        %6401 = vmatpush.msra.mxu0 0.0
        %6402 = vmatpush.msra.mxu0 0.0
        %6403 = vmatpush.msra.mxu0 0.0
        %6404 = vmatpush.msra.mxu0 0.0
        %6405 = vmatpush.msra.mxu0 0.0
        %6406 = vmatpush.msra.mxu0 0.0
        %6407 = vmatpush.msra.mxu0 %v485
        %6408 = vmatmul.f32.gmra.mxu0 %v6390
        %v6409 = vpop.f32.mrf.mxu0
        %v6410 = vadd.f32 %v5530, %v6409
        %6411 = vdwg.mxu0
        %6412 = vxpose.xlu0.b32.start [1/16] %v4999, 128
        %6413 = vxpose.xlu0.b32.cont [2/16] 0.0, 128
        %6414 = vxpose.xlu0.b32.cont [3/16] 0.0, 128
        %6415 = vxpose.xlu0.b32.cont [4/16] 0.0, 128
        %6416 = vxpose.xlu0.b32.cont [5/16] 0.0, 128
        %6417 = vxpose.xlu0.b32.cont [6/16] 0.0, 128
        %6418 = vxpose.xlu0.b32.cont [7/16] 0.0, 128
        %6419 = vxpose.xlu0.b32.cont [8/16] 0.0, 128
        %6420 = vxpose.xlu0.b32.cont [9/16] 0.0, 128
        %6421 = vxpose.xlu0.b32.cont [10/16] 0.0, 128
        %6422 = vxpose.xlu0.b32.cont [11/16] 0.0, 128
        %6423 = vxpose.xlu0.b32.cont [12/16] 0.0, 128
        %6424 = vxpose.xlu0.b32.cont [13/16] 0.0, 128
        %6425 = vxpose.xlu0.b32.cont [14/16] 0.0, 128
        %6426 = vxpose.xlu0.b32.cont [15/16] 0.0, 128
        %6427 = vxpose.xlu0.b32.end [16/16] 0.0, 128
        %v6428 = vpop.trf.xlu0
        %v6429 = vpop.trf.xlu0
        %v6430 = vpop.trf.xlu0
        %v6431 = vpop.trf.xlu0
        %v6432 = vpop.trf.xlu0
        %v6433 = vpop.trf.xlu0
        %v6434 = vpop.trf.xlu0
        %v6435 = vpop.trf.xlu0
        %v6436 = vpop.trf.xlu0
        %v6437 = vpop.trf.xlu0
        %v6438 = vpop.trf.xlu0
        %v6439 = vpop.trf.xlu0
        %v6440 = vpop.trf.xlu0
        %v6441 = vpop.trf.xlu0
        %v6442 = vpop.trf.xlu0
        %v6443 = vpop.trf.xlu0
        %v6445 = vsel %vm455, %v6428, 0
        %6447 = vmatpush.msra.mxu0 0.0
        %6448 = vmatpush.msra.mxu0 0.0
        %6449 = vmatpush.msra.mxu0 0.0
        %6450 = vmatpush.msra.mxu0 0.0
        %6451 = vmatpush.msra.mxu0 0.0
        %6452 = vmatpush.msra.mxu0 0.0
        %6453 = vmatpush.msra.mxu0 0.0
        %6454 = vmatpush.msra.mxu0 0.0
        %6455 = vmatpush.msra.mxu0 0.0
        %6456 = vmatpush.msra.mxu0 0.0
        %6457 = vmatpush.msra.mxu0 0.0
        %6458 = vmatpush.msra.mxu0 0.0
        %6459 = vmatpush.msra.mxu0 0.0
        %6460 = vmatpush.msra.mxu0 0.0
        %6461 = vmatpush.msra.mxu0 0.0
        %6462 = vmatpush.msra.mxu0 %v485
        %6463 = vmatmul.f32.gmra.mxu0 %v6445
        %v6464 = vpop.f32.mrf.mxu0
        %v6465 = vadd.f32 %v5585, %v6464
        %6466 = vdwg.mxu0
        %6467 = vxpose.xlu0.b32.start [1/16] %v5002, 128
        %6468 = vxpose.xlu0.b32.cont [2/16] 0.0, 128
        %6469 = vxpose.xlu0.b32.cont [3/16] 0.0, 128
        %6470 = vxpose.xlu0.b32.cont [4/16] 0.0, 128
        %6471 = vxpose.xlu0.b32.cont [5/16] 0.0, 128
        %6472 = vxpose.xlu0.b32.cont [6/16] 0.0, 128
        %6473 = vxpose.xlu0.b32.cont [7/16] 0.0, 128
        %6474 = vxpose.xlu0.b32.cont [8/16] 0.0, 128
        %6475 = vxpose.xlu0.b32.cont [9/16] 0.0, 128
        %6476 = vxpose.xlu0.b32.cont [10/16] 0.0, 128
        %6477 = vxpose.xlu0.b32.cont [11/16] 0.0, 128
        %6478 = vxpose.xlu0.b32.cont [12/16] 0.0, 128
        %6479 = vxpose.xlu0.b32.cont [13/16] 0.0, 128
        %6480 = vxpose.xlu0.b32.cont [14/16] 0.0, 128
        %6481 = vxpose.xlu0.b32.cont [15/16] 0.0, 128
        %6482 = vxpose.xlu0.b32.end [16/16] 0.0, 128
        %v6483 = vpop.trf.xlu0
        %v6484 = vpop.trf.xlu0
        %v6485 = vpop.trf.xlu0
        %v6486 = vpop.trf.xlu0
        %v6487 = vpop.trf.xlu0
        %v6488 = vpop.trf.xlu0
        %v6489 = vpop.trf.xlu0
        %v6490 = vpop.trf.xlu0
        %v6491 = vpop.trf.xlu0
        %v6492 = vpop.trf.xlu0
        %v6493 = vpop.trf.xlu0
        %v6494 = vpop.trf.xlu0
        %v6495 = vpop.trf.xlu0
        %v6496 = vpop.trf.xlu0
        %v6497 = vpop.trf.xlu0
        %v6498 = vpop.trf.xlu0
        %v6500 = vsel %vm455, %v6483, 0
        %6502 = vmatpush.msra.mxu0 0.0
        %6503 = vmatpush.msra.mxu0 0.0
        %6504 = vmatpush.msra.mxu0 0.0
        %6505 = vmatpush.msra.mxu0 0.0
        %6506 = vmatpush.msra.mxu0 0.0
        %6507 = vmatpush.msra.mxu0 0.0
        %6508 = vmatpush.msra.mxu0 0.0
        %6509 = vmatpush.msra.mxu0 0.0
        %6510 = vmatpush.msra.mxu0 0.0
        %6511 = vmatpush.msra.mxu0 0.0
        %6512 = vmatpush.msra.mxu0 0.0
        %6513 = vmatpush.msra.mxu0 0.0
        %6514 = vmatpush.msra.mxu0 0.0
        %6515 = vmatpush.msra.mxu0 0.0
        %6516 = vmatpush.msra.mxu0 0.0
        %6517 = vmatpush.msra.mxu0 %v485
        %6518 = vmatmul.f32.gmra.mxu0 %v6500
        %v6519 = vpop.f32.mrf.mxu0
        %v6520 = vadd.f32 %v5640, %v6519
        %6521 = vdwg.mxu0
        %6522 = vxpose.xlu0.b32.start [1/16] %v5005, 128
        %6523 = vxpose.xlu0.b32.cont [2/16] 0.0, 128
        %6524 = vxpose.xlu0.b32.cont [3/16] 0.0, 128
        %6525 = vxpose.xlu0.b32.cont [4/16] 0.0, 128
        %6526 = vxpose.xlu0.b32.cont [5/16] 0.0, 128
        %6527 = vxpose.xlu0.b32.cont [6/16] 0.0, 128
        %6528 = vxpose.xlu0.b32.cont [7/16] 0.0, 128
        %6529 = vxpose.xlu0.b32.cont [8/16] 0.0, 128
        %6530 = vxpose.xlu0.b32.cont [9/16] 0.0, 128
        %6531 = vxpose.xlu0.b32.cont [10/16] 0.0, 128
        %6532 = vxpose.xlu0.b32.cont [11/16] 0.0, 128
        %6533 = vxpose.xlu0.b32.cont [12/16] 0.0, 128
        %6534 = vxpose.xlu0.b32.cont [13/16] 0.0, 128
        %6535 = vxpose.xlu0.b32.cont [14/16] 0.0, 128
        %6536 = vxpose.xlu0.b32.cont [15/16] 0.0, 128
        %6537 = vxpose.xlu0.b32.end [16/16] 0.0, 128
        %v6538 = vpop.trf.xlu0
        %v6539 = vpop.trf.xlu0
        %v6540 = vpop.trf.xlu0
        %v6541 = vpop.trf.xlu0
        %v6542 = vpop.trf.xlu0
        %v6543 = vpop.trf.xlu0
        %v6544 = vpop.trf.xlu0
        %v6545 = vpop.trf.xlu0
        %v6546 = vpop.trf.xlu0
        %v6547 = vpop.trf.xlu0
        %v6548 = vpop.trf.xlu0
        %v6549 = vpop.trf.xlu0
        %v6550 = vpop.trf.xlu0
        %v6551 = vpop.trf.xlu0
        %v6552 = vpop.trf.xlu0
        %v6553 = vpop.trf.xlu0
        %v6555 = vsel %vm455, %v6538, 0
        %6557 = vmatpush.msra.mxu0 0.0
        %6558 = vmatpush.msra.mxu0 0.0
        %6559 = vmatpush.msra.mxu0 0.0
        %6560 = vmatpush.msra.mxu0 0.0
        %6561 = vmatpush.msra.mxu0 0.0
        %6562 = vmatpush.msra.mxu0 0.0
        %6563 = vmatpush.msra.mxu0 0.0
        %6564 = vmatpush.msra.mxu0 0.0
        %6565 = vmatpush.msra.mxu0 0.0
        %6566 = vmatpush.msra.mxu0 0.0
        %6567 = vmatpush.msra.mxu0 0.0
        %6568 = vmatpush.msra.mxu0 0.0
        %6569 = vmatpush.msra.mxu0 0.0
        %6570 = vmatpush.msra.mxu0 0.0
        %6571 = vmatpush.msra.mxu0 0.0
        %6572 = vmatpush.msra.mxu0 %v485
        %6573 = vmatmul.f32.gmra.mxu0 %v6555
        %v6574 = vpop.f32.mrf.mxu0
        %v6575 = vadd.f32 %v5695, %v6574
        %6576 = vdwg.mxu0
        %6577 = vxpose.xlu0.b32.start [1/16] %v5008, 128
        %6578 = vxpose.xlu0.b32.cont [2/16] 0.0, 128
        %6579 = vxpose.xlu0.b32.cont [3/16] 0.0, 128
        %6580 = vxpose.xlu0.b32.cont [4/16] 0.0, 128
        %6581 = vxpose.xlu0.b32.cont [5/16] 0.0, 128
        %6582 = vxpose.xlu0.b32.cont [6/16] 0.0, 128
        %6583 = vxpose.xlu0.b32.cont [7/16] 0.0, 128
        %6584 = vxpose.xlu0.b32.cont [8/16] 0.0, 128
        %6585 = vxpose.xlu0.b32.cont [9/16] 0.0, 128
        %6586 = vxpose.xlu0.b32.cont [10/16] 0.0, 128
        %6587 = vxpose.xlu0.b32.cont [11/16] 0.0, 128
        %6588 = vxpose.xlu0.b32.cont [12/16] 0.0, 128
        %6589 = vxpose.xlu0.b32.cont [13/16] 0.0, 128
        %6590 = vxpose.xlu0.b32.cont [14/16] 0.0, 128
        %6591 = vxpose.xlu0.b32.cont [15/16] 0.0, 128
        %6592 = vxpose.xlu0.b32.end [16/16] 0.0, 128
        %v6593 = vpop.trf.xlu0
        %v6594 = vpop.trf.xlu0
        %v6595 = vpop.trf.xlu0
        %v6596 = vpop.trf.xlu0
        %v6597 = vpop.trf.xlu0
        %v6598 = vpop.trf.xlu0
        %v6599 = vpop.trf.xlu0
        %v6600 = vpop.trf.xlu0
        %v6601 = vpop.trf.xlu0
        %v6602 = vpop.trf.xlu0
        %v6603 = vpop.trf.xlu0
        %v6604 = vpop.trf.xlu0
        %v6605 = vpop.trf.xlu0
        %v6606 = vpop.trf.xlu0
        %v6607 = vpop.trf.xlu0
        %v6608 = vpop.trf.xlu0
        %v6610 = vsel %vm455, %v6593, 0
        %6612 = vmatpush.msra.mxu0 0.0
        %6613 = vmatpush.msra.mxu0 0.0
        %6614 = vmatpush.msra.mxu0 0.0
        %6615 = vmatpush.msra.mxu0 0.0
        %6616 = vmatpush.msra.mxu0 0.0
        %6617 = vmatpush.msra.mxu0 0.0
        %6618 = vmatpush.msra.mxu0 0.0
        %6619 = vmatpush.msra.mxu0 0.0
        %6620 = vmatpush.msra.mxu0 0.0
        %6621 = vmatpush.msra.mxu0 0.0
        %6622 = vmatpush.msra.mxu0 0.0
        %6623 = vmatpush.msra.mxu0 0.0
        %6624 = vmatpush.msra.mxu0 0.0
        %6625 = vmatpush.msra.mxu0 0.0
        %6626 = vmatpush.msra.mxu0 0.0
        %6627 = vmatpush.msra.mxu0 %v485
        %6628 = vmatmul.f32.gmra.mxu0 %v6610
        %v6629 = vpop.f32.mrf.mxu0
        %v6630 = vadd.f32 %v5750, %v6629
        %6631 = vdwg.mxu0
        %6632 = vxpose.xlu0.b32.start [1/16] %v5011, 128
        %6633 = vxpose.xlu0.b32.cont [2/16] 0.0, 128
        %6634 = vxpose.xlu0.b32.cont [3/16] 0.0, 128
        %6635 = vxpose.xlu0.b32.cont [4/16] 0.0, 128
        %6636 = vxpose.xlu0.b32.cont [5/16] 0.0, 128
        %6637 = vxpose.xlu0.b32.cont [6/16] 0.0, 128
        %6638 = vxpose.xlu0.b32.cont [7/16] 0.0, 128
        %6639 = vxpose.xlu0.b32.cont [8/16] 0.0, 128
        %6640 = vxpose.xlu0.b32.cont [9/16] 0.0, 128
        %6641 = vxpose.xlu0.b32.cont [10/16] 0.0, 128
        %6642 = vxpose.xlu0.b32.cont [11/16] 0.0, 128
        %6643 = vxpose.xlu0.b32.cont [12/16] 0.0, 128
        %6644 = vxpose.xlu0.b32.cont [13/16] 0.0, 128
        %6645 = vxpose.xlu0.b32.cont [14/16] 0.0, 128
        %6646 = vxpose.xlu0.b32.cont [15/16] 0.0, 128
        %6647 = vxpose.xlu0.b32.end [16/16] 0.0, 128
        %v6648 = vpop.trf.xlu0
        %v6649 = vpop.trf.xlu0
        %v6650 = vpop.trf.xlu0
        %v6651 = vpop.trf.xlu0
        %v6652 = vpop.trf.xlu0
        %v6653 = vpop.trf.xlu0
        %v6654 = vpop.trf.xlu0
        %v6655 = vpop.trf.xlu0
        %v6656 = vpop.trf.xlu0
        %v6657 = vpop.trf.xlu0
        %v6658 = vpop.trf.xlu0
        %v6659 = vpop.trf.xlu0
        %v6660 = vpop.trf.xlu0
        %v6661 = vpop.trf.xlu0
        %v6662 = vpop.trf.xlu0
        %v6663 = vpop.trf.xlu0
        %v6665 = vsel %vm455, %v6648, 0
        %6667 = vmatpush.msra.mxu0 0.0
        %6668 = vmatpush.msra.mxu0 0.0
        %6669 = vmatpush.msra.mxu0 0.0
        %6670 = vmatpush.msra.mxu0 0.0
        %6671 = vmatpush.msra.mxu0 0.0
        %6672 = vmatpush.msra.mxu0 0.0
        %6673 = vmatpush.msra.mxu0 0.0
        %6674 = vmatpush.msra.mxu0 0.0
        %6675 = vmatpush.msra.mxu0 0.0
        %6676 = vmatpush.msra.mxu0 0.0
        %6677 = vmatpush.msra.mxu0 0.0
        %6678 = vmatpush.msra.mxu0 0.0
        %6679 = vmatpush.msra.mxu0 0.0
        %6680 = vmatpush.msra.mxu0 0.0
        %6681 = vmatpush.msra.mxu0 0.0
        %6682 = vmatpush.msra.mxu0 %v485
        %6683 = vmatmul.f32.gmra.mxu0 %v6665
        %v6684 = vpop.f32.mrf.mxu0
        %v6685 = vadd.f32 %v5805, %v6684
        %6686 = vdwg.mxu0
        %6687 = vxpose.xlu0.b32.start [1/16] %v5014, 128
        %6688 = vxpose.xlu0.b32.cont [2/16] 0.0, 128
        %6689 = vxpose.xlu0.b32.cont [3/16] 0.0, 128
        %6690 = vxpose.xlu0.b32.cont [4/16] 0.0, 128
        %6691 = vxpose.xlu0.b32.cont [5/16] 0.0, 128
        %6692 = vxpose.xlu0.b32.cont [6/16] 0.0, 128
        %6693 = vxpose.xlu0.b32.cont [7/16] 0.0, 128
        %6694 = vxpose.xlu0.b32.cont [8/16] 0.0, 128
        %6695 = vxpose.xlu0.b32.cont [9/16] 0.0, 128
        %6696 = vxpose.xlu0.b32.cont [10/16] 0.0, 128
        %6697 = vxpose.xlu0.b32.cont [11/16] 0.0, 128
        %6698 = vxpose.xlu0.b32.cont [12/16] 0.0, 128
        %6699 = vxpose.xlu0.b32.cont [13/16] 0.0, 128
        %6700 = vxpose.xlu0.b32.cont [14/16] 0.0, 128
        %6701 = vxpose.xlu0.b32.cont [15/16] 0.0, 128
        %6702 = vxpose.xlu0.b32.end [16/16] 0.0, 128
        %v6703 = vpop.trf.xlu0
        %v6704 = vpop.trf.xlu0
        %v6705 = vpop.trf.xlu0
        %v6706 = vpop.trf.xlu0
        %v6707 = vpop.trf.xlu0
        %v6708 = vpop.trf.xlu0
        %v6709 = vpop.trf.xlu0
        %v6710 = vpop.trf.xlu0
        %v6711 = vpop.trf.xlu0
        %v6712 = vpop.trf.xlu0
        %v6713 = vpop.trf.xlu0
        %v6714 = vpop.trf.xlu0
        %v6715 = vpop.trf.xlu0
        %v6716 = vpop.trf.xlu0
        %v6717 = vpop.trf.xlu0
        %v6718 = vpop.trf.xlu0
        %v6720 = vsel %vm455, %v6703, 0
        %6722 = vmatpush.msra.mxu0 0.0
        %6723 = vmatpush.msra.mxu0 0.0
        %6724 = vmatpush.msra.mxu0 0.0
        %6725 = vmatpush.msra.mxu0 0.0
        %6726 = vmatpush.msra.mxu0 0.0
        %6727 = vmatpush.msra.mxu0 0.0
        %6728 = vmatpush.msra.mxu0 0.0
        %6729 = vmatpush.msra.mxu0 0.0
        %6730 = vmatpush.msra.mxu0 0.0
        %6731 = vmatpush.msra.mxu0 0.0
        %6732 = vmatpush.msra.mxu0 0.0
        %6733 = vmatpush.msra.mxu0 0.0
        %6734 = vmatpush.msra.mxu0 0.0
        %6735 = vmatpush.msra.mxu0 0.0
        %6736 = vmatpush.msra.mxu0 0.0
        %6737 = vmatpush.msra.mxu0 %v485
        %6738 = vmatmul.f32.gmra.mxu0 %v6720
        %v6739 = vpop.f32.mrf.mxu0
        %v6740 = vadd.f32 %v5860, %v6739
        %6741 = vdwg.mxu0
        %6742 = vxpose.xlu0.b32.start [1/16] %v5017, 128
        %6743 = vxpose.xlu0.b32.cont [2/16] 0.0, 128
        %6744 = vxpose.xlu0.b32.cont [3/16] 0.0, 128
        %6745 = vxpose.xlu0.b32.cont [4/16] 0.0, 128
        %6746 = vxpose.xlu0.b32.cont [5/16] 0.0, 128
        %6747 = vxpose.xlu0.b32.cont [6/16] 0.0, 128
        %6748 = vxpose.xlu0.b32.cont [7/16] 0.0, 128
        %6749 = vxpose.xlu0.b32.cont [8/16] 0.0, 128
        %6750 = vxpose.xlu0.b32.cont [9/16] 0.0, 128
        %6751 = vxpose.xlu0.b32.cont [10/16] 0.0, 128
        %6752 = vxpose.xlu0.b32.cont [11/16] 0.0, 128
        %6753 = vxpose.xlu0.b32.cont [12/16] 0.0, 128
        %6754 = vxpose.xlu0.b32.cont [13/16] 0.0, 128
        %6755 = vxpose.xlu0.b32.cont [14/16] 0.0, 128
        %6756 = vxpose.xlu0.b32.cont [15/16] 0.0, 128
        %6757 = vxpose.xlu0.b32.end [16/16] 0.0, 128
        %v6758 = vpop.trf.xlu0
        %v6759 = vpop.trf.xlu0
        %v6760 = vpop.trf.xlu0
        %v6761 = vpop.trf.xlu0
        %v6762 = vpop.trf.xlu0
        %v6763 = vpop.trf.xlu0
        %v6764 = vpop.trf.xlu0
        %v6765 = vpop.trf.xlu0
        %v6766 = vpop.trf.xlu0
        %v6767 = vpop.trf.xlu0
        %v6768 = vpop.trf.xlu0
        %v6769 = vpop.trf.xlu0
        %v6770 = vpop.trf.xlu0
        %v6771 = vpop.trf.xlu0
        %v6772 = vpop.trf.xlu0
        %v6773 = vpop.trf.xlu0
        %v6775 = vsel %vm455, %v6758, 0
        %6777 = vmatpush.msra.mxu0 0.0
        %6778 = vmatpush.msra.mxu0 0.0
        %6779 = vmatpush.msra.mxu0 0.0
        %6780 = vmatpush.msra.mxu0 0.0
        %6781 = vmatpush.msra.mxu0 0.0
        %6782 = vmatpush.msra.mxu0 0.0
        %6783 = vmatpush.msra.mxu0 0.0
        %6784 = vmatpush.msra.mxu0 0.0
        %6785 = vmatpush.msra.mxu0 0.0
        %6786 = vmatpush.msra.mxu0 0.0
        %6787 = vmatpush.msra.mxu0 0.0
        %6788 = vmatpush.msra.mxu0 0.0
        %6789 = vmatpush.msra.mxu0 0.0
        %6790 = vmatpush.msra.mxu0 0.0
        %6791 = vmatpush.msra.mxu0 0.0
        %6792 = vmatpush.msra.mxu0 %v485
        %6793 = vmatmul.f32.gmra.mxu0 %v6775
        %v6794 = vpop.f32.mrf.mxu0
        %v6795 = vadd.f32 %v5915, %v6794
        %6796 = vdwg.mxu0
        %6797 = vxpose.xlu0.b32.start [1/16] %v5020, 128
        %6798 = vxpose.xlu0.b32.cont [2/16] 0.0, 128
        %6799 = vxpose.xlu0.b32.cont [3/16] 0.0, 128
        %6800 = vxpose.xlu0.b32.cont [4/16] 0.0, 128
        %6801 = vxpose.xlu0.b32.cont [5/16] 0.0, 128
        %6802 = vxpose.xlu0.b32.cont [6/16] 0.0, 128
        %6803 = vxpose.xlu0.b32.cont [7/16] 0.0, 128
        %6804 = vxpose.xlu0.b32.cont [8/16] 0.0, 128
        %6805 = vxpose.xlu0.b32.cont [9/16] 0.0, 128
        %6806 = vxpose.xlu0.b32.cont [10/16] 0.0, 128
        %6807 = vxpose.xlu0.b32.cont [11/16] 0.0, 128
        %6808 = vxpose.xlu0.b32.cont [12/16] 0.0, 128
        %6809 = vxpose.xlu0.b32.cont [13/16] 0.0, 128
        %6810 = vxpose.xlu0.b32.cont [14/16] 0.0, 128
        %6811 = vxpose.xlu0.b32.cont [15/16] 0.0, 128
        %6812 = vxpose.xlu0.b32.end [16/16] 0.0, 128
        %v6813 = vpop.trf.xlu0
        %v6814 = vpop.trf.xlu0
        %v6815 = vpop.trf.xlu0
        %v6816 = vpop.trf.xlu0
        %v6817 = vpop.trf.xlu0
        %v6818 = vpop.trf.xlu0
        %v6819 = vpop.trf.xlu0
        %v6820 = vpop.trf.xlu0
        %v6821 = vpop.trf.xlu0
        %v6822 = vpop.trf.xlu0
        %v6823 = vpop.trf.xlu0
        %v6824 = vpop.trf.xlu0
        %v6825 = vpop.trf.xlu0
        %v6826 = vpop.trf.xlu0
        %v6827 = vpop.trf.xlu0
        %v6828 = vpop.trf.xlu0
        %v6830 = vsel %vm455, %v6813, 0
        %6832 = vmatpush.msra.mxu0 0.0
        %6833 = vmatpush.msra.mxu0 0.0
        %6834 = vmatpush.msra.mxu0 0.0
        %6835 = vmatpush.msra.mxu0 0.0
        %6836 = vmatpush.msra.mxu0 0.0
        %6837 = vmatpush.msra.mxu0 0.0
        %6838 = vmatpush.msra.mxu0 0.0
        %6839 = vmatpush.msra.mxu0 0.0
        %6840 = vmatpush.msra.mxu0 0.0
        %6841 = vmatpush.msra.mxu0 0.0
        %6842 = vmatpush.msra.mxu0 0.0
        %6843 = vmatpush.msra.mxu0 0.0
        %6844 = vmatpush.msra.mxu0 0.0
        %6845 = vmatpush.msra.mxu0 0.0
        %6846 = vmatpush.msra.mxu0 0.0
        %6847 = vmatpush.msra.mxu0 %v485
        %6848 = vmatmul.f32.gmra.mxu0 %v6830
        %v6849 = vpop.f32.mrf.mxu0
        %v6850 = vadd.f32 %v5970, %v6849
        %6851 = vdwg.mxu0
        %v6852 = vadd.f32 %v6025, %v2473
        %v6853 = vadd.f32 %v6080, %v2473
        %v6854 = vadd.f32 %v6135, %v2473
        %v6855 = vadd.f32 %v6190, %v2473
        %v6856 = vadd.f32 %v6245, %v2473
        %v6857 = vadd.f32 %v6300, %v2473
        %v6858 = vadd.f32 %v6355, %v2473
        %v6859 = vadd.f32 %v6410, %v2473
        %v6860 = vadd.f32 %v6465, %v2473
        %v6861 = vadd.f32 %v6520, %v2473
        %v6862 = vadd.f32 %v6575, %v2473
        %v6863 = vadd.f32 %v6630, %v2473
        %v6864 = vadd.f32 %v6685, %v2473
        %v6865 = vadd.f32 %v6740, %v2473
        %v6866 = vadd.f32 %v6795, %v2473
        %v6867 = vadd.f32 %v6850, %v2473
        %v6868 = vrot.slane %v6854, 4
        %v6869 = vsel %vm283, %v6868, %v6852
        %v6870 = vrot.slane %v6852, 4
        %v6871 = vsel %vm283, %v6854, %v6870
        %v6873 = vunpack.c.l.s4 1983009808
        %v6874 = vunpack.c.0.s8 %v6873
        %v6875 = vperm.slane %v6869, %v6874
        %v6877 = vunpack.c.l.s4 1983009808
        %v6878 = vunpack.c.0.s8 %v6877
        %v6879 = vperm.slane %v6871, %v6878
        %v6880 = vrot.slane %v6855, 4
        %v6881 = vsel %vm283, %v6880, %v6853
        %v6882 = vrot.slane %v6853, 4
        %v6883 = vsel %vm283, %v6855, %v6882
        %v6885 = vunpack.c.l.s4 1983009808
        %v6886 = vunpack.c.0.s8 %v6885
        %v6887 = vperm.slane %v6881, %v6886
        %v6889 = vunpack.c.l.s4 1983009808
        %v6890 = vunpack.c.0.s8 %v6889
        %v6891 = vperm.slane %v6883, %v6890
        %v6892 = vrot.slane %v6858, 4
        %v6893 = vsel %vm283, %v6892, %v6856
        %v6894 = vrot.slane %v6856, 4
        %v6895 = vsel %vm283, %v6858, %v6894
        %v6897 = vunpack.c.l.s4 1983009808
        %v6898 = vunpack.c.0.s8 %v6897
        %v6899 = vperm.slane %v6893, %v6898
        %v6901 = vunpack.c.l.s4 1983009808
        %v6902 = vunpack.c.0.s8 %v6901
        %v6903 = vperm.slane %v6895, %v6902
        %v6904 = vrot.slane %v6859, 4
        %v6905 = vsel %vm283, %v6904, %v6857
        %v6906 = vrot.slane %v6857, 4
        %v6907 = vsel %vm283, %v6859, %v6906
        %v6909 = vunpack.c.l.s4 1983009808
        %v6910 = vunpack.c.0.s8 %v6909
        %v6911 = vperm.slane %v6905, %v6910
        %v6913 = vunpack.c.l.s4 1983009808
        %v6914 = vunpack.c.0.s8 %v6913
        %v6915 = vperm.slane %v6907, %v6914
        %v6916 = vrot.slane %v6887, 4
        %v6917 = vsel %vm283, %v6916, %v6875
        %v6918 = vrot.slane %v6875, 4
        %v6919 = vsel %vm283, %v6887, %v6918
        %v6921 = vunpack.c.l.s4 1934713408
        %v6922 = vunpack.c.0.s8 %v6921
        %v6923 = vperm.slane %v6917, %v6922
        %v6925 = vunpack.c.l.s4 1934713408
        %v6926 = vunpack.c.0.s8 %v6925
        %v6927 = vperm.slane %v6919, %v6926
        %v6928 = vrot.slane %v6891, 4
        %v6929 = vsel %vm283, %v6928, %v6879
        %v6930 = vrot.slane %v6879, 4
        %v6931 = vsel %vm283, %v6891, %v6930
        %v6933 = vunpack.c.l.s4 1934713408
        %v6934 = vunpack.c.0.s8 %v6933
        %v6935 = vperm.slane %v6929, %v6934
        %v6937 = vunpack.c.l.s4 1934713408
        %v6938 = vunpack.c.0.s8 %v6937
        %v6939 = vperm.slane %v6931, %v6938
        %v6940 = vrot.slane %v6911, 4
        %v6941 = vsel %vm283, %v6940, %v6899
        %v6942 = vrot.slane %v6899, 4
        %v6943 = vsel %vm283, %v6911, %v6942
        %v6945 = vunpack.c.l.s4 1934713408
        %v6946 = vunpack.c.0.s8 %v6945
        %v6947 = vperm.slane %v6941, %v6946
        %v6949 = vunpack.c.l.s4 1934713408
        %v6950 = vunpack.c.0.s8 %v6949
        %v6951 = vperm.slane %v6943, %v6950
        %v6952 = vrot.slane %v6915, 4
        %v6953 = vsel %vm283, %v6952, %v6903
        %v6954 = vrot.slane %v6903, 4
        %v6955 = vsel %vm283, %v6915, %v6954
        %v6957 = vunpack.c.l.s4 1934713408
        %v6958 = vunpack.c.0.s8 %v6957
        %v6959 = vperm.slane %v6953, %v6958
        %v6961 = vunpack.c.l.s4 1934713408
        %v6962 = vunpack.c.0.s8 %v6961
        %v6963 = vperm.slane %v6955, %v6962
        %v6964 = vrot.slane %v6947, 4
        %v6965 = vsel %vm283, %v6964, %v6923
        %v6966 = vrot.slane %v6923, 4
        %v6967 = vsel %vm283, %v6947, %v6966
        %v6968 = vrot.slane %v6951, 4
        %v6969 = vsel %vm283, %v6968, %v6927
        %v6970 = vrot.slane %v6927, 4
        %v6971 = vsel %vm283, %v6951, %v6970
        %v6972 = vrot.slane %v6959, 4
        %v6973 = vsel %vm283, %v6972, %v6935
        %v6974 = vrot.slane %v6935, 4
        %v6975 = vsel %vm283, %v6959, %v6974
        %v6976 = vrot.slane %v6963, 4
        %v6977 = vsel %vm283, %v6976, %v6939
        %v6978 = vrot.slane %v6939, 4
        %v6979 = vsel %vm283, %v6963, %v6978
        %v6980 = vrot.slane %v6862, 4
        %v6981 = vsel %vm283, %v6980, %v6860
        %v6982 = vrot.slane %v6860, 4
        %v6983 = vsel %vm283, %v6862, %v6982
        %v6985 = vunpack.c.l.s4 1983009808
        %v6986 = vunpack.c.0.s8 %v6985
        %v6987 = vperm.slane %v6981, %v6986
        %v6989 = vunpack.c.l.s4 1983009808
        %v6990 = vunpack.c.0.s8 %v6989
        %v6991 = vperm.slane %v6983, %v6990
        %v6992 = vrot.slane %v6863, 4
        %v6993 = vsel %vm283, %v6992, %v6861
        %v6994 = vrot.slane %v6861, 4
        %v6995 = vsel %vm283, %v6863, %v6994
        %v6997 = vunpack.c.l.s4 1983009808
        %v6998 = vunpack.c.0.s8 %v6997
        %v6999 = vperm.slane %v6993, %v6998
        %v7001 = vunpack.c.l.s4 1983009808
        %v7002 = vunpack.c.0.s8 %v7001
        %v7003 = vperm.slane %v6995, %v7002
        %v7004 = vrot.slane %v6866, 4
        %v7005 = vsel %vm283, %v7004, %v6864
        %v7006 = vrot.slane %v6864, 4
        %v7007 = vsel %vm283, %v6866, %v7006
        %v7009 = vunpack.c.l.s4 1983009808
        %v7010 = vunpack.c.0.s8 %v7009
        %v7011 = vperm.slane %v7005, %v7010
        %v7013 = vunpack.c.l.s4 1983009808
        %v7014 = vunpack.c.0.s8 %v7013
        %v7015 = vperm.slane %v7007, %v7014
        %v7016 = vrot.slane %v6867, 4
        %v7017 = vsel %vm283, %v7016, %v6865
        %v7018 = vrot.slane %v6865, 4
        %v7019 = vsel %vm283, %v6867, %v7018
        %v7021 = vunpack.c.l.s4 1983009808
        %v7022 = vunpack.c.0.s8 %v7021
        %v7023 = vperm.slane %v7017, %v7022
        %v7025 = vunpack.c.l.s4 1983009808
        %v7026 = vunpack.c.0.s8 %v7025
        %v7027 = vperm.slane %v7019, %v7026
        %v7028 = vrot.slane %v6999, 4
        %v7029 = vsel %vm283, %v7028, %v6987
        %v7030 = vrot.slane %v6987, 4
        %v7031 = vsel %vm283, %v6999, %v7030
        %v7033 = vunpack.c.l.s4 1934713408
        %v7034 = vunpack.c.0.s8 %v7033
        %v7035 = vperm.slane %v7029, %v7034
        %v7037 = vunpack.c.l.s4 1934713408
        %v7038 = vunpack.c.0.s8 %v7037
        %v7039 = vperm.slane %v7031, %v7038
        %v7040 = vrot.slane %v7003, 4
        %v7041 = vsel %vm283, %v7040, %v6991
        %v7042 = vrot.slane %v6991, 4
        %v7043 = vsel %vm283, %v7003, %v7042
        %v7045 = vunpack.c.l.s4 1934713408
        %v7046 = vunpack.c.0.s8 %v7045
        %v7047 = vperm.slane %v7041, %v7046
        %v7049 = vunpack.c.l.s4 1934713408
        %v7050 = vunpack.c.0.s8 %v7049
        %v7051 = vperm.slane %v7043, %v7050
        %v7052 = vrot.slane %v7023, 4
        %v7053 = vsel %vm283, %v7052, %v7011
        %v7054 = vrot.slane %v7011, 4
        %v7055 = vsel %vm283, %v7023, %v7054
        %v7057 = vunpack.c.l.s4 1934713408
        %v7058 = vunpack.c.0.s8 %v7057
        %v7059 = vperm.slane %v7053, %v7058
        %v7061 = vunpack.c.l.s4 1934713408
        %v7062 = vunpack.c.0.s8 %v7061
        %v7063 = vperm.slane %v7055, %v7062
        %v7064 = vrot.slane %v7027, 4
        %v7065 = vsel %vm283, %v7064, %v7015
        %v7066 = vrot.slane %v7015, 4
        %v7067 = vsel %vm283, %v7027, %v7066
        %v7069 = vunpack.c.l.s4 1934713408
        %v7070 = vunpack.c.0.s8 %v7069
        %v7071 = vperm.slane %v7065, %v7070
        %v7073 = vunpack.c.l.s4 1934713408
        %v7074 = vunpack.c.0.s8 %v7073
        %v7075 = vperm.slane %v7067, %v7074
        %v7076 = vrot.slane %v7059, 4
        %v7077 = vsel %vm283, %v7076, %v7035
        %v7078 = vrot.slane %v7035, 4
        %v7079 = vsel %vm283, %v7059, %v7078
        %v7080 = vrot.slane %v7063, 4
        %v7081 = vsel %vm283, %v7080, %v7039
        %v7082 = vrot.slane %v7039, 4
        %v7083 = vsel %vm283, %v7063, %v7082
        %v7084 = vrot.slane %v7071, 4
        %v7085 = vsel %vm283, %v7084, %v7047
        %v7086 = vrot.slane %v7047, 4
        %v7087 = vsel %vm283, %v7071, %v7086
        %v7088 = vrot.slane %v7075, 4
        %v7089 = vsel %vm283, %v7088, %v7051
        %v7090 = vrot.slane %v7051, 4
        %v7091 = vsel %vm283, %v7075, %v7090
        %s7092 = scalar_lea.vmem %s273, 16 [#allocation3]
        %7093 = vst.msk [vmem:[%s7092] sm:$0xff] %vm457, %v6965
        %7094 = vst.msk [vmem:[%s7092 + $0x8] sm:$0xff] %vm457, %v7077
        %7095 = vst.msk [vmem:[%s7092 + $0x20] sm:$0xff] %vm457, %v6967
        %7096 = vst.msk [vmem:[%s7092 + $0x28] sm:$0xff] %vm457, %v7079
        %7097 = vst.msk [vmem:[%s7092 + $0x40] sm:$0xff] %vm457, %v6969
        %7098 = vst.msk [vmem:[%s7092 + $0x48] sm:$0xff] %vm457, %v7081
        %7099 = vst.msk [vmem:[%s7092 + $0x60] sm:$0xff] %vm457, %v6971
        %7100 = vst.msk [vmem:[%s7092 + $0x68] sm:$0xff] %vm457, %v7083
        %7101 = vst.msk [vmem:[%s7092 + $0x80] sm:$0xff] %vm457, %v6973
        %7102 = vst.msk [vmem:[%s7092 + $0x88] sm:$0xff] %vm457, %v7085
        %7103 = vst.msk [vmem:[%s7092 + $0xa0] sm:$0xff] %vm457, %v6975
        %7104 = vst.msk [vmem:[%s7092 + $0xa8] sm:$0xff] %vm457, %v7087
        %7105 = vst.msk [vmem:[%s7092 + $0xc0] sm:$0xff] %vm457, %v6977
        %7106 = vst.msk [vmem:[%s7092 + $0xc8] sm:$0xff] %vm457, %v7089
        %7107 = vst.msk [vmem:[%s7092 + $0xe0] sm:$0xff] %vm457, %v6979
        %7108 = vst.msk [vmem:[%s7092 + $0xe8] sm:$0xff] %vm457, %v7091
        %s7109 = scalar_lea.vmem %s0, 24
        %v7110 = vld [vmem:[%s7109] sm:$0xf]
        %v7112 = vsel %vm571, %v7110, 0
        %7114 = vmatpush.msra.mxu0 0.0
        %7115 = vmatpush.msra.mxu0 0.0
        %7116 = vmatpush.msra.mxu0 0.0
        %7117 = vmatpush.msra.mxu0 0.0
        %7118 = vmatpush.msra.mxu0 0.0
        %7119 = vmatpush.msra.mxu0 0.0
        %7120 = vmatpush.msra.mxu0 0.0
        %7121 = vmatpush.msra.mxu0 0.0
        %7122 = vmatpush.msra.mxu0 0.0
        %7123 = vmatpush.msra.mxu0 0.0
        %7124 = vmatpush.msra.mxu0 0.0
        %7125 = vmatpush.msra.mxu0 0.0
        %7126 = vmatpush.msra.mxu0 0.0
        %7127 = vmatpush.msra.mxu0 0.0
        %7128 = vmatpush.msra.mxu0 0.0
        %7129 = vmatpush.msra.mxu0 %v7112
        %7130 = vmatmul.f32.gmra.mxu0 %v524
        %v7131 = vpop.f32.mrf.mxu0
        %v7132 = vadd.f32 0.0, %v7131
        %7133 = vmatmul.f32.gmra.mxu0 %v527
        %v7134 = vpop.f32.mrf.mxu0
        %v7135 = vadd.f32 0.0, %v7134
        %7136 = vmatmul.f32.gmra.mxu0 %v530
        %v7137 = vpop.f32.mrf.mxu0
        %v7138 = vadd.f32 0.0, %v7137
        %7139 = vmatmul.f32.gmra.mxu0 %v533
        %v7140 = vpop.f32.mrf.mxu0
        %v7141 = vadd.f32 0.0, %v7140
        %7142 = vmatmul.f32.gmra.mxu0 %v536
        %v7143 = vpop.f32.mrf.mxu0
        %v7144 = vadd.f32 0.0, %v7143
        %7145 = vmatmul.f32.gmra.mxu0 %v539
        %v7146 = vpop.f32.mrf.mxu0
        %v7147 = vadd.f32 0.0, %v7146
        %7148 = vmatmul.f32.gmra.mxu0 %v542
        %v7149 = vpop.f32.mrf.mxu0
        %v7150 = vadd.f32 0.0, %v7149
        %7151 = vmatmul.f32.gmra.mxu0 %v545
        %v7152 = vpop.f32.mrf.mxu0
        %v7153 = vadd.f32 0.0, %v7152
        %7154 = vmatmul.f32.gmra.mxu0 %v548
        %v7155 = vpop.f32.mrf.mxu0
        %v7156 = vadd.f32 0.0, %v7155
        %7157 = vmatmul.f32.gmra.mxu0 %v551
        %v7158 = vpop.f32.mrf.mxu0
        %v7159 = vadd.f32 0.0, %v7158
        %7160 = vmatmul.f32.gmra.mxu0 %v554
        %v7161 = vpop.f32.mrf.mxu0
        %v7162 = vadd.f32 0.0, %v7161
        %7163 = vmatmul.f32.gmra.mxu0 %v557
        %v7164 = vpop.f32.mrf.mxu0
        %v7165 = vadd.f32 0.0, %v7164
        %7166 = vmatmul.f32.gmra.mxu0 %v560
        %v7167 = vpop.f32.mrf.mxu0
        %v7168 = vadd.f32 0.0, %v7167
        %7169 = vmatmul.f32.gmra.mxu0 %v563
        %v7170 = vpop.f32.mrf.mxu0
        %v7171 = vadd.f32 0.0, %v7170
        %7172 = vmatmul.f32.gmra.mxu0 %v566
        %v7173 = vpop.f32.mrf.mxu0
        %v7174 = vadd.f32 0.0, %v7173
        %7175 = vmatmul.f32.gmra.mxu0 %v569
        %v7176 = vpop.f32.mrf.mxu0
        %v7177 = vadd.f32 0.0, %v7176
        %7178 = vdwg.mxu0
        %s7179 = scalar_lea.vmem %s0, 28
        %v7180 = vld [vmem:[%s7179] sm:$0xf]
        %v7182 = vsel %vm571, %v7180, 0
        %7184 = vmatpush.msra.mxu0 0.0
        %7185 = vmatpush.msra.mxu0 0.0
        %7186 = vmatpush.msra.mxu0 0.0
        %7187 = vmatpush.msra.mxu0 0.0
        %7188 = vmatpush.msra.mxu0 0.0
        %7189 = vmatpush.msra.mxu0 0.0
        %7190 = vmatpush.msra.mxu0 0.0
        %7191 = vmatpush.msra.mxu0 0.0
        %7192 = vmatpush.msra.mxu0 0.0
        %7193 = vmatpush.msra.mxu0 0.0
        %7194 = vmatpush.msra.mxu0 0.0
        %7195 = vmatpush.msra.mxu0 0.0
        %7196 = vmatpush.msra.mxu0 0.0
        %7197 = vmatpush.msra.mxu0 0.0
        %7198 = vmatpush.msra.mxu0 0.0
        %7199 = vmatpush.msra.mxu0 %v7182
        %7200 = vmatmul.f32.gmra.mxu0 %v524
        %v7201 = vpop.f32.mrf.mxu0
        %v7202 = vadd.f32 0.0, %v7201
        %7203 = vmatmul.f32.gmra.mxu0 %v527
        %v7204 = vpop.f32.mrf.mxu0
        %v7205 = vadd.f32 0.0, %v7204
        %7206 = vmatmul.f32.gmra.mxu0 %v530
        %v7207 = vpop.f32.mrf.mxu0
        %v7208 = vadd.f32 0.0, %v7207
        %7209 = vmatmul.f32.gmra.mxu0 %v533
        %v7210 = vpop.f32.mrf.mxu0
        %v7211 = vadd.f32 0.0, %v7210
        %7212 = vmatmul.f32.gmra.mxu0 %v536
        %v7213 = vpop.f32.mrf.mxu0
        %v7214 = vadd.f32 0.0, %v7213
        %7215 = vmatmul.f32.gmra.mxu0 %v539
        %v7216 = vpop.f32.mrf.mxu0
        %v7217 = vadd.f32 0.0, %v7216
        %7218 = vmatmul.f32.gmra.mxu0 %v542
        %v7219 = vpop.f32.mrf.mxu0
        %v7220 = vadd.f32 0.0, %v7219
        %7221 = vmatmul.f32.gmra.mxu0 %v545
        %v7222 = vpop.f32.mrf.mxu0
        %v7223 = vadd.f32 0.0, %v7222
        %7224 = vmatmul.f32.gmra.mxu0 %v548
        %v7225 = vpop.f32.mrf.mxu0
        %v7226 = vadd.f32 0.0, %v7225
        %7227 = vmatmul.f32.gmra.mxu0 %v551
        %v7228 = vpop.f32.mrf.mxu0
        %v7229 = vadd.f32 0.0, %v7228
        %7230 = vmatmul.f32.gmra.mxu0 %v554
        %v7231 = vpop.f32.mrf.mxu0
        %v7232 = vadd.f32 0.0, %v7231
        %7233 = vmatmul.f32.gmra.mxu0 %v557
        %v7234 = vpop.f32.mrf.mxu0
        %v7235 = vadd.f32 0.0, %v7234
        %7236 = vmatmul.f32.gmra.mxu0 %v560
        %v7237 = vpop.f32.mrf.mxu0
        %v7238 = vadd.f32 0.0, %v7237
        %7239 = vmatmul.f32.gmra.mxu0 %v563
        %v7240 = vpop.f32.mrf.mxu0
        %v7241 = vadd.f32 0.0, %v7240
        %7242 = vmatmul.f32.gmra.mxu0 %v566
        %v7243 = vpop.f32.mrf.mxu0
        %v7244 = vadd.f32 0.0, %v7243
        %7245 = vmatmul.f32.gmra.mxu0 %v569
        %v7246 = vpop.f32.mrf.mxu0
        %v7247 = vadd.f32 0.0, %v7246
        %7248 = vdwg.mxu0
        %7249 = vxpose.xlu0.b32.start [1/16] %v7202, 128
        %7250 = vxpose.xlu0.b32.cont [2/16] 0.0, 128
        %7251 = vxpose.xlu0.b32.cont [3/16] 0.0, 128
        %7252 = vxpose.xlu0.b32.cont [4/16] 0.0, 128
        %7253 = vxpose.xlu0.b32.cont [5/16] 0.0, 128
        %7254 = vxpose.xlu0.b32.cont [6/16] 0.0, 128
        %7255 = vxpose.xlu0.b32.cont [7/16] 0.0, 128
        %7256 = vxpose.xlu0.b32.cont [8/16] 0.0, 128
        %7257 = vxpose.xlu0.b32.cont [9/16] 0.0, 128
        %7258 = vxpose.xlu0.b32.cont [10/16] 0.0, 128
        %7259 = vxpose.xlu0.b32.cont [11/16] 0.0, 128
        %7260 = vxpose.xlu0.b32.cont [12/16] 0.0, 128
        %7261 = vxpose.xlu0.b32.cont [13/16] 0.0, 128
        %7262 = vxpose.xlu0.b32.cont [14/16] 0.0, 128
        %7263 = vxpose.xlu0.b32.cont [15/16] 0.0, 128
        %7264 = vxpose.xlu0.b32.end [16/16] 0.0, 128
        %v7265 = vpop.trf.xlu0
        %v7266 = vpop.trf.xlu0
        %v7267 = vpop.trf.xlu0
        %v7268 = vpop.trf.xlu0
        %v7269 = vpop.trf.xlu0
        %v7270 = vpop.trf.xlu0
        %v7271 = vpop.trf.xlu0
        %v7272 = vpop.trf.xlu0
        %v7273 = vpop.trf.xlu0
        %v7274 = vpop.trf.xlu0
        %v7275 = vpop.trf.xlu0
        %v7276 = vpop.trf.xlu0
        %v7277 = vpop.trf.xlu0
        %v7278 = vpop.trf.xlu0
        %v7279 = vpop.trf.xlu0
        %v7280 = vpop.trf.xlu0
        %v7282 = vsel %vm455, %v7265, 0
        %7284 = vmatpush.msra.mxu0 0.0
        %7285 = vmatpush.msra.mxu0 0.0
        %7286 = vmatpush.msra.mxu0 0.0
        %7287 = vmatpush.msra.mxu0 0.0
        %7288 = vmatpush.msra.mxu0 0.0
        %7289 = vmatpush.msra.mxu0 0.0
        %7290 = vmatpush.msra.mxu0 0.0
        %7291 = vmatpush.msra.mxu0 0.0
        %7292 = vmatpush.msra.mxu0 0.0
        %7293 = vmatpush.msra.mxu0 0.0
        %7294 = vmatpush.msra.mxu0 0.0
        %7295 = vmatpush.msra.mxu0 0.0
        %7296 = vmatpush.msra.mxu0 0.0
        %7297 = vmatpush.msra.mxu0 0.0
        %7298 = vmatpush.msra.mxu0 0.0
        %7299 = vmatpush.msra.mxu0 %v487
        %7300 = vmatmul.f32.gmra.mxu0 %v7282
        %v7301 = vpop.f32.mrf.mxu0
        %v7302 = vadd.f32 0.0, %v7301
        %7303 = vdwg.mxu0
        %7304 = vxpose.xlu0.b32.start [1/16] %v7205, 128
        %7305 = vxpose.xlu0.b32.cont [2/16] 0.0, 128
        %7306 = vxpose.xlu0.b32.cont [3/16] 0.0, 128
        %7307 = vxpose.xlu0.b32.cont [4/16] 0.0, 128
        %7308 = vxpose.xlu0.b32.cont [5/16] 0.0, 128
        %7309 = vxpose.xlu0.b32.cont [6/16] 0.0, 128
        %7310 = vxpose.xlu0.b32.cont [7/16] 0.0, 128
        %7311 = vxpose.xlu0.b32.cont [8/16] 0.0, 128
        %7312 = vxpose.xlu0.b32.cont [9/16] 0.0, 128
        %7313 = vxpose.xlu0.b32.cont [10/16] 0.0, 128
        %7314 = vxpose.xlu0.b32.cont [11/16] 0.0, 128
        %7315 = vxpose.xlu0.b32.cont [12/16] 0.0, 128
        %7316 = vxpose.xlu0.b32.cont [13/16] 0.0, 128
        %7317 = vxpose.xlu0.b32.cont [14/16] 0.0, 128
        %7318 = vxpose.xlu0.b32.cont [15/16] 0.0, 128
        %7319 = vxpose.xlu0.b32.end [16/16] 0.0, 128
        %v7320 = vpop.trf.xlu0
        %v7321 = vpop.trf.xlu0
        %v7322 = vpop.trf.xlu0
        %v7323 = vpop.trf.xlu0
        %v7324 = vpop.trf.xlu0
        %v7325 = vpop.trf.xlu0
        %v7326 = vpop.trf.xlu0
        %v7327 = vpop.trf.xlu0
        %v7328 = vpop.trf.xlu0
        %v7329 = vpop.trf.xlu0
        %v7330 = vpop.trf.xlu0
        %v7331 = vpop.trf.xlu0
        %v7332 = vpop.trf.xlu0
        %v7333 = vpop.trf.xlu0
        %v7334 = vpop.trf.xlu0
        %v7335 = vpop.trf.xlu0
        %v7337 = vsel %vm455, %v7320, 0
        %7339 = vmatpush.msra.mxu0 0.0
        %7340 = vmatpush.msra.mxu0 0.0
        %7341 = vmatpush.msra.mxu0 0.0
        %7342 = vmatpush.msra.mxu0 0.0
        %7343 = vmatpush.msra.mxu0 0.0
        %7344 = vmatpush.msra.mxu0 0.0
        %7345 = vmatpush.msra.mxu0 0.0
        %7346 = vmatpush.msra.mxu0 0.0
        %7347 = vmatpush.msra.mxu0 0.0
        %7348 = vmatpush.msra.mxu0 0.0
        %7349 = vmatpush.msra.mxu0 0.0
        %7350 = vmatpush.msra.mxu0 0.0
        %7351 = vmatpush.msra.mxu0 0.0
        %7352 = vmatpush.msra.mxu0 0.0
        %7353 = vmatpush.msra.mxu0 0.0
        %7354 = vmatpush.msra.mxu0 %v487
        %7355 = vmatmul.f32.gmra.mxu0 %v7337
        %v7356 = vpop.f32.mrf.mxu0
        %v7357 = vadd.f32 0.0, %v7356
        %7358 = vdwg.mxu0
        %7359 = vxpose.xlu0.b32.start [1/16] %v7208, 128
        %7360 = vxpose.xlu0.b32.cont [2/16] 0.0, 128
        %7361 = vxpose.xlu0.b32.cont [3/16] 0.0, 128
        %7362 = vxpose.xlu0.b32.cont [4/16] 0.0, 128
        %7363 = vxpose.xlu0.b32.cont [5/16] 0.0, 128
        %7364 = vxpose.xlu0.b32.cont [6/16] 0.0, 128
        %7365 = vxpose.xlu0.b32.cont [7/16] 0.0, 128
        %7366 = vxpose.xlu0.b32.cont [8/16] 0.0, 128
        %7367 = vxpose.xlu0.b32.cont [9/16] 0.0, 128
        %7368 = vxpose.xlu0.b32.cont [10/16] 0.0, 128
        %7369 = vxpose.xlu0.b32.cont [11/16] 0.0, 128
        %7370 = vxpose.xlu0.b32.cont [12/16] 0.0, 128
        %7371 = vxpose.xlu0.b32.cont [13/16] 0.0, 128
        %7372 = vxpose.xlu0.b32.cont [14/16] 0.0, 128
        %7373 = vxpose.xlu0.b32.cont [15/16] 0.0, 128
        %7374 = vxpose.xlu0.b32.end [16/16] 0.0, 128
        %v7375 = vpop.trf.xlu0
        %v7376 = vpop.trf.xlu0
        %v7377 = vpop.trf.xlu0
        %v7378 = vpop.trf.xlu0
        %v7379 = vpop.trf.xlu0
        %v7380 = vpop.trf.xlu0
        %v7381 = vpop.trf.xlu0
        %v7382 = vpop.trf.xlu0
        %v7383 = vpop.trf.xlu0
        %v7384 = vpop.trf.xlu0
        %v7385 = vpop.trf.xlu0
        %v7386 = vpop.trf.xlu0
        %v7387 = vpop.trf.xlu0
        %v7388 = vpop.trf.xlu0
        %v7389 = vpop.trf.xlu0
        %v7390 = vpop.trf.xlu0
        %v7392 = vsel %vm455, %v7375, 0
        %7394 = vmatpush.msra.mxu0 0.0
        %7395 = vmatpush.msra.mxu0 0.0
        %7396 = vmatpush.msra.mxu0 0.0
        %7397 = vmatpush.msra.mxu0 0.0
        %7398 = vmatpush.msra.mxu0 0.0
        %7399 = vmatpush.msra.mxu0 0.0
        %7400 = vmatpush.msra.mxu0 0.0
        %7401 = vmatpush.msra.mxu0 0.0
        %7402 = vmatpush.msra.mxu0 0.0
        %7403 = vmatpush.msra.mxu0 0.0
        %7404 = vmatpush.msra.mxu0 0.0
        %7405 = vmatpush.msra.mxu0 0.0
        %7406 = vmatpush.msra.mxu0 0.0
        %7407 = vmatpush.msra.mxu0 0.0
        %7408 = vmatpush.msra.mxu0 0.0
        %7409 = vmatpush.msra.mxu0 %v487
        %7410 = vmatmul.f32.gmra.mxu0 %v7392
        %v7411 = vpop.f32.mrf.mxu0
        %v7412 = vadd.f32 0.0, %v7411
        %7413 = vdwg.mxu0
        %7414 = vxpose.xlu0.b32.start [1/16] %v7211, 128
        %7415 = vxpose.xlu0.b32.cont [2/16] 0.0, 128
        %7416 = vxpose.xlu0.b32.cont [3/16] 0.0, 128
        %7417 = vxpose.xlu0.b32.cont [4/16] 0.0, 128
        %7418 = vxpose.xlu0.b32.cont [5/16] 0.0, 128
        %7419 = vxpose.xlu0.b32.cont [6/16] 0.0, 128
        %7420 = vxpose.xlu0.b32.cont [7/16] 0.0, 128
        %7421 = vxpose.xlu0.b32.cont [8/16] 0.0, 128
        %7422 = vxpose.xlu0.b32.cont [9/16] 0.0, 128
        %7423 = vxpose.xlu0.b32.cont [10/16] 0.0, 128
        %7424 = vxpose.xlu0.b32.cont [11/16] 0.0, 128
        %7425 = vxpose.xlu0.b32.cont [12/16] 0.0, 128
        %7426 = vxpose.xlu0.b32.cont [13/16] 0.0, 128
        %7427 = vxpose.xlu0.b32.cont [14/16] 0.0, 128
        %7428 = vxpose.xlu0.b32.cont [15/16] 0.0, 128
        %7429 = vxpose.xlu0.b32.end [16/16] 0.0, 128
        %v7430 = vpop.trf.xlu0
        %v7431 = vpop.trf.xlu0
        %v7432 = vpop.trf.xlu0
        %v7433 = vpop.trf.xlu0
        %v7434 = vpop.trf.xlu0
        %v7435 = vpop.trf.xlu0
        %v7436 = vpop.trf.xlu0
        %v7437 = vpop.trf.xlu0
        %v7438 = vpop.trf.xlu0
        %v7439 = vpop.trf.xlu0
        %v7440 = vpop.trf.xlu0
        %v7441 = vpop.trf.xlu0
        %v7442 = vpop.trf.xlu0
        %v7443 = vpop.trf.xlu0
        %v7444 = vpop.trf.xlu0
        %v7445 = vpop.trf.xlu0
        %v7447 = vsel %vm455, %v7430, 0
        %7449 = vmatpush.msra.mxu0 0.0
        %7450 = vmatpush.msra.mxu0 0.0
        %7451 = vmatpush.msra.mxu0 0.0
        %7452 = vmatpush.msra.mxu0 0.0
        %7453 = vmatpush.msra.mxu0 0.0
        %7454 = vmatpush.msra.mxu0 0.0
        %7455 = vmatpush.msra.mxu0 0.0
        %7456 = vmatpush.msra.mxu0 0.0
        %7457 = vmatpush.msra.mxu0 0.0
        %7458 = vmatpush.msra.mxu0 0.0
        %7459 = vmatpush.msra.mxu0 0.0
        %7460 = vmatpush.msra.mxu0 0.0
        %7461 = vmatpush.msra.mxu0 0.0
        %7462 = vmatpush.msra.mxu0 0.0
        %7463 = vmatpush.msra.mxu0 0.0
        %7464 = vmatpush.msra.mxu0 %v487
        %7465 = vmatmul.f32.gmra.mxu0 %v7447
        %v7466 = vpop.f32.mrf.mxu0
        %v7467 = vadd.f32 0.0, %v7466
        %7468 = vdwg.mxu0
        %7469 = vxpose.xlu0.b32.start [1/16] %v7214, 128
        %7470 = vxpose.xlu0.b32.cont [2/16] 0.0, 128
        %7471 = vxpose.xlu0.b32.cont [3/16] 0.0, 128
        %7472 = vxpose.xlu0.b32.cont [4/16] 0.0, 128
        %7473 = vxpose.xlu0.b32.cont [5/16] 0.0, 128
        %7474 = vxpose.xlu0.b32.cont [6/16] 0.0, 128
        %7475 = vxpose.xlu0.b32.cont [7/16] 0.0, 128
        %7476 = vxpose.xlu0.b32.cont [8/16] 0.0, 128
        %7477 = vxpose.xlu0.b32.cont [9/16] 0.0, 128
        %7478 = vxpose.xlu0.b32.cont [10/16] 0.0, 128
        %7479 = vxpose.xlu0.b32.cont [11/16] 0.0, 128
        %7480 = vxpose.xlu0.b32.cont [12/16] 0.0, 128
        %7481 = vxpose.xlu0.b32.cont [13/16] 0.0, 128
        %7482 = vxpose.xlu0.b32.cont [14/16] 0.0, 128
        %7483 = vxpose.xlu0.b32.cont [15/16] 0.0, 128
        %7484 = vxpose.xlu0.b32.end [16/16] 0.0, 128
        %v7485 = vpop.trf.xlu0
        %v7486 = vpop.trf.xlu0
        %v7487 = vpop.trf.xlu0
        %v7488 = vpop.trf.xlu0
        %v7489 = vpop.trf.xlu0
        %v7490 = vpop.trf.xlu0
        %v7491 = vpop.trf.xlu0
        %v7492 = vpop.trf.xlu0
        %v7493 = vpop.trf.xlu0
        %v7494 = vpop.trf.xlu0
        %v7495 = vpop.trf.xlu0
        %v7496 = vpop.trf.xlu0
        %v7497 = vpop.trf.xlu0
        %v7498 = vpop.trf.xlu0
        %v7499 = vpop.trf.xlu0
        %v7500 = vpop.trf.xlu0
        %v7502 = vsel %vm455, %v7485, 0
        %7504 = vmatpush.msra.mxu0 0.0
        %7505 = vmatpush.msra.mxu0 0.0
        %7506 = vmatpush.msra.mxu0 0.0
        %7507 = vmatpush.msra.mxu0 0.0
        %7508 = vmatpush.msra.mxu0 0.0
        %7509 = vmatpush.msra.mxu0 0.0
        %7510 = vmatpush.msra.mxu0 0.0
        %7511 = vmatpush.msra.mxu0 0.0
        %7512 = vmatpush.msra.mxu0 0.0
        %7513 = vmatpush.msra.mxu0 0.0
        %7514 = vmatpush.msra.mxu0 0.0
        %7515 = vmatpush.msra.mxu0 0.0
        %7516 = vmatpush.msra.mxu0 0.0
        %7517 = vmatpush.msra.mxu0 0.0
        %7518 = vmatpush.msra.mxu0 0.0
        %7519 = vmatpush.msra.mxu0 %v487
        %7520 = vmatmul.f32.gmra.mxu0 %v7502
        %v7521 = vpop.f32.mrf.mxu0
        %v7522 = vadd.f32 0.0, %v7521
        %7523 = vdwg.mxu0
        %7524 = vxpose.xlu0.b32.start [1/16] %v7217, 128
        %7525 = vxpose.xlu0.b32.cont [2/16] 0.0, 128
        %7526 = vxpose.xlu0.b32.cont [3/16] 0.0, 128
        %7527 = vxpose.xlu0.b32.cont [4/16] 0.0, 128
        %7528 = vxpose.xlu0.b32.cont [5/16] 0.0, 128
        %7529 = vxpose.xlu0.b32.cont [6/16] 0.0, 128
        %7530 = vxpose.xlu0.b32.cont [7/16] 0.0, 128
        %7531 = vxpose.xlu0.b32.cont [8/16] 0.0, 128
        %7532 = vxpose.xlu0.b32.cont [9/16] 0.0, 128
        %7533 = vxpose.xlu0.b32.cont [10/16] 0.0, 128
        %7534 = vxpose.xlu0.b32.cont [11/16] 0.0, 128
        %7535 = vxpose.xlu0.b32.cont [12/16] 0.0, 128
        %7536 = vxpose.xlu0.b32.cont [13/16] 0.0, 128
        %7537 = vxpose.xlu0.b32.cont [14/16] 0.0, 128
        %7538 = vxpose.xlu0.b32.cont [15/16] 0.0, 128
        %7539 = vxpose.xlu0.b32.end [16/16] 0.0, 128
        %v7540 = vpop.trf.xlu0
        %v7541 = vpop.trf.xlu0
        %v7542 = vpop.trf.xlu0
        %v7543 = vpop.trf.xlu0
        %v7544 = vpop.trf.xlu0
        %v7545 = vpop.trf.xlu0
        %v7546 = vpop.trf.xlu0
        %v7547 = vpop.trf.xlu0
        %v7548 = vpop.trf.xlu0
        %v7549 = vpop.trf.xlu0
        %v7550 = vpop.trf.xlu0
        %v7551 = vpop.trf.xlu0
        %v7552 = vpop.trf.xlu0
        %v7553 = vpop.trf.xlu0
        %v7554 = vpop.trf.xlu0
        %v7555 = vpop.trf.xlu0
        %v7557 = vsel %vm455, %v7540, 0
        %7559 = vmatpush.msra.mxu0 0.0
        %7560 = vmatpush.msra.mxu0 0.0
        %7561 = vmatpush.msra.mxu0 0.0
        %7562 = vmatpush.msra.mxu0 0.0
        %7563 = vmatpush.msra.mxu0 0.0
        %7564 = vmatpush.msra.mxu0 0.0
        %7565 = vmatpush.msra.mxu0 0.0
        %7566 = vmatpush.msra.mxu0 0.0
        %7567 = vmatpush.msra.mxu0 0.0
        %7568 = vmatpush.msra.mxu0 0.0
        %7569 = vmatpush.msra.mxu0 0.0
        %7570 = vmatpush.msra.mxu0 0.0
        %7571 = vmatpush.msra.mxu0 0.0
        %7572 = vmatpush.msra.mxu0 0.0
        %7573 = vmatpush.msra.mxu0 0.0
        %7574 = vmatpush.msra.mxu0 %v487
        %7575 = vmatmul.f32.gmra.mxu0 %v7557
        %v7576 = vpop.f32.mrf.mxu0
        %v7577 = vadd.f32 0.0, %v7576
        %7578 = vdwg.mxu0
        %7579 = vxpose.xlu0.b32.start [1/16] %v7220, 128
        %7580 = vxpose.xlu0.b32.cont [2/16] 0.0, 128
        %7581 = vxpose.xlu0.b32.cont [3/16] 0.0, 128
        %7582 = vxpose.xlu0.b32.cont [4/16] 0.0, 128
        %7583 = vxpose.xlu0.b32.cont [5/16] 0.0, 128
        %7584 = vxpose.xlu0.b32.cont [6/16] 0.0, 128
        %7585 = vxpose.xlu0.b32.cont [7/16] 0.0, 128
        %7586 = vxpose.xlu0.b32.cont [8/16] 0.0, 128
        %7587 = vxpose.xlu0.b32.cont [9/16] 0.0, 128
        %7588 = vxpose.xlu0.b32.cont [10/16] 0.0, 128
        %7589 = vxpose.xlu0.b32.cont [11/16] 0.0, 128
        %7590 = vxpose.xlu0.b32.cont [12/16] 0.0, 128
        %7591 = vxpose.xlu0.b32.cont [13/16] 0.0, 128
        %7592 = vxpose.xlu0.b32.cont [14/16] 0.0, 128
        %7593 = vxpose.xlu0.b32.cont [15/16] 0.0, 128
        %7594 = vxpose.xlu0.b32.end [16/16] 0.0, 128
        %v7595 = vpop.trf.xlu0
        %v7596 = vpop.trf.xlu0
        %v7597 = vpop.trf.xlu0
        %v7598 = vpop.trf.xlu0
        %v7599 = vpop.trf.xlu0
        %v7600 = vpop.trf.xlu0
        %v7601 = vpop.trf.xlu0
        %v7602 = vpop.trf.xlu0
        %v7603 = vpop.trf.xlu0
        %v7604 = vpop.trf.xlu0
        %v7605 = vpop.trf.xlu0
        %v7606 = vpop.trf.xlu0
        %v7607 = vpop.trf.xlu0
        %v7608 = vpop.trf.xlu0
        %v7609 = vpop.trf.xlu0
        %v7610 = vpop.trf.xlu0
        %v7612 = vsel %vm455, %v7595, 0
        %7614 = vmatpush.msra.mxu0 0.0
        %7615 = vmatpush.msra.mxu0 0.0
        %7616 = vmatpush.msra.mxu0 0.0
        %7617 = vmatpush.msra.mxu0 0.0
        %7618 = vmatpush.msra.mxu0 0.0
        %7619 = vmatpush.msra.mxu0 0.0
        %7620 = vmatpush.msra.mxu0 0.0
        %7621 = vmatpush.msra.mxu0 0.0
        %7622 = vmatpush.msra.mxu0 0.0
        %7623 = vmatpush.msra.mxu0 0.0
        %7624 = vmatpush.msra.mxu0 0.0
        %7625 = vmatpush.msra.mxu0 0.0
        %7626 = vmatpush.msra.mxu0 0.0
        %7627 = vmatpush.msra.mxu0 0.0
        %7628 = vmatpush.msra.mxu0 0.0
        %7629 = vmatpush.msra.mxu0 %v487
        %7630 = vmatmul.f32.gmra.mxu0 %v7612
        %v7631 = vpop.f32.mrf.mxu0
        %v7632 = vadd.f32 0.0, %v7631
        %7633 = vdwg.mxu0
        %7634 = vxpose.xlu0.b32.start [1/16] %v7223, 128
        %7635 = vxpose.xlu0.b32.cont [2/16] 0.0, 128
        %7636 = vxpose.xlu0.b32.cont [3/16] 0.0, 128
        %7637 = vxpose.xlu0.b32.cont [4/16] 0.0, 128
        %7638 = vxpose.xlu0.b32.cont [5/16] 0.0, 128
        %7639 = vxpose.xlu0.b32.cont [6/16] 0.0, 128
        %7640 = vxpose.xlu0.b32.cont [7/16] 0.0, 128
        %7641 = vxpose.xlu0.b32.cont [8/16] 0.0, 128
        %7642 = vxpose.xlu0.b32.cont [9/16] 0.0, 128
        %7643 = vxpose.xlu0.b32.cont [10/16] 0.0, 128
        %7644 = vxpose.xlu0.b32.cont [11/16] 0.0, 128
        %7645 = vxpose.xlu0.b32.cont [12/16] 0.0, 128
        %7646 = vxpose.xlu0.b32.cont [13/16] 0.0, 128
        %7647 = vxpose.xlu0.b32.cont [14/16] 0.0, 128
        %7648 = vxpose.xlu0.b32.cont [15/16] 0.0, 128
        %7649 = vxpose.xlu0.b32.end [16/16] 0.0, 128
        %v7650 = vpop.trf.xlu0
        %v7651 = vpop.trf.xlu0
        %v7652 = vpop.trf.xlu0
        %v7653 = vpop.trf.xlu0
        %v7654 = vpop.trf.xlu0
        %v7655 = vpop.trf.xlu0
        %v7656 = vpop.trf.xlu0
        %v7657 = vpop.trf.xlu0
        %v7658 = vpop.trf.xlu0
        %v7659 = vpop.trf.xlu0
        %v7660 = vpop.trf.xlu0
        %v7661 = vpop.trf.xlu0
        %v7662 = vpop.trf.xlu0
        %v7663 = vpop.trf.xlu0
        %v7664 = vpop.trf.xlu0
        %v7665 = vpop.trf.xlu0
        %v7667 = vsel %vm455, %v7650, 0
        %7669 = vmatpush.msra.mxu0 0.0
        %7670 = vmatpush.msra.mxu0 0.0
        %7671 = vmatpush.msra.mxu0 0.0
        %7672 = vmatpush.msra.mxu0 0.0
        %7673 = vmatpush.msra.mxu0 0.0
        %7674 = vmatpush.msra.mxu0 0.0
        %7675 = vmatpush.msra.mxu0 0.0
        %7676 = vmatpush.msra.mxu0 0.0
        %7677 = vmatpush.msra.mxu0 0.0
        %7678 = vmatpush.msra.mxu0 0.0
        %7679 = vmatpush.msra.mxu0 0.0
        %7680 = vmatpush.msra.mxu0 0.0
        %7681 = vmatpush.msra.mxu0 0.0
        %7682 = vmatpush.msra.mxu0 0.0
        %7683 = vmatpush.msra.mxu0 0.0
        %7684 = vmatpush.msra.mxu0 %v487
        %7685 = vmatmul.f32.gmra.mxu0 %v7667
        %v7686 = vpop.f32.mrf.mxu0
        %v7687 = vadd.f32 0.0, %v7686
        %7688 = vdwg.mxu0
        %7689 = vxpose.xlu0.b32.start [1/16] %v7226, 128
        %7690 = vxpose.xlu0.b32.cont [2/16] 0.0, 128
        %7691 = vxpose.xlu0.b32.cont [3/16] 0.0, 128
        %7692 = vxpose.xlu0.b32.cont [4/16] 0.0, 128
        %7693 = vxpose.xlu0.b32.cont [5/16] 0.0, 128
        %7694 = vxpose.xlu0.b32.cont [6/16] 0.0, 128
        %7695 = vxpose.xlu0.b32.cont [7/16] 0.0, 128
        %7696 = vxpose.xlu0.b32.cont [8/16] 0.0, 128
        %7697 = vxpose.xlu0.b32.cont [9/16] 0.0, 128
        %7698 = vxpose.xlu0.b32.cont [10/16] 0.0, 128
        %7699 = vxpose.xlu0.b32.cont [11/16] 0.0, 128
        %7700 = vxpose.xlu0.b32.cont [12/16] 0.0, 128
        %7701 = vxpose.xlu0.b32.cont [13/16] 0.0, 128
        %7702 = vxpose.xlu0.b32.cont [14/16] 0.0, 128
        %7703 = vxpose.xlu0.b32.cont [15/16] 0.0, 128
        %7704 = vxpose.xlu0.b32.end [16/16] 0.0, 128
        %v7705 = vpop.trf.xlu0
        %v7706 = vpop.trf.xlu0
        %v7707 = vpop.trf.xlu0
        %v7708 = vpop.trf.xlu0
        %v7709 = vpop.trf.xlu0
        %v7710 = vpop.trf.xlu0
        %v7711 = vpop.trf.xlu0
        %v7712 = vpop.trf.xlu0
        %v7713 = vpop.trf.xlu0
        %v7714 = vpop.trf.xlu0
        %v7715 = vpop.trf.xlu0
        %v7716 = vpop.trf.xlu0
        %v7717 = vpop.trf.xlu0
        %v7718 = vpop.trf.xlu0
        %v7719 = vpop.trf.xlu0
        %v7720 = vpop.trf.xlu0
        %v7722 = vsel %vm455, %v7705, 0
        %7724 = vmatpush.msra.mxu0 0.0
        %7725 = vmatpush.msra.mxu0 0.0
        %7726 = vmatpush.msra.mxu0 0.0
        %7727 = vmatpush.msra.mxu0 0.0
        %7728 = vmatpush.msra.mxu0 0.0
        %7729 = vmatpush.msra.mxu0 0.0
        %7730 = vmatpush.msra.mxu0 0.0
        %7731 = vmatpush.msra.mxu0 0.0
        %7732 = vmatpush.msra.mxu0 0.0
        %7733 = vmatpush.msra.mxu0 0.0
        %7734 = vmatpush.msra.mxu0 0.0
        %7735 = vmatpush.msra.mxu0 0.0
        %7736 = vmatpush.msra.mxu0 0.0
        %7737 = vmatpush.msra.mxu0 0.0
        %7738 = vmatpush.msra.mxu0 0.0
        %7739 = vmatpush.msra.mxu0 %v487
        %7740 = vmatmul.f32.gmra.mxu0 %v7722
        %v7741 = vpop.f32.mrf.mxu0
        %v7742 = vadd.f32 0.0, %v7741
        %7743 = vdwg.mxu0
        %7744 = vxpose.xlu0.b32.start [1/16] %v7229, 128
        %7745 = vxpose.xlu0.b32.cont [2/16] 0.0, 128
        %7746 = vxpose.xlu0.b32.cont [3/16] 0.0, 128
        %7747 = vxpose.xlu0.b32.cont [4/16] 0.0, 128
        %7748 = vxpose.xlu0.b32.cont [5/16] 0.0, 128
        %7749 = vxpose.xlu0.b32.cont [6/16] 0.0, 128
        %7750 = vxpose.xlu0.b32.cont [7/16] 0.0, 128
        %7751 = vxpose.xlu0.b32.cont [8/16] 0.0, 128
        %7752 = vxpose.xlu0.b32.cont [9/16] 0.0, 128
        %7753 = vxpose.xlu0.b32.cont [10/16] 0.0, 128
        %7754 = vxpose.xlu0.b32.cont [11/16] 0.0, 128
        %7755 = vxpose.xlu0.b32.cont [12/16] 0.0, 128
        %7756 = vxpose.xlu0.b32.cont [13/16] 0.0, 128
        %7757 = vxpose.xlu0.b32.cont [14/16] 0.0, 128
        %7758 = vxpose.xlu0.b32.cont [15/16] 0.0, 128
        %7759 = vxpose.xlu0.b32.end [16/16] 0.0, 128
        %v7760 = vpop.trf.xlu0
        %v7761 = vpop.trf.xlu0
        %v7762 = vpop.trf.xlu0
        %v7763 = vpop.trf.xlu0
        %v7764 = vpop.trf.xlu0
        %v7765 = vpop.trf.xlu0
        %v7766 = vpop.trf.xlu0
        %v7767 = vpop.trf.xlu0
        %v7768 = vpop.trf.xlu0
        %v7769 = vpop.trf.xlu0
        %v7770 = vpop.trf.xlu0
        %v7771 = vpop.trf.xlu0
        %v7772 = vpop.trf.xlu0
        %v7773 = vpop.trf.xlu0
        %v7774 = vpop.trf.xlu0
        %v7775 = vpop.trf.xlu0
        %v7777 = vsel %vm455, %v7760, 0
        %7779 = vmatpush.msra.mxu0 0.0
        %7780 = vmatpush.msra.mxu0 0.0
        %7781 = vmatpush.msra.mxu0 0.0
        %7782 = vmatpush.msra.mxu0 0.0
        %7783 = vmatpush.msra.mxu0 0.0
        %7784 = vmatpush.msra.mxu0 0.0
        %7785 = vmatpush.msra.mxu0 0.0
        %7786 = vmatpush.msra.mxu0 0.0
        %7787 = vmatpush.msra.mxu0 0.0
        %7788 = vmatpush.msra.mxu0 0.0
        %7789 = vmatpush.msra.mxu0 0.0
        %7790 = vmatpush.msra.mxu0 0.0
        %7791 = vmatpush.msra.mxu0 0.0
        %7792 = vmatpush.msra.mxu0 0.0
        %7793 = vmatpush.msra.mxu0 0.0
        %7794 = vmatpush.msra.mxu0 %v487
        %7795 = vmatmul.f32.gmra.mxu0 %v7777
        %v7796 = vpop.f32.mrf.mxu0
        %v7797 = vadd.f32 0.0, %v7796
        %7798 = vdwg.mxu0
        %7799 = vxpose.xlu0.b32.start [1/16] %v7232, 128
        %7800 = vxpose.xlu0.b32.cont [2/16] 0.0, 128
        %7801 = vxpose.xlu0.b32.cont [3/16] 0.0, 128
        %7802 = vxpose.xlu0.b32.cont [4/16] 0.0, 128
        %7803 = vxpose.xlu0.b32.cont [5/16] 0.0, 128
        %7804 = vxpose.xlu0.b32.cont [6/16] 0.0, 128
        %7805 = vxpose.xlu0.b32.cont [7/16] 0.0, 128
        %7806 = vxpose.xlu0.b32.cont [8/16] 0.0, 128
        %7807 = vxpose.xlu0.b32.cont [9/16] 0.0, 128
        %7808 = vxpose.xlu0.b32.cont [10/16] 0.0, 128
        %7809 = vxpose.xlu0.b32.cont [11/16] 0.0, 128
        %7810 = vxpose.xlu0.b32.cont [12/16] 0.0, 128
        %7811 = vxpose.xlu0.b32.cont [13/16] 0.0, 128
        %7812 = vxpose.xlu0.b32.cont [14/16] 0.0, 128
        %7813 = vxpose.xlu0.b32.cont [15/16] 0.0, 128
        %7814 = vxpose.xlu0.b32.end [16/16] 0.0, 128
        %v7815 = vpop.trf.xlu0
        %v7816 = vpop.trf.xlu0
        %v7817 = vpop.trf.xlu0
        %v7818 = vpop.trf.xlu0
        %v7819 = vpop.trf.xlu0
        %v7820 = vpop.trf.xlu0
        %v7821 = vpop.trf.xlu0
        %v7822 = vpop.trf.xlu0
        %v7823 = vpop.trf.xlu0
        %v7824 = vpop.trf.xlu0
        %v7825 = vpop.trf.xlu0
        %v7826 = vpop.trf.xlu0
        %v7827 = vpop.trf.xlu0
        %v7828 = vpop.trf.xlu0
        %v7829 = vpop.trf.xlu0
        %v7830 = vpop.trf.xlu0
        %v7832 = vsel %vm455, %v7815, 0
        %7834 = vmatpush.msra.mxu0 0.0
        %7835 = vmatpush.msra.mxu0 0.0
        %7836 = vmatpush.msra.mxu0 0.0
        %7837 = vmatpush.msra.mxu0 0.0
        %7838 = vmatpush.msra.mxu0 0.0
        %7839 = vmatpush.msra.mxu0 0.0
        %7840 = vmatpush.msra.mxu0 0.0
        %7841 = vmatpush.msra.mxu0 0.0
        %7842 = vmatpush.msra.mxu0 0.0
        %7843 = vmatpush.msra.mxu0 0.0
        %7844 = vmatpush.msra.mxu0 0.0
        %7845 = vmatpush.msra.mxu0 0.0
        %7846 = vmatpush.msra.mxu0 0.0
        %7847 = vmatpush.msra.mxu0 0.0
        %7848 = vmatpush.msra.mxu0 0.0
        %7849 = vmatpush.msra.mxu0 %v487
        %7850 = vmatmul.f32.gmra.mxu0 %v7832
        %v7851 = vpop.f32.mrf.mxu0
        %v7852 = vadd.f32 0.0, %v7851
        %7853 = vdwg.mxu0
        %7854 = vxpose.xlu0.b32.start [1/16] %v7235, 128
        %7855 = vxpose.xlu0.b32.cont [2/16] 0.0, 128
        %7856 = vxpose.xlu0.b32.cont [3/16] 0.0, 128
        %7857 = vxpose.xlu0.b32.cont [4/16] 0.0, 128
        %7858 = vxpose.xlu0.b32.cont [5/16] 0.0, 128
        %7859 = vxpose.xlu0.b32.cont [6/16] 0.0, 128
        %7860 = vxpose.xlu0.b32.cont [7/16] 0.0, 128
        %7861 = vxpose.xlu0.b32.cont [8/16] 0.0, 128
        %7862 = vxpose.xlu0.b32.cont [9/16] 0.0, 128
        %7863 = vxpose.xlu0.b32.cont [10/16] 0.0, 128
        %7864 = vxpose.xlu0.b32.cont [11/16] 0.0, 128
        %7865 = vxpose.xlu0.b32.cont [12/16] 0.0, 128
        %7866 = vxpose.xlu0.b32.cont [13/16] 0.0, 128
        %7867 = vxpose.xlu0.b32.cont [14/16] 0.0, 128
        %7868 = vxpose.xlu0.b32.cont [15/16] 0.0, 128
        %7869 = vxpose.xlu0.b32.end [16/16] 0.0, 128
        %v7870 = vpop.trf.xlu0
        %v7871 = vpop.trf.xlu0
        %v7872 = vpop.trf.xlu0
        %v7873 = vpop.trf.xlu0
        %v7874 = vpop.trf.xlu0
        %v7875 = vpop.trf.xlu0
        %v7876 = vpop.trf.xlu0
        %v7877 = vpop.trf.xlu0
        %v7878 = vpop.trf.xlu0
        %v7879 = vpop.trf.xlu0
        %v7880 = vpop.trf.xlu0
        %v7881 = vpop.trf.xlu0
        %v7882 = vpop.trf.xlu0
        %v7883 = vpop.trf.xlu0
        %v7884 = vpop.trf.xlu0
        %v7885 = vpop.trf.xlu0
        %v7887 = vsel %vm455, %v7870, 0
        %7889 = vmatpush.msra.mxu0 0.0
        %7890 = vmatpush.msra.mxu0 0.0
        %7891 = vmatpush.msra.mxu0 0.0
        %7892 = vmatpush.msra.mxu0 0.0
        %7893 = vmatpush.msra.mxu0 0.0
        %7894 = vmatpush.msra.mxu0 0.0
        %7895 = vmatpush.msra.mxu0 0.0
        %7896 = vmatpush.msra.mxu0 0.0
        %7897 = vmatpush.msra.mxu0 0.0
        %7898 = vmatpush.msra.mxu0 0.0
        %7899 = vmatpush.msra.mxu0 0.0
        %7900 = vmatpush.msra.mxu0 0.0
        %7901 = vmatpush.msra.mxu0 0.0
        %7902 = vmatpush.msra.mxu0 0.0
        %7903 = vmatpush.msra.mxu0 0.0
        %7904 = vmatpush.msra.mxu0 %v487
        %7905 = vmatmul.f32.gmra.mxu0 %v7887
        %v7906 = vpop.f32.mrf.mxu0
        %v7907 = vadd.f32 0.0, %v7906
        %7908 = vdwg.mxu0
        %7909 = vxpose.xlu0.b32.start [1/16] %v7238, 128
        %7910 = vxpose.xlu0.b32.cont [2/16] 0.0, 128
        %7911 = vxpose.xlu0.b32.cont [3/16] 0.0, 128
        %7912 = vxpose.xlu0.b32.cont [4/16] 0.0, 128
        %7913 = vxpose.xlu0.b32.cont [5/16] 0.0, 128
        %7914 = vxpose.xlu0.b32.cont [6/16] 0.0, 128
        %7915 = vxpose.xlu0.b32.cont [7/16] 0.0, 128
        %7916 = vxpose.xlu0.b32.cont [8/16] 0.0, 128
        %7917 = vxpose.xlu0.b32.cont [9/16] 0.0, 128
        %7918 = vxpose.xlu0.b32.cont [10/16] 0.0, 128
        %7919 = vxpose.xlu0.b32.cont [11/16] 0.0, 128
        %7920 = vxpose.xlu0.b32.cont [12/16] 0.0, 128
        %7921 = vxpose.xlu0.b32.cont [13/16] 0.0, 128
        %7922 = vxpose.xlu0.b32.cont [14/16] 0.0, 128
        %7923 = vxpose.xlu0.b32.cont [15/16] 0.0, 128
        %7924 = vxpose.xlu0.b32.end [16/16] 0.0, 128
        %v7925 = vpop.trf.xlu0
        %v7926 = vpop.trf.xlu0
        %v7927 = vpop.trf.xlu0
        %v7928 = vpop.trf.xlu0
        %v7929 = vpop.trf.xlu0
        %v7930 = vpop.trf.xlu0
        %v7931 = vpop.trf.xlu0
        %v7932 = vpop.trf.xlu0
        %v7933 = vpop.trf.xlu0
        %v7934 = vpop.trf.xlu0
        %v7935 = vpop.trf.xlu0
        %v7936 = vpop.trf.xlu0
        %v7937 = vpop.trf.xlu0
        %v7938 = vpop.trf.xlu0
        %v7939 = vpop.trf.xlu0
        %v7940 = vpop.trf.xlu0
        %v7942 = vsel %vm455, %v7925, 0
        %7944 = vmatpush.msra.mxu0 0.0
        %7945 = vmatpush.msra.mxu0 0.0
        %7946 = vmatpush.msra.mxu0 0.0
        %7947 = vmatpush.msra.mxu0 0.0
        %7948 = vmatpush.msra.mxu0 0.0
        %7949 = vmatpush.msra.mxu0 0.0
        %7950 = vmatpush.msra.mxu0 0.0
        %7951 = vmatpush.msra.mxu0 0.0
        %7952 = vmatpush.msra.mxu0 0.0
        %7953 = vmatpush.msra.mxu0 0.0
        %7954 = vmatpush.msra.mxu0 0.0
        %7955 = vmatpush.msra.mxu0 0.0
        %7956 = vmatpush.msra.mxu0 0.0
        %7957 = vmatpush.msra.mxu0 0.0
        %7958 = vmatpush.msra.mxu0 0.0
        %7959 = vmatpush.msra.mxu0 %v487
        %7960 = vmatmul.f32.gmra.mxu0 %v7942
        %v7961 = vpop.f32.mrf.mxu0
        %v7962 = vadd.f32 0.0, %v7961
        %7963 = vdwg.mxu0
        %7964 = vxpose.xlu0.b32.start [1/16] %v7241, 128
        %7965 = vxpose.xlu0.b32.cont [2/16] 0.0, 128
        %7966 = vxpose.xlu0.b32.cont [3/16] 0.0, 128
        %7967 = vxpose.xlu0.b32.cont [4/16] 0.0, 128
        %7968 = vxpose.xlu0.b32.cont [5/16] 0.0, 128
        %7969 = vxpose.xlu0.b32.cont [6/16] 0.0, 128
        %7970 = vxpose.xlu0.b32.cont [7/16] 0.0, 128
        %7971 = vxpose.xlu0.b32.cont [8/16] 0.0, 128
        %7972 = vxpose.xlu0.b32.cont [9/16] 0.0, 128
        %7973 = vxpose.xlu0.b32.cont [10/16] 0.0, 128
        %7974 = vxpose.xlu0.b32.cont [11/16] 0.0, 128
        %7975 = vxpose.xlu0.b32.cont [12/16] 0.0, 128
        %7976 = vxpose.xlu0.b32.cont [13/16] 0.0, 128
        %7977 = vxpose.xlu0.b32.cont [14/16] 0.0, 128
        %7978 = vxpose.xlu0.b32.cont [15/16] 0.0, 128
        %7979 = vxpose.xlu0.b32.end [16/16] 0.0, 128
        %v7980 = vpop.trf.xlu0
        %v7981 = vpop.trf.xlu0
        %v7982 = vpop.trf.xlu0
        %v7983 = vpop.trf.xlu0
        %v7984 = vpop.trf.xlu0
        %v7985 = vpop.trf.xlu0
        %v7986 = vpop.trf.xlu0
        %v7987 = vpop.trf.xlu0
        %v7988 = vpop.trf.xlu0
        %v7989 = vpop.trf.xlu0
        %v7990 = vpop.trf.xlu0
        %v7991 = vpop.trf.xlu0
        %v7992 = vpop.trf.xlu0
        %v7993 = vpop.trf.xlu0
        %v7994 = vpop.trf.xlu0
        %v7995 = vpop.trf.xlu0
        %v7997 = vsel %vm455, %v7980, 0
        %7999 = vmatpush.msra.mxu0 0.0
        %8000 = vmatpush.msra.mxu0 0.0
        %8001 = vmatpush.msra.mxu0 0.0
        %8002 = vmatpush.msra.mxu0 0.0
        %8003 = vmatpush.msra.mxu0 0.0
        %8004 = vmatpush.msra.mxu0 0.0
        %8005 = vmatpush.msra.mxu0 0.0
        %8006 = vmatpush.msra.mxu0 0.0
        %8007 = vmatpush.msra.mxu0 0.0
        %8008 = vmatpush.msra.mxu0 0.0
        %8009 = vmatpush.msra.mxu0 0.0
        %8010 = vmatpush.msra.mxu0 0.0
        %8011 = vmatpush.msra.mxu0 0.0
        %8012 = vmatpush.msra.mxu0 0.0
        %8013 = vmatpush.msra.mxu0 0.0
        %8014 = vmatpush.msra.mxu0 %v487
        %8015 = vmatmul.f32.gmra.mxu0 %v7997
        %v8016 = vpop.f32.mrf.mxu0
        %v8017 = vadd.f32 0.0, %v8016
        %8018 = vdwg.mxu0
        %8019 = vxpose.xlu0.b32.start [1/16] %v7244, 128
        %8020 = vxpose.xlu0.b32.cont [2/16] 0.0, 128
        %8021 = vxpose.xlu0.b32.cont [3/16] 0.0, 128
        %8022 = vxpose.xlu0.b32.cont [4/16] 0.0, 128
        %8023 = vxpose.xlu0.b32.cont [5/16] 0.0, 128
        %8024 = vxpose.xlu0.b32.cont [6/16] 0.0, 128
        %8025 = vxpose.xlu0.b32.cont [7/16] 0.0, 128
        %8026 = vxpose.xlu0.b32.cont [8/16] 0.0, 128
        %8027 = vxpose.xlu0.b32.cont [9/16] 0.0, 128
        %8028 = vxpose.xlu0.b32.cont [10/16] 0.0, 128
        %8029 = vxpose.xlu0.b32.cont [11/16] 0.0, 128
        %8030 = vxpose.xlu0.b32.cont [12/16] 0.0, 128
        %8031 = vxpose.xlu0.b32.cont [13/16] 0.0, 128
        %8032 = vxpose.xlu0.b32.cont [14/16] 0.0, 128
        %8033 = vxpose.xlu0.b32.cont [15/16] 0.0, 128
        %8034 = vxpose.xlu0.b32.end [16/16] 0.0, 128
        %v8035 = vpop.trf.xlu0
        %v8036 = vpop.trf.xlu0
        %v8037 = vpop.trf.xlu0
        %v8038 = vpop.trf.xlu0
        %v8039 = vpop.trf.xlu0
        %v8040 = vpop.trf.xlu0
        %v8041 = vpop.trf.xlu0
        %v8042 = vpop.trf.xlu0
        %v8043 = vpop.trf.xlu0
        %v8044 = vpop.trf.xlu0
        %v8045 = vpop.trf.xlu0
        %v8046 = vpop.trf.xlu0
        %v8047 = vpop.trf.xlu0
        %v8048 = vpop.trf.xlu0
        %v8049 = vpop.trf.xlu0
        %v8050 = vpop.trf.xlu0
        %v8052 = vsel %vm455, %v8035, 0
        %8054 = vmatpush.msra.mxu0 0.0
        %8055 = vmatpush.msra.mxu0 0.0
        %8056 = vmatpush.msra.mxu0 0.0
        %8057 = vmatpush.msra.mxu0 0.0
        %8058 = vmatpush.msra.mxu0 0.0
        %8059 = vmatpush.msra.mxu0 0.0
        %8060 = vmatpush.msra.mxu0 0.0
        %8061 = vmatpush.msra.mxu0 0.0
        %8062 = vmatpush.msra.mxu0 0.0
        %8063 = vmatpush.msra.mxu0 0.0
        %8064 = vmatpush.msra.mxu0 0.0
        %8065 = vmatpush.msra.mxu0 0.0
        %8066 = vmatpush.msra.mxu0 0.0
        %8067 = vmatpush.msra.mxu0 0.0
        %8068 = vmatpush.msra.mxu0 0.0
        %8069 = vmatpush.msra.mxu0 %v487
        %8070 = vmatmul.f32.gmra.mxu0 %v8052
        %v8071 = vpop.f32.mrf.mxu0
        %v8072 = vadd.f32 0.0, %v8071
        %8073 = vdwg.mxu0
        %8074 = vxpose.xlu0.b32.start [1/16] %v7247, 128
        %8075 = vxpose.xlu0.b32.cont [2/16] 0.0, 128
        %8076 = vxpose.xlu0.b32.cont [3/16] 0.0, 128
        %8077 = vxpose.xlu0.b32.cont [4/16] 0.0, 128
        %8078 = vxpose.xlu0.b32.cont [5/16] 0.0, 128
        %8079 = vxpose.xlu0.b32.cont [6/16] 0.0, 128
        %8080 = vxpose.xlu0.b32.cont [7/16] 0.0, 128
        %8081 = vxpose.xlu0.b32.cont [8/16] 0.0, 128
        %8082 = vxpose.xlu0.b32.cont [9/16] 0.0, 128
        %8083 = vxpose.xlu0.b32.cont [10/16] 0.0, 128
        %8084 = vxpose.xlu0.b32.cont [11/16] 0.0, 128
        %8085 = vxpose.xlu0.b32.cont [12/16] 0.0, 128
        %8086 = vxpose.xlu0.b32.cont [13/16] 0.0, 128
        %8087 = vxpose.xlu0.b32.cont [14/16] 0.0, 128
        %8088 = vxpose.xlu0.b32.cont [15/16] 0.0, 128
        %8089 = vxpose.xlu0.b32.end [16/16] 0.0, 128
        %v8090 = vpop.trf.xlu0
        %v8091 = vpop.trf.xlu0
        %v8092 = vpop.trf.xlu0
        %v8093 = vpop.trf.xlu0
        %v8094 = vpop.trf.xlu0
        %v8095 = vpop.trf.xlu0
        %v8096 = vpop.trf.xlu0
        %v8097 = vpop.trf.xlu0
        %v8098 = vpop.trf.xlu0
        %v8099 = vpop.trf.xlu0
        %v8100 = vpop.trf.xlu0
        %v8101 = vpop.trf.xlu0
        %v8102 = vpop.trf.xlu0
        %v8103 = vpop.trf.xlu0
        %v8104 = vpop.trf.xlu0
        %v8105 = vpop.trf.xlu0
        %v8107 = vsel %vm455, %v8090, 0
        %8109 = vmatpush.msra.mxu0 0.0
        %8110 = vmatpush.msra.mxu0 0.0
        %8111 = vmatpush.msra.mxu0 0.0
        %8112 = vmatpush.msra.mxu0 0.0
        %8113 = vmatpush.msra.mxu0 0.0
        %8114 = vmatpush.msra.mxu0 0.0
        %8115 = vmatpush.msra.mxu0 0.0
        %8116 = vmatpush.msra.mxu0 0.0
        %8117 = vmatpush.msra.mxu0 0.0
        %8118 = vmatpush.msra.mxu0 0.0
        %8119 = vmatpush.msra.mxu0 0.0
        %8120 = vmatpush.msra.mxu0 0.0
        %8121 = vmatpush.msra.mxu0 0.0
        %8122 = vmatpush.msra.mxu0 0.0
        %8123 = vmatpush.msra.mxu0 0.0
        %8124 = vmatpush.msra.mxu0 %v487
        %8125 = vmatmul.f32.gmra.mxu0 %v8107
        %v8126 = vpop.f32.mrf.mxu0
        %v8127 = vadd.f32 0.0, %v8126
        %8128 = vdwg.mxu0
        %8129 = vxpose.xlu0.b32.start [1/16] %v7132, 128
        %8130 = vxpose.xlu0.b32.cont [2/16] 0.0, 128
        %8131 = vxpose.xlu0.b32.cont [3/16] 0.0, 128
        %8132 = vxpose.xlu0.b32.cont [4/16] 0.0, 128
        %8133 = vxpose.xlu0.b32.cont [5/16] 0.0, 128
        %8134 = vxpose.xlu0.b32.cont [6/16] 0.0, 128
        %8135 = vxpose.xlu0.b32.cont [7/16] 0.0, 128
        %8136 = vxpose.xlu0.b32.cont [8/16] 0.0, 128
        %8137 = vxpose.xlu0.b32.cont [9/16] 0.0, 128
        %8138 = vxpose.xlu0.b32.cont [10/16] 0.0, 128
        %8139 = vxpose.xlu0.b32.cont [11/16] 0.0, 128
        %8140 = vxpose.xlu0.b32.cont [12/16] 0.0, 128
        %8141 = vxpose.xlu0.b32.cont [13/16] 0.0, 128
        %8142 = vxpose.xlu0.b32.cont [14/16] 0.0, 128
        %8143 = vxpose.xlu0.b32.cont [15/16] 0.0, 128
        %8144 = vxpose.xlu0.b32.end [16/16] 0.0, 128
        %v8145 = vpop.trf.xlu0
        %v8146 = vpop.trf.xlu0
        %v8147 = vpop.trf.xlu0
        %v8148 = vpop.trf.xlu0
        %v8149 = vpop.trf.xlu0
        %v8150 = vpop.trf.xlu0
        %v8151 = vpop.trf.xlu0
        %v8152 = vpop.trf.xlu0
        %v8153 = vpop.trf.xlu0
        %v8154 = vpop.trf.xlu0
        %v8155 = vpop.trf.xlu0
        %v8156 = vpop.trf.xlu0
        %v8157 = vpop.trf.xlu0
        %v8158 = vpop.trf.xlu0
        %v8159 = vpop.trf.xlu0
        %v8160 = vpop.trf.xlu0
        %v8162 = vsel %vm455, %v8145, 0
        %8164 = vmatpush.msra.mxu0 0.0
        %8165 = vmatpush.msra.mxu0 0.0
        %8166 = vmatpush.msra.mxu0 0.0
        %8167 = vmatpush.msra.mxu0 0.0
        %8168 = vmatpush.msra.mxu0 0.0
        %8169 = vmatpush.msra.mxu0 0.0
        %8170 = vmatpush.msra.mxu0 0.0
        %8171 = vmatpush.msra.mxu0 0.0
        %8172 = vmatpush.msra.mxu0 0.0
        %8173 = vmatpush.msra.mxu0 0.0
        %8174 = vmatpush.msra.mxu0 0.0
        %8175 = vmatpush.msra.mxu0 0.0
        %8176 = vmatpush.msra.mxu0 0.0
        %8177 = vmatpush.msra.mxu0 0.0
        %8178 = vmatpush.msra.mxu0 0.0
        %8179 = vmatpush.msra.mxu0 %v485
        %8180 = vmatmul.f32.gmra.mxu0 %v8162
        %v8181 = vpop.f32.mrf.mxu0
        %v8182 = vadd.f32 %v7302, %v8181
        %8183 = vdwg.mxu0
        %8184 = vxpose.xlu0.b32.start [1/16] %v7135, 128
        %8185 = vxpose.xlu0.b32.cont [2/16] 0.0, 128
        %8186 = vxpose.xlu0.b32.cont [3/16] 0.0, 128
        %8187 = vxpose.xlu0.b32.cont [4/16] 0.0, 128
        %8188 = vxpose.xlu0.b32.cont [5/16] 0.0, 128
        %8189 = vxpose.xlu0.b32.cont [6/16] 0.0, 128
        %8190 = vxpose.xlu0.b32.cont [7/16] 0.0, 128
        %8191 = vxpose.xlu0.b32.cont [8/16] 0.0, 128
        %8192 = vxpose.xlu0.b32.cont [9/16] 0.0, 128
        %8193 = vxpose.xlu0.b32.cont [10/16] 0.0, 128
        %8194 = vxpose.xlu0.b32.cont [11/16] 0.0, 128
        %8195 = vxpose.xlu0.b32.cont [12/16] 0.0, 128
        %8196 = vxpose.xlu0.b32.cont [13/16] 0.0, 128
        %8197 = vxpose.xlu0.b32.cont [14/16] 0.0, 128
        %8198 = vxpose.xlu0.b32.cont [15/16] 0.0, 128
        %8199 = vxpose.xlu0.b32.end [16/16] 0.0, 128
        %v8200 = vpop.trf.xlu0
        %v8201 = vpop.trf.xlu0
        %v8202 = vpop.trf.xlu0
        %v8203 = vpop.trf.xlu0
        %v8204 = vpop.trf.xlu0
        %v8205 = vpop.trf.xlu0
        %v8206 = vpop.trf.xlu0
        %v8207 = vpop.trf.xlu0
        %v8208 = vpop.trf.xlu0
        %v8209 = vpop.trf.xlu0
        %v8210 = vpop.trf.xlu0
        %v8211 = vpop.trf.xlu0
        %v8212 = vpop.trf.xlu0
        %v8213 = vpop.trf.xlu0
        %v8214 = vpop.trf.xlu0
        %v8215 = vpop.trf.xlu0
        %v8217 = vsel %vm455, %v8200, 0
        %8219 = vmatpush.msra.mxu0 0.0
        %8220 = vmatpush.msra.mxu0 0.0
        %8221 = vmatpush.msra.mxu0 0.0
        %8222 = vmatpush.msra.mxu0 0.0
        %8223 = vmatpush.msra.mxu0 0.0
        %8224 = vmatpush.msra.mxu0 0.0
        %8225 = vmatpush.msra.mxu0 0.0
        %8226 = vmatpush.msra.mxu0 0.0
        %8227 = vmatpush.msra.mxu0 0.0
        %8228 = vmatpush.msra.mxu0 0.0
        %8229 = vmatpush.msra.mxu0 0.0
        %8230 = vmatpush.msra.mxu0 0.0
        %8231 = vmatpush.msra.mxu0 0.0
        %8232 = vmatpush.msra.mxu0 0.0
        %8233 = vmatpush.msra.mxu0 0.0
        %8234 = vmatpush.msra.mxu0 %v485
        %8235 = vmatmul.f32.gmra.mxu0 %v8217
        %v8236 = vpop.f32.mrf.mxu0
        %v8237 = vadd.f32 %v7357, %v8236
        %8238 = vdwg.mxu0
        %8239 = vxpose.xlu0.b32.start [1/16] %v7138, 128
        %8240 = vxpose.xlu0.b32.cont [2/16] 0.0, 128
        %8241 = vxpose.xlu0.b32.cont [3/16] 0.0, 128
        %8242 = vxpose.xlu0.b32.cont [4/16] 0.0, 128
        %8243 = vxpose.xlu0.b32.cont [5/16] 0.0, 128
        %8244 = vxpose.xlu0.b32.cont [6/16] 0.0, 128
        %8245 = vxpose.xlu0.b32.cont [7/16] 0.0, 128
        %8246 = vxpose.xlu0.b32.cont [8/16] 0.0, 128
        %8247 = vxpose.xlu0.b32.cont [9/16] 0.0, 128
        %8248 = vxpose.xlu0.b32.cont [10/16] 0.0, 128
        %8249 = vxpose.xlu0.b32.cont [11/16] 0.0, 128
        %8250 = vxpose.xlu0.b32.cont [12/16] 0.0, 128
        %8251 = vxpose.xlu0.b32.cont [13/16] 0.0, 128
        %8252 = vxpose.xlu0.b32.cont [14/16] 0.0, 128
        %8253 = vxpose.xlu0.b32.cont [15/16] 0.0, 128
        %8254 = vxpose.xlu0.b32.end [16/16] 0.0, 128
        %v8255 = vpop.trf.xlu0
        %v8256 = vpop.trf.xlu0
        %v8257 = vpop.trf.xlu0
        %v8258 = vpop.trf.xlu0
        %v8259 = vpop.trf.xlu0
        %v8260 = vpop.trf.xlu0
        %v8261 = vpop.trf.xlu0
        %v8262 = vpop.trf.xlu0
        %v8263 = vpop.trf.xlu0
        %v8264 = vpop.trf.xlu0
        %v8265 = vpop.trf.xlu0
        %v8266 = vpop.trf.xlu0
        %v8267 = vpop.trf.xlu0
        %v8268 = vpop.trf.xlu0
        %v8269 = vpop.trf.xlu0
        %v8270 = vpop.trf.xlu0
        %v8272 = vsel %vm455, %v8255, 0
        %8274 = vmatpush.msra.mxu0 0.0
        %8275 = vmatpush.msra.mxu0 0.0
        %8276 = vmatpush.msra.mxu0 0.0
        %8277 = vmatpush.msra.mxu0 0.0
        %8278 = vmatpush.msra.mxu0 0.0
        %8279 = vmatpush.msra.mxu0 0.0
        %8280 = vmatpush.msra.mxu0 0.0
        %8281 = vmatpush.msra.mxu0 0.0
        %8282 = vmatpush.msra.mxu0 0.0
        %8283 = vmatpush.msra.mxu0 0.0
        %8284 = vmatpush.msra.mxu0 0.0
        %8285 = vmatpush.msra.mxu0 0.0
        %8286 = vmatpush.msra.mxu0 0.0
        %8287 = vmatpush.msra.mxu0 0.0
        %8288 = vmatpush.msra.mxu0 0.0
        %8289 = vmatpush.msra.mxu0 %v485
        %8290 = vmatmul.f32.gmra.mxu0 %v8272
        %v8291 = vpop.f32.mrf.mxu0
        %v8292 = vadd.f32 %v7412, %v8291
        %8293 = vdwg.mxu0
        %8294 = vxpose.xlu0.b32.start [1/16] %v7141, 128
        %8295 = vxpose.xlu0.b32.cont [2/16] 0.0, 128
        %8296 = vxpose.xlu0.b32.cont [3/16] 0.0, 128
        %8297 = vxpose.xlu0.b32.cont [4/16] 0.0, 128
        %8298 = vxpose.xlu0.b32.cont [5/16] 0.0, 128
        %8299 = vxpose.xlu0.b32.cont [6/16] 0.0, 128
        %8300 = vxpose.xlu0.b32.cont [7/16] 0.0, 128
        %8301 = vxpose.xlu0.b32.cont [8/16] 0.0, 128
        %8302 = vxpose.xlu0.b32.cont [9/16] 0.0, 128
        %8303 = vxpose.xlu0.b32.cont [10/16] 0.0, 128
        %8304 = vxpose.xlu0.b32.cont [11/16] 0.0, 128
        %8305 = vxpose.xlu0.b32.cont [12/16] 0.0, 128
        %8306 = vxpose.xlu0.b32.cont [13/16] 0.0, 128
        %8307 = vxpose.xlu0.b32.cont [14/16] 0.0, 128
        %8308 = vxpose.xlu0.b32.cont [15/16] 0.0, 128
        %8309 = vxpose.xlu0.b32.end [16/16] 0.0, 128
        %v8310 = vpop.trf.xlu0
        %v8311 = vpop.trf.xlu0
        %v8312 = vpop.trf.xlu0
        %v8313 = vpop.trf.xlu0
        %v8314 = vpop.trf.xlu0
        %v8315 = vpop.trf.xlu0
        %v8316 = vpop.trf.xlu0
        %v8317 = vpop.trf.xlu0
        %v8318 = vpop.trf.xlu0
        %v8319 = vpop.trf.xlu0
        %v8320 = vpop.trf.xlu0
        %v8321 = vpop.trf.xlu0
        %v8322 = vpop.trf.xlu0
        %v8323 = vpop.trf.xlu0
        %v8324 = vpop.trf.xlu0
        %v8325 = vpop.trf.xlu0
        %v8327 = vsel %vm455, %v8310, 0
        %8329 = vmatpush.msra.mxu0 0.0
        %8330 = vmatpush.msra.mxu0 0.0
        %8331 = vmatpush.msra.mxu0 0.0
        %8332 = vmatpush.msra.mxu0 0.0
        %8333 = vmatpush.msra.mxu0 0.0
        %8334 = vmatpush.msra.mxu0 0.0
        %8335 = vmatpush.msra.mxu0 0.0
        %8336 = vmatpush.msra.mxu0 0.0
        %8337 = vmatpush.msra.mxu0 0.0
        %8338 = vmatpush.msra.mxu0 0.0
        %8339 = vmatpush.msra.mxu0 0.0
        %8340 = vmatpush.msra.mxu0 0.0
        %8341 = vmatpush.msra.mxu0 0.0
        %8342 = vmatpush.msra.mxu0 0.0
        %8343 = vmatpush.msra.mxu0 0.0
        %8344 = vmatpush.msra.mxu0 %v485
        %8345 = vmatmul.f32.gmra.mxu0 %v8327
        %v8346 = vpop.f32.mrf.mxu0
        %v8347 = vadd.f32 %v7467, %v8346
        %8348 = vdwg.mxu0
        %8349 = vxpose.xlu0.b32.start [1/16] %v7144, 128
        %8350 = vxpose.xlu0.b32.cont [2/16] 0.0, 128
        %8351 = vxpose.xlu0.b32.cont [3/16] 0.0, 128
        %8352 = vxpose.xlu0.b32.cont [4/16] 0.0, 128
        %8353 = vxpose.xlu0.b32.cont [5/16] 0.0, 128
        %8354 = vxpose.xlu0.b32.cont [6/16] 0.0, 128
        %8355 = vxpose.xlu0.b32.cont [7/16] 0.0, 128
        %8356 = vxpose.xlu0.b32.cont [8/16] 0.0, 128
        %8357 = vxpose.xlu0.b32.cont [9/16] 0.0, 128
        %8358 = vxpose.xlu0.b32.cont [10/16] 0.0, 128
        %8359 = vxpose.xlu0.b32.cont [11/16] 0.0, 128
        %8360 = vxpose.xlu0.b32.cont [12/16] 0.0, 128
        %8361 = vxpose.xlu0.b32.cont [13/16] 0.0, 128
        %8362 = vxpose.xlu0.b32.cont [14/16] 0.0, 128
        %8363 = vxpose.xlu0.b32.cont [15/16] 0.0, 128
        %8364 = vxpose.xlu0.b32.end [16/16] 0.0, 128
        %v8365 = vpop.trf.xlu0
        %v8366 = vpop.trf.xlu0
        %v8367 = vpop.trf.xlu0
        %v8368 = vpop.trf.xlu0
        %v8369 = vpop.trf.xlu0
        %v8370 = vpop.trf.xlu0
        %v8371 = vpop.trf.xlu0
        %v8372 = vpop.trf.xlu0
        %v8373 = vpop.trf.xlu0
        %v8374 = vpop.trf.xlu0
        %v8375 = vpop.trf.xlu0
        %v8376 = vpop.trf.xlu0
        %v8377 = vpop.trf.xlu0
        %v8378 = vpop.trf.xlu0
        %v8379 = vpop.trf.xlu0
        %v8380 = vpop.trf.xlu0
        %v8382 = vsel %vm455, %v8365, 0
        %8384 = vmatpush.msra.mxu0 0.0
        %8385 = vmatpush.msra.mxu0 0.0
        %8386 = vmatpush.msra.mxu0 0.0
        %8387 = vmatpush.msra.mxu0 0.0
        %8388 = vmatpush.msra.mxu0 0.0
        %8389 = vmatpush.msra.mxu0 0.0
        %8390 = vmatpush.msra.mxu0 0.0
        %8391 = vmatpush.msra.mxu0 0.0
        %8392 = vmatpush.msra.mxu0 0.0
        %8393 = vmatpush.msra.mxu0 0.0
        %8394 = vmatpush.msra.mxu0 0.0
        %8395 = vmatpush.msra.mxu0 0.0
        %8396 = vmatpush.msra.mxu0 0.0
        %8397 = vmatpush.msra.mxu0 0.0
        %8398 = vmatpush.msra.mxu0 0.0
        %8399 = vmatpush.msra.mxu0 %v485
        %8400 = vmatmul.f32.gmra.mxu0 %v8382
        %v8401 = vpop.f32.mrf.mxu0
        %v8402 = vadd.f32 %v7522, %v8401
        %8403 = vdwg.mxu0
        %8404 = vxpose.xlu0.b32.start [1/16] %v7147, 128
        %8405 = vxpose.xlu0.b32.cont [2/16] 0.0, 128
        %8406 = vxpose.xlu0.b32.cont [3/16] 0.0, 128
        %8407 = vxpose.xlu0.b32.cont [4/16] 0.0, 128
        %8408 = vxpose.xlu0.b32.cont [5/16] 0.0, 128
        %8409 = vxpose.xlu0.b32.cont [6/16] 0.0, 128
        %8410 = vxpose.xlu0.b32.cont [7/16] 0.0, 128
        %8411 = vxpose.xlu0.b32.cont [8/16] 0.0, 128
        %8412 = vxpose.xlu0.b32.cont [9/16] 0.0, 128
        %8413 = vxpose.xlu0.b32.cont [10/16] 0.0, 128
        %8414 = vxpose.xlu0.b32.cont [11/16] 0.0, 128
        %8415 = vxpose.xlu0.b32.cont [12/16] 0.0, 128
        %8416 = vxpose.xlu0.b32.cont [13/16] 0.0, 128
        %8417 = vxpose.xlu0.b32.cont [14/16] 0.0, 128
        %8418 = vxpose.xlu0.b32.cont [15/16] 0.0, 128
        %8419 = vxpose.xlu0.b32.end [16/16] 0.0, 128
        %v8420 = vpop.trf.xlu0
        %v8421 = vpop.trf.xlu0
        %v8422 = vpop.trf.xlu0
        %v8423 = vpop.trf.xlu0
        %v8424 = vpop.trf.xlu0
        %v8425 = vpop.trf.xlu0
        %v8426 = vpop.trf.xlu0
        %v8427 = vpop.trf.xlu0
        %v8428 = vpop.trf.xlu0
        %v8429 = vpop.trf.xlu0
        %v8430 = vpop.trf.xlu0
        %v8431 = vpop.trf.xlu0
        %v8432 = vpop.trf.xlu0
        %v8433 = vpop.trf.xlu0
        %v8434 = vpop.trf.xlu0
        %v8435 = vpop.trf.xlu0
        %v8437 = vsel %vm455, %v8420, 0
        %8439 = vmatpush.msra.mxu0 0.0
        %8440 = vmatpush.msra.mxu0 0.0
        %8441 = vmatpush.msra.mxu0 0.0
        %8442 = vmatpush.msra.mxu0 0.0
        %8443 = vmatpush.msra.mxu0 0.0
        %8444 = vmatpush.msra.mxu0 0.0
        %8445 = vmatpush.msra.mxu0 0.0
        %8446 = vmatpush.msra.mxu0 0.0
        %8447 = vmatpush.msra.mxu0 0.0
        %8448 = vmatpush.msra.mxu0 0.0
        %8449 = vmatpush.msra.mxu0 0.0
        %8450 = vmatpush.msra.mxu0 0.0
        %8451 = vmatpush.msra.mxu0 0.0
        %8452 = vmatpush.msra.mxu0 0.0
        %8453 = vmatpush.msra.mxu0 0.0
        %8454 = vmatpush.msra.mxu0 %v485
        %8455 = vmatmul.f32.gmra.mxu0 %v8437
        %v8456 = vpop.f32.mrf.mxu0
        %v8457 = vadd.f32 %v7577, %v8456
        %8458 = vdwg.mxu0
        %8459 = vxpose.xlu0.b32.start [1/16] %v7150, 128
        %8460 = vxpose.xlu0.b32.cont [2/16] 0.0, 128
        %8461 = vxpose.xlu0.b32.cont [3/16] 0.0, 128
        %8462 = vxpose.xlu0.b32.cont [4/16] 0.0, 128
        %8463 = vxpose.xlu0.b32.cont [5/16] 0.0, 128
        %8464 = vxpose.xlu0.b32.cont [6/16] 0.0, 128
        %8465 = vxpose.xlu0.b32.cont [7/16] 0.0, 128
        %8466 = vxpose.xlu0.b32.cont [8/16] 0.0, 128
        %8467 = vxpose.xlu0.b32.cont [9/16] 0.0, 128
        %8468 = vxpose.xlu0.b32.cont [10/16] 0.0, 128
        %8469 = vxpose.xlu0.b32.cont [11/16] 0.0, 128
        %8470 = vxpose.xlu0.b32.cont [12/16] 0.0, 128
        %8471 = vxpose.xlu0.b32.cont [13/16] 0.0, 128
        %8472 = vxpose.xlu0.b32.cont [14/16] 0.0, 128
        %8473 = vxpose.xlu0.b32.cont [15/16] 0.0, 128
        %8474 = vxpose.xlu0.b32.end [16/16] 0.0, 128
        %v8475 = vpop.trf.xlu0
        %v8476 = vpop.trf.xlu0
        %v8477 = vpop.trf.xlu0
        %v8478 = vpop.trf.xlu0
        %v8479 = vpop.trf.xlu0
        %v8480 = vpop.trf.xlu0
        %v8481 = vpop.trf.xlu0
        %v8482 = vpop.trf.xlu0
        %v8483 = vpop.trf.xlu0
        %v8484 = vpop.trf.xlu0
        %v8485 = vpop.trf.xlu0
        %v8486 = vpop.trf.xlu0
        %v8487 = vpop.trf.xlu0
        %v8488 = vpop.trf.xlu0
        %v8489 = vpop.trf.xlu0
        %v8490 = vpop.trf.xlu0
        %v8492 = vsel %vm455, %v8475, 0
        %8494 = vmatpush.msra.mxu0 0.0
        %8495 = vmatpush.msra.mxu0 0.0
        %8496 = vmatpush.msra.mxu0 0.0
        %8497 = vmatpush.msra.mxu0 0.0
        %8498 = vmatpush.msra.mxu0 0.0
        %8499 = vmatpush.msra.mxu0 0.0
        %8500 = vmatpush.msra.mxu0 0.0
        %8501 = vmatpush.msra.mxu0 0.0
        %8502 = vmatpush.msra.mxu0 0.0
        %8503 = vmatpush.msra.mxu0 0.0
        %8504 = vmatpush.msra.mxu0 0.0
        %8505 = vmatpush.msra.mxu0 0.0
        %8506 = vmatpush.msra.mxu0 0.0
        %8507 = vmatpush.msra.mxu0 0.0
        %8508 = vmatpush.msra.mxu0 0.0
        %8509 = vmatpush.msra.mxu0 %v485
        %8510 = vmatmul.f32.gmra.mxu0 %v8492
        %v8511 = vpop.f32.mrf.mxu0
        %v8512 = vadd.f32 %v7632, %v8511
        %8513 = vdwg.mxu0
        %8514 = vxpose.xlu0.b32.start [1/16] %v7153, 128
        %8515 = vxpose.xlu0.b32.cont [2/16] 0.0, 128
        %8516 = vxpose.xlu0.b32.cont [3/16] 0.0, 128
        %8517 = vxpose.xlu0.b32.cont [4/16] 0.0, 128
        %8518 = vxpose.xlu0.b32.cont [5/16] 0.0, 128
        %8519 = vxpose.xlu0.b32.cont [6/16] 0.0, 128
        %8520 = vxpose.xlu0.b32.cont [7/16] 0.0, 128
        %8521 = vxpose.xlu0.b32.cont [8/16] 0.0, 128
        %8522 = vxpose.xlu0.b32.cont [9/16] 0.0, 128
        %8523 = vxpose.xlu0.b32.cont [10/16] 0.0, 128
        %8524 = vxpose.xlu0.b32.cont [11/16] 0.0, 128
        %8525 = vxpose.xlu0.b32.cont [12/16] 0.0, 128
        %8526 = vxpose.xlu0.b32.cont [13/16] 0.0, 128
        %8527 = vxpose.xlu0.b32.cont [14/16] 0.0, 128
        %8528 = vxpose.xlu0.b32.cont [15/16] 0.0, 128
        %8529 = vxpose.xlu0.b32.end [16/16] 0.0, 128
        %v8530 = vpop.trf.xlu0
        %v8531 = vpop.trf.xlu0
        %v8532 = vpop.trf.xlu0
        %v8533 = vpop.trf.xlu0
        %v8534 = vpop.trf.xlu0
        %v8535 = vpop.trf.xlu0
        %v8536 = vpop.trf.xlu0
        %v8537 = vpop.trf.xlu0
        %v8538 = vpop.trf.xlu0
        %v8539 = vpop.trf.xlu0
        %v8540 = vpop.trf.xlu0
        %v8541 = vpop.trf.xlu0
        %v8542 = vpop.trf.xlu0
        %v8543 = vpop.trf.xlu0
        %v8544 = vpop.trf.xlu0
        %v8545 = vpop.trf.xlu0
        %v8547 = vsel %vm455, %v8530, 0
        %8549 = vmatpush.msra.mxu0 0.0
        %8550 = vmatpush.msra.mxu0 0.0
        %8551 = vmatpush.msra.mxu0 0.0
        %8552 = vmatpush.msra.mxu0 0.0
        %8553 = vmatpush.msra.mxu0 0.0
        %8554 = vmatpush.msra.mxu0 0.0
        %8555 = vmatpush.msra.mxu0 0.0
        %8556 = vmatpush.msra.mxu0 0.0
        %8557 = vmatpush.msra.mxu0 0.0
        %8558 = vmatpush.msra.mxu0 0.0
        %8559 = vmatpush.msra.mxu0 0.0
        %8560 = vmatpush.msra.mxu0 0.0
        %8561 = vmatpush.msra.mxu0 0.0
        %8562 = vmatpush.msra.mxu0 0.0
        %8563 = vmatpush.msra.mxu0 0.0
        %8564 = vmatpush.msra.mxu0 %v485
        %8565 = vmatmul.f32.gmra.mxu0 %v8547
        %v8566 = vpop.f32.mrf.mxu0
        %v8567 = vadd.f32 %v7687, %v8566
        %8568 = vdwg.mxu0
        %8569 = vxpose.xlu0.b32.start [1/16] %v7156, 128
        %8570 = vxpose.xlu0.b32.cont [2/16] 0.0, 128
        %8571 = vxpose.xlu0.b32.cont [3/16] 0.0, 128
        %8572 = vxpose.xlu0.b32.cont [4/16] 0.0, 128
        %8573 = vxpose.xlu0.b32.cont [5/16] 0.0, 128
        %8574 = vxpose.xlu0.b32.cont [6/16] 0.0, 128
        %8575 = vxpose.xlu0.b32.cont [7/16] 0.0, 128
        %8576 = vxpose.xlu0.b32.cont [8/16] 0.0, 128
        %8577 = vxpose.xlu0.b32.cont [9/16] 0.0, 128
        %8578 = vxpose.xlu0.b32.cont [10/16] 0.0, 128
        %8579 = vxpose.xlu0.b32.cont [11/16] 0.0, 128
        %8580 = vxpose.xlu0.b32.cont [12/16] 0.0, 128
        %8581 = vxpose.xlu0.b32.cont [13/16] 0.0, 128
        %8582 = vxpose.xlu0.b32.cont [14/16] 0.0, 128
        %8583 = vxpose.xlu0.b32.cont [15/16] 0.0, 128
        %8584 = vxpose.xlu0.b32.end [16/16] 0.0, 128
        %v8585 = vpop.trf.xlu0
        %v8586 = vpop.trf.xlu0
        %v8587 = vpop.trf.xlu0
        %v8588 = vpop.trf.xlu0
        %v8589 = vpop.trf.xlu0
        %v8590 = vpop.trf.xlu0
        %v8591 = vpop.trf.xlu0
        %v8592 = vpop.trf.xlu0
        %v8593 = vpop.trf.xlu0
        %v8594 = vpop.trf.xlu0
        %v8595 = vpop.trf.xlu0
        %v8596 = vpop.trf.xlu0
        %v8597 = vpop.trf.xlu0
        %v8598 = vpop.trf.xlu0
        %v8599 = vpop.trf.xlu0
        %v8600 = vpop.trf.xlu0
        %v8602 = vsel %vm455, %v8585, 0
        %8604 = vmatpush.msra.mxu0 0.0
        %8605 = vmatpush.msra.mxu0 0.0
        %8606 = vmatpush.msra.mxu0 0.0
        %8607 = vmatpush.msra.mxu0 0.0
        %8608 = vmatpush.msra.mxu0 0.0
        %8609 = vmatpush.msra.mxu0 0.0
        %8610 = vmatpush.msra.mxu0 0.0
        %8611 = vmatpush.msra.mxu0 0.0
        %8612 = vmatpush.msra.mxu0 0.0
        %8613 = vmatpush.msra.mxu0 0.0
        %8614 = vmatpush.msra.mxu0 0.0
        %8615 = vmatpush.msra.mxu0 0.0
        %8616 = vmatpush.msra.mxu0 0.0
        %8617 = vmatpush.msra.mxu0 0.0
        %8618 = vmatpush.msra.mxu0 0.0
        %8619 = vmatpush.msra.mxu0 %v485
        %8620 = vmatmul.f32.gmra.mxu0 %v8602
        %v8621 = vpop.f32.mrf.mxu0
        %v8622 = vadd.f32 %v7742, %v8621
        %8623 = vdwg.mxu0
        %8624 = vxpose.xlu0.b32.start [1/16] %v7159, 128
        %8625 = vxpose.xlu0.b32.cont [2/16] 0.0, 128
        %8626 = vxpose.xlu0.b32.cont [3/16] 0.0, 128
        %8627 = vxpose.xlu0.b32.cont [4/16] 0.0, 128
        %8628 = vxpose.xlu0.b32.cont [5/16] 0.0, 128
        %8629 = vxpose.xlu0.b32.cont [6/16] 0.0, 128
        %8630 = vxpose.xlu0.b32.cont [7/16] 0.0, 128
        %8631 = vxpose.xlu0.b32.cont [8/16] 0.0, 128
        %8632 = vxpose.xlu0.b32.cont [9/16] 0.0, 128
        %8633 = vxpose.xlu0.b32.cont [10/16] 0.0, 128
        %8634 = vxpose.xlu0.b32.cont [11/16] 0.0, 128
        %8635 = vxpose.xlu0.b32.cont [12/16] 0.0, 128
        %8636 = vxpose.xlu0.b32.cont [13/16] 0.0, 128
        %8637 = vxpose.xlu0.b32.cont [14/16] 0.0, 128
        %8638 = vxpose.xlu0.b32.cont [15/16] 0.0, 128
        %8639 = vxpose.xlu0.b32.end [16/16] 0.0, 128
        %v8640 = vpop.trf.xlu0
        %v8641 = vpop.trf.xlu0
        %v8642 = vpop.trf.xlu0
        %v8643 = vpop.trf.xlu0
        %v8644 = vpop.trf.xlu0
        %v8645 = vpop.trf.xlu0
        %v8646 = vpop.trf.xlu0
        %v8647 = vpop.trf.xlu0
        %v8648 = vpop.trf.xlu0
        %v8649 = vpop.trf.xlu0
        %v8650 = vpop.trf.xlu0
        %v8651 = vpop.trf.xlu0
        %v8652 = vpop.trf.xlu0
        %v8653 = vpop.trf.xlu0
        %v8654 = vpop.trf.xlu0
        %v8655 = vpop.trf.xlu0
        %v8657 = vsel %vm455, %v8640, 0
        %8659 = vmatpush.msra.mxu0 0.0
        %8660 = vmatpush.msra.mxu0 0.0
        %8661 = vmatpush.msra.mxu0 0.0
        %8662 = vmatpush.msra.mxu0 0.0
        %8663 = vmatpush.msra.mxu0 0.0
        %8664 = vmatpush.msra.mxu0 0.0
        %8665 = vmatpush.msra.mxu0 0.0
        %8666 = vmatpush.msra.mxu0 0.0
        %8667 = vmatpush.msra.mxu0 0.0
        %8668 = vmatpush.msra.mxu0 0.0
        %8669 = vmatpush.msra.mxu0 0.0
        %8670 = vmatpush.msra.mxu0 0.0
        %8671 = vmatpush.msra.mxu0 0.0
        %8672 = vmatpush.msra.mxu0 0.0
        %8673 = vmatpush.msra.mxu0 0.0
        %8674 = vmatpush.msra.mxu0 %v485
        %8675 = vmatmul.f32.gmra.mxu0 %v8657
        %v8676 = vpop.f32.mrf.mxu0
        %v8677 = vadd.f32 %v7797, %v8676
        %8678 = vdwg.mxu0
        %8679 = vxpose.xlu0.b32.start [1/16] %v7162, 128
        %8680 = vxpose.xlu0.b32.cont [2/16] 0.0, 128
        %8681 = vxpose.xlu0.b32.cont [3/16] 0.0, 128
        %8682 = vxpose.xlu0.b32.cont [4/16] 0.0, 128
        %8683 = vxpose.xlu0.b32.cont [5/16] 0.0, 128
        %8684 = vxpose.xlu0.b32.cont [6/16] 0.0, 128
        %8685 = vxpose.xlu0.b32.cont [7/16] 0.0, 128
        %8686 = vxpose.xlu0.b32.cont [8/16] 0.0, 128
        %8687 = vxpose.xlu0.b32.cont [9/16] 0.0, 128
        %8688 = vxpose.xlu0.b32.cont [10/16] 0.0, 128
        %8689 = vxpose.xlu0.b32.cont [11/16] 0.0, 128
        %8690 = vxpose.xlu0.b32.cont [12/16] 0.0, 128
        %8691 = vxpose.xlu0.b32.cont [13/16] 0.0, 128
        %8692 = vxpose.xlu0.b32.cont [14/16] 0.0, 128
        %8693 = vxpose.xlu0.b32.cont [15/16] 0.0, 128
        %8694 = vxpose.xlu0.b32.end [16/16] 0.0, 128
        %v8695 = vpop.trf.xlu0
        %v8696 = vpop.trf.xlu0
        %v8697 = vpop.trf.xlu0
        %v8698 = vpop.trf.xlu0
        %v8699 = vpop.trf.xlu0
        %v8700 = vpop.trf.xlu0
        %v8701 = vpop.trf.xlu0
        %v8702 = vpop.trf.xlu0
        %v8703 = vpop.trf.xlu0
        %v8704 = vpop.trf.xlu0
        %v8705 = vpop.trf.xlu0
        %v8706 = vpop.trf.xlu0
        %v8707 = vpop.trf.xlu0
        %v8708 = vpop.trf.xlu0
        %v8709 = vpop.trf.xlu0
        %v8710 = vpop.trf.xlu0
        %v8712 = vsel %vm455, %v8695, 0
        %8714 = vmatpush.msra.mxu0 0.0
        %8715 = vmatpush.msra.mxu0 0.0
        %8716 = vmatpush.msra.mxu0 0.0
        %8717 = vmatpush.msra.mxu0 0.0
        %8718 = vmatpush.msra.mxu0 0.0
        %8719 = vmatpush.msra.mxu0 0.0
        %8720 = vmatpush.msra.mxu0 0.0
        %8721 = vmatpush.msra.mxu0 0.0
        %8722 = vmatpush.msra.mxu0 0.0
        %8723 = vmatpush.msra.mxu0 0.0
        %8724 = vmatpush.msra.mxu0 0.0
        %8725 = vmatpush.msra.mxu0 0.0
        %8726 = vmatpush.msra.mxu0 0.0
        %8727 = vmatpush.msra.mxu0 0.0
        %8728 = vmatpush.msra.mxu0 0.0
        %8729 = vmatpush.msra.mxu0 %v485
        %8730 = vmatmul.f32.gmra.mxu0 %v8712
        %v8731 = vpop.f32.mrf.mxu0
        %v8732 = vadd.f32 %v7852, %v8731
        %8733 = vdwg.mxu0
        %8734 = vxpose.xlu0.b32.start [1/16] %v7165, 128
        %8735 = vxpose.xlu0.b32.cont [2/16] 0.0, 128
        %8736 = vxpose.xlu0.b32.cont [3/16] 0.0, 128
        %8737 = vxpose.xlu0.b32.cont [4/16] 0.0, 128
        %8738 = vxpose.xlu0.b32.cont [5/16] 0.0, 128
        %8739 = vxpose.xlu0.b32.cont [6/16] 0.0, 128
        %8740 = vxpose.xlu0.b32.cont [7/16] 0.0, 128
        %8741 = vxpose.xlu0.b32.cont [8/16] 0.0, 128
        %8742 = vxpose.xlu0.b32.cont [9/16] 0.0, 128
        %8743 = vxpose.xlu0.b32.cont [10/16] 0.0, 128
        %8744 = vxpose.xlu0.b32.cont [11/16] 0.0, 128
        %8745 = vxpose.xlu0.b32.cont [12/16] 0.0, 128
        %8746 = vxpose.xlu0.b32.cont [13/16] 0.0, 128
        %8747 = vxpose.xlu0.b32.cont [14/16] 0.0, 128
        %8748 = vxpose.xlu0.b32.cont [15/16] 0.0, 128
        %8749 = vxpose.xlu0.b32.end [16/16] 0.0, 128
        %v8750 = vpop.trf.xlu0
        %v8751 = vpop.trf.xlu0
        %v8752 = vpop.trf.xlu0
        %v8753 = vpop.trf.xlu0
        %v8754 = vpop.trf.xlu0
        %v8755 = vpop.trf.xlu0
        %v8756 = vpop.trf.xlu0
        %v8757 = vpop.trf.xlu0
        %v8758 = vpop.trf.xlu0
        %v8759 = vpop.trf.xlu0
        %v8760 = vpop.trf.xlu0
        %v8761 = vpop.trf.xlu0
        %v8762 = vpop.trf.xlu0
        %v8763 = vpop.trf.xlu0
        %v8764 = vpop.trf.xlu0
        %v8765 = vpop.trf.xlu0
        %v8767 = vsel %vm455, %v8750, 0
        %8769 = vmatpush.msra.mxu0 0.0
        %8770 = vmatpush.msra.mxu0 0.0
        %8771 = vmatpush.msra.mxu0 0.0
        %8772 = vmatpush.msra.mxu0 0.0
        %8773 = vmatpush.msra.mxu0 0.0
        %8774 = vmatpush.msra.mxu0 0.0
        %8775 = vmatpush.msra.mxu0 0.0
        %8776 = vmatpush.msra.mxu0 0.0
        %8777 = vmatpush.msra.mxu0 0.0
        %8778 = vmatpush.msra.mxu0 0.0
        %8779 = vmatpush.msra.mxu0 0.0
        %8780 = vmatpush.msra.mxu0 0.0
        %8781 = vmatpush.msra.mxu0 0.0
        %8782 = vmatpush.msra.mxu0 0.0
        %8783 = vmatpush.msra.mxu0 0.0
        %8784 = vmatpush.msra.mxu0 %v485
        %8785 = vmatmul.f32.gmra.mxu0 %v8767
        %v8786 = vpop.f32.mrf.mxu0
        %v8787 = vadd.f32 %v7907, %v8786
        %8788 = vdwg.mxu0
        %8789 = vxpose.xlu0.b32.start [1/16] %v7168, 128
        %8790 = vxpose.xlu0.b32.cont [2/16] 0.0, 128
        %8791 = vxpose.xlu0.b32.cont [3/16] 0.0, 128
        %8792 = vxpose.xlu0.b32.cont [4/16] 0.0, 128
        %8793 = vxpose.xlu0.b32.cont [5/16] 0.0, 128
        %8794 = vxpose.xlu0.b32.cont [6/16] 0.0, 128
        %8795 = vxpose.xlu0.b32.cont [7/16] 0.0, 128
        %8796 = vxpose.xlu0.b32.cont [8/16] 0.0, 128
        %8797 = vxpose.xlu0.b32.cont [9/16] 0.0, 128
        %8798 = vxpose.xlu0.b32.cont [10/16] 0.0, 128
        %8799 = vxpose.xlu0.b32.cont [11/16] 0.0, 128
        %8800 = vxpose.xlu0.b32.cont [12/16] 0.0, 128
        %8801 = vxpose.xlu0.b32.cont [13/16] 0.0, 128
        %8802 = vxpose.xlu0.b32.cont [14/16] 0.0, 128
        %8803 = vxpose.xlu0.b32.cont [15/16] 0.0, 128
        %8804 = vxpose.xlu0.b32.end [16/16] 0.0, 128
        %v8805 = vpop.trf.xlu0
        %v8806 = vpop.trf.xlu0
        %v8807 = vpop.trf.xlu0
        %v8808 = vpop.trf.xlu0
        %v8809 = vpop.trf.xlu0
        %v8810 = vpop.trf.xlu0
        %v8811 = vpop.trf.xlu0
        %v8812 = vpop.trf.xlu0
        %v8813 = vpop.trf.xlu0
        %v8814 = vpop.trf.xlu0
        %v8815 = vpop.trf.xlu0
        %v8816 = vpop.trf.xlu0
        %v8817 = vpop.trf.xlu0
        %v8818 = vpop.trf.xlu0
        %v8819 = vpop.trf.xlu0
        %v8820 = vpop.trf.xlu0
        %v8822 = vsel %vm455, %v8805, 0
        %8824 = vmatpush.msra.mxu0 0.0
        %8825 = vmatpush.msra.mxu0 0.0
        %8826 = vmatpush.msra.mxu0 0.0
        %8827 = vmatpush.msra.mxu0 0.0
        %8828 = vmatpush.msra.mxu0 0.0
        %8829 = vmatpush.msra.mxu0 0.0
        %8830 = vmatpush.msra.mxu0 0.0
        %8831 = vmatpush.msra.mxu0 0.0
        %8832 = vmatpush.msra.mxu0 0.0
        %8833 = vmatpush.msra.mxu0 0.0
        %8834 = vmatpush.msra.mxu0 0.0
        %8835 = vmatpush.msra.mxu0 0.0
        %8836 = vmatpush.msra.mxu0 0.0
        %8837 = vmatpush.msra.mxu0 0.0
        %8838 = vmatpush.msra.mxu0 0.0
        %8839 = vmatpush.msra.mxu0 %v485
        %8840 = vmatmul.f32.gmra.mxu0 %v8822
        %v8841 = vpop.f32.mrf.mxu0
        %v8842 = vadd.f32 %v7962, %v8841
        %8843 = vdwg.mxu0
        %8844 = vxpose.xlu0.b32.start [1/16] %v7171, 128
        %8845 = vxpose.xlu0.b32.cont [2/16] 0.0, 128
        %8846 = vxpose.xlu0.b32.cont [3/16] 0.0, 128
        %8847 = vxpose.xlu0.b32.cont [4/16] 0.0, 128
        %8848 = vxpose.xlu0.b32.cont [5/16] 0.0, 128
        %8849 = vxpose.xlu0.b32.cont [6/16] 0.0, 128
        %8850 = vxpose.xlu0.b32.cont [7/16] 0.0, 128
        %8851 = vxpose.xlu0.b32.cont [8/16] 0.0, 128
        %8852 = vxpose.xlu0.b32.cont [9/16] 0.0, 128
        %8853 = vxpose.xlu0.b32.cont [10/16] 0.0, 128
        %8854 = vxpose.xlu0.b32.cont [11/16] 0.0, 128
        %8855 = vxpose.xlu0.b32.cont [12/16] 0.0, 128
        %8856 = vxpose.xlu0.b32.cont [13/16] 0.0, 128
        %8857 = vxpose.xlu0.b32.cont [14/16] 0.0, 128
        %8858 = vxpose.xlu0.b32.cont [15/16] 0.0, 128
        %8859 = vxpose.xlu0.b32.end [16/16] 0.0, 128
        %v8860 = vpop.trf.xlu0
        %v8861 = vpop.trf.xlu0
        %v8862 = vpop.trf.xlu0
        %v8863 = vpop.trf.xlu0
        %v8864 = vpop.trf.xlu0
        %v8865 = vpop.trf.xlu0
        %v8866 = vpop.trf.xlu0
        %v8867 = vpop.trf.xlu0
        %v8868 = vpop.trf.xlu0
        %v8869 = vpop.trf.xlu0
        %v8870 = vpop.trf.xlu0
        %v8871 = vpop.trf.xlu0
        %v8872 = vpop.trf.xlu0
        %v8873 = vpop.trf.xlu0
        %v8874 = vpop.trf.xlu0
        %v8875 = vpop.trf.xlu0
        %v8877 = vsel %vm455, %v8860, 0
        %8879 = vmatpush.msra.mxu0 0.0
        %8880 = vmatpush.msra.mxu0 0.0
        %8881 = vmatpush.msra.mxu0 0.0
        %8882 = vmatpush.msra.mxu0 0.0
        %8883 = vmatpush.msra.mxu0 0.0
        %8884 = vmatpush.msra.mxu0 0.0
        %8885 = vmatpush.msra.mxu0 0.0
        %8886 = vmatpush.msra.mxu0 0.0
        %8887 = vmatpush.msra.mxu0 0.0
        %8888 = vmatpush.msra.mxu0 0.0
        %8889 = vmatpush.msra.mxu0 0.0
        %8890 = vmatpush.msra.mxu0 0.0
        %8891 = vmatpush.msra.mxu0 0.0
        %8892 = vmatpush.msra.mxu0 0.0
        %8893 = vmatpush.msra.mxu0 0.0
        %8894 = vmatpush.msra.mxu0 %v485
        %8895 = vmatmul.f32.gmra.mxu0 %v8877
        %v8896 = vpop.f32.mrf.mxu0
        %v8897 = vadd.f32 %v8017, %v8896
        %8898 = vdwg.mxu0
        %8899 = vxpose.xlu0.b32.start [1/16] %v7174, 128
        %8900 = vxpose.xlu0.b32.cont [2/16] 0.0, 128
        %8901 = vxpose.xlu0.b32.cont [3/16] 0.0, 128
        %8902 = vxpose.xlu0.b32.cont [4/16] 0.0, 128
        %8903 = vxpose.xlu0.b32.cont [5/16] 0.0, 128
        %8904 = vxpose.xlu0.b32.cont [6/16] 0.0, 128
        %8905 = vxpose.xlu0.b32.cont [7/16] 0.0, 128
        %8906 = vxpose.xlu0.b32.cont [8/16] 0.0, 128
        %8907 = vxpose.xlu0.b32.cont [9/16] 0.0, 128
        %8908 = vxpose.xlu0.b32.cont [10/16] 0.0, 128
        %8909 = vxpose.xlu0.b32.cont [11/16] 0.0, 128
        %8910 = vxpose.xlu0.b32.cont [12/16] 0.0, 128
        %8911 = vxpose.xlu0.b32.cont [13/16] 0.0, 128
        %8912 = vxpose.xlu0.b32.cont [14/16] 0.0, 128
        %8913 = vxpose.xlu0.b32.cont [15/16] 0.0, 128
        %8914 = vxpose.xlu0.b32.end [16/16] 0.0, 128
        %v8915 = vpop.trf.xlu0
        %v8916 = vpop.trf.xlu0
        %v8917 = vpop.trf.xlu0
        %v8918 = vpop.trf.xlu0
        %v8919 = vpop.trf.xlu0
        %v8920 = vpop.trf.xlu0
        %v8921 = vpop.trf.xlu0
        %v8922 = vpop.trf.xlu0
        %v8923 = vpop.trf.xlu0
        %v8924 = vpop.trf.xlu0
        %v8925 = vpop.trf.xlu0
        %v8926 = vpop.trf.xlu0
        %v8927 = vpop.trf.xlu0
        %v8928 = vpop.trf.xlu0
        %v8929 = vpop.trf.xlu0
        %v8930 = vpop.trf.xlu0
        %v8932 = vsel %vm455, %v8915, 0
        %8934 = vmatpush.msra.mxu0 0.0
        %8935 = vmatpush.msra.mxu0 0.0
        %8936 = vmatpush.msra.mxu0 0.0
        %8937 = vmatpush.msra.mxu0 0.0
        %8938 = vmatpush.msra.mxu0 0.0
        %8939 = vmatpush.msra.mxu0 0.0
        %8940 = vmatpush.msra.mxu0 0.0
        %8941 = vmatpush.msra.mxu0 0.0
        %8942 = vmatpush.msra.mxu0 0.0
        %8943 = vmatpush.msra.mxu0 0.0
        %8944 = vmatpush.msra.mxu0 0.0
        %8945 = vmatpush.msra.mxu0 0.0
        %8946 = vmatpush.msra.mxu0 0.0
        %8947 = vmatpush.msra.mxu0 0.0
        %8948 = vmatpush.msra.mxu0 0.0
        %8949 = vmatpush.msra.mxu0 %v485
        %8950 = vmatmul.f32.gmra.mxu0 %v8932
        %v8951 = vpop.f32.mrf.mxu0
        %v8952 = vadd.f32 %v8072, %v8951
        %8953 = vdwg.mxu0
        %8954 = vxpose.xlu0.b32.start [1/16] %v7177, 128
        %8955 = vxpose.xlu0.b32.cont [2/16] 0.0, 128
        %8956 = vxpose.xlu0.b32.cont [3/16] 0.0, 128
        %8957 = vxpose.xlu0.b32.cont [4/16] 0.0, 128
        %8958 = vxpose.xlu0.b32.cont [5/16] 0.0, 128
        %8959 = vxpose.xlu0.b32.cont [6/16] 0.0, 128
        %8960 = vxpose.xlu0.b32.cont [7/16] 0.0, 128
        %8961 = vxpose.xlu0.b32.cont [8/16] 0.0, 128
        %8962 = vxpose.xlu0.b32.cont [9/16] 0.0, 128
        %8963 = vxpose.xlu0.b32.cont [10/16] 0.0, 128
        %8964 = vxpose.xlu0.b32.cont [11/16] 0.0, 128
        %8965 = vxpose.xlu0.b32.cont [12/16] 0.0, 128
        %8966 = vxpose.xlu0.b32.cont [13/16] 0.0, 128
        %8967 = vxpose.xlu0.b32.cont [14/16] 0.0, 128
        %8968 = vxpose.xlu0.b32.cont [15/16] 0.0, 128
        %8969 = vxpose.xlu0.b32.end [16/16] 0.0, 128
        %v8970 = vpop.trf.xlu0
        %v8971 = vpop.trf.xlu0
        %v8972 = vpop.trf.xlu0
        %v8973 = vpop.trf.xlu0
        %v8974 = vpop.trf.xlu0
        %v8975 = vpop.trf.xlu0
        %v8976 = vpop.trf.xlu0
        %v8977 = vpop.trf.xlu0
        %v8978 = vpop.trf.xlu0
        %v8979 = vpop.trf.xlu0
        %v8980 = vpop.trf.xlu0
        %v8981 = vpop.trf.xlu0
        %v8982 = vpop.trf.xlu0
        %v8983 = vpop.trf.xlu0
        %v8984 = vpop.trf.xlu0
        %v8985 = vpop.trf.xlu0
        %v8987 = vsel %vm455, %v8970, 0
        %8989 = vmatpush.msra.mxu0 0.0
        %8990 = vmatpush.msra.mxu0 0.0
        %8991 = vmatpush.msra.mxu0 0.0
        %8992 = vmatpush.msra.mxu0 0.0
        %8993 = vmatpush.msra.mxu0 0.0
        %8994 = vmatpush.msra.mxu0 0.0
        %8995 = vmatpush.msra.mxu0 0.0
        %8996 = vmatpush.msra.mxu0 0.0
        %8997 = vmatpush.msra.mxu0 0.0
        %8998 = vmatpush.msra.mxu0 0.0
        %8999 = vmatpush.msra.mxu0 0.0
        %9000 = vmatpush.msra.mxu0 0.0
        %9001 = vmatpush.msra.mxu0 0.0
        %9002 = vmatpush.msra.mxu0 0.0
        %9003 = vmatpush.msra.mxu0 0.0
        %9004 = vmatpush.msra.mxu0 %v485
        %9005 = vmatmul.f32.gmra.mxu0 %v8987
        %v9006 = vpop.f32.mrf.mxu0
        %v9007 = vadd.f32 %v8127, %v9006
        %9008 = vdwg.mxu0
        %v9009 = vadd.f32 %v8182, %v2473
        %v9010 = vadd.f32 %v8237, %v2473
        %v9011 = vadd.f32 %v8292, %v2473
        %v9012 = vadd.f32 %v8347, %v2473
        %v9013 = vadd.f32 %v8402, %v2473
        %v9014 = vadd.f32 %v8457, %v2473
        %v9015 = vadd.f32 %v8512, %v2473
        %v9016 = vadd.f32 %v8567, %v2473
        %v9017 = vadd.f32 %v8622, %v2473
        %v9018 = vadd.f32 %v8677, %v2473
        %v9019 = vadd.f32 %v8732, %v2473
        %v9020 = vadd.f32 %v8787, %v2473
        %v9021 = vadd.f32 %v8842, %v2473
        %v9022 = vadd.f32 %v8897, %v2473
        %v9023 = vadd.f32 %v8952, %v2473
        %v9024 = vadd.f32 %v9007, %v2473
        %v9025 = vrot.slane %v9011, 4
        %v9026 = vsel %vm283, %v9025, %v9009
        %v9027 = vrot.slane %v9009, 4
        %v9028 = vsel %vm283, %v9011, %v9027
        %v9030 = vunpack.c.l.s4 1983009808
        %v9031 = vunpack.c.0.s8 %v9030
        %v9032 = vperm.slane %v9026, %v9031
        %v9034 = vunpack.c.l.s4 1983009808
        %v9035 = vunpack.c.0.s8 %v9034
        %v9036 = vperm.slane %v9028, %v9035
        %v9037 = vrot.slane %v9012, 4
        %v9038 = vsel %vm283, %v9037, %v9010
        %v9039 = vrot.slane %v9010, 4
        %v9040 = vsel %vm283, %v9012, %v9039
        %v9042 = vunpack.c.l.s4 1983009808
        %v9043 = vunpack.c.0.s8 %v9042
        %v9044 = vperm.slane %v9038, %v9043
        %v9046 = vunpack.c.l.s4 1983009808
        %v9047 = vunpack.c.0.s8 %v9046
        %v9048 = vperm.slane %v9040, %v9047
        %v9049 = vrot.slane %v9015, 4
        %v9050 = vsel %vm283, %v9049, %v9013
        %v9051 = vrot.slane %v9013, 4
        %v9052 = vsel %vm283, %v9015, %v9051
        %v9054 = vunpack.c.l.s4 1983009808
        %v9055 = vunpack.c.0.s8 %v9054
        %v9056 = vperm.slane %v9050, %v9055
        %v9058 = vunpack.c.l.s4 1983009808
        %v9059 = vunpack.c.0.s8 %v9058
        %v9060 = vperm.slane %v9052, %v9059
        %v9061 = vrot.slane %v9016, 4
        %v9062 = vsel %vm283, %v9061, %v9014
        %v9063 = vrot.slane %v9014, 4
        %v9064 = vsel %vm283, %v9016, %v9063
        %v9066 = vunpack.c.l.s4 1983009808
        %v9067 = vunpack.c.0.s8 %v9066
        %v9068 = vperm.slane %v9062, %v9067
        %v9070 = vunpack.c.l.s4 1983009808
        %v9071 = vunpack.c.0.s8 %v9070
        %v9072 = vperm.slane %v9064, %v9071
        %v9073 = vrot.slane %v9044, 4
        %v9074 = vsel %vm283, %v9073, %v9032
        %v9075 = vrot.slane %v9032, 4
        %v9076 = vsel %vm283, %v9044, %v9075
        %v9078 = vunpack.c.l.s4 1934713408
        %v9079 = vunpack.c.0.s8 %v9078
        %v9080 = vperm.slane %v9074, %v9079
        %v9082 = vunpack.c.l.s4 1934713408
        %v9083 = vunpack.c.0.s8 %v9082
        %v9084 = vperm.slane %v9076, %v9083
        %v9085 = vrot.slane %v9048, 4
        %v9086 = vsel %vm283, %v9085, %v9036
        %v9087 = vrot.slane %v9036, 4
        %v9088 = vsel %vm283, %v9048, %v9087
        %v9090 = vunpack.c.l.s4 1934713408
        %v9091 = vunpack.c.0.s8 %v9090
        %v9092 = vperm.slane %v9086, %v9091
        %v9094 = vunpack.c.l.s4 1934713408
        %v9095 = vunpack.c.0.s8 %v9094
        %v9096 = vperm.slane %v9088, %v9095
        %v9097 = vrot.slane %v9068, 4
        %v9098 = vsel %vm283, %v9097, %v9056
        %v9099 = vrot.slane %v9056, 4
        %v9100 = vsel %vm283, %v9068, %v9099
        %v9102 = vunpack.c.l.s4 1934713408
        %v9103 = vunpack.c.0.s8 %v9102
        %v9104 = vperm.slane %v9098, %v9103
        %v9106 = vunpack.c.l.s4 1934713408
        %v9107 = vunpack.c.0.s8 %v9106
        %v9108 = vperm.slane %v9100, %v9107
        %v9109 = vrot.slane %v9072, 4
        %v9110 = vsel %vm283, %v9109, %v9060
        %v9111 = vrot.slane %v9060, 4
        %v9112 = vsel %vm283, %v9072, %v9111
        %v9114 = vunpack.c.l.s4 1934713408
        %v9115 = vunpack.c.0.s8 %v9114
        %v9116 = vperm.slane %v9110, %v9115
        %v9118 = vunpack.c.l.s4 1934713408
        %v9119 = vunpack.c.0.s8 %v9118
        %v9120 = vperm.slane %v9112, %v9119
        %v9121 = vrot.slane %v9104, 4
        %v9122 = vsel %vm283, %v9121, %v9080
        %v9123 = vrot.slane %v9080, 4
        %v9124 = vsel %vm283, %v9104, %v9123
        %v9125 = vrot.slane %v9108, 4
        %v9126 = vsel %vm283, %v9125, %v9084
        %v9127 = vrot.slane %v9084, 4
        %v9128 = vsel %vm283, %v9108, %v9127
        %v9129 = vrot.slane %v9116, 4
        %v9130 = vsel %vm283, %v9129, %v9092
        %v9131 = vrot.slane %v9092, 4
        %v9132 = vsel %vm283, %v9116, %v9131
        %v9133 = vrot.slane %v9120, 4
        %v9134 = vsel %vm283, %v9133, %v9096
        %v9135 = vrot.slane %v9096, 4
        %v9136 = vsel %vm283, %v9120, %v9135
        %v9137 = vrot.slane %v9019, 4
        %v9138 = vsel %vm283, %v9137, %v9017
        %v9139 = vrot.slane %v9017, 4
        %v9140 = vsel %vm283, %v9019, %v9139
        %v9142 = vunpack.c.l.s4 1983009808
        %v9143 = vunpack.c.0.s8 %v9142
        %v9144 = vperm.slane %v9138, %v9143
        %v9146 = vunpack.c.l.s4 1983009808
        %v9147 = vunpack.c.0.s8 %v9146
        %v9148 = vperm.slane %v9140, %v9147
        %v9149 = vrot.slane %v9020, 4
        %v9150 = vsel %vm283, %v9149, %v9018
        %v9151 = vrot.slane %v9018, 4
        %v9152 = vsel %vm283, %v9020, %v9151
        %v9154 = vunpack.c.l.s4 1983009808
        %v9155 = vunpack.c.0.s8 %v9154
        %v9156 = vperm.slane %v9150, %v9155
        %v9158 = vunpack.c.l.s4 1983009808
        %v9159 = vunpack.c.0.s8 %v9158
        %v9160 = vperm.slane %v9152, %v9159
        %v9161 = vrot.slane %v9023, 4
        %v9162 = vsel %vm283, %v9161, %v9021
        %v9163 = vrot.slane %v9021, 4
        %v9164 = vsel %vm283, %v9023, %v9163
        %v9166 = vunpack.c.l.s4 1983009808
        %v9167 = vunpack.c.0.s8 %v9166
        %v9168 = vperm.slane %v9162, %v9167
        %v9170 = vunpack.c.l.s4 1983009808
        %v9171 = vunpack.c.0.s8 %v9170
        %v9172 = vperm.slane %v9164, %v9171
        %v9173 = vrot.slane %v9024, 4
        %v9174 = vsel %vm283, %v9173, %v9022
        %v9175 = vrot.slane %v9022, 4
        %v9176 = vsel %vm283, %v9024, %v9175
        %v9178 = vunpack.c.l.s4 1983009808
        %v9179 = vunpack.c.0.s8 %v9178
        %v9180 = vperm.slane %v9174, %v9179
        %v9182 = vunpack.c.l.s4 1983009808
        %v9183 = vunpack.c.0.s8 %v9182
        %v9184 = vperm.slane %v9176, %v9183
        %v9185 = vrot.slane %v9156, 4
        %v9186 = vsel %vm283, %v9185, %v9144
        %v9187 = vrot.slane %v9144, 4
        %v9188 = vsel %vm283, %v9156, %v9187
        %v9190 = vunpack.c.l.s4 1934713408
        %v9191 = vunpack.c.0.s8 %v9190
        %v9192 = vperm.slane %v9186, %v9191
        %v9194 = vunpack.c.l.s4 1934713408
        %v9195 = vunpack.c.0.s8 %v9194
        %v9196 = vperm.slane %v9188, %v9195
        %v9197 = vrot.slane %v9160, 4
        %v9198 = vsel %vm283, %v9197, %v9148
        %v9199 = vrot.slane %v9148, 4
        %v9200 = vsel %vm283, %v9160, %v9199
        %v9202 = vunpack.c.l.s4 1934713408
        %v9203 = vunpack.c.0.s8 %v9202
        %v9204 = vperm.slane %v9198, %v9203
        %v9206 = vunpack.c.l.s4 1934713408
        %v9207 = vunpack.c.0.s8 %v9206
        %v9208 = vperm.slane %v9200, %v9207
        %v9209 = vrot.slane %v9180, 4
        %v9210 = vsel %vm283, %v9209, %v9168
        %v9211 = vrot.slane %v9168, 4
        %v9212 = vsel %vm283, %v9180, %v9211
        %v9214 = vunpack.c.l.s4 1934713408
        %v9215 = vunpack.c.0.s8 %v9214
        %v9216 = vperm.slane %v9210, %v9215
        %v9218 = vunpack.c.l.s4 1934713408
        %v9219 = vunpack.c.0.s8 %v9218
        %v9220 = vperm.slane %v9212, %v9219
        %v9221 = vrot.slane %v9184, 4
        %v9222 = vsel %vm283, %v9221, %v9172
        %v9223 = vrot.slane %v9172, 4
        %v9224 = vsel %vm283, %v9184, %v9223
        %v9226 = vunpack.c.l.s4 1934713408
        %v9227 = vunpack.c.0.s8 %v9226
        %v9228 = vperm.slane %v9222, %v9227
        %v9230 = vunpack.c.l.s4 1934713408
        %v9231 = vunpack.c.0.s8 %v9230
        %v9232 = vperm.slane %v9224, %v9231
        %v9233 = vrot.slane %v9216, 4
        %v9234 = vsel %vm283, %v9233, %v9192
        %v9235 = vrot.slane %v9192, 4
        %v9236 = vsel %vm283, %v9216, %v9235
        %v9237 = vrot.slane %v9220, 4
        %v9238 = vsel %vm283, %v9237, %v9196
        %v9239 = vrot.slane %v9196, 4
        %v9240 = vsel %vm283, %v9220, %v9239
        %v9241 = vrot.slane %v9228, 4
        %v9242 = vsel %vm283, %v9241, %v9204
        %v9243 = vrot.slane %v9204, 4
        %v9244 = vsel %vm283, %v9228, %v9243
        %v9245 = vrot.slane %v9232, 4
        %v9246 = vsel %vm283, %v9245, %v9208
        %v9247 = vrot.slane %v9208, 4
        %v9248 = vsel %vm283, %v9232, %v9247
        %9265 = vrot.lane.b32.xlu0 %v9122, 16
        %v9266 = vpop.permute.xlu0 %9265
        %9267 = vrot.lane.b32.xlu0 %v9234, 16
        %v9268 = vpop.permute.xlu0 %9267
        %9269 = vrot.lane.b32.xlu0 %v9124, 16
        %v9270 = vpop.permute.xlu0 %9269
        %9271 = vrot.lane.b32.xlu0 %v9236, 16
        %v9272 = vpop.permute.xlu0 %9271
        %9273 = vrot.lane.b32.xlu0 %v9126, 16
        %v9274 = vpop.permute.xlu0 %9273
        %9275 = vrot.lane.b32.xlu0 %v9238, 16
        %v9276 = vpop.permute.xlu0 %9275
        %9277 = vrot.lane.b32.xlu0 %v9128, 16
        %v9278 = vpop.permute.xlu0 %9277
        %9279 = vrot.lane.b32.xlu0 %v9240, 16
        %v9280 = vpop.permute.xlu0 %9279
        %9281 = vrot.lane.b32.xlu0 %v9130, 16
        %v9282 = vpop.permute.xlu0 %9281
        %9283 = vrot.lane.b32.xlu0 %v9242, 16
        %v9284 = vpop.permute.xlu0 %9283
        %9285 = vrot.lane.b32.xlu0 %v9132, 16
        %v9286 = vpop.permute.xlu0 %9285
        %9287 = vrot.lane.b32.xlu0 %v9244, 16
        %v9288 = vpop.permute.xlu0 %9287
        %9289 = vrot.lane.b32.xlu0 %v9134, 16
        %v9290 = vpop.permute.xlu0 %9289
        %9291 = vrot.lane.b32.xlu0 %v9246, 16
        %v9292 = vpop.permute.xlu0 %9291
        %9293 = vrot.lane.b32.xlu0 %v9136, 16
        %v9294 = vpop.permute.xlu0 %9293
        %9295 = vrot.lane.b32.xlu0 %v9248, 16
        %v9296 = vpop.permute.xlu0 %9295
        %9313 = vst.msk [vmem:[%s7092] sm:$0xff] %vm4935, %v9266
        %9314 = vst.msk [vmem:[%s7092 + $0x8] sm:$0xff] %vm4935, %v9268
        %9315 = vst.msk [vmem:[%s7092 + $0x20] sm:$0xff] %vm4935, %v9270
        %9316 = vst.msk [vmem:[%s7092 + $0x28] sm:$0xff] %vm4935, %v9272
        %9317 = vst.msk [vmem:[%s7092 + $0x40] sm:$0xff] %vm4935, %v9274
        %9318 = vst.msk [vmem:[%s7092 + $0x48] sm:$0xff] %vm4935, %v9276
        %9319 = vst.msk [vmem:[%s7092 + $0x60] sm:$0xff] %vm4935, %v9278
        %9320 = vst.msk [vmem:[%s7092 + $0x68] sm:$0xff] %vm4935, %v9280
        %9321 = vst.msk [vmem:[%s7092 + $0x80] sm:$0xff] %vm4935, %v9282
        %9322 = vst.msk [vmem:[%s7092 + $0x88] sm:$0xff] %vm4935, %v9284
        %9323 = vst.msk [vmem:[%s7092 + $0xa0] sm:$0xff] %vm4935, %v9286
        %9324 = vst.msk [vmem:[%s7092 + $0xa8] sm:$0xff] %vm4935, %v9288
        %9325 = vst.msk [vmem:[%s7092 + $0xc0] sm:$0xff] %vm4935, %v9290
        %9326 = vst.msk [vmem:[%s7092 + $0xc8] sm:$0xff] %vm4935, %v9292
        %9327 = vst.msk [vmem:[%s7092 + $0xe0] sm:$0xff] %vm4935, %v9294
        %9328 = vst.msk [vmem:[%s7092 + $0xe8] sm:$0xff] %vm4935, %v9296
        %s9329 = sand.u32 %s128, 1
        %s9330 = sand.u32 %s128, 1
        %s9331 = smul.addr %s9330, 256
        %s9332 = scalar_lea.vmem [#allocation3], %s9331
        // Predicated region
        $region75: #{deconv3d_k2s2.1} parent=69 // pred_check
          %p9333 = pneg %p138
        $region76: #{deconv3d_k2s2.1} parent=69 // pred_check_branch
          %9335 = sbr.rel (%p9333) target = $region78
        $region77: #{deconv3d_k2s2.1} parent=69 // pred_region
          %s9336 = smul.addr %s20, 4
          %s9337 = smul.addr %s19, 512
          %s9338 = sadd.s32 %s9336, %s9337
          %s9339 = smul.addr %s9338, 8
          %s9340 = scalar_lea.vmem %s4, %s9339
          // Predicated region
          $region79: #{deconv3d_k2s2.1} parent=77 // pred_check
            _
          $region80: #{deconv3d_k2s2.1} parent=77 // pred_check_branch
            %9342 = sbr.rel (0) target = $region82
          $region81: #{deconv3d_k2s2.1} parent=77 // pred_region
            // Predicated region
            $region83: #{deconv3d_k2s2.1} parent=81 // pred_check
              _
            $region84: #{deconv3d_k2s2.1} parent=81 // pred_check_branch
              %9344 = sbr.rel (0) target = $region86
            $region85: #{deconv3d_k2s2.1} parent=81 // pred_region
              // Predicated region
              $region98: #{deconv3d_k2s2.1} parent=85 // pred_check
                _
              $region99: #{deconv3d_k2s2.1} parent=85 // pred_check_branch
                %9422 = sbr.rel (0) target = $region101
              $region100: #{deconv3d_k2s2.1} parent=85 // pred_region
                loop: start=0, step=1, limit=1
                $region102: #{deconv3d_k2s2.1} parent=100 // loop_pre_header
                  _
                $region103: #{deconv3d_k2s2.1} parent=100 // loop_header
                  %s9424 = sphi 0, %s9428
                  %p9425 = scmp.ge.s32.totalorder %s9424, 1
                  %s9429 = sphi %s9332, %s9332
                  %s9430 = sphi %s9340, %s9340
                $region104: #{deconv3d_k2s2.1} parent=100 // loop_header_branch
                  %9427 = sbr.rel (%p9425) target = $region108
                $region105: #{deconv3d_k2s2.1} parent=100 // loop_body
                  %v9431 = vld [vmem:[%s9429] sm:$0xff]
                  %9432 = vst [vmem:[%s9430] sm:$0xff] %v9431
                  %v9433 = vld [vmem:[%s9429 + $0x8] sm:$0xff]
                  %9434 = vst [vmem:[%s9430 + $0x8] sm:$0xff] %v9433
                  %v9435 = vld [vmem:[%s9429 + $0x10] sm:$0xff]
                  %9436 = vst [vmem:[%s9430 + $0x10] sm:$0xff] %v9435
                  %v9437 = vld [vmem:[%s9429 + $0x18] sm:$0xff]
                  %9438 = vst [vmem:[%s9430 + $0x18] sm:$0xff] %v9437
                  %v9439 = vld [vmem:[%s9429 + $0x20] sm:$0xff]
                  %9440 = vst [vmem:[%s9430 + $0x200] sm:$0xff] %v9439
                  %v9441 = vld [vmem:[%s9429 + $0x28] sm:$0xff]
                  %9442 = vst [vmem:[%s9430 + $0x208] sm:$0xff] %v9441
                  %v9443 = vld [vmem:[%s9429 + $0x30] sm:$0xff]
                  %9444 = vst [vmem:[%s9430 + $0x210] sm:$0xff] %v9443
                  %v9445 = vld [vmem:[%s9429 + $0x38] sm:$0xff]
                  %9446 = vst [vmem:[%s9430 + $0x218] sm:$0xff] %v9445
                  %v9447 = vld [vmem:[%s9429 + $0x40] sm:$0xff]
                  %9448 = vst [vmem:[%s9430 + $0x400] sm:$0xff] %v9447
                  %v9449 = vld [vmem:[%s9429 + $0x48] sm:$0xff]
                  %9450 = vst [vmem:[%s9430 + $0x408] sm:$0xff] %v9449
                  %v9451 = vld [vmem:[%s9429 + $0x50] sm:$0xff]
                  %9452 = vst [vmem:[%s9430 + $0x410] sm:$0xff] %v9451
                  %v9453 = vld [vmem:[%s9429 + $0x58] sm:$0xff]
                  %9454 = vst [vmem:[%s9430 + $0x418] sm:$0xff] %v9453
                  %v9455 = vld [vmem:[%s9429 + $0x60] sm:$0xff]
                  %9456 = vst [vmem:[%s9430 + $0x600] sm:$0xff] %v9455
                  %v9457 = vld [vmem:[%s9429 + $0x68] sm:$0xff]
                  %9458 = vst [vmem:[%s9430 + $0x608] sm:$0xff] %v9457
                  %v9459 = vld [vmem:[%s9429 + $0x70] sm:$0xff]
                  %9460 = vst [vmem:[%s9430 + $0x610] sm:$0xff] %v9459
                  %v9461 = vld [vmem:[%s9429 + $0x78] sm:$0xff]
                  %9462 = vst [vmem:[%s9430 + $0x618] sm:$0xff] %v9461
                  %v9463 = vld [vmem:[%s9429 + $0x80] sm:$0xff]
                  %9464 = vst [vmem:[%s9430 + $0x800] sm:$0xff] %v9463
                  %v9465 = vld [vmem:[%s9429 + $0x88] sm:$0xff]
                  %9466 = vst [vmem:[%s9430 + $0x808] sm:$0xff] %v9465
                  %v9467 = vld [vmem:[%s9429 + $0x90] sm:$0xff]
                  %9468 = vst [vmem:[%s9430 + $0x810] sm:$0xff] %v9467
                  %v9469 = vld [vmem:[%s9429 + $0x98] sm:$0xff]
                  %9470 = vst [vmem:[%s9430 + $0x818] sm:$0xff] %v9469
                  %v9471 = vld [vmem:[%s9429 + $0xa0] sm:$0xff]
                  %9472 = vst [vmem:[%s9430 + $0xa00] sm:$0xff] %v9471
                  %v9473 = vld [vmem:[%s9429 + $0xa8] sm:$0xff]
                  %9474 = vst [vmem:[%s9430 + $0xa08] sm:$0xff] %v9473
                  %v9475 = vld [vmem:[%s9429 + $0xb0] sm:$0xff]
                  %9476 = vst [vmem:[%s9430 + $0xa10] sm:$0xff] %v9475
                  %v9477 = vld [vmem:[%s9429 + $0xb8] sm:$0xff]
                  %9478 = vst [vmem:[%s9430 + $0xa18] sm:$0xff] %v9477
                  %v9479 = vld [vmem:[%s9429 + $0xc0] sm:$0xff]
                  %9480 = vst [vmem:[%s9430 + $0xc00] sm:$0xff] %v9479
                  %v9481 = vld [vmem:[%s9429 + $0xc8] sm:$0xff]
                  %9482 = vst [vmem:[%s9430 + $0xc08] sm:$0xff] %v9481
                  %v9483 = vld [vmem:[%s9429 + $0xd0] sm:$0xff]
                  %9484 = vst [vmem:[%s9430 + $0xc10] sm:$0xff] %v9483
                  %v9485 = vld [vmem:[%s9429 + $0xd8] sm:$0xff]
                  %9486 = vst [vmem:[%s9430 + $0xc18] sm:$0xff] %v9485
                  %v9487 = vld [vmem:[%s9429 + $0xe0] sm:$0xff]
                  %9488 = vst [vmem:[%s9430 + $0xe00] sm:$0xff] %v9487
                  %v9489 = vld [vmem:[%s9429 + $0xe8] sm:$0xff]
                  %9490 = vst [vmem:[%s9430 + $0xe08] sm:$0xff] %v9489
                  %v9491 = vld [vmem:[%s9429 + $0xf0] sm:$0xff]
                  %9492 = vst [vmem:[%s9430 + $0xe10] sm:$0xff] %v9491
                  %v9493 = vld [vmem:[%s9429 + $0xf8] sm:$0xff]
                  %9494 = vst [vmem:[%s9430 + $0xe18] sm:$0xff] %v9493
                $region106: #{deconv3d_k2s2.1} parent=100 // loop_footer
                  %s9428 = sadd.s32 1, %s9424
                $region107: #{deconv3d_k2s2.1} parent=100 // loop_footer_branch
                  %9423 = sbr.rel target = $region103
                $region108: #{deconv3d_k2s2.1} parent=100 // loop_exit
                  _
              $region101: #{deconv3d_k2s2.1} parent=85 // pred_fallthru
                _
              // Predicated region
              $region109: #{deconv3d_k2s2.1} parent=85 // pred_check
                _
              $region110: #{deconv3d_k2s2.1} parent=85 // pred_check_branch
                %9496 = sbr.rel target = $region112
              $region111: #{deconv3d_k2s2.1} parent=85 // pred_region
                _
              $region112: #{deconv3d_k2s2.1} parent=85 // pred_fallthru
                _
            $region86: #{deconv3d_k2s2.1} parent=81 // pred_fallthru
              _
            // Predicated region
            $region87: #{deconv3d_k2s2.1} parent=81 // pred_check
              _
            $region88: #{deconv3d_k2s2.1} parent=81 // pred_check_branch
              %9346 = sbr.rel target = $region90
            $region89: #{deconv3d_k2s2.1} parent=81 // pred_region
              %s9348 = ssub.s32 256, 1
              loop: start=0, step=1, limit=1
              $region91: #{deconv3d_k2s2.1} parent=89 // loop_pre_header
                _
              $region92: #{deconv3d_k2s2.1} parent=89 // loop_header
                %s9350 = sphi 0, %s9354
                %p9351 = scmp.ge.s32.totalorder %s9350, 1
                %s9355 = sphi %s9332, %s9332
                %s9356 = sphi %s9340, %s9340
              $region93: #{deconv3d_k2s2.1} parent=89 // loop_header_branch
                %9353 = sbr.rel (%p9351) target = $region97
              $region94: #{deconv3d_k2s2.1} parent=89 // loop_body
                %v9357 = vld [vmem:[%s9355] sm:%s9348]
                %9358 = vst [vmem:[%s9356] sm:%s9348] %v9357
                %v9359 = vld [vmem:[%s9355 + $0x8] sm:%s9348]
                %9360 = vst [vmem:[%s9356 + $0x8] sm:%s9348] %v9359
                %v9361 = vld [vmem:[%s9355 + $0x10] sm:%s9348]
                %9362 = vst [vmem:[%s9356 + $0x10] sm:%s9348] %v9361
                %v9363 = vld [vmem:[%s9355 + $0x18] sm:%s9348]
                %9364 = vst [vmem:[%s9356 + $0x18] sm:%s9348] %v9363
                %v9365 = vld [vmem:[%s9355 + $0x20] sm:%s9348]
                %9366 = vst [vmem:[%s9356 + $0x200] sm:%s9348] %v9365
                %v9367 = vld [vmem:[%s9355 + $0x28] sm:%s9348]
                %9368 = vst [vmem:[%s9356 + $0x208] sm:%s9348] %v9367
                %v9369 = vld [vmem:[%s9355 + $0x30] sm:%s9348]
                %9370 = vst [vmem:[%s9356 + $0x210] sm:%s9348] %v9369
                %v9371 = vld [vmem:[%s9355 + $0x38] sm:%s9348]
                %9372 = vst [vmem:[%s9356 + $0x218] sm:%s9348] %v9371
                %v9373 = vld [vmem:[%s9355 + $0x40] sm:%s9348]
                %9374 = vst [vmem:[%s9356 + $0x400] sm:%s9348] %v9373
                %v9375 = vld [vmem:[%s9355 + $0x48] sm:%s9348]
                %9376 = vst [vmem:[%s9356 + $0x408] sm:%s9348] %v9375
                %v9377 = vld [vmem:[%s9355 + $0x50] sm:%s9348]
                %9378 = vst [vmem:[%s9356 + $0x410] sm:%s9348] %v9377
                %v9379 = vld [vmem:[%s9355 + $0x58] sm:%s9348]
                %9380 = vst [vmem:[%s9356 + $0x418] sm:%s9348] %v9379
                %v9381 = vld [vmem:[%s9355 + $0x60] sm:%s9348]
                %9382 = vst [vmem:[%s9356 + $0x600] sm:%s9348] %v9381
                %v9383 = vld [vmem:[%s9355 + $0x68] sm:%s9348]
                %9384 = vst [vmem:[%s9356 + $0x608] sm:%s9348] %v9383
                %v9385 = vld [vmem:[%s9355 + $0x70] sm:%s9348]
                %9386 = vst [vmem:[%s9356 + $0x610] sm:%s9348] %v9385
                %v9387 = vld [vmem:[%s9355 + $0x78] sm:%s9348]
                %9388 = vst [vmem:[%s9356 + $0x618] sm:%s9348] %v9387
                %v9389 = vld [vmem:[%s9355 + $0x80] sm:%s9348]
                %9390 = vst [vmem:[%s9356 + $0x800] sm:%s9348] %v9389
                %v9391 = vld [vmem:[%s9355 + $0x88] sm:%s9348]
                %9392 = vst [vmem:[%s9356 + $0x808] sm:%s9348] %v9391
                %v9393 = vld [vmem:[%s9355 + $0x90] sm:%s9348]
                %9394 = vst [vmem:[%s9356 + $0x810] sm:%s9348] %v9393
                %v9395 = vld [vmem:[%s9355 + $0x98] sm:%s9348]
                %9396 = vst [vmem:[%s9356 + $0x818] sm:%s9348] %v9395
                %v9397 = vld [vmem:[%s9355 + $0xa0] sm:%s9348]
                %9398 = vst [vmem:[%s9356 + $0xa00] sm:%s9348] %v9397
                %v9399 = vld [vmem:[%s9355 + $0xa8] sm:%s9348]
                %9400 = vst [vmem:[%s9356 + $0xa08] sm:%s9348] %v9399
                %v9401 = vld [vmem:[%s9355 + $0xb0] sm:%s9348]
                %9402 = vst [vmem:[%s9356 + $0xa10] sm:%s9348] %v9401
                %v9403 = vld [vmem:[%s9355 + $0xb8] sm:%s9348]
                %9404 = vst [vmem:[%s9356 + $0xa18] sm:%s9348] %v9403
                %v9405 = vld [vmem:[%s9355 + $0xc0] sm:%s9348]
                %9406 = vst [vmem:[%s9356 + $0xc00] sm:%s9348] %v9405
                %v9407 = vld [vmem:[%s9355 + $0xc8] sm:%s9348]
                %9408 = vst [vmem:[%s9356 + $0xc08] sm:%s9348] %v9407
                %v9409 = vld [vmem:[%s9355 + $0xd0] sm:%s9348]
                %9410 = vst [vmem:[%s9356 + $0xc10] sm:%s9348] %v9409
                %v9411 = vld [vmem:[%s9355 + $0xd8] sm:%s9348]
                %9412 = vst [vmem:[%s9356 + $0xc18] sm:%s9348] %v9411
                %v9413 = vld [vmem:[%s9355 + $0xe0] sm:%s9348]
                %9414 = vst [vmem:[%s9356 + $0xe00] sm:%s9348] %v9413
                %v9415 = vld [vmem:[%s9355 + $0xe8] sm:%s9348]
                %9416 = vst [vmem:[%s9356 + $0xe08] sm:%s9348] %v9415
                %v9417 = vld [vmem:[%s9355 + $0xf0] sm:%s9348]
                %9418 = vst [vmem:[%s9356 + $0xe10] sm:%s9348] %v9417
                %v9419 = vld [vmem:[%s9355 + $0xf8] sm:%s9348]
                %9420 = vst [vmem:[%s9356 + $0xe18] sm:%s9348] %v9419
              $region95: #{deconv3d_k2s2.1} parent=89 // loop_footer
                %s9354 = sadd.s32 1, %s9350
              $region96: #{deconv3d_k2s2.1} parent=89 // loop_footer_branch
                %9349 = sbr.rel target = $region92
              $region97: #{deconv3d_k2s2.1} parent=89 // loop_exit
                _
            $region90: #{deconv3d_k2s2.1} parent=81 // pred_fallthru
              _
          $region82: #{deconv3d_k2s2.1} parent=77 // pred_fallthru
            _
          %9497 = vnop
        $region78: #{deconv3d_k2s2.1} parent=69 // pred_fallthru
          _
      $region70: #{deconv3d_k2s2.1} parent=5 // pred_fallthru
        _
      %p9498 = scmp.le.s32.totalorder 2, %s10
      // Predicated region
      $region113: #{deconv3d_k2s2.1} parent=5 // pred_check
        %p9499 = pneg %p9498
      $region114: #{deconv3d_k2s2.1} parent=5 // pred_check_branch
        %9501 = sbr.rel (%p9499) target = $region116
      $region115: #{deconv3d_k2s2.1} parent=5 // pred_region
        %s9502 = ssub.s32 %s10, 2
        // Predicated region
        $region117: #{deconv3d_k2s2.1} parent=115 // pred_check
          %p9503 = pneg %p144
        $region118: #{deconv3d_k2s2.1} parent=115 // pred_check_branch
          %9505 = sbr.rel (%p9503) target = $region120
        $region119: #{deconv3d_k2s2.1} parent=115 // pred_region
          %s9506 = sand.u32 %s129, 1
          %s9507 = sand.u32 %s129, 1
          %s9508 = smul.addr %s9507, 256
          %s9509 = scalar_lea.vmem [#allocation3], %s9508
        $region120: #{deconv3d_k2s2.1} parent=115 // pred_fallthru
          _
      $region116: #{deconv3d_k2s2.1} parent=5 // pred_fallthru
        _
    $region6: #{deconv3d_k2s2.1} parent=1 // loop_footer
      %s14 = sadd.s32 1, %s10
    $region7: #{deconv3d_k2s2.1} parent=1 // loop_footer_branch
      %9 = sbr.rel target = $region3
    $region8: #{deconv3d_k2s2.1} parent=1 // loop_exit
      _

// kernel: deconv3d_k2s2.1
$region0: #{deconv3d_k2s2.1}
  #allocation0 [shape = 'u32[]', space=smem, size = 0x4, offset = 0x4, fixed_abs, tag = 'smem constant byte address 0x4 - core index']
  #allocation1 [shape = 'u32[72,128]{1,0:T(1,128)}', space=vmem, size = 0x9000, scoped, tag = 'internal scratch']
  %s0 = inlined_call_operand.vmem [shape: f32[64,4], index: 0, kind: input, shape index: {}]
  %s1 = inlined_call_operand.vmem [shape: f32[64,1], index: 1, kind: input, shape index: {}]
  %s2 = inlined_call_operand.vmem [shape: f32[2,4,2048], index: 2, kind: input, shape index: {}]
  %s3 = inlined_call_operand.vmem [shape: f32[2,64,2048], index: 3, kind: output, shape index: {}]
  %s4 = sld [smem:[#allocation0]]
  $region45: #{deconv3d_k2s2.1} parent=0
    _
  %s6 = ssub.s32 1, %s4
  %s7 = scalar_select 0, %s6, %s4
  loop: start=0, step=1, limit=4
  $region2: #{deconv3d_k2s2.1} parent=0 // loop_pre_header
    _
  $region3: #{deconv3d_k2s2.1} parent=0 // loop_header
    %s9 = sphi 0, %s13
    %p10 = scmp.ge.s32.totalorder %s9, 4
    %s16 = sphi 0, %s28
    %s17 = sphi 0, %s24
    %s18 = sphi 0, %s16
    %s19 = sphi 0, %s17
    %s20 = sphi 0, %s18
    %s21 = sphi 0, %s19
    %s29 = sphi 0, %s29
    %s31 = sphi 0, %s29
    %s32 = sphi 0, %s31
    %s46 = sphi 0, %s32
    %s50 = sphi 0, %s50
    %s52 = sphi 0, %s50
    %s53 = sphi 0, %s52
    %s67 = sphi 0, %s53
    %s75 = sphi 0, %s77
    %s78 = sphi 0, %s75
    %s79 = sphi 0, %s78
    %s95 = sphi 0, %s79
    %s103 = sphi 0, %s105
    %s106 = sphi 0, %s103
    %s107 = sphi 0, %s106
    %s123 = sphi 0, %s107
  $region4: #{deconv3d_k2s2.1} parent=0 // loop_header_branch
    %12 = sbr.rel (%p10) target = $region8
  $region5: #{deconv3d_k2s2.1} parent=0 // loop_body
    %s14 = ssub.s32 %s9, 1
    %s15 = ssub.s32 %s9, 2
    %s22 = sadd.s32 1, %s17
    %p23 = scmp.ge.s32.totalorder %s22, 1
    %s24 = scalar_select %p23, 0, %s22
    %s25 = sadd.s32 1, %s16
    %s26 = scalar_select %p23, %s25, %s16
    %p27 = scmp.ge.s32.totalorder %s26, 2
    %s28 = scalar_select %p27, 0, %s26
    %s30 = sadd.s32 %s29, 1
    %p33 = scmp.eq.s32.totalorder %s9, 1
    %p34 = scmp.ne.s32.totalorder %s29, %s31
    %p35 = scmp.eq.s32.totalorder %s9, 0
    %p36 = por %p34, %p35
    %p37 = scmp.ne.s32.totalorder %s29, %s31
    %p38 = scmp.eq.s32.totalorder %s14, 1
    %p39 = por %p37, %p38
    %p40 = scmp.ne.s32.totalorder %s31, %s32
    %p41 = scmp.eq.s32.totalorder %s14, 0
    %p42 = por %p40, %p41
    %p43 = scmp.ne.s32.totalorder %s31, %s32
    %p44 = scmp.eq.s32.totalorder %s15, 1
    %p45 = por %p43, %p44
    %p47 = scmp.ne.s32.totalorder %s32, %s46
    %p48 = scmp.eq.s32.totalorder %s15, 0
    %p49 = por %p47, %p48
    %s51 = sadd.s32 %s50, 1
    %p54 = scmp.eq.s32.totalorder %s9, 1
    %p55 = scmp.ne.s32.totalorder %s50, %s52
    %p56 = scmp.eq.s32.totalorder %s9, 0
    %p57 = por %p55, %p56
    %p58 = scmp.ne.s32.totalorder %s50, %s52
    %p59 = scmp.eq.s32.totalorder %s14, 1
    %p60 = por %p58, %p59
    %p61 = scmp.ne.s32.totalorder %s52, %s53
    %p62 = scmp.eq.s32.totalorder %s14, 0
    %p63 = por %p61, %p62
    %p64 = scmp.ne.s32.totalorder %s52, %s53
    %p65 = scmp.eq.s32.totalorder %s15, 1
    %p66 = por %p64, %p65
    %p68 = scmp.ne.s32.totalorder %s53, %s67
    %p69 = scmp.eq.s32.totalorder %s15, 0
    %p70 = por %p68, %p69
    %s71 = ssub.s32 %s16, %s28
    %s72 = ssub.s32 %s17, %s24
    %s73 = sor.u32 %s71, %s72
    %p74 = scmp.eq.s32.totalorder %s73, 0
    %s76 = sadd.s32 %s75, 1
    %s77 = scalar_select %p74, %s75, %s76
    %p80 = pneg %p74
    %p81 = scmp.eq.s32.totalorder %s9, 1
    %p82 = por %p80, %p81
    %p83 = scmp.ne.s32.totalorder %s75, %s78
    %p84 = scmp.eq.s32.totalorder %s9, 0
    %p85 = por %p83, %p84
    %p86 = scmp.ne.s32.totalorder %s75, %s78
    %p87 = scmp.eq.s32.totalorder %s14, 1
    %p88 = por %p86, %p87
    %p89 = scmp.ne.s32.totalorder %s78, %s79
    %p90 = scmp.eq.s32.totalorder %s14, 0
    %p91 = por %p89, %p90
    %p92 = scmp.ne.s32.totalorder %s78, %s79
    %p93 = scmp.eq.s32.totalorder %s15, 1
    %p94 = por %p92, %p93
    %p96 = scmp.ne.s32.totalorder %s79, %s95
    %p97 = scmp.eq.s32.totalorder %s15, 0
    %p98 = por %p96, %p97
    %s99 = ssub.s32 %s16, %s28
    %s100 = ssub.s32 %s17, %s24
    %s101 = sor.u32 %s99, %s100
    %p102 = scmp.eq.s32.totalorder %s101, 0
    %s104 = sadd.s32 %s103, 1
    %s105 = scalar_select %p102, %s103, %s104
    %p108 = pneg %p102
    %p109 = scmp.eq.s32.totalorder %s9, 1
    %p110 = por %p108, %p109
    %p111 = scmp.ne.s32.totalorder %s103, %s106
    %p112 = scmp.eq.s32.totalorder %s9, 0
    %p113 = por %p111, %p112
    %p114 = scmp.ne.s32.totalorder %s103, %s106
    %p115 = scmp.eq.s32.totalorder %s14, 1
    %p116 = por %p114, %p115
    %p117 = scmp.ne.s32.totalorder %s106, %s107
    %p118 = scmp.eq.s32.totalorder %s14, 0
    %p119 = por %p117, %p118
    %p120 = scmp.ne.s32.totalorder %s106, %s107
    %p121 = scmp.eq.s32.totalorder %s15, 1
    %p122 = por %p120, %p121
    %p124 = scmp.ne.s32.totalorder %s107, %s123
    %p125 = scmp.eq.s32.totalorder %s15, 0
    %p126 = por %p124, %p125
    %p127 = scmp.le.s32.totalorder 1, %s9
    %p128 = scmp.lt.s32.totalorder %s9, 3
    %p129 = pnand %p127, %p128
    %p130 = pneg %p129
    // Predicated region
    $region9: #{deconv3d_k2s2.1} parent=5 // pred_check
      _
    $region10: #{deconv3d_k2s2.1} parent=5 // pred_check_branch
      %132 = sbr.rel (%p129) target = $region12
    $region11: #{deconv3d_k2s2.1} parent=5 // pred_region
      %s133 = ssub.s32 %s9, 1
      // Predicated region
      $region13: #{deconv3d_k2s2.1} parent=11 // pred_check
        %p134 = pneg %p42
      $region14: #{deconv3d_k2s2.1} parent=11 // pred_check_branch
        %136 = sbr.rel (%p134) target = $region16
      $region15: #{deconv3d_k2s2.1} parent=11 // pred_region
        _
      $region16: #{deconv3d_k2s2.1} parent=11 // pred_fallthru
        _
      // Predicated region
      $region17: #{deconv3d_k2s2.1} parent=11 // pred_check
        %p137 = pneg %p63
      $region18: #{deconv3d_k2s2.1} parent=11 // pred_check_branch
        %139 = sbr.rel (%p137) target = $region20
      $region19: #{deconv3d_k2s2.1} parent=11 // pred_region
        _
      $region20: #{deconv3d_k2s2.1} parent=11 // pred_fallthru
        _
    $region12: #{deconv3d_k2s2.1} parent=5 // pred_fallthru
      _
    %p140 = scmp.lt.s32.totalorder %s9, 2
    // Predicated region
    $region21: #{deconv3d_k2s2.1} parent=5 // pred_check
      %p141 = pneg %p140
    $region22: #{deconv3d_k2s2.1} parent=5 // pred_check_branch
      %143 = sbr.rel (%p141) target = $region24
    $region23: #{deconv3d_k2s2.1} parent=5 // pred_region
      // Predicated region
      $region25: #{deconv3d_k2s2.1} parent=23 // pred_check
        %p144 = pneg %p85
      $region26: #{deconv3d_k2s2.1} parent=23 // pred_check_branch
        %146 = sbr.rel (%p144) target = $region28
      $region27: #{deconv3d_k2s2.1} parent=23 // pred_region
        %s147 = smul.u32 16, %s17
        %p148 = scmp.lt.s32.totalorder %s16, 1
        %s149 = scalar_select %p148, %s16, 1
        %p150 = scmp.lt.s32.totalorder %s147, 15
        %s151 = scalar_select %p150, %s147, 15
        %s152 = smul.addr %s149, 16
        %s153 = sadd.s32 %s151, %s152
        %s154 = smul.addr %s153, 4
        %s155 = scalar_lea.vmem %s2, %s154
        %s156 = smul.u32 16, %s17
      $region28: #{deconv3d_k2s2.1} parent=23 // pred_fallthru
        _
    $region24: #{deconv3d_k2s2.1} parent=5 // pred_fallthru
      _
    %p157 = scmp.le.s32.totalorder 1, %s9
    %p158 = scmp.lt.s32.totalorder %s9, 3
    %p159 = pnand %p157, %p158
    %p160 = pneg %p159
    // Predicated region
    $region29: #{deconv3d_k2s2.1} parent=5 // pred_check
      _
    $region30: #{deconv3d_k2s2.1} parent=5 // pred_check_branch
      %162 = sbr.rel (%p159) target = $region32
    $region31: #{deconv3d_k2s2.1} parent=5 // pred_region
      %s163 = ssub.s32 %s9, 1
      %p164 = pneg %p42
      %p165 = pneg %p39
      %p166 = pneg %p63
      %p167 = pneg %p60
      %s168 = smul.u32 16, %s19
      %p169 = scmp.lt.s32.totalorder %s18, 1
      %s170 = scalar_select %p169, %s18, 1
      %p171 = scmp.lt.s32.totalorder %s168, 15
      %s172 = scalar_select %p171, %s168, 15
      %s173 = smul.addr %s170, 16
      %s174 = sadd.s32 %s172, %s173
      %s175 = smul.addr %s174, 4
      %s176 = scalar_lea.vmem %s2, %s175
      %p177 = pneg %p91
      %p178 = pneg %p88
      %p179 = pneg %p119
      %p180 = pneg %p116
      %s181 = smul.u32 16, %s19
      %p182 = scmp.lt.s32.totalorder %s18, 1
      %s183 = scalar_select %p182, %s18, 1
      %p184 = scmp.lt.s32.totalorder %s181, 15
      %s185 = scalar_select %p184, %s181, 15
      %s186 = smul.addr %s183, 128
      %s187 = sadd.s32 %s185, %s186
      %s188 = smul.addr %s187, 8
      %s189 = scalar_lea.vmem %s3, %s188
      %s190 = smul.u32 16, %s19
      %p191 = scmp.lt.s32.totalorder %s18, 1
      %s192 = scalar_select %p191, %s18, 1
      %p193 = scmp.lt.s32.totalorder %s190, 15
      %s194 = scalar_select %p193, %s190, 15
      %s195 = smul.addr %s192, 16
      %s196 = sadd.s32 %s194, %s195
      %s197 = smul.addr %s196, 4
      %s198 = scalar_lea.vmem %s2, %s197
      %s199 = smul.u32 16, %s19
      %s200 = smul.u32 16, %s19
      %p201 = scmp.lt.s32.totalorder %s18, 1
      %s202 = scalar_select %p201, %s18, 1
      %p203 = scmp.lt.s32.totalorder %s200, 15
      %s204 = scalar_select %p203, %s200, 15
      %s205 = smul.addr %s202, 128
      %s206 = sadd.s32 %s204, %s205
      %s207 = smul.addr %s206, 8
      %s208 = scalar_lea.vmem %s3, %s207
      %s209 = smul.u32 16, %s19
      %v210 = vld [vmem:[%s0] sm:$0xff]
      %v211 = vld [vmem:[%s0 + $0x8] sm:$0xff]
      %v212 = vld [vmem:[%s0 + $0x10] sm:$0xff]
      %v213 = vld [vmem:[%s0 + $0x18] sm:$0xff]
      %v214 = vld [vmem:[%s0 + $0x20] sm:$0xff]
      %v215 = vld [vmem:[%s0 + $0x28] sm:$0xff]
      %v216 = vld [vmem:[%s0 + $0x30] sm:$0xff]
      %v217 = vld [vmem:[%s0 + $0x38] sm:$0xff]
      %v218 = vld [vmem:[%s198] sm:$0xff]
      %v219 = vld [vmem:[%s198 + $0x8] sm:$0xff]
      %v220 = vld [vmem:[%s198 + $0x10] sm:$0xff]
      %v221 = vld [vmem:[%s198 + $0x18] sm:$0xff]
      %v222 = vld [vmem:[%s198 + $0x20] sm:$0xff]
      %v223 = vld [vmem:[%s198 + $0x28] sm:$0xff]
      %v224 = vld [vmem:[%s198 + $0x30] sm:$0xff]
      %v225 = vld [vmem:[%s198 + $0x38] sm:$0xff]
      %v226 = vld [vmem:[%s1] sm:$0xff]
      %v227 = vld [vmem:[%s1 + $0x8] sm:$0xff]
      %v228 = vld [vmem:[%s1 + $0x10] sm:$0xff]
      %v229 = vld [vmem:[%s1 + $0x18] sm:$0xff]
      %v230 = vld [vmem:[%s1 + $0x20] sm:$0xff]
      %v231 = vld [vmem:[%s1 + $0x28] sm:$0xff]
      %v232 = vld [vmem:[%s1 + $0x30] sm:$0xff]
      %v233 = vld [vmem:[%s1 + $0x38] sm:$0xff]
      %235 = vset.pattern.permute.xlu0 0
      %236 = vperm.xlu0 %235, %v226
      %v237 = vpop.permute.xlu0 %236
      %240 = vset.pattern.permute.xlu0 0
      %241 = vperm.xlu0 %240, %v227
      %v242 = vpop.permute.xlu0 %241
      %245 = vset.pattern.permute.xlu0 0
      %246 = vperm.xlu0 %245, %v228
      %v247 = vpop.permute.xlu0 %246
      %250 = vset.pattern.permute.xlu0 0
      %251 = vperm.xlu0 %250, %v229
      %v252 = vpop.permute.xlu0 %251
      %255 = vset.pattern.permute.xlu0 0
      %256 = vperm.xlu0 %255, %v230
      %v257 = vpop.permute.xlu0 %256
      %260 = vset.pattern.permute.xlu0 0
      %261 = vperm.xlu0 %260, %v231
      %v262 = vpop.permute.xlu0 %261
      %265 = vset.pattern.permute.xlu0 0
      %266 = vperm.xlu0 %265, %v232
      %v267 = vpop.permute.xlu0 %266
      %270 = vset.pattern.permute.xlu0 0
      %271 = vperm.xlu0 %270, %v233
      %v272 = vpop.permute.xlu0 %271
      %282 = vst [vmem:[#allocation1] ss:$2 sm:$0xff] %v218
      %s283 = scalar_lea.vmem [#allocation1], 16
      %284 = vst [vmem:[%s283] ss:$2 sm:$0xff] %v219
      %s285 = scalar_lea.vmem [#allocation1], 32
      %286 = vst [vmem:[%s285] ss:$2 sm:$0xff] %v220
      %s287 = scalar_lea.vmem [#allocation1], 48
      %288 = vst [vmem:[%s287] ss:$2 sm:$0xff] %v221
      %v289 = vld.sshfl [vmem:[#allocation1] sm:$0xff pattern:$0x75316420]
      %v290 = vld.sshfl [vmem:[#allocation1 + $0x8] sm:$0xff pattern:$0x75316420]
      %v291 = vld.sshfl [vmem:[#allocation1 + $0x10] sm:$0xff pattern:$0x75316420]
      %v292 = vld.sshfl [vmem:[#allocation1 + $0x18] sm:$0xff pattern:$0x75316420]
      %v293 = vld.sshfl [vmem:[#allocation1 + $0x20] sm:$0xff pattern:$0x75316420]
      %v294 = vld.sshfl [vmem:[#allocation1 + $0x28] sm:$0xff pattern:$0x75316420]
      %v295 = vld.sshfl [vmem:[#allocation1 + $0x30] sm:$0xff pattern:$0x75316420]
      %v296 = vld.sshfl [vmem:[#allocation1 + $0x38] sm:$0xff pattern:$0x75316420]
      %297 = vst [vmem:[#allocation1] ss:$2 sm:$0xff] %v222
      %298 = vst [vmem:[%s283] ss:$2 sm:$0xff] %v223
      %299 = vst [vmem:[%s285] ss:$2 sm:$0xff] %v224
      %300 = vst [vmem:[%s287] ss:$2 sm:$0xff] %v225
      %v301 = vld.sshfl [vmem:[#allocation1] sm:$0xff pattern:$0x75316420]
      %v302 = vld.sshfl [vmem:[#allocation1 + $0x8] sm:$0xff pattern:$0x75316420]
      %v303 = vld.sshfl [vmem:[#allocation1 + $0x10] sm:$0xff pattern:$0x75316420]
      %v304 = vld.sshfl [vmem:[#allocation1 + $0x18] sm:$0xff pattern:$0x75316420]
      %v305 = vld.sshfl [vmem:[#allocation1 + $0x20] sm:$0xff pattern:$0x75316420]
      %v306 = vld.sshfl [vmem:[#allocation1 + $0x28] sm:$0xff pattern:$0x75316420]
      %v307 = vld.sshfl [vmem:[#allocation1 + $0x30] sm:$0xff pattern:$0x75316420]
      %v308 = vld.sshfl [vmem:[#allocation1 + $0x38] sm:$0xff pattern:$0x75316420]
      %vm309 = vcmask 31744
      %v311 = vsel %vm309, %v210, 0
      %v314 = vsel %vm309, %v211, 0
      %v317 = vsel %vm309, %v212, 0
      %v320 = vsel %vm309, %v213, 0
      %v323 = vsel %vm309, %v214, 0
      %v326 = vsel %vm309, %v215, 0
      %v329 = vsel %vm309, %v216, 0
      %v332 = vsel %vm309, %v217, 0
      %vm334 = vcmask 1043456
      %v335 = vsel %vm334, %v289, 0
      %v337 = vsel %vm334, %v290, 0
      %v339 = vsel %vm334, %v291, 0
      %v341 = vsel %vm334, %v292, 0
      %v343 = vsel %vm334, %v293, 0
      %v345 = vsel %vm334, %v294, 0
      %v347 = vsel %vm334, %v295, 0
      %v349 = vsel %vm334, %v296, 0
      %v351 = vsel %vm334, %v301, 0
      %v353 = vsel %vm334, %v302, 0
      %v355 = vsel %vm334, %v303, 0
      %v357 = vsel %vm334, %v304, 0
      %v359 = vsel %vm334, %v305, 0
      %v361 = vsel %vm334, %v306, 0
      %v363 = vsel %vm334, %v307, 0
      %v365 = vsel %vm334, %v308, 0
      %367 = vmatpush.msra.mxu0 0.0
      %368 = vmatpush.msra.mxu0 0.0
      %369 = vmatpush.msra.mxu0 0.0
      %370 = vmatpush.msra.mxu0 0.0
      %371 = vmatpush.msra.mxu0 0.0
      %372 = vmatpush.msra.mxu0 0.0
      %373 = vmatpush.msra.mxu0 0.0
      %374 = vmatpush.msra.mxu0 0.0
      %375 = vmatpush.msra.mxu0 0.0
      %376 = vmatpush.msra.mxu0 0.0
      %377 = vmatpush.msra.mxu0 0.0
      %378 = vmatpush.msra.mxu0 0.0
      %379 = vmatpush.msra.mxu0 0.0
      %380 = vmatpush.msra.mxu0 0.0
      %381 = vmatpush.msra.mxu0 0.0
      %382 = vmatpush.msra.mxu0 %v335
      %383 = vmatmul.f32.gmra.mxu0 %v311
      %v384 = vpop.f32.mrf.mxu0
      %v385 = vadd.f32 %v237, %v384
      %386 = vmatmul.f32.gmra.mxu0 %v314
      %v387 = vpop.f32.mrf.mxu0
      %v388 = vadd.f32 %v242, %v387
      %389 = vmatmul.f32.gmra.mxu0 %v317
      %v390 = vpop.f32.mrf.mxu0
      %v391 = vadd.f32 %v247, %v390
      %392 = vmatmul.f32.gmra.mxu0 %v320
      %v393 = vpop.f32.mrf.mxu0
      %v394 = vadd.f32 %v252, %v393
      %395 = vmatmul.f32.gmra.mxu0 %v323
      %v396 = vpop.f32.mrf.mxu0
      %v397 = vadd.f32 %v257, %v396
      %398 = vmatmul.f32.gmra.mxu0 %v326
      %v399 = vpop.f32.mrf.mxu0
      %v400 = vadd.f32 %v262, %v399
      %401 = vmatmul.f32.gmra.mxu0 %v329
      %v402 = vpop.f32.mrf.mxu0
      %v403 = vadd.f32 %v267, %v402
      %404 = vmatmul.f32.gmra.mxu0 %v332
      %v405 = vpop.f32.mrf.mxu0
      %v406 = vadd.f32 %v272, %v405
      %407 = vdwg.mxu0
      %408 = vmatpush.msra.mxu0 0.0
      %409 = vmatpush.msra.mxu0 0.0
      %410 = vmatpush.msra.mxu0 0.0
      %411 = vmatpush.msra.mxu0 0.0
      %412 = vmatpush.msra.mxu0 0.0
      %413 = vmatpush.msra.mxu0 0.0
      %414 = vmatpush.msra.mxu0 0.0
      %415 = vmatpush.msra.mxu0 0.0
      %416 = vmatpush.msra.mxu0 0.0
      %417 = vmatpush.msra.mxu0 0.0
      %418 = vmatpush.msra.mxu0 0.0
      %419 = vmatpush.msra.mxu0 0.0
      %420 = vmatpush.msra.mxu0 0.0
      %421 = vmatpush.msra.mxu0 0.0
      %422 = vmatpush.msra.mxu0 0.0
      %423 = vmatpush.msra.mxu0 %v337
      %424 = vmatmul.f32.gmra.mxu0 %v311
      %v425 = vpop.f32.mrf.mxu0
      %v426 = vadd.f32 %v237, %v425
      %427 = vmatmul.f32.gmra.mxu0 %v314
      %v428 = vpop.f32.mrf.mxu0
      %v429 = vadd.f32 %v242, %v428
      %430 = vmatmul.f32.gmra.mxu0 %v317
      %v431 = vpop.f32.mrf.mxu0
      %v432 = vadd.f32 %v247, %v431
      %433 = vmatmul.f32.gmra.mxu0 %v320
      %v434 = vpop.f32.mrf.mxu0
      %v435 = vadd.f32 %v252, %v434
      %436 = vmatmul.f32.gmra.mxu0 %v323
      %v437 = vpop.f32.mrf.mxu0
      %v438 = vadd.f32 %v257, %v437
      %439 = vmatmul.f32.gmra.mxu0 %v326
      %v440 = vpop.f32.mrf.mxu0
      %v441 = vadd.f32 %v262, %v440
      %442 = vmatmul.f32.gmra.mxu0 %v329
      %v443 = vpop.f32.mrf.mxu0
      %v444 = vadd.f32 %v267, %v443
      %445 = vmatmul.f32.gmra.mxu0 %v332
      %v446 = vpop.f32.mrf.mxu0
      %v447 = vadd.f32 %v272, %v446
      %448 = vdwg.mxu0
      %449 = vmatpush.msra.mxu0 0.0
      %450 = vmatpush.msra.mxu0 0.0
      %451 = vmatpush.msra.mxu0 0.0
      %452 = vmatpush.msra.mxu0 0.0
      %453 = vmatpush.msra.mxu0 0.0
      %454 = vmatpush.msra.mxu0 0.0
      %455 = vmatpush.msra.mxu0 0.0
      %456 = vmatpush.msra.mxu0 0.0
      %457 = vmatpush.msra.mxu0 0.0
      %458 = vmatpush.msra.mxu0 0.0
      %459 = vmatpush.msra.mxu0 0.0
      %460 = vmatpush.msra.mxu0 0.0
      %461 = vmatpush.msra.mxu0 0.0
      %462 = vmatpush.msra.mxu0 0.0
      %463 = vmatpush.msra.mxu0 0.0
      %464 = vmatpush.msra.mxu0 %v339
      %465 = vmatmul.f32.gmra.mxu0 %v311
      %v466 = vpop.f32.mrf.mxu0
      %v467 = vadd.f32 %v237, %v466
      %468 = vmatmul.f32.gmra.mxu0 %v314
      %v469 = vpop.f32.mrf.mxu0
      %v470 = vadd.f32 %v242, %v469
      %471 = vmatmul.f32.gmra.mxu0 %v317
      %v472 = vpop.f32.mrf.mxu0
      %v473 = vadd.f32 %v247, %v472
      %474 = vmatmul.f32.gmra.mxu0 %v320
      %v475 = vpop.f32.mrf.mxu0
      %v476 = vadd.f32 %v252, %v475
      %477 = vmatmul.f32.gmra.mxu0 %v323
      %v478 = vpop.f32.mrf.mxu0
      %v479 = vadd.f32 %v257, %v478
      %480 = vmatmul.f32.gmra.mxu0 %v326
      %v481 = vpop.f32.mrf.mxu0
      %v482 = vadd.f32 %v262, %v481
      %483 = vmatmul.f32.gmra.mxu0 %v329
      %v484 = vpop.f32.mrf.mxu0
      %v485 = vadd.f32 %v267, %v484
      %486 = vmatmul.f32.gmra.mxu0 %v332
      %v487 = vpop.f32.mrf.mxu0
      %v488 = vadd.f32 %v272, %v487
      %489 = vdwg.mxu0
      %490 = vmatpush.msra.mxu0 0.0
      %491 = vmatpush.msra.mxu0 0.0
      %492 = vmatpush.msra.mxu0 0.0
      %493 = vmatpush.msra.mxu0 0.0
      %494 = vmatpush.msra.mxu0 0.0
      %495 = vmatpush.msra.mxu0 0.0
      %496 = vmatpush.msra.mxu0 0.0
      %497 = vmatpush.msra.mxu0 0.0
      %498 = vmatpush.msra.mxu0 0.0
      %499 = vmatpush.msra.mxu0 0.0
      %500 = vmatpush.msra.mxu0 0.0
      %501 = vmatpush.msra.mxu0 0.0
      %502 = vmatpush.msra.mxu0 0.0
      %503 = vmatpush.msra.mxu0 0.0
      %504 = vmatpush.msra.mxu0 0.0
      %505 = vmatpush.msra.mxu0 %v341
      %506 = vmatmul.f32.gmra.mxu0 %v311
      %v507 = vpop.f32.mrf.mxu0
      %v508 = vadd.f32 %v237, %v507
      %509 = vmatmul.f32.gmra.mxu0 %v314
      %v510 = vpop.f32.mrf.mxu0
      %v511 = vadd.f32 %v242, %v510
      %512 = vmatmul.f32.gmra.mxu0 %v317
      %v513 = vpop.f32.mrf.mxu0
      %v514 = vadd.f32 %v247, %v513
      %515 = vmatmul.f32.gmra.mxu0 %v320
      %v516 = vpop.f32.mrf.mxu0
      %v517 = vadd.f32 %v252, %v516
      %518 = vmatmul.f32.gmra.mxu0 %v323
      %v519 = vpop.f32.mrf.mxu0
      %v520 = vadd.f32 %v257, %v519
      %521 = vmatmul.f32.gmra.mxu0 %v326
      %v522 = vpop.f32.mrf.mxu0
      %v523 = vadd.f32 %v262, %v522
      %524 = vmatmul.f32.gmra.mxu0 %v329
      %v525 = vpop.f32.mrf.mxu0
      %v526 = vadd.f32 %v267, %v525
      %527 = vmatmul.f32.gmra.mxu0 %v332
      %v528 = vpop.f32.mrf.mxu0
      %v529 = vadd.f32 %v272, %v528
      %530 = vdwg.mxu0
      %531 = vmatpush.msra.mxu0 0.0
      %532 = vmatpush.msra.mxu0 0.0
      %533 = vmatpush.msra.mxu0 0.0
      %534 = vmatpush.msra.mxu0 0.0
      %535 = vmatpush.msra.mxu0 0.0
      %536 = vmatpush.msra.mxu0 0.0
      %537 = vmatpush.msra.mxu0 0.0
      %538 = vmatpush.msra.mxu0 0.0
      %539 = vmatpush.msra.mxu0 0.0
      %540 = vmatpush.msra.mxu0 0.0
      %541 = vmatpush.msra.mxu0 0.0
      %542 = vmatpush.msra.mxu0 0.0
      %543 = vmatpush.msra.mxu0 0.0
      %544 = vmatpush.msra.mxu0 0.0
      %545 = vmatpush.msra.mxu0 0.0
      %546 = vmatpush.msra.mxu0 %v343
      %547 = vmatmul.f32.gmra.mxu0 %v311
      %v548 = vpop.f32.mrf.mxu0
      %v549 = vadd.f32 %v237, %v548
      %550 = vmatmul.f32.gmra.mxu0 %v314
      %v551 = vpop.f32.mrf.mxu0
      %v552 = vadd.f32 %v242, %v551
      %553 = vmatmul.f32.gmra.mxu0 %v317
      %v554 = vpop.f32.mrf.mxu0
      %v555 = vadd.f32 %v247, %v554
      %556 = vmatmul.f32.gmra.mxu0 %v320
      %v557 = vpop.f32.mrf.mxu0
      %v558 = vadd.f32 %v252, %v557
      %559 = vmatmul.f32.gmra.mxu0 %v323
      %v560 = vpop.f32.mrf.mxu0
      %v561 = vadd.f32 %v257, %v560
      %562 = vmatmul.f32.gmra.mxu0 %v326
      %v563 = vpop.f32.mrf.mxu0
      %v564 = vadd.f32 %v262, %v563
      %565 = vmatmul.f32.gmra.mxu0 %v329
      %v566 = vpop.f32.mrf.mxu0
      %v567 = vadd.f32 %v267, %v566
      %568 = vmatmul.f32.gmra.mxu0 %v332
      %v569 = vpop.f32.mrf.mxu0
      %v570 = vadd.f32 %v272, %v569
      %571 = vdwg.mxu0
      %572 = vmatpush.msra.mxu0 0.0
      %573 = vmatpush.msra.mxu0 0.0
      %574 = vmatpush.msra.mxu0 0.0
      %575 = vmatpush.msra.mxu0 0.0
      %576 = vmatpush.msra.mxu0 0.0
      %577 = vmatpush.msra.mxu0 0.0
      %578 = vmatpush.msra.mxu0 0.0
      %579 = vmatpush.msra.mxu0 0.0
      %580 = vmatpush.msra.mxu0 0.0
      %581 = vmatpush.msra.mxu0 0.0
      %582 = vmatpush.msra.mxu0 0.0
      %583 = vmatpush.msra.mxu0 0.0
      %584 = vmatpush.msra.mxu0 0.0
      %585 = vmatpush.msra.mxu0 0.0
      %586 = vmatpush.msra.mxu0 0.0
      %587 = vmatpush.msra.mxu0 %v345
      %588 = vmatmul.f32.gmra.mxu0 %v311
      %v589 = vpop.f32.mrf.mxu0
      %v590 = vadd.f32 %v237, %v589
      %591 = vmatmul.f32.gmra.mxu0 %v314
      %v592 = vpop.f32.mrf.mxu0
      %v593 = vadd.f32 %v242, %v592
      %594 = vmatmul.f32.gmra.mxu0 %v317
      %v595 = vpop.f32.mrf.mxu0
      %v596 = vadd.f32 %v247, %v595
      %597 = vmatmul.f32.gmra.mxu0 %v320
      %v598 = vpop.f32.mrf.mxu0
      %v599 = vadd.f32 %v252, %v598
      %600 = vmatmul.f32.gmra.mxu0 %v323
      %v601 = vpop.f32.mrf.mxu0
      %v602 = vadd.f32 %v257, %v601
      %603 = vmatmul.f32.gmra.mxu0 %v326
      %v604 = vpop.f32.mrf.mxu0
      %v605 = vadd.f32 %v262, %v604
      %606 = vmatmul.f32.gmra.mxu0 %v329
      %v607 = vpop.f32.mrf.mxu0
      %v608 = vadd.f32 %v267, %v607
      %609 = vmatmul.f32.gmra.mxu0 %v332
      %v610 = vpop.f32.mrf.mxu0
      %v611 = vadd.f32 %v272, %v610
      %612 = vdwg.mxu0
      %613 = vmatpush.msra.mxu0 0.0
      %614 = vmatpush.msra.mxu0 0.0
      %615 = vmatpush.msra.mxu0 0.0
      %616 = vmatpush.msra.mxu0 0.0
      %617 = vmatpush.msra.mxu0 0.0
      %618 = vmatpush.msra.mxu0 0.0
      %619 = vmatpush.msra.mxu0 0.0
      %620 = vmatpush.msra.mxu0 0.0
      %621 = vmatpush.msra.mxu0 0.0
      %622 = vmatpush.msra.mxu0 0.0
      %623 = vmatpush.msra.mxu0 0.0
      %624 = vmatpush.msra.mxu0 0.0
      %625 = vmatpush.msra.mxu0 0.0
      %626 = vmatpush.msra.mxu0 0.0
      %627 = vmatpush.msra.mxu0 0.0
      %628 = vmatpush.msra.mxu0 %v347
      %629 = vmatmul.f32.gmra.mxu0 %v311
      %v630 = vpop.f32.mrf.mxu0
      %v631 = vadd.f32 %v237, %v630
      %632 = vmatmul.f32.gmra.mxu0 %v314
      %v633 = vpop.f32.mrf.mxu0
      %v634 = vadd.f32 %v242, %v633
      %635 = vmatmul.f32.gmra.mxu0 %v317
      %v636 = vpop.f32.mrf.mxu0
      %v637 = vadd.f32 %v247, %v636
      %638 = vmatmul.f32.gmra.mxu0 %v320
      %v639 = vpop.f32.mrf.mxu0
      %v640 = vadd.f32 %v252, %v639
      %641 = vmatmul.f32.gmra.mxu0 %v323
      %v642 = vpop.f32.mrf.mxu0
      %v643 = vadd.f32 %v257, %v642
      %644 = vmatmul.f32.gmra.mxu0 %v326
      %v645 = vpop.f32.mrf.mxu0
      %v646 = vadd.f32 %v262, %v645
      %647 = vmatmul.f32.gmra.mxu0 %v329
      %v648 = vpop.f32.mrf.mxu0
      %v649 = vadd.f32 %v267, %v648
      %650 = vmatmul.f32.gmra.mxu0 %v332
      %v651 = vpop.f32.mrf.mxu0
      %v652 = vadd.f32 %v272, %v651
      %653 = vdwg.mxu0
      %654 = vmatpush.msra.mxu0 0.0
      %655 = vmatpush.msra.mxu0 0.0
      %656 = vmatpush.msra.mxu0 0.0
      %657 = vmatpush.msra.mxu0 0.0
      %658 = vmatpush.msra.mxu0 0.0
      %659 = vmatpush.msra.mxu0 0.0
      %660 = vmatpush.msra.mxu0 0.0
      %661 = vmatpush.msra.mxu0 0.0
      %662 = vmatpush.msra.mxu0 0.0
      %663 = vmatpush.msra.mxu0 0.0
      %664 = vmatpush.msra.mxu0 0.0
      %665 = vmatpush.msra.mxu0 0.0
      %666 = vmatpush.msra.mxu0 0.0
      %667 = vmatpush.msra.mxu0 0.0
      %668 = vmatpush.msra.mxu0 0.0
      %669 = vmatpush.msra.mxu0 %v349
      %670 = vmatmul.f32.gmra.mxu0 %v311
      %v671 = vpop.f32.mrf.mxu0
      %v672 = vadd.f32 %v237, %v671
      %673 = vmatmul.f32.gmra.mxu0 %v314
      %v674 = vpop.f32.mrf.mxu0
      %v675 = vadd.f32 %v242, %v674
      %676 = vmatmul.f32.gmra.mxu0 %v317
      %v677 = vpop.f32.mrf.mxu0
      %v678 = vadd.f32 %v247, %v677
      %679 = vmatmul.f32.gmra.mxu0 %v320
      %v680 = vpop.f32.mrf.mxu0
      %v681 = vadd.f32 %v252, %v680
      %682 = vmatmul.f32.gmra.mxu0 %v323
      %v683 = vpop.f32.mrf.mxu0
      %v684 = vadd.f32 %v257, %v683
      %685 = vmatmul.f32.gmra.mxu0 %v326
      %v686 = vpop.f32.mrf.mxu0
      %v687 = vadd.f32 %v262, %v686
      %688 = vmatmul.f32.gmra.mxu0 %v329
      %v689 = vpop.f32.mrf.mxu0
      %v690 = vadd.f32 %v267, %v689
      %691 = vmatmul.f32.gmra.mxu0 %v332
      %v692 = vpop.f32.mrf.mxu0
      %v693 = vadd.f32 %v272, %v692
      %694 = vdwg.mxu0
      %695 = vmatpush.msra.mxu0 0.0
      %696 = vmatpush.msra.mxu0 0.0
      %697 = vmatpush.msra.mxu0 0.0
      %698 = vmatpush.msra.mxu0 0.0
      %699 = vmatpush.msra.mxu0 0.0
      %700 = vmatpush.msra.mxu0 0.0
      %701 = vmatpush.msra.mxu0 0.0
      %702 = vmatpush.msra.mxu0 0.0
      %703 = vmatpush.msra.mxu0 0.0
      %704 = vmatpush.msra.mxu0 0.0
      %705 = vmatpush.msra.mxu0 0.0
      %706 = vmatpush.msra.mxu0 0.0
      %707 = vmatpush.msra.mxu0 0.0
      %708 = vmatpush.msra.mxu0 0.0
      %709 = vmatpush.msra.mxu0 0.0
      %710 = vmatpush.msra.mxu0 %v351
      %711 = vmatmul.f32.gmra.mxu0 %v311
      %v712 = vpop.f32.mrf.mxu0
      %v713 = vadd.f32 %v237, %v712
      %714 = vmatmul.f32.gmra.mxu0 %v314
      %v715 = vpop.f32.mrf.mxu0
      %v716 = vadd.f32 %v242, %v715
      %717 = vmatmul.f32.gmra.mxu0 %v317
      %v718 = vpop.f32.mrf.mxu0
      %v719 = vadd.f32 %v247, %v718
      %720 = vmatmul.f32.gmra.mxu0 %v320
      %v721 = vpop.f32.mrf.mxu0
      %v722 = vadd.f32 %v252, %v721
      %723 = vmatmul.f32.gmra.mxu0 %v323
      %v724 = vpop.f32.mrf.mxu0
      %v725 = vadd.f32 %v257, %v724
      %726 = vmatmul.f32.gmra.mxu0 %v326
      %v727 = vpop.f32.mrf.mxu0
      %v728 = vadd.f32 %v262, %v727
      %729 = vmatmul.f32.gmra.mxu0 %v329
      %v730 = vpop.f32.mrf.mxu0
      %v731 = vadd.f32 %v267, %v730
      %732 = vmatmul.f32.gmra.mxu0 %v332
      %v733 = vpop.f32.mrf.mxu0
      %v734 = vadd.f32 %v272, %v733
      %735 = vdwg.mxu0
      %736 = vmatpush.msra.mxu0 0.0
      %737 = vmatpush.msra.mxu0 0.0
      %738 = vmatpush.msra.mxu0 0.0
      %739 = vmatpush.msra.mxu0 0.0
      %740 = vmatpush.msra.mxu0 0.0
      %741 = vmatpush.msra.mxu0 0.0
      %742 = vmatpush.msra.mxu0 0.0
      %743 = vmatpush.msra.mxu0 0.0
      %744 = vmatpush.msra.mxu0 0.0
      %745 = vmatpush.msra.mxu0 0.0
      %746 = vmatpush.msra.mxu0 0.0
      %747 = vmatpush.msra.mxu0 0.0
      %748 = vmatpush.msra.mxu0 0.0
      %749 = vmatpush.msra.mxu0 0.0
      %750 = vmatpush.msra.mxu0 0.0
      %751 = vmatpush.msra.mxu0 %v353
      %752 = vmatmul.f32.gmra.mxu0 %v311
      %v753 = vpop.f32.mrf.mxu0
      %v754 = vadd.f32 %v237, %v753
      %755 = vmatmul.f32.gmra.mxu0 %v314
      %v756 = vpop.f32.mrf.mxu0
      %v757 = vadd.f32 %v242, %v756
      %758 = vmatmul.f32.gmra.mxu0 %v317
      %v759 = vpop.f32.mrf.mxu0
      %v760 = vadd.f32 %v247, %v759
      %761 = vmatmul.f32.gmra.mxu0 %v320
      %v762 = vpop.f32.mrf.mxu0
      %v763 = vadd.f32 %v252, %v762
      %764 = vmatmul.f32.gmra.mxu0 %v323
      %v765 = vpop.f32.mrf.mxu0
      %v766 = vadd.f32 %v257, %v765
      %767 = vmatmul.f32.gmra.mxu0 %v326
      %v768 = vpop.f32.mrf.mxu0
      %v769 = vadd.f32 %v262, %v768
      %770 = vmatmul.f32.gmra.mxu0 %v329
      %v771 = vpop.f32.mrf.mxu0
      %v772 = vadd.f32 %v267, %v771
      %773 = vmatmul.f32.gmra.mxu0 %v332
      %v774 = vpop.f32.mrf.mxu0
      %v775 = vadd.f32 %v272, %v774
      %776 = vdwg.mxu0
      %777 = vmatpush.msra.mxu0 0.0
      %778 = vmatpush.msra.mxu0 0.0
      %779 = vmatpush.msra.mxu0 0.0
      %780 = vmatpush.msra.mxu0 0.0
      %781 = vmatpush.msra.mxu0 0.0
      %782 = vmatpush.msra.mxu0 0.0
      %783 = vmatpush.msra.mxu0 0.0
      %784 = vmatpush.msra.mxu0 0.0
      %785 = vmatpush.msra.mxu0 0.0
      %786 = vmatpush.msra.mxu0 0.0
      %787 = vmatpush.msra.mxu0 0.0
      %788 = vmatpush.msra.mxu0 0.0
      %789 = vmatpush.msra.mxu0 0.0
      %790 = vmatpush.msra.mxu0 0.0
      %791 = vmatpush.msra.mxu0 0.0
      %792 = vmatpush.msra.mxu0 %v355
      %793 = vmatmul.f32.gmra.mxu0 %v311
      %v794 = vpop.f32.mrf.mxu0
      %v795 = vadd.f32 %v237, %v794
      %796 = vmatmul.f32.gmra.mxu0 %v314
      %v797 = vpop.f32.mrf.mxu0
      %v798 = vadd.f32 %v242, %v797
      %799 = vmatmul.f32.gmra.mxu0 %v317
      %v800 = vpop.f32.mrf.mxu0
      %v801 = vadd.f32 %v247, %v800
      %802 = vmatmul.f32.gmra.mxu0 %v320
      %v803 = vpop.f32.mrf.mxu0
      %v804 = vadd.f32 %v252, %v803
      %805 = vmatmul.f32.gmra.mxu0 %v323
      %v806 = vpop.f32.mrf.mxu0
      %v807 = vadd.f32 %v257, %v806
      %808 = vmatmul.f32.gmra.mxu0 %v326
      %v809 = vpop.f32.mrf.mxu0
      %v810 = vadd.f32 %v262, %v809
      %811 = vmatmul.f32.gmra.mxu0 %v329
      %v812 = vpop.f32.mrf.mxu0
      %v813 = vadd.f32 %v267, %v812
      %814 = vmatmul.f32.gmra.mxu0 %v332
      %v815 = vpop.f32.mrf.mxu0
      %v816 = vadd.f32 %v272, %v815
      %817 = vdwg.mxu0
      %818 = vmatpush.msra.mxu0 0.0
      %819 = vmatpush.msra.mxu0 0.0
      %820 = vmatpush.msra.mxu0 0.0
      %821 = vmatpush.msra.mxu0 0.0
      %822 = vmatpush.msra.mxu0 0.0
      %823 = vmatpush.msra.mxu0 0.0
      %824 = vmatpush.msra.mxu0 0.0
      %825 = vmatpush.msra.mxu0 0.0
      %826 = vmatpush.msra.mxu0 0.0
      %827 = vmatpush.msra.mxu0 0.0
      %828 = vmatpush.msra.mxu0 0.0
      %829 = vmatpush.msra.mxu0 0.0
      %830 = vmatpush.msra.mxu0 0.0
      %831 = vmatpush.msra.mxu0 0.0
      %832 = vmatpush.msra.mxu0 0.0
      %833 = vmatpush.msra.mxu0 %v357
      %834 = vmatmul.f32.gmra.mxu0 %v311
      %v835 = vpop.f32.mrf.mxu0
      %v836 = vadd.f32 %v237, %v835
      %837 = vmatmul.f32.gmra.mxu0 %v314
      %v838 = vpop.f32.mrf.mxu0
      %v839 = vadd.f32 %v242, %v838
      %840 = vmatmul.f32.gmra.mxu0 %v317
      %v841 = vpop.f32.mrf.mxu0
      %v842 = vadd.f32 %v247, %v841
      %843 = vmatmul.f32.gmra.mxu0 %v320
      %v844 = vpop.f32.mrf.mxu0
      %v845 = vadd.f32 %v252, %v844
      %846 = vmatmul.f32.gmra.mxu0 %v323
      %v847 = vpop.f32.mrf.mxu0
      %v848 = vadd.f32 %v257, %v847
      %849 = vmatmul.f32.gmra.mxu0 %v326
      %v850 = vpop.f32.mrf.mxu0
      %v851 = vadd.f32 %v262, %v850
      %852 = vmatmul.f32.gmra.mxu0 %v329
      %v853 = vpop.f32.mrf.mxu0
      %v854 = vadd.f32 %v267, %v853
      %855 = vmatmul.f32.gmra.mxu0 %v332
      %v856 = vpop.f32.mrf.mxu0
      %v857 = vadd.f32 %v272, %v856
      %858 = vdwg.mxu0
      %859 = vmatpush.msra.mxu0 0.0
      %860 = vmatpush.msra.mxu0 0.0
      %861 = vmatpush.msra.mxu0 0.0
      %862 = vmatpush.msra.mxu0 0.0
      %863 = vmatpush.msra.mxu0 0.0
      %864 = vmatpush.msra.mxu0 0.0
      %865 = vmatpush.msra.mxu0 0.0
      %866 = vmatpush.msra.mxu0 0.0
      %867 = vmatpush.msra.mxu0 0.0
      %868 = vmatpush.msra.mxu0 0.0
      %869 = vmatpush.msra.mxu0 0.0
      %870 = vmatpush.msra.mxu0 0.0
      %871 = vmatpush.msra.mxu0 0.0
      %872 = vmatpush.msra.mxu0 0.0
      %873 = vmatpush.msra.mxu0 0.0
      %874 = vmatpush.msra.mxu0 %v359
      %875 = vmatmul.f32.gmra.mxu0 %v311
      %v876 = vpop.f32.mrf.mxu0
      %v877 = vadd.f32 %v237, %v876
      %878 = vmatmul.f32.gmra.mxu0 %v314
      %v879 = vpop.f32.mrf.mxu0
      %v880 = vadd.f32 %v242, %v879
      %881 = vmatmul.f32.gmra.mxu0 %v317
      %v882 = vpop.f32.mrf.mxu0
      %v883 = vadd.f32 %v247, %v882
      %884 = vmatmul.f32.gmra.mxu0 %v320
      %v885 = vpop.f32.mrf.mxu0
      %v886 = vadd.f32 %v252, %v885
      %887 = vmatmul.f32.gmra.mxu0 %v323
      %v888 = vpop.f32.mrf.mxu0
      %v889 = vadd.f32 %v257, %v888
      %890 = vmatmul.f32.gmra.mxu0 %v326
      %v891 = vpop.f32.mrf.mxu0
      %v892 = vadd.f32 %v262, %v891
      %893 = vmatmul.f32.gmra.mxu0 %v329
      %v894 = vpop.f32.mrf.mxu0
      %v895 = vadd.f32 %v267, %v894
      %896 = vmatmul.f32.gmra.mxu0 %v332
      %v897 = vpop.f32.mrf.mxu0
      %v898 = vadd.f32 %v272, %v897
      %899 = vdwg.mxu0
      %900 = vmatpush.msra.mxu0 0.0
      %901 = vmatpush.msra.mxu0 0.0
      %902 = vmatpush.msra.mxu0 0.0
      %903 = vmatpush.msra.mxu0 0.0
      %904 = vmatpush.msra.mxu0 0.0
      %905 = vmatpush.msra.mxu0 0.0
      %906 = vmatpush.msra.mxu0 0.0
      %907 = vmatpush.msra.mxu0 0.0
      %908 = vmatpush.msra.mxu0 0.0
      %909 = vmatpush.msra.mxu0 0.0
      %910 = vmatpush.msra.mxu0 0.0
      %911 = vmatpush.msra.mxu0 0.0
      %912 = vmatpush.msra.mxu0 0.0
      %913 = vmatpush.msra.mxu0 0.0
      %914 = vmatpush.msra.mxu0 0.0
      %915 = vmatpush.msra.mxu0 %v361
      %916 = vmatmul.f32.gmra.mxu0 %v311
      %v917 = vpop.f32.mrf.mxu0
      %v918 = vadd.f32 %v237, %v917
      %919 = vmatmul.f32.gmra.mxu0 %v314
      %v920 = vpop.f32.mrf.mxu0
      %v921 = vadd.f32 %v242, %v920
      %922 = vmatmul.f32.gmra.mxu0 %v317
      %v923 = vpop.f32.mrf.mxu0
      %v924 = vadd.f32 %v247, %v923
      %925 = vmatmul.f32.gmra.mxu0 %v320
      %v926 = vpop.f32.mrf.mxu0
      %v927 = vadd.f32 %v252, %v926
      %928 = vmatmul.f32.gmra.mxu0 %v323
      %v929 = vpop.f32.mrf.mxu0
      %v930 = vadd.f32 %v257, %v929
      %931 = vmatmul.f32.gmra.mxu0 %v326
      %v932 = vpop.f32.mrf.mxu0
      %v933 = vadd.f32 %v262, %v932
      %934 = vmatmul.f32.gmra.mxu0 %v329
      %v935 = vpop.f32.mrf.mxu0
      %v936 = vadd.f32 %v267, %v935
      %937 = vmatmul.f32.gmra.mxu0 %v332
      %v938 = vpop.f32.mrf.mxu0
      %v939 = vadd.f32 %v272, %v938
      %940 = vdwg.mxu0
      %941 = vmatpush.msra.mxu0 0.0
      %942 = vmatpush.msra.mxu0 0.0
      %943 = vmatpush.msra.mxu0 0.0
      %944 = vmatpush.msra.mxu0 0.0
      %945 = vmatpush.msra.mxu0 0.0
      %946 = vmatpush.msra.mxu0 0.0
      %947 = vmatpush.msra.mxu0 0.0
      %948 = vmatpush.msra.mxu0 0.0
      %949 = vmatpush.msra.mxu0 0.0
      %950 = vmatpush.msra.mxu0 0.0
      %951 = vmatpush.msra.mxu0 0.0
      %952 = vmatpush.msra.mxu0 0.0
      %953 = vmatpush.msra.mxu0 0.0
      %954 = vmatpush.msra.mxu0 0.0
      %955 = vmatpush.msra.mxu0 0.0
      %956 = vmatpush.msra.mxu0 %v363
      %957 = vmatmul.f32.gmra.mxu0 %v311
      %v958 = vpop.f32.mrf.mxu0
      %v959 = vadd.f32 %v237, %v958
      %960 = vmatmul.f32.gmra.mxu0 %v314
      %v961 = vpop.f32.mrf.mxu0
      %v962 = vadd.f32 %v242, %v961
      %963 = vmatmul.f32.gmra.mxu0 %v317
      %v964 = vpop.f32.mrf.mxu0
      %v965 = vadd.f32 %v247, %v964
      %966 = vmatmul.f32.gmra.mxu0 %v320
      %v967 = vpop.f32.mrf.mxu0
      %v968 = vadd.f32 %v252, %v967
      %969 = vmatmul.f32.gmra.mxu0 %v323
      %v970 = vpop.f32.mrf.mxu0
      %v971 = vadd.f32 %v257, %v970
      %972 = vmatmul.f32.gmra.mxu0 %v326
      %v973 = vpop.f32.mrf.mxu0
      %v974 = vadd.f32 %v262, %v973
      %975 = vmatmul.f32.gmra.mxu0 %v329
      %v976 = vpop.f32.mrf.mxu0
      %v977 = vadd.f32 %v267, %v976
      %978 = vmatmul.f32.gmra.mxu0 %v332
      %v979 = vpop.f32.mrf.mxu0
      %v980 = vadd.f32 %v272, %v979
      %981 = vdwg.mxu0
      %982 = vmatpush.msra.mxu0 0.0
      %983 = vmatpush.msra.mxu0 0.0
      %984 = vmatpush.msra.mxu0 0.0
      %985 = vmatpush.msra.mxu0 0.0
      %986 = vmatpush.msra.mxu0 0.0
      %987 = vmatpush.msra.mxu0 0.0
      %988 = vmatpush.msra.mxu0 0.0
      %989 = vmatpush.msra.mxu0 0.0
      %990 = vmatpush.msra.mxu0 0.0
      %991 = vmatpush.msra.mxu0 0.0
      %992 = vmatpush.msra.mxu0 0.0
      %993 = vmatpush.msra.mxu0 0.0
      %994 = vmatpush.msra.mxu0 0.0
      %995 = vmatpush.msra.mxu0 0.0
      %996 = vmatpush.msra.mxu0 0.0
      %997 = vmatpush.msra.mxu0 %v365
      %998 = vmatmul.f32.gmra.mxu0 %v311
      %v999 = vpop.f32.mrf.mxu0
      %v1000 = vadd.f32 %v237, %v999
      %1001 = vmatmul.f32.gmra.mxu0 %v314
      %v1002 = vpop.f32.mrf.mxu0
      %v1003 = vadd.f32 %v242, %v1002
      %1004 = vmatmul.f32.gmra.mxu0 %v317
      %v1005 = vpop.f32.mrf.mxu0
      %v1006 = vadd.f32 %v247, %v1005
      %1007 = vmatmul.f32.gmra.mxu0 %v320
      %v1008 = vpop.f32.mrf.mxu0
      %v1009 = vadd.f32 %v252, %v1008
      %1010 = vmatmul.f32.gmra.mxu0 %v323
      %v1011 = vpop.f32.mrf.mxu0
      %v1012 = vadd.f32 %v257, %v1011
      %1013 = vmatmul.f32.gmra.mxu0 %v326
      %v1014 = vpop.f32.mrf.mxu0
      %v1015 = vadd.f32 %v262, %v1014
      %1016 = vmatmul.f32.gmra.mxu0 %v329
      %v1017 = vpop.f32.mrf.mxu0
      %v1018 = vadd.f32 %v267, %v1017
      %1019 = vmatmul.f32.gmra.mxu0 %v332
      %v1020 = vpop.f32.mrf.mxu0
      %v1021 = vadd.f32 %v272, %v1020
      %1022 = vdwg.mxu0
      %1023 = vst [vmem:[%s208] sm:$0xff] %v385
      %1024 = vst [vmem:[%s208 + $0x8] sm:$0xff] %v426
      %1025 = vst [vmem:[%s208 + $0x10] sm:$0xff] %v467
      %1026 = vst [vmem:[%s208 + $0x18] sm:$0xff] %v508
      %1027 = vst [vmem:[%s208 + $0x20] sm:$0xff] %v549
      %1028 = vst [vmem:[%s208 + $0x28] sm:$0xff] %v590
      %1029 = vst [vmem:[%s208 + $0x30] sm:$0xff] %v631
      %1030 = vst [vmem:[%s208 + $0x38] sm:$0xff] %v672
      %1031 = vst [vmem:[%s208 + $0x40] sm:$0xff] %v713
      %1032 = vst [vmem:[%s208 + $0x48] sm:$0xff] %v754
      %1033 = vst [vmem:[%s208 + $0x50] sm:$0xff] %v795
      %1034 = vst [vmem:[%s208 + $0x58] sm:$0xff] %v836
      %1035 = vst [vmem:[%s208 + $0x60] sm:$0xff] %v877
      %1036 = vst [vmem:[%s208 + $0x68] sm:$0xff] %v918
      %1037 = vst [vmem:[%s208 + $0x70] sm:$0xff] %v959
      %1038 = vst [vmem:[%s208 + $0x78] sm:$0xff] %v1000
      %1039 = vst [vmem:[%s208 + $0x80] sm:$0xff] %v388
      %1040 = vst [vmem:[%s208 + $0x88] sm:$0xff] %v429
      %1041 = vst [vmem:[%s208 + $0x90] sm:$0xff] %v470
      %1042 = vst [vmem:[%s208 + $0x98] sm:$0xff] %v511
      %1043 = vst [vmem:[%s208 + $0xa0] sm:$0xff] %v552
      %1044 = vst [vmem:[%s208 + $0xa8] sm:$0xff] %v593
      %1045 = vst [vmem:[%s208 + $0xb0] sm:$0xff] %v634
      %1046 = vst [vmem:[%s208 + $0xb8] sm:$0xff] %v675
      %1047 = vst [vmem:[%s208 + $0xc0] sm:$0xff] %v716
      %1048 = vst [vmem:[%s208 + $0xc8] sm:$0xff] %v757
      %1049 = vst [vmem:[%s208 + $0xd0] sm:$0xff] %v798
      %1050 = vst [vmem:[%s208 + $0xd8] sm:$0xff] %v839
      %1051 = vst [vmem:[%s208 + $0xe0] sm:$0xff] %v880
      %1052 = vst [vmem:[%s208 + $0xe8] sm:$0xff] %v921
      %1053 = vst [vmem:[%s208 + $0xf0] sm:$0xff] %v962
      %1054 = vst [vmem:[%s208 + $0xf8] sm:$0xff] %v1003
      %1055 = vst [vmem:[%s208 + $0x100] sm:$0xff] %v391
      %1056 = vst [vmem:[%s208 + $0x108] sm:$0xff] %v432
      %1057 = vst [vmem:[%s208 + $0x110] sm:$0xff] %v473
      %1058 = vst [vmem:[%s208 + $0x118] sm:$0xff] %v514
      %1059 = vst [vmem:[%s208 + $0x120] sm:$0xff] %v555
      %1060 = vst [vmem:[%s208 + $0x128] sm:$0xff] %v596
      %1061 = vst [vmem:[%s208 + $0x130] sm:$0xff] %v637
      %1062 = vst [vmem:[%s208 + $0x138] sm:$0xff] %v678
      %1063 = vst [vmem:[%s208 + $0x140] sm:$0xff] %v719
      %1064 = vst [vmem:[%s208 + $0x148] sm:$0xff] %v760
      %1065 = vst [vmem:[%s208 + $0x150] sm:$0xff] %v801
      %1066 = vst [vmem:[%s208 + $0x158] sm:$0xff] %v842
      %1067 = vst [vmem:[%s208 + $0x160] sm:$0xff] %v883
      %1068 = vst [vmem:[%s208 + $0x168] sm:$0xff] %v924
      %1069 = vst [vmem:[%s208 + $0x170] sm:$0xff] %v965
      %1070 = vst [vmem:[%s208 + $0x178] sm:$0xff] %v1006
      %1071 = vst [vmem:[%s208 + $0x180] sm:$0xff] %v394
      %1072 = vst [vmem:[%s208 + $0x188] sm:$0xff] %v435
      %1073 = vst [vmem:[%s208 + $0x190] sm:$0xff] %v476
      %1074 = vst [vmem:[%s208 + $0x198] sm:$0xff] %v517
      %1075 = vst [vmem:[%s208 + $0x1a0] sm:$0xff] %v558
      %1076 = vst [vmem:[%s208 + $0x1a8] sm:$0xff] %v599
      %1077 = vst [vmem:[%s208 + $0x1b0] sm:$0xff] %v640
      %1078 = vst [vmem:[%s208 + $0x1b8] sm:$0xff] %v681
      %1079 = vst [vmem:[%s208 + $0x1c0] sm:$0xff] %v722
      %1080 = vst [vmem:[%s208 + $0x1c8] sm:$0xff] %v763
      %1081 = vst [vmem:[%s208 + $0x1d0] sm:$0xff] %v804
      %1082 = vst [vmem:[%s208 + $0x1d8] sm:$0xff] %v845
      %1083 = vst [vmem:[%s208 + $0x1e0] sm:$0xff] %v886
      %1084 = vst [vmem:[%s208 + $0x1e8] sm:$0xff] %v927
      %1085 = vst [vmem:[%s208 + $0x1f0] sm:$0xff] %v968
      %1086 = vst [vmem:[%s208 + $0x1f8] sm:$0xff] %v1009
      %1087 = vst [vmem:[%s208 + $0x200] sm:$0xff] %v397
      %1088 = vst [vmem:[%s208 + $0x208] sm:$0xff] %v438
      %1089 = vst [vmem:[%s208 + $0x210] sm:$0xff] %v479
      %1090 = vst [vmem:[%s208 + $0x218] sm:$0xff] %v520
      %1091 = vst [vmem:[%s208 + $0x220] sm:$0xff] %v561
      %1092 = vst [vmem:[%s208 + $0x228] sm:$0xff] %v602
      %1093 = vst [vmem:[%s208 + $0x230] sm:$0xff] %v643
      %1094 = vst [vmem:[%s208 + $0x238] sm:$0xff] %v684
      %1095 = vst [vmem:[%s208 + $0x240] sm:$0xff] %v725
      %1096 = vst [vmem:[%s208 + $0x248] sm:$0xff] %v766
      %1097 = vst [vmem:[%s208 + $0x250] sm:$0xff] %v807
      %1098 = vst [vmem:[%s208 + $0x258] sm:$0xff] %v848
      %1099 = vst [vmem:[%s208 + $0x260] sm:$0xff] %v889
      %1100 = vst [vmem:[%s208 + $0x268] sm:$0xff] %v930
      %1101 = vst [vmem:[%s208 + $0x270] sm:$0xff] %v971
      %1102 = vst [vmem:[%s208 + $0x278] sm:$0xff] %v1012
      %1103 = vst [vmem:[%s208 + $0x280] sm:$0xff] %v400
      %1104 = vst [vmem:[%s208 + $0x288] sm:$0xff] %v441
      %1105 = vst [vmem:[%s208 + $0x290] sm:$0xff] %v482
      %1106 = vst [vmem:[%s208 + $0x298] sm:$0xff] %v523
      %1107 = vst [vmem:[%s208 + $0x2a0] sm:$0xff] %v564
      %1108 = vst [vmem:[%s208 + $0x2a8] sm:$0xff] %v605
      %1109 = vst [vmem:[%s208 + $0x2b0] sm:$0xff] %v646
      %1110 = vst [vmem:[%s208 + $0x2b8] sm:$0xff] %v687
      %1111 = vst [vmem:[%s208 + $0x2c0] sm:$0xff] %v728
      %1112 = vst [vmem:[%s208 + $0x2c8] sm:$0xff] %v769
      %1113 = vst [vmem:[%s208 + $0x2d0] sm:$0xff] %v810
      %1114 = vst [vmem:[%s208 + $0x2d8] sm:$0xff] %v851
      %1115 = vst [vmem:[%s208 + $0x2e0] sm:$0xff] %v892
      %1116 = vst [vmem:[%s208 + $0x2e8] sm:$0xff] %v933
      %1117 = vst [vmem:[%s208 + $0x2f0] sm:$0xff] %v974
      %1118 = vst [vmem:[%s208 + $0x2f8] sm:$0xff] %v1015
      %1119 = vst [vmem:[%s208 + $0x300] sm:$0xff] %v403
      %1120 = vst [vmem:[%s208 + $0x308] sm:$0xff] %v444
      %1121 = vst [vmem:[%s208 + $0x310] sm:$0xff] %v485
      %1122 = vst [vmem:[%s208 + $0x318] sm:$0xff] %v526
      %1123 = vst [vmem:[%s208 + $0x320] sm:$0xff] %v567
      %1124 = vst [vmem:[%s208 + $0x328] sm:$0xff] %v608
      %1125 = vst [vmem:[%s208 + $0x330] sm:$0xff] %v649
      %1126 = vst [vmem:[%s208 + $0x338] sm:$0xff] %v690
      %1127 = vst [vmem:[%s208 + $0x340] sm:$0xff] %v731
      %1128 = vst [vmem:[%s208 + $0x348] sm:$0xff] %v772
      %1129 = vst [vmem:[%s208 + $0x350] sm:$0xff] %v813
      %1130 = vst [vmem:[%s208 + $0x358] sm:$0xff] %v854
      %1131 = vst [vmem:[%s208 + $0x360] sm:$0xff] %v895
      %1132 = vst [vmem:[%s208 + $0x368] sm:$0xff] %v936
      %1133 = vst [vmem:[%s208 + $0x370] sm:$0xff] %v977
      %1134 = vst [vmem:[%s208 + $0x378] sm:$0xff] %v1018
      %1135 = vst [vmem:[%s208 + $0x380] sm:$0xff] %v406
      %1136 = vst [vmem:[%s208 + $0x388] sm:$0xff] %v447
      %1137 = vst [vmem:[%s208 + $0x390] sm:$0xff] %v488
      %1138 = vst [vmem:[%s208 + $0x398] sm:$0xff] %v529
      %1139 = vst [vmem:[%s208 + $0x3a0] sm:$0xff] %v570
      %1140 = vst [vmem:[%s208 + $0x3a8] sm:$0xff] %v611
      %1141 = vst [vmem:[%s208 + $0x3b0] sm:$0xff] %v652
      %1142 = vst [vmem:[%s208 + $0x3b8] sm:$0xff] %v693
      %1143 = vst [vmem:[%s208 + $0x3c0] sm:$0xff] %v734
      %1144 = vst [vmem:[%s208 + $0x3c8] sm:$0xff] %v775
      %1145 = vst [vmem:[%s208 + $0x3d0] sm:$0xff] %v816
      %1146 = vst [vmem:[%s208 + $0x3d8] sm:$0xff] %v857
      %1147 = vst [vmem:[%s208 + $0x3e0] sm:$0xff] %v898
      %1148 = vst [vmem:[%s208 + $0x3e8] sm:$0xff] %v939
      %1149 = vst [vmem:[%s208 + $0x3f0] sm:$0xff] %v980
      %1150 = vst [vmem:[%s208 + $0x3f8] sm:$0xff] %v1021
      %s1151 = smul.u32 16, %s19
      %p1152 = scmp.lt.s32.totalorder %s18, 1
      %s1153 = scalar_select %p1152, %s18, 1
      %p1154 = scmp.lt.s32.totalorder %s1151, 15
      %s1155 = scalar_select %p1154, %s1151, 15
      %s1156 = smul.addr %s1153, 128
      %s1157 = sadd.s32 %s1155, %s1156
      %s1158 = smul.addr %s1157, 8
      %s1159 = scalar_lea.vmem %s3, %s1158
      // Predicated region
      $region33: #{deconv3d_k2s2.1} parent=31 // pred_check
        %p1160 = pneg %p116
      $region34: #{deconv3d_k2s2.1} parent=31 // pred_check_branch
        %1162 = sbr.rel (%p1160) target = $region36
      $region35: #{deconv3d_k2s2.1} parent=31 // pred_region
        %s1163 = smul.u32 16, %s19
      $region36: #{deconv3d_k2s2.1} parent=31 // pred_fallthru
        _
    $region32: #{deconv3d_k2s2.1} parent=5 // pred_fallthru
      _
    %p1164 = scmp.le.s32.totalorder 2, %s9
    // Predicated region
    $region37: #{deconv3d_k2s2.1} parent=5 // pred_check
      %p1165 = pneg %p1164
    $region38: #{deconv3d_k2s2.1} parent=5 // pred_check_branch
      %1167 = sbr.rel (%p1165) target = $region40
    $region39: #{deconv3d_k2s2.1} parent=5 // pred_region
      %s1168 = ssub.s32 %s9, 2
      // Predicated region
      $region41: #{deconv3d_k2s2.1} parent=39 // pred_check
        %p1169 = pneg %p122
      $region42: #{deconv3d_k2s2.1} parent=39 // pred_check_branch
        %1171 = sbr.rel (%p1169) target = $region44
      $region43: #{deconv3d_k2s2.1} parent=39 // pred_region
        %s1172 = smul.u32 16, %s21
        %p1173 = scmp.lt.s32.totalorder %s20, 1
        %s1174 = scalar_select %p1173, %s20, 1
        %p1175 = scmp.lt.s32.totalorder %s1172, 15
        %s1176 = scalar_select %p1175, %s1172, 15
        %s1177 = smul.addr %s1174, 128
        %s1178 = sadd.s32 %s1176, %s1177
        %s1179 = smul.addr %s1178, 8
        %s1180 = scalar_lea.vmem %s3, %s1179
      $region44: #{deconv3d_k2s2.1} parent=39 // pred_fallthru
        _
    $region40: #{deconv3d_k2s2.1} parent=5 // pred_fallthru
      _
  $region6: #{deconv3d_k2s2.1} parent=0 // loop_footer
    %s13 = sadd.s32 1, %s9
  $region7: #{deconv3d_k2s2.1} parent=0 // loop_footer_branch
    %8 = sbr.rel target = $region3
  $region8: #{deconv3d_k2s2.1} parent=0 // loop_exit
    _

</llo_original>
